<compile_context>
chip_gen: v7x
topology: tpu7x:2x2x1
jax: 0.10.0
libtpu: 0.0.40
codegen_flags: <defaults>
</compile_context>

<pallas_src>
import functools

import numpy as np
import jax
import jax.numpy as jnp
from jax.experimental import pallas as pl
from jax.experimental.pallas import tpu as pltpu

# ---------------- small, module-consistent configuration ----------------
IMG = (16, 16, 16)          # img_size (3D)
PATCH = 8                   # patch_size
EMBED = 32                  # embed_dim
DEPTH = 2                   # depth
HEADS = 4                   # n_heads
MLP_RATIO = 4.0
N_CLASSES = 10
NUM_PROMPT = 4              # num_prompt_tokens
HEAD_DIM = EMBED // HEADS
HIDDEN = int(EMBED * MLP_RATIO)
PATCH_VOL = PATCH ** 3
N_PATCHES = (IMG[0] // PATCH) * (IMG[1] // PATCH) * (IMG[2] // PATCH)
EMBED_LEN = 1 + N_PATCHES                  # cls + patches (pos_embed length)
NUM_PREFIX = 1 + NUM_PROMPT                # cls + prompt tokens
SEQ = NUM_PREFIX + N_PATCHES               # 13 real tokens
SEQ_PAD = 16                               # padded to a sublane multiple
N_OUT_PAD = 128                            # lane-dense classifier output width
EPS = 1e-6
SCALE = HEAD_DIM ** -0.5
INV_SQRT2 = 0.7071067811865476
NEG_INF = -1e30


def _full_spec(shape):
    """BlockSpec covering the whole (small) array, independent of grid index."""
    n = len(shape)
    return pl.BlockSpec(shape, lambda b, n=n: (0,) * n)


def _layer_norm(h, w, b):
    mu = jnp.mean(h, axis=-1, keepdims=True)
    var = jnp.mean((h - mu) ** 2, axis=-1, keepdims=True)
    return (h - mu) * jax.lax.rsqrt(var + EPS) * w + b


# ---------------- fully-fused forward kernel (BT samples per grid step) -------
def _make_kernel(bt):
    m = bt * SEQ_PAD  # rows in the activation slab

    def kernel(xp_ref, base_ref, bias_ref, pw_ref, qkvw_ref, qkvb_ref,
               projw_ref, vec_ref, fc1_ref, fc2_ref, fin_ref, head_ref, o_ref):
        # ---- patch embed + full sequence assembly in ONE matmul + add ----
        # xp rows: [0,5) zeros, [5,13) patch vectors, [13,16) zeros  (per sample)
        # base rows: cls+pos0 / prompts / pos[1:]+conv-bias / zeros   (per sample)
        base = jnp.concatenate([base_ref[...]] * bt, axis=0)           # (m, E), 16-row aligned
        h = jnp.dot(xp_ref[...], pw_ref[...],
                    preferred_element_type=jnp.float32) + base         # (m, E)

        attn_bias = bias_ref[...]                                      # (m, m) block-diag mask

        # ---- transformer blocks (static unroll; DropPath identity) ----
        for d in range(DEPTH):
            v6 = d * 6
            ln1w, ln1b = vec_ref[v6 + 0], vec_ref[v6 + 1]
            projb = vec_ref[v6 + 2]
            ln2w, ln2b = vec_ref[v6 + 3], vec_ref[v6 + 4]
            fc2b = vec_ref[v6 + 5]

            # --- attention: per-head weights (no lane slicing of fused qkv) ---
            hn = _layer_norm(h, ln1w, ln1b)
            att = jnp.zeros((m, EMBED), jnp.float32)
            for hh in range(HEADS):                                    # static unroll
                iq = (0 * DEPTH + d) * HEADS + hh
                ik = (1 * DEPTH + d) * HEADS + hh
                iv = (2 * DEPTH + d) * HEADS + hh
                q = jnp.dot(hn, qkvw_ref[iq],
                            preferred_element_type=jnp.float32) + qkvb_ref[iq]
                k = jnp.dot(hn, qkvw_ref[ik],
                            preferred_element_type=jnp.float32) + qkvb_ref[ik]
                v = jnp.dot(hn, qkvw_ref[iv],
                            preferred_element_type=jnp.float32) + qkvb_ref[iv]
                # q @ k^T without materializing a transpose (contract dim 1 x dim 1)
                s = jax.lax.dot_general(q, k, (((1,), (1,)), ((), ())),
                                        preferred_element_type=jnp.float32)
                s = s * SCALE + attn_bias
                s = s - jnp.max(s, axis=-1, keepdims=True)
                p = jnp.exp(s)
                a = p * pl.reciprocal(jnp.sum(p, axis=-1, keepdims=True), approx=True)
                ctx = jnp.dot(a, v, preferred_element_type=jnp.float32)    # (m, HD)
                # fold head concat into the output projection (per-head accumulate)
                att = att + jnp.dot(ctx, projw_ref[d * HEADS + hh],
                                    preferred_element_type=jnp.float32)
            h = h + att + projb

            # --- MLP (exact erf GELU, matching nn.GELU default) ---
            hn2 = _layer_norm(h, ln2w, ln2b)
            fc1 = fc1_ref[d]                                           # (E+1, HIDDEN)
            mm = jnp.dot(hn2, fc1[:EMBED, :],
                         preferred_element_type=jnp.float32) + fc1[EMBED:, :]
            mm = 0.5 * mm * (1.0 + jax.lax.erf(mm * INV_SQRT2))
            mm = jnp.dot(mm, fc2_ref[d],
                         preferred_element_type=jnp.float32) + fc2b
            h = h + mm

        # ---- final LayerNorm + classifier head on every (padded) row; the
        #      wrapper picks row 0 of each sample.  Output is 128-lane dense. ----
        hn = _layer_norm(h, fin_ref[0], fin_ref[1])
        hw = head_ref[...]                                             # (E+1, 128)
        o_ref[...] = jnp.dot(hn, hw[:EMBED, :],
                             preferred_element_type=jnp.float32) + hw[EMBED:, :]

    return kernel


def vpt_forward_fused(xp_pad, pk, bt):
    """xp_pad: (B, SEQ_PAD, PATCH_VOL) zero-padded patch vectors. -> (B, N_CLASSES)."""
    B = xp_pad.shape[0]
    assert B % bt == 0, (B, bt)
    nt = B // bt
    m = bt * SEQ_PAD
    xpg = xp_pad.reshape(nt, m, PATCH_VOL)

    # Static block-diagonal + pad-key attention bias (constant-folded by XLA).
    ar = np.arange(m)
    valid = ((ar[:, None] // SEQ_PAD) == (ar[None, :] // SEQ_PAD)) & \
            ((ar[None, :] % SEQ_PAD) < SEQ)
    attn_bias = jnp.asarray(np.where(valid, 0.0, NEG_INF).astype(np.float32))

    args = (xpg, pk["base"], attn_bias, pk["patch_w"], pk["qkv_w"], pk["qkv_b"],
            pk["proj_w"], pk["vecs"], pk["fc1_wb"], pk["fc2_w"], pk["fin"],
            pk["head_wb"])
    in_specs = [pl.BlockSpec((None, m, PATCH_VOL), lambda b: (b, 0, 0))]
    in_specs += [_full_spec(a.shape) for a in args[1:]]

    out = pl.pallas_call(
        _make_kernel(bt),
        out_shape=jax.ShapeDtypeStruct((nt, m, N_OUT_PAD), jnp.float32),
        grid=(nt,),
        in_specs=in_specs,
        out_specs=pl.BlockSpec((None, m, N_OUT_PAD), lambda b: (b, 0, 0)),
        compiler_params=pltpu.CompilerParams(
            dimension_semantics=("parallel",),        # shards batch tiles on v7x
            vmem_limit_bytes=16 * 1024 * 1024,        # working set < 2 MiB
            # let XLA fuse the patch-extraction reshape/transpose/pad into the
            # pallas input instead of a separate HBM round trip
            allow_input_fusion=[True] + [False] * (len(args) - 1)),
    )(*args)
    # pick the cls row of each sample, drop the lane padding
    return out.reshape(B, SEQ_PAD, N_OUT_PAD)[:, 0, :N_CLASSES]


# ---------------- parameters (deterministic synthetic init, PyTorch layout) ---
def init_params(key):
    def nrm(k, shape, std=0.02):
        return (std * jax.random.normal(k, shape)).astype(jnp.float32)

    keys = iter(jax.random.split(key, 8 + 4 * DEPTH))
    params = {
        # Conv3d(1, EMBED, PATCH, stride=PATCH) as dense projection:
        # weight (EMBED,1,P,P,P).reshape(EMBED, P^3).T == (P^3, EMBED);
        # the (pd, ph, pw) C-order matches the patch transpose in the wrapper.
        "patch_w": nrm(next(keys), (PATCH_VOL, EMBED)),
        "patch_b": nrm(next(keys), (1, EMBED)),
        "cls_token": nrm(next(keys), (1, 1, EMBED), std=1e-6),
        "pos_embed": nrm(next(keys), (1, EMBED_LEN, EMBED)),
        "prompt": nrm(next(keys), (1, NUM_PROMPT, EMBED)),
        "norm_w": jnp.ones((1, EMBED), jnp.float32),
        "norm_b": jnp.zeros((1, EMBED), jnp.float32),
        "head_w": nrm(next(keys), (EMBED, N_CLASSES)),
        "head_b": jnp.zeros((1, N_CLASSES), jnp.float32),
    }
    params["blocks"] = {
        "ln1_w": jnp.ones((DEPTH, 1, EMBED), jnp.float32),
        "ln1_b": jnp.zeros((DEPTH, 1, EMBED), jnp.float32),
        "qkv_w": jnp.stack([nrm(next(keys), (EMBED, 3 * EMBED)) for _ in range(DEPTH)]),
        "qkv_b": jnp.zeros((DEPTH, 1, 3 * EMBED), jnp.float32),
        "proj_w": jnp.stack([nrm(next(keys), (EMBED, EMBED)) for _ in range(DEPTH)]),
        "proj_b": jnp.zeros((DEPTH, 1, EMBED), jnp.float32),
        "ln2_w": jnp.ones((DEPTH, 1, EMBED), jnp.float32),
        "ln2_b": jnp.zeros((DEPTH, 1, EMBED), jnp.float32),
        "fc1_w": jnp.stack([nrm(next(keys), (EMBED, HIDDEN)) for _ in range(DEPTH)]),
        "fc1_b": jnp.zeros((DEPTH, 1, HIDDEN), jnp.float32),
        "fc2_w": jnp.stack([nrm(next(keys), (HIDDEN, EMBED)) for _ in range(DEPTH)]),
        "fc2_b": jnp.zeros((DEPTH, 1, EMBED), jnp.float32),
    }
    return params


def pack_params(p):
    """One-time repack of PyTorch-layout params into kernel-friendly slabs.

    Called once (outside the jitted forward) so the packing ops never show up
    in the per-call HLO.
    """
    bp = p["blocks"]
    D, H, E, HD = DEPTH, HEADS, EMBED, HEAD_DIM

    # per-head q/k/v weights: (3*D*H, E, HD); index = (which*D + d)*H + h
    qkv_w = bp["qkv_w"].reshape(D, E, 3, H, HD).transpose(2, 0, 3, 1, 4)
    qkv_w = qkv_w.reshape(3 * D * H, E, HD)
    qkv_b = bp["qkv_b"].reshape(D, 3, H, HD).transpose(1, 0, 2, 3)
    qkv_b = qkv_b.reshape(3 * D * H, 1, HD)
    # per-head output-projection rows: (D*H, HD, E); index = d*H + h
    proj_w = bp["proj_w"].reshape(D * H, HD, E)

    # small per-block vectors packed in one slab: (6*D, 1, E), index = d*6 + i
    vecs = jnp.stack([bp["ln1_w"], bp["ln1_b"], bp["proj_b"],
                      bp["ln2_w"], bp["ln2_b"], bp["fc2_b"]], axis=1)
    vecs = vecs.reshape(6 * D, 1, E)

    # MLP fc1 weight + bias packed (bias is the last row; slice offsets are
    # multiples of 8 sublanes)
    fc1_wb = jnp.concatenate([bp["fc1_w"], bp["fc1_b"]], axis=1)       # (D, E+1, HIDDEN)

    # classifier head weight + bias, padded to 128 output lanes (dense store)
    head_wb = jnp.concatenate([p["head_w"], p["head_b"]], axis=0)      # (E+1, N_CLASSES)
    head_wb = jnp.pad(head_wb, ((0, 0), (0, N_OUT_PAD - N_CLASSES)))

    fin = jnp.stack([p["norm_w"], p["norm_b"]], axis=0)                # (2, 1, E)

    # input-invariant per-sample sequence base (SEQ_PAD, E):
    #   row 0          : cls_token + pos_embed[0]
    #   rows 1..4      : prompt tokens (no pos embed, matching incorporate_prompt)
    #   rows 5..12     : pos_embed[1:] + conv (patch-embed) bias
    #   rows 13..15    : zero padding
    prefix = jnp.concatenate([p["cls_token"][0] + p["pos_embed"][0, :1],
                              p["prompt"][0]], axis=0)                 # (NUM_PREFIX, E)
    patch_base = p["pos_embed"][0, 1:] + p["patch_b"]                  # (N_PATCHES, E)
    base = jnp.concatenate(
        [prefix, patch_base, jnp.zeros((SEQ_PAD - SEQ, E), jnp.float32)], axis=0)

    return {"patch_w": p["patch_w"], "base": base, "qkv_w": qkv_w, "qkv_b": qkv_b,
            "proj_w": proj_w, "vecs": vecs, "fc1_wb": fc1_wb, "fc2_w": bp["fc2_w"],
            "fin": fin, "head_wb": head_wb}


# ---------------- forward pass ----------------
@functools.partial(jax.jit, static_argnames=("batch_tile",))
def vpt_vit3d_forward(x, packed, batch_tile=None):
    """x : (B, 1, D, H, W)  NCDHW, in_chans=1.  Returns (B, N_CLASSES).

    batch_tile: samples per grid step.  Default = B (grid=(1,)), which maximizes
    matmul M and minimizes per-step overhead on v5e/v6e (single TensorCore).
    On v7x pass batch_tile=B//2 so the 'parallel' grid axis feeds both cores.
    """
    B = x.shape[0]
    bt = B if batch_tile is None else batch_tile
    Dz, Hy, Wx = IMG
    # Patch extraction (pure layout op; allow_input_fusion lets XLA fuse it into
    # the pallas input).  Patch vector ordering (pd, ph, pw) C-order matches the
    # Conv3d weight flatten used for params["patch_w"].
    xp = x.reshape(B, Dz // PATCH, PATCH, Hy // PATCH, PATCH, Wx // PATCH, PATCH)
    xp = xp.transpose(0, 1, 3, 5, 2, 4, 6).reshape(B, N_PATCHES, PATCH_VOL)
    # Zero-pad so patch vectors land at sequence rows [NUM_PREFIX, NUM_PREFIX+N_PATCHES)
    # of a 16-row-per-sample slab; prefix/pad rows are all zero.
    xp_pad = jnp.pad(xp, ((0, 0), (NUM_PREFIX, SEQ_PAD - SEQ), (0, 0)))
    return vpt_forward_fused(xp_pad, packed, bt)


# TODO(synk): Dropout / DropPath / prompt_dropout are eval-mode identities here
# (training-mode stochastic behaviour not implemented).  Softmax uses
# pl.reciprocal(approx=True): ~1e-3 relative error vs exact division.

if __name__ == "__main__":
    key = jax.random.PRNGKey(0)
    k_x, k_p = jax.random.split(key)
    x = jax.random.normal(k_x, (2, 1, *IMG), dtype=jnp.float32)  # batch=2, in_chans=1
    params = init_params(k_p)
    packed = pack_params(params)          # one-time repack, outside the jitted forward

    out = vpt_vit3d_forward(x, packed)
    out = jax.block_until_ready(out)
    assert out.shape == (2, N_CLASSES), out.shape
    print("KERNEL_OK")
</pallas_src>

<mosaic_0001>
module attributes {stable_mosaic.version = 11 : i64} {
  func.func @kernel(%arg0: i32, %arg1: memref<1x32x512xf32, #tpu.memory_space<vmem>>, %arg2: memref<16x32xf32, #tpu.memory_space<vmem>>, %arg3: memref<32x32xf32, #tpu.memory_space<vmem>>, %arg4: memref<512x32xf32, #tpu.memory_space<vmem>>, %arg5: memref<24x32x8xf32, #tpu.memory_space<vmem>>, %arg6: memref<24x1x8xf32, #tpu.memory_space<vmem>>, %arg7: memref<8x8x32xf32, #tpu.memory_space<vmem>>, %arg8: memref<12x1x32xf32, #tpu.memory_space<vmem>>, %arg9: memref<2x33x128xf32, #tpu.memory_space<vmem>>, %arg10: memref<2x128x32xf32, #tpu.memory_space<vmem>>, %arg11: memref<2x1x32xf32, #tpu.memory_space<vmem>>, %arg12: memref<33x128xf32, #tpu.memory_space<vmem>>, %arg13: memref<1x32x128xf32, #tpu.memory_space<vmem>>) attributes {dimension_semantics = [#tpu.dimension_semantics<parallel>], iteration_bounds = array<i64: 1>, scalar_prefetch = 0 : i64, scratch_operands = 0 : i64, tpu.core_type = #tpu.core_type<tc>, window_params = [{transform_indices = @transform_0, window_bounds = array<i64: 1, 32, 512>}, {pipeline_mode = #tpu.pipeline_mode<synchronous>, transform_indices = @transform_1, window_bounds = array<i64: 16, 32>}, {pipeline_mode = #tpu.pipeline_mode<synchronous>, transform_indices = @transform_2, window_bounds = array<i64: 32, 32>}, {pipeline_mode = #tpu.pipeline_mode<synchronous>, transform_indices = @transform_3, window_bounds = array<i64: 512, 32>}, {pipeline_mode = #tpu.pipeline_mode<synchronous>, transform_indices = @transform_4, window_bounds = array<i64: 24, 32, 8>}, {pipeline_mode = #tpu.pipeline_mode<synchronous>, transform_indices = @transform_5, window_bounds = array<i64: 24, 1, 8>}, {pipeline_mode = #tpu.pipeline_mode<synchronous>, transform_indices = @transform_6, window_bounds = array<i64: 8, 8, 32>}, {pipeline_mode = #tpu.pipeline_mode<synchronous>, transform_indices = @transform_7, window_bounds = array<i64: 12, 1, 32>}, {pipeline_mode = #tpu.pipeline_mode<synchronous>, transform_indices = @transform_8, window_bounds = array<i64: 2, 33, 128>}, {pipeline_mode = #tpu.pipeline_mode<synchronous>, transform_indices = @transform_9, window_bounds = array<i64: 2, 128, 32>}, {pipeline_mode = #tpu.pipeline_mode<synchronous>, transform_indices = @transform_10, window_bounds = array<i64: 2, 1, 32>}, {pipeline_mode = #tpu.pipeline_mode<synchronous>, transform_indices = @transform_11, window_bounds = array<i64: 33, 128>}, {transform_indices = @transform_12, window_bounds = array<i64: 1, 32, 128>}]} {
    %c0 = arith.constant 0 : index
    %c0_0 = arith.constant 0 : index
    %0 = vector.load %arg2[%c0, %c0_0] : memref<16x32xf32, #tpu.memory_space<vmem>>, vector<16x32xf32>
    %1 = tpu.concatenate %0, %0 in 0 : vector<16x32xf32>, vector<16x32xf32> -> vector<32x32xf32>
    %c0_1 = arith.constant 0 : index
    %c0_2 = arith.constant 0 : index
    %c0_3 = arith.constant 0 : index
    %2 = vector.load %arg1[%c0_1, %c0_2, %c0_3] : memref<1x32x512xf32, #tpu.memory_space<vmem>>, vector<1x32x512xf32>
    %3 = vector.shape_cast %2 : vector<1x32x512xf32> to vector<32x512xf32>
    %c0_4 = arith.constant 0 : index
    %c0_5 = arith.constant 0 : index
    %4 = vector.load %arg4[%c0_4, %c0_5] : memref<512x32xf32, #tpu.memory_space<vmem>>, vector<512x32xf32>
    %cst = arith.constant dense<0.000000e+00> : vector<32x32xf32>
    %5 = tpu.matmul %3, %4, %cst {dimension_numbers = #tpu.dot_dimension_numbers<[1], [0], [0], [1], [0, 0, 1, 1], [], []>} : vector<32x512xf32>, vector<512x32xf32>, vector<32x32xf32> -> vector<32x32xf32>
    %6 = arith.addf %5, %1 : vector<32x32xf32>
    %c0_6 = arith.constant 0 : index
    %c0_7 = arith.constant 0 : index
    %7 = vector.load %arg3[%c0_6, %c0_7] : memref<32x32xf32, #tpu.memory_space<vmem>>, vector<32x32xf32>
    %c0_8 = arith.constant 0 : index
    %c0_9 = arith.constant 0 : index
    %c0_10 = arith.constant 0 : index
    %8 = vector.load %arg8[%c0_8, %c0_9, %c0_10] : memref<12x1x32xf32, #tpu.memory_space<vmem>>, vector<1x1x32xf32>
    %9 = vector.shape_cast %8 : vector<1x1x32xf32> to vector<1x32xf32>
    %c1 = arith.constant 1 : index
    %c0_11 = arith.constant 0 : index
    %c0_12 = arith.constant 0 : index
    %10 = vector.load %arg8[%c1, %c0_11, %c0_12] : memref<12x1x32xf32, #tpu.memory_space<vmem>>, vector<1x1x32xf32>
    %11 = vector.shape_cast %10 : vector<1x1x32xf32> to vector<1x32xf32>
    %c2 = arith.constant 2 : index
    %c0_13 = arith.constant 0 : index
    %c0_14 = arith.constant 0 : index
    %12 = vector.load %arg8[%c2, %c0_13, %c0_14] : memref<12x1x32xf32, #tpu.memory_space<vmem>>, vector<1x1x32xf32>
    %13 = vector.shape_cast %12 : vector<1x1x32xf32> to vector<1x32xf32>
    %c3 = arith.constant 3 : index
    %c0_15 = arith.constant 0 : index
    %c0_16 = arith.constant 0 : index
    %14 = vector.load %arg8[%c3, %c0_15, %c0_16] : memref<12x1x32xf32, #tpu.memory_space<vmem>>, vector<1x1x32xf32>
    %15 = vector.shape_cast %14 : vector<1x1x32xf32> to vector<1x32xf32>
    %c4 = arith.constant 4 : index
    %c0_17 = arith.constant 0 : index
    %c0_18 = arith.constant 0 : index
    %16 = vector.load %arg8[%c4, %c0_17, %c0_18] : memref<12x1x32xf32, #tpu.memory_space<vmem>>, vector<1x1x32xf32>
    %17 = vector.shape_cast %16 : vector<1x1x32xf32> to vector<1x32xf32>
    %c5 = arith.constant 5 : index
    %c0_19 = arith.constant 0 : index
    %c0_20 = arith.constant 0 : index
    %18 = vector.load %arg8[%c5, %c0_19, %c0_20] : memref<12x1x32xf32, #tpu.memory_space<vmem>>, vector<1x1x32xf32>
    %19 = vector.shape_cast %18 : vector<1x1x32xf32> to vector<1x32xf32>
    %cst_21 = arith.constant dense<0.000000e+00> : vector<32xf32>
    %20 = vector.multi_reduction <add>, %6, %cst_21 [1] : vector<32x32xf32> to vector<32xf32>
    %21 = vector.shape_cast %20 : vector<32xf32> to vector<32x1xf32>
    %cst_22 = arith.constant 3.200000e+01 : f32
    %22 = vector.broadcast %cst_22 : f32 to vector<32x1xf32>
    %23 = arith.divf %21, %22 : vector<32x1xf32>
    %24 = vector.broadcast %23 : vector<32x1xf32> to vector<32x32xf32>
    %25 = arith.subf %6, %24 : vector<32x32xf32>
    %26 = arith.mulf %25, %25 : vector<32x32xf32>
    %cst_23 = arith.constant dense<0.000000e+00> : vector<32xf32>
    %27 = vector.multi_reduction <add>, %26, %cst_23 [1] : vector<32x32xf32> to vector<32xf32>
    %28 = vector.shape_cast %27 : vector<32xf32> to vector<32x1xf32>
    %cst_24 = arith.constant 3.200000e+01 : f32
    %29 = vector.broadcast %cst_24 : f32 to vector<32x1xf32>
    %30 = arith.divf %28, %29 : vector<32x1xf32>
    %31 = vector.broadcast %23 : vector<32x1xf32> to vector<32x32xf32>
    %32 = arith.subf %6, %31 : vector<32x32xf32>
    %cst_25 = arith.constant 9.99999997E-7 : f32
    %33 = vector.broadcast %cst_25 : f32 to vector<32x1xf32>
    %34 = arith.addf %30, %33 : vector<32x1xf32>
    %35 = math.rsqrt %34 : vector<32x1xf32>
    %36 = vector.broadcast %35 : vector<32x1xf32> to vector<32x32xf32>
    %37 = arith.mulf %32, %36 : vector<32x32xf32>
    %38 = vector.broadcast %9 : vector<1x32xf32> to vector<32x32xf32>
    %39 = arith.mulf %37, %38 : vector<32x32xf32>
    %40 = vector.broadcast %11 : vector<1x32xf32> to vector<32x32xf32>
    %41 = arith.addf %39, %40 : vector<32x32xf32>
    %cst_26 = arith.constant 0.000000e+00 : f32
    %42 = vector.broadcast %cst_26 : f32 to vector<32x32xf32>
    %c0_27 = arith.constant 0 : index
    %c0_28 = arith.constant 0 : index
    %c0_29 = arith.constant 0 : index
    %43 = vector.load %arg5[%c0_27, %c0_28, %c0_29] : memref<24x32x8xf32, #tpu.memory_space<vmem>>, vector<1x32x8xf32>
    %44 = vector.shape_cast %43 : vector<1x32x8xf32> to vector<32x8xf32>
    %cst_30 = arith.constant dense<0.000000e+00> : vector<32x8xf32>
    %45 = tpu.matmul %41, %44, %cst_30 {dimension_numbers = #tpu.dot_dimension_numbers<[1], [0], [0], [1], [0, 0, 1, 1], [], []>} : vector<32x32xf32>, vector<32x8xf32>, vector<32x8xf32> -> vector<32x8xf32>
    %c0_31 = arith.constant 0 : index
    %c0_32 = arith.constant 0 : index
    %c0_33 = arith.constant 0 : index
    %46 = vector.load %arg6[%c0_31, %c0_32, %c0_33] : memref<24x1x8xf32, #tpu.memory_space<vmem>>, vector<1x1x8xf32>
    %47 = vector.shape_cast %46 : vector<1x1x8xf32> to vector<1x8xf32>
    %48 = vector.broadcast %47 : vector<1x8xf32> to vector<32x8xf32>
    %49 = arith.addf %45, %48 : vector<32x8xf32>
    %c8 = arith.constant 8 : index
    %c0_34 = arith.constant 0 : index
    %c0_35 = arith.constant 0 : index
    %50 = vector.load %arg5[%c8, %c0_34, %c0_35] : memref<24x32x8xf32, #tpu.memory_space<vmem>>, vector<1x32x8xf32>
    %51 = vector.shape_cast %50 : vector<1x32x8xf32> to vector<32x8xf32>
    %cst_36 = arith.constant dense<0.000000e+00> : vector<32x8xf32>
    %52 = tpu.matmul %41, %51, %cst_36 {dimension_numbers = #tpu.dot_dimension_numbers<[1], [0], [0], [1], [0, 0, 1, 1], [], []>} : vector<32x32xf32>, vector<32x8xf32>, vector<32x8xf32> -> vector<32x8xf32>
    %c8_37 = arith.constant 8 : index
    %c0_38 = arith.constant 0 : index
    %c0_39 = arith.constant 0 : index
    %53 = vector.load %arg6[%c8_37, %c0_38, %c0_39] : memref<24x1x8xf32, #tpu.memory_space<vmem>>, vector<1x1x8xf32>
    %54 = vector.shape_cast %53 : vector<1x1x8xf32> to vector<1x8xf32>
    %55 = vector.broadcast %54 : vector<1x8xf32> to vector<32x8xf32>
    %56 = arith.addf %52, %55 : vector<32x8xf32>
    %c16 = arith.constant 16 : index
    %c0_40 = arith.constant 0 : index
    %c0_41 = arith.constant 0 : index
    %57 = vector.load %arg5[%c16, %c0_40, %c0_41] : memref<24x32x8xf32, #tpu.memory_space<vmem>>, vector<1x32x8xf32>
    %58 = vector.shape_cast %57 : vector<1x32x8xf32> to vector<32x8xf32>
    %cst_42 = arith.constant dense<0.000000e+00> : vector<32x8xf32>
    %59 = tpu.matmul %41, %58, %cst_42 {dimension_numbers = #tpu.dot_dimension_numbers<[1], [0], [0], [1], [0, 0, 1, 1], [], []>} : vector<32x32xf32>, vector<32x8xf32>, vector<32x8xf32> -> vector<32x8xf32>
    %c16_43 = arith.constant 16 : index
    %c0_44 = arith.constant 0 : index
    %c0_45 = arith.constant 0 : index
    %60 = vector.load %arg6[%c16_43, %c0_44, %c0_45] : memref<24x1x8xf32, #tpu.memory_space<vmem>>, vector<1x1x8xf32>
    %61 = vector.shape_cast %60 : vector<1x1x8xf32> to vector<1x8xf32>
    %62 = vector.broadcast %61 : vector<1x8xf32> to vector<32x8xf32>
    %63 = arith.addf %59, %62 : vector<32x8xf32>
    %cst_46 = arith.constant dense<0.000000e+00> : vector<32x32xf32>
    %64 = tpu.matmul %49, %56, %cst_46 {dimension_numbers = #tpu.dot_dimension_numbers<[1], [1], [0], [0], [0, 0, 1, 0], [], []>} : vector<32x8xf32>, vector<32x8xf32>, vector<32x32xf32> -> vector<32x32xf32>
    %cst_47 = arith.constant 0.353553385 : f32
    %65 = vector.broadcast %cst_47 : f32 to vector<32x32xf32>
    %66 = arith.mulf %64, %65 : vector<32x32xf32>
    %67 = arith.addf %66, %7 : vector<32x32xf32>
    %cst_48 = arith.constant dense<0xFF800000> : vector<32xf32>
    %68 = vector.multi_reduction <maximumf>, %67, %cst_48 [1] : vector<32x32xf32> to vector<32xf32>
    %69 = vector.shape_cast %68 : vector<32xf32> to vector<32x1xf32>
    %70 = vector.broadcast %69 : vector<32x1xf32> to vector<32x32xf32>
    %71 = arith.subf %67, %70 : vector<32x32xf32>
    %72 = math.exp %71 : vector<32x32xf32>
    %cst_49 = arith.constant dense<0.000000e+00> : vector<32xf32>
    %73 = vector.multi_reduction <add>, %72, %cst_49 [1] : vector<32x32xf32> to vector<32xf32>
    %74 = vector.shape_cast %73 : vector<32xf32> to vector<32x1xf32>
    %75 = tpu.reciprocal %74 {approx = true} : vector<32x1xf32> -> vector<32x1xf32>
    %76 = vector.broadcast %75 : vector<32x1xf32> to vector<32x32xf32>
    %77 = arith.mulf %72, %76 : vector<32x32xf32>
    %cst_50 = arith.constant dense<0.000000e+00> : vector<32x8xf32>
    %78 = tpu.matmul %77, %63, %cst_50 {dimension_numbers = #tpu.dot_dimension_numbers<[1], [0], [0], [1], [0, 0, 1, 1], [], []>} : vector<32x32xf32>, vector<32x8xf32>, vector<32x8xf32> -> vector<32x8xf32>
    %c0_51 = arith.constant 0 : index
    %c0_52 = arith.constant 0 : index
    %c0_53 = arith.constant 0 : index
    %79 = vector.load %arg7[%c0_51, %c0_52, %c0_53] : memref<8x8x32xf32, #tpu.memory_space<vmem>>, vector<1x8x32xf32>
    %80 = vector.shape_cast %79 : vector<1x8x32xf32> to vector<8x32xf32>
    %cst_54 = arith.constant dense<0.000000e+00> : vector<32x32xf32>
    %81 = tpu.matmul %78, %80, %cst_54 {dimension_numbers = #tpu.dot_dimension_numbers<[1], [0], [0], [1], [0, 0, 1, 1], [], []>} : vector<32x8xf32>, vector<8x32xf32>, vector<32x32xf32> -> vector<32x32xf32>
    %82 = arith.addf %42, %81 : vector<32x32xf32>
    %c1_55 = arith.constant 1 : index
    %c0_56 = arith.constant 0 : index
    %c0_57 = arith.constant 0 : index
    %83 = vector.load %arg5[%c1_55, %c0_56, %c0_57] : memref<24x32x8xf32, #tpu.memory_space<vmem>>, vector<1x32x8xf32>
    %84 = vector.shape_cast %83 : vector<1x32x8xf32> to vector<32x8xf32>
    %cst_58 = arith.constant dense<0.000000e+00> : vector<32x8xf32>
    %85 = tpu.matmul %41, %84, %cst_58 {dimension_numbers = #tpu.dot_dimension_numbers<[1], [0], [0], [1], [0, 0, 1, 1], [], []>} : vector<32x32xf32>, vector<32x8xf32>, vector<32x8xf32> -> vector<32x8xf32>
    %c1_59 = arith.constant 1 : index
    %c0_60 = arith.constant 0 : index
    %c0_61 = arith.constant 0 : index
    %86 = vector.load %arg6[%c1_59, %c0_60, %c0_61] : memref<24x1x8xf32, #tpu.memory_space<vmem>>, vector<1x1x8xf32>
    %87 = vector.shape_cast %86 : vector<1x1x8xf32> to vector<1x8xf32>
    %88 = vector.broadcast %87 : vector<1x8xf32> to vector<32x8xf32>
    %89 = arith.addf %85, %88 : vector<32x8xf32>
    %c9 = arith.constant 9 : index
    %c0_62 = arith.constant 0 : index
    %c0_63 = arith.constant 0 : index
    %90 = vector.load %arg5[%c9, %c0_62, %c0_63] : memref<24x32x8xf32, #tpu.memory_space<vmem>>, vector<1x32x8xf32>
    %91 = vector.shape_cast %90 : vector<1x32x8xf32> to vector<32x8xf32>
    %cst_64 = arith.constant dense<0.000000e+00> : vector<32x8xf32>
    %92 = tpu.matmul %41, %91, %cst_64 {dimension_numbers = #tpu.dot_dimension_numbers<[1], [0], [0], [1], [0, 0, 1, 1], [], []>} : vector<32x32xf32>, vector<32x8xf32>, vector<32x8xf32> -> vector<32x8xf32>
    %c9_65 = arith.constant 9 : index
    %c0_66 = arith.constant 0 : index
    %c0_67 = arith.constant 0 : index
    %93 = vector.load %arg6[%c9_65, %c0_66, %c0_67] : memref<24x1x8xf32, #tpu.memory_space<vmem>>, vector<1x1x8xf32>
    %94 = vector.shape_cast %93 : vector<1x1x8xf32> to vector<1x8xf32>
    %95 = vector.broadcast %94 : vector<1x8xf32> to vector<32x8xf32>
    %96 = arith.addf %92, %95 : vector<32x8xf32>
    %c17 = arith.constant 17 : index
    %c0_68 = arith.constant 0 : index
    %c0_69 = arith.constant 0 : index
    %97 = vector.load %arg5[%c17, %c0_68, %c0_69] : memref<24x32x8xf32, #tpu.memory_space<vmem>>, vector<1x32x8xf32>
    %98 = vector.shape_cast %97 : vector<1x32x8xf32> to vector<32x8xf32>
    %cst_70 = arith.constant dense<0.000000e+00> : vector<32x8xf32>
    %99 = tpu.matmul %41, %98, %cst_70 {dimension_numbers = #tpu.dot_dimension_numbers<[1], [0], [0], [1], [0, 0, 1, 1], [], []>} : vector<32x32xf32>, vector<32x8xf32>, vector<32x8xf32> -> vector<32x8xf32>
    %c17_71 = arith.constant 17 : index
    %c0_72 = arith.constant 0 : index
    %c0_73 = arith.constant 0 : index
    %100 = vector.load %arg6[%c17_71, %c0_72, %c0_73] : memref<24x1x8xf32, #tpu.memory_space<vmem>>, vector<1x1x8xf32>
    %101 = vector.shape_cast %100 : vector<1x1x8xf32> to vector<1x8xf32>
    %102 = vector.broadcast %101 : vector<1x8xf32> to vector<32x8xf32>
    %103 = arith.addf %99, %102 : vector<32x8xf32>
    %cst_74 = arith.constant dense<0.000000e+00> : vector<32x32xf32>
    %104 = tpu.matmul %89, %96, %cst_74 {dimension_numbers = #tpu.dot_dimension_numbers<[1], [1], [0], [0], [0, 0, 1, 0], [], []>} : vector<32x8xf32>, vector<32x8xf32>, vector<32x32xf32> -> vector<32x32xf32>
    %cst_75 = arith.constant 0.353553385 : f32
    %105 = vector.broadcast %cst_75 : f32 to vector<32x32xf32>
    %106 = arith.mulf %104, %105 : vector<32x32xf32>
    %107 = arith.addf %106, %7 : vector<32x32xf32>
    %cst_76 = arith.constant dense<0xFF800000> : vector<32xf32>
    %108 = vector.multi_reduction <maximumf>, %107, %cst_76 [1] : vector<32x32xf32> to vector<32xf32>
    %109 = vector.shape_cast %108 : vector<32xf32> to vector<32x1xf32>
    %110 = vector.broadcast %109 : vector<32x1xf32> to vector<32x32xf32>
    %111 = arith.subf %107, %110 : vector<32x32xf32>
    %112 = math.exp %111 : vector<32x32xf32>
    %cst_77 = arith.constant dense<0.000000e+00> : vector<32xf32>
    %113 = vector.multi_reduction <add>, %112, %cst_77 [1] : vector<32x32xf32> to vector<32xf32>
    %114 = vector.shape_cast %113 : vector<32xf32> to vector<32x1xf32>
    %115 = tpu.reciprocal %114 {approx = true} : vector<32x1xf32> -> vector<32x1xf32>
    %116 = vector.broadcast %115 : vector<32x1xf32> to vector<32x32xf32>
    %117 = arith.mulf %112, %116 : vector<32x32xf32>
    %cst_78 = arith.constant dense<0.000000e+00> : vector<32x8xf32>
    %118 = tpu.matmul %117, %103, %cst_78 {dimension_numbers = #tpu.dot_dimension_numbers<[1], [0], [0], [1], [0, 0, 1, 1], [], []>} : vector<32x32xf32>, vector<32x8xf32>, vector<32x8xf32> -> vector<32x8xf32>
    %c1_79 = arith.constant 1 : index
    %c0_80 = arith.constant 0 : index
    %c0_81 = arith.constant 0 : index
    %119 = vector.load %arg7[%c1_79, %c0_80, %c0_81] : memref<8x8x32xf32, #tpu.memory_space<vmem>>, vector<1x8x32xf32>
    %120 = vector.shape_cast %119 : vector<1x8x32xf32> to vector<8x32xf32>
    %cst_82 = arith.constant dense<0.000000e+00> : vector<32x32xf32>
    %121 = tpu.matmul %118, %120, %cst_82 {dimension_numbers = #tpu.dot_dimension_numbers<[1], [0], [0], [1], [0, 0, 1, 1], [], []>} : vector<32x8xf32>, vector<8x32xf32>, vector<32x32xf32> -> vector<32x32xf32>
    %122 = arith.addf %82, %121 : vector<32x32xf32>
    %c2_83 = arith.constant 2 : index
    %c0_84 = arith.constant 0 : index
    %c0_85 = arith.constant 0 : index
    %123 = vector.load %arg5[%c2_83, %c0_84, %c0_85] : memref<24x32x8xf32, #tpu.memory_space<vmem>>, vector<1x32x8xf32>
    %124 = vector.shape_cast %123 : vector<1x32x8xf32> to vector<32x8xf32>
    %cst_86 = arith.constant dense<0.000000e+00> : vector<32x8xf32>
    %125 = tpu.matmul %41, %124, %cst_86 {dimension_numbers = #tpu.dot_dimension_numbers<[1], [0], [0], [1], [0, 0, 1, 1], [], []>} : vector<32x32xf32>, vector<32x8xf32>, vector<32x8xf32> -> vector<32x8xf32>
    %c2_87 = arith.constant 2 : index
    %c0_88 = arith.constant 0 : index
    %c0_89 = arith.constant 0 : index
    %126 = vector.load %arg6[%c2_87, %c0_88, %c0_89] : memref<24x1x8xf32, #tpu.memory_space<vmem>>, vector<1x1x8xf32>
    %127 = vector.shape_cast %126 : vector<1x1x8xf32> to vector<1x8xf32>
    %128 = vector.broadcast %127 : vector<1x8xf32> to vector<32x8xf32>
    %129 = arith.addf %125, %128 : vector<32x8xf32>
    %c10 = arith.constant 10 : index
    %c0_90 = arith.constant 0 : index
    %c0_91 = arith.constant 0 : index
    %130 = vector.load %arg5[%c10, %c0_90, %c0_91] : memref<24x32x8xf32, #tpu.memory_space<vmem>>, vector<1x32x8xf32>
    %131 = vector.shape_cast %130 : vector<1x32x8xf32> to vector<32x8xf32>
    %cst_92 = arith.constant dense<0.000000e+00> : vector<32x8xf32>
    %132 = tpu.matmul %41, %131, %cst_92 {dimension_numbers = #tpu.dot_dimension_numbers<[1], [0], [0], [1], [0, 0, 1, 1], [], []>} : vector<32x32xf32>, vector<32x8xf32>, vector<32x8xf32> -> vector<32x8xf32>
    %c10_93 = arith.constant 10 : index
    %c0_94 = arith.constant 0 : index
    %c0_95 = arith.constant 0 : index
    %133 = vector.load %arg6[%c10_93, %c0_94, %c0_95] : memref<24x1x8xf32, #tpu.memory_space<vmem>>, vector<1x1x8xf32>
    %134 = vector.shape_cast %133 : vector<1x1x8xf32> to vector<1x8xf32>
    %135 = vector.broadcast %134 : vector<1x8xf32> to vector<32x8xf32>
    %136 = arith.addf %132, %135 : vector<32x8xf32>
    %c18 = arith.constant 18 : index
    %c0_96 = arith.constant 0 : index
    %c0_97 = arith.constant 0 : index
    %137 = vector.load %arg5[%c18, %c0_96, %c0_97] : memref<24x32x8xf32, #tpu.memory_space<vmem>>, vector<1x32x8xf32>
    %138 = vector.shape_cast %137 : vector<1x32x8xf32> to vector<32x8xf32>
    %cst_98 = arith.constant dense<0.000000e+00> : vector<32x8xf32>
    %139 = tpu.matmul %41, %138, %cst_98 {dimension_numbers = #tpu.dot_dimension_numbers<[1], [0], [0], [1], [0, 0, 1, 1], [], []>} : vector<32x32xf32>, vector<32x8xf32>, vector<32x8xf32> -> vector<32x8xf32>
    %c18_99 = arith.constant 18 : index
    %c0_100 = arith.constant 0 : index
    %c0_101 = arith.constant 0 : index
    %140 = vector.load %arg6[%c18_99, %c0_100, %c0_101] : memref<24x1x8xf32, #tpu.memory_space<vmem>>, vector<1x1x8xf32>
    %141 = vector.shape_cast %140 : vector<1x1x8xf32> to vector<1x8xf32>
    %142 = vector.broadcast %141 : vector<1x8xf32> to vector<32x8xf32>
    %143 = arith.addf %139, %142 : vector<32x8xf32>
    %cst_102 = arith.constant dense<0.000000e+00> : vector<32x32xf32>
    %144 = tpu.matmul %129, %136, %cst_102 {dimension_numbers = #tpu.dot_dimension_numbers<[1], [1], [0], [0], [0, 0, 1, 0], [], []>} : vector<32x8xf32>, vector<32x8xf32>, vector<32x32xf32> -> vector<32x32xf32>
    %cst_103 = arith.constant 0.353553385 : f32
    %145 = vector.broadcast %cst_103 : f32 to vector<32x32xf32>
    %146 = arith.mulf %144, %145 : vector<32x32xf32>
    %147 = arith.addf %146, %7 : vector<32x32xf32>
    %cst_104 = arith.constant dense<0xFF800000> : vector<32xf32>
    %148 = vector.multi_reduction <maximumf>, %147, %cst_104 [1] : vector<32x32xf32> to vector<32xf32>
    %149 = vector.shape_cast %148 : vector<32xf32> to vector<32x1xf32>
    %150 = vector.broadcast %149 : vector<32x1xf32> to vector<32x32xf32>
    %151 = arith.subf %147, %150 : vector<32x32xf32>
    %152 = math.exp %151 : vector<32x32xf32>
    %cst_105 = arith.constant dense<0.000000e+00> : vector<32xf32>
    %153 = vector.multi_reduction <add>, %152, %cst_105 [1] : vector<32x32xf32> to vector<32xf32>
    %154 = vector.shape_cast %153 : vector<32xf32> to vector<32x1xf32>
    %155 = tpu.reciprocal %154 {approx = true} : vector<32x1xf32> -> vector<32x1xf32>
    %156 = vector.broadcast %155 : vector<32x1xf32> to vector<32x32xf32>
    %157 = arith.mulf %152, %156 : vector<32x32xf32>
    %cst_106 = arith.constant dense<0.000000e+00> : vector<32x8xf32>
    %158 = tpu.matmul %157, %143, %cst_106 {dimension_numbers = #tpu.dot_dimension_numbers<[1], [0], [0], [1], [0, 0, 1, 1], [], []>} : vector<32x32xf32>, vector<32x8xf32>, vector<32x8xf32> -> vector<32x8xf32>
    %c2_107 = arith.constant 2 : index
    %c0_108 = arith.constant 0 : index
    %c0_109 = arith.constant 0 : index
    %159 = vector.load %arg7[%c2_107, %c0_108, %c0_109] : memref<8x8x32xf32, #tpu.memory_space<vmem>>, vector<1x8x32xf32>
    %160 = vector.shape_cast %159 : vector<1x8x32xf32> to vector<8x32xf32>
    %cst_110 = arith.constant dense<0.000000e+00> : vector<32x32xf32>
    %161 = tpu.matmul %158, %160, %cst_110 {dimension_numbers = #tpu.dot_dimension_numbers<[1], [0], [0], [1], [0, 0, 1, 1], [], []>} : vector<32x8xf32>, vector<8x32xf32>, vector<32x32xf32> -> vector<32x32xf32>
    %162 = arith.addf %122, %161 : vector<32x32xf32>
    %c3_111 = arith.constant 3 : index
    %c0_112 = arith.constant 0 : index
    %c0_113 = arith.constant 0 : index
    %163 = vector.load %arg5[%c3_111, %c0_112, %c0_113] : memref<24x32x8xf32, #tpu.memory_space<vmem>>, vector<1x32x8xf32>
    %164 = vector.shape_cast %163 : vector<1x32x8xf32> to vector<32x8xf32>
    %cst_114 = arith.constant dense<0.000000e+00> : vector<32x8xf32>
    %165 = tpu.matmul %41, %164, %cst_114 {dimension_numbers = #tpu.dot_dimension_numbers<[1], [0], [0], [1], [0, 0, 1, 1], [], []>} : vector<32x32xf32>, vector<32x8xf32>, vector<32x8xf32> -> vector<32x8xf32>
    %c3_115 = arith.constant 3 : index
    %c0_116 = arith.constant 0 : index
    %c0_117 = arith.constant 0 : index
    %166 = vector.load %arg6[%c3_115, %c0_116, %c0_117] : memref<24x1x8xf32, #tpu.memory_space<vmem>>, vector<1x1x8xf32>
    %167 = vector.shape_cast %166 : vector<1x1x8xf32> to vector<1x8xf32>
    %168 = vector.broadcast %167 : vector<1x8xf32> to vector<32x8xf32>
    %169 = arith.addf %165, %168 : vector<32x8xf32>
    %c11 = arith.constant 11 : index
    %c0_118 = arith.constant 0 : index
    %c0_119 = arith.constant 0 : index
    %170 = vector.load %arg5[%c11, %c0_118, %c0_119] : memref<24x32x8xf32, #tpu.memory_space<vmem>>, vector<1x32x8xf32>
    %171 = vector.shape_cast %170 : vector<1x32x8xf32> to vector<32x8xf32>
    %cst_120 = arith.constant dense<0.000000e+00> : vector<32x8xf32>
    %172 = tpu.matmul %41, %171, %cst_120 {dimension_numbers = #tpu.dot_dimension_numbers<[1], [0], [0], [1], [0, 0, 1, 1], [], []>} : vector<32x32xf32>, vector<32x8xf32>, vector<32x8xf32> -> vector<32x8xf32>
    %c11_121 = arith.constant 11 : index
    %c0_122 = arith.constant 0 : index
    %c0_123 = arith.constant 0 : index
    %173 = vector.load %arg6[%c11_121, %c0_122, %c0_123] : memref<24x1x8xf32, #tpu.memory_space<vmem>>, vector<1x1x8xf32>
    %174 = vector.shape_cast %173 : vector<1x1x8xf32> to vector<1x8xf32>
    %175 = vector.broadcast %174 : vector<1x8xf32> to vector<32x8xf32>
    %176 = arith.addf %172, %175 : vector<32x8xf32>
    %c19 = arith.constant 19 : index
    %c0_124 = arith.constant 0 : index
    %c0_125 = arith.constant 0 : index
    %177 = vector.load %arg5[%c19, %c0_124, %c0_125] : memref<24x32x8xf32, #tpu.memory_space<vmem>>, vector<1x32x8xf32>
    %178 = vector.shape_cast %177 : vector<1x32x8xf32> to vector<32x8xf32>
    %cst_126 = arith.constant dense<0.000000e+00> : vector<32x8xf32>
    %179 = tpu.matmul %41, %178, %cst_126 {dimension_numbers = #tpu.dot_dimension_numbers<[1], [0], [0], [1], [0, 0, 1, 1], [], []>} : vector<32x32xf32>, vector<32x8xf32>, vector<32x8xf32> -> vector<32x8xf32>
    %c19_127 = arith.constant 19 : index
    %c0_128 = arith.constant 0 : index
    %c0_129 = arith.constant 0 : index
    %180 = vector.load %arg6[%c19_127, %c0_128, %c0_129] : memref<24x1x8xf32, #tpu.memory_space<vmem>>, vector<1x1x8xf32>
    %181 = vector.shape_cast %180 : vector<1x1x8xf32> to vector<1x8xf32>
    %182 = vector.broadcast %181 : vector<1x8xf32> to vector<32x8xf32>
    %183 = arith.addf %179, %182 : vector<32x8xf32>
    %cst_130 = arith.constant dense<0.000000e+00> : vector<32x32xf32>
    %184 = tpu.matmul %169, %176, %cst_130 {dimension_numbers = #tpu.dot_dimension_numbers<[1], [1], [0], [0], [0, 0, 1, 0], [], []>} : vector<32x8xf32>, vector<32x8xf32>, vector<32x32xf32> -> vector<32x32xf32>
    %cst_131 = arith.constant 0.353553385 : f32
    %185 = vector.broadcast %cst_131 : f32 to vector<32x32xf32>
    %186 = arith.mulf %184, %185 : vector<32x32xf32>
    %187 = arith.addf %186, %7 : vector<32x32xf32>
    %cst_132 = arith.constant dense<0xFF800000> : vector<32xf32>
    %188 = vector.multi_reduction <maximumf>, %187, %cst_132 [1] : vector<32x32xf32> to vector<32xf32>
    %189 = vector.shape_cast %188 : vector<32xf32> to vector<32x1xf32>
    %190 = vector.broadcast %189 : vector<32x1xf32> to vector<32x32xf32>
    %191 = arith.subf %187, %190 : vector<32x32xf32>
    %192 = math.exp %191 : vector<32x32xf32>
    %cst_133 = arith.constant dense<0.000000e+00> : vector<32xf32>
    %193 = vector.multi_reduction <add>, %192, %cst_133 [1] : vector<32x32xf32> to vector<32xf32>
    %194 = vector.shape_cast %193 : vector<32xf32> to vector<32x1xf32>
    %195 = tpu.reciprocal %194 {approx = true} : vector<32x1xf32> -> vector<32x1xf32>
    %196 = vector.broadcast %195 : vector<32x1xf32> to vector<32x32xf32>
    %197 = arith.mulf %192, %196 : vector<32x32xf32>
    %cst_134 = arith.constant dense<0.000000e+00> : vector<32x8xf32>
    %198 = tpu.matmul %197, %183, %cst_134 {dimension_numbers = #tpu.dot_dimension_numbers<[1], [0], [0], [1], [0, 0, 1, 1], [], []>} : vector<32x32xf32>, vector<32x8xf32>, vector<32x8xf32> -> vector<32x8xf32>
    %c3_135 = arith.constant 3 : index
    %c0_136 = arith.constant 0 : index
    %c0_137 = arith.constant 0 : index
    %199 = vector.load %arg7[%c3_135, %c0_136, %c0_137] : memref<8x8x32xf32, #tpu.memory_space<vmem>>, vector<1x8x32xf32>
    %200 = vector.shape_cast %199 : vector<1x8x32xf32> to vector<8x32xf32>
    %cst_138 = arith.constant dense<0.000000e+00> : vector<32x32xf32>
    %201 = tpu.matmul %198, %200, %cst_138 {dimension_numbers = #tpu.dot_dimension_numbers<[1], [0], [0], [1], [0, 0, 1, 1], [], []>} : vector<32x8xf32>, vector<8x32xf32>, vector<32x32xf32> -> vector<32x32xf32>
    %202 = arith.addf %162, %201 : vector<32x32xf32>
    %203 = arith.addf %6, %202 : vector<32x32xf32>
    %204 = vector.broadcast %13 : vector<1x32xf32> to vector<32x32xf32>
    %205 = arith.addf %203, %204 : vector<32x32xf32>
    %cst_139 = arith.constant dense<0.000000e+00> : vector<32xf32>
    %206 = vector.multi_reduction <add>, %205, %cst_139 [1] : vector<32x32xf32> to vector<32xf32>
    %207 = vector.shape_cast %206 : vector<32xf32> to vector<32x1xf32>
    %cst_140 = arith.constant 3.200000e+01 : f32
    %208 = vector.broadcast %cst_140 : f32 to vector<32x1xf32>
    %209 = arith.divf %207, %208 : vector<32x1xf32>
    %210 = vector.broadcast %209 : vector<32x1xf32> to vector<32x32xf32>
    %211 = arith.subf %205, %210 : vector<32x32xf32>
    %212 = arith.mulf %211, %211 : vector<32x32xf32>
    %cst_141 = arith.constant dense<0.000000e+00> : vector<32xf32>
    %213 = vector.multi_reduction <add>, %212, %cst_141 [1] : vector<32x32xf32> to vector<32xf32>
    %214 = vector.shape_cast %213 : vector<32xf32> to vector<32x1xf32>
    %cst_142 = arith.constant 3.200000e+01 : f32
    %215 = vector.broadcast %cst_142 : f32 to vector<32x1xf32>
    %216 = arith.divf %214, %215 : vector<32x1xf32>
    %217 = vector.broadcast %209 : vector<32x1xf32> to vector<32x32xf32>
    %218 = arith.subf %205, %217 : vector<32x32xf32>
    %cst_143 = arith.constant 9.99999997E-7 : f32
    %219 = vector.broadcast %cst_143 : f32 to vector<32x1xf32>
    %220 = arith.addf %216, %219 : vector<32x1xf32>
    %221 = math.rsqrt %220 : vector<32x1xf32>
    %222 = vector.broadcast %221 : vector<32x1xf32> to vector<32x32xf32>
    %223 = arith.mulf %218, %222 : vector<32x32xf32>
    %224 = vector.broadcast %15 : vector<1x32xf32> to vector<32x32xf32>
    %225 = arith.mulf %223, %224 : vector<32x32xf32>
    %226 = vector.broadcast %17 : vector<1x32xf32> to vector<32x32xf32>
    %227 = arith.addf %225, %226 : vector<32x32xf32>
    %c0_144 = arith.constant 0 : index
    %c0_145 = arith.constant 0 : index
    %c0_146 = arith.constant 0 : index
    %228 = vector.load %arg9[%c0_144, %c0_145, %c0_146] : memref<2x33x128xf32, #tpu.memory_space<vmem>>, vector<1x33x128xf32>
    %229 = vector.shape_cast %228 : vector<1x33x128xf32> to vector<33x128xf32>
    %230 = vector.extract_strided_slice %229 {offsets = [0, 0], sizes = [32, 128], strides = [1, 1]} : vector<33x128xf32> to vector<32x128xf32>
    %cst_147 = arith.constant dense<0.000000e+00> : vector<32x128xf32>
    %231 = tpu.matmul %227, %230, %cst_147 {dimension_numbers = #tpu.dot_dimension_numbers<[1], [0], [0], [1], [0, 0, 1, 1], [], []>} : vector<32x32xf32>, vector<32x128xf32>, vector<32x128xf32> -> vector<32x128xf32>
    %232 = vector.extract_strided_slice %229 {offsets = [32, 0], sizes = [1, 128], strides = [1, 1]} : vector<33x128xf32> to vector<1x128xf32>
    %233 = vector.broadcast %232 : vector<1x128xf32> to vector<32x128xf32>
    %234 = arith.addf %231, %233 : vector<32x128xf32>
    %cst_148 = arith.constant 5.000000e-01 : f32
    %235 = vector.broadcast %cst_148 : f32 to vector<32x128xf32>
    %236 = arith.mulf %235, %234 : vector<32x128xf32>
    %cst_149 = arith.constant 0.707106769 : f32
    %237 = vector.broadcast %cst_149 : f32 to vector<32x128xf32>
    %238 = arith.mulf %234, %237 : vector<32x128xf32>
    %239 = math.erf %238 : vector<32x128xf32>
    %cst_150 = arith.constant 1.000000e+00 : f32
    %240 = vector.broadcast %cst_150 : f32 to vector<32x128xf32>
    %241 = arith.addf %240, %239 : vector<32x128xf32>
    %242 = arith.mulf %236, %241 : vector<32x128xf32>
    %c0_151 = arith.constant 0 : index
    %c0_152 = arith.constant 0 : index
    %c0_153 = arith.constant 0 : index
    %243 = vector.load %arg10[%c0_151, %c0_152, %c0_153] : memref<2x128x32xf32, #tpu.memory_space<vmem>>, vector<1x128x32xf32>
    %244 = vector.shape_cast %243 : vector<1x128x32xf32> to vector<128x32xf32>
    %cst_154 = arith.constant dense<0.000000e+00> : vector<32x32xf32>
    %245 = tpu.matmul %242, %244, %cst_154 {dimension_numbers = #tpu.dot_dimension_numbers<[1], [0], [0], [1], [0, 0, 1, 1], [], []>} : vector<32x128xf32>, vector<128x32xf32>, vector<32x32xf32> -> vector<32x32xf32>
    %246 = vector.broadcast %19 : vector<1x32xf32> to vector<32x32xf32>
    %247 = arith.addf %245, %246 : vector<32x32xf32>
    %248 = arith.addf %205, %247 : vector<32x32xf32>
    %c6 = arith.constant 6 : index
    %c0_155 = arith.constant 0 : index
    %c0_156 = arith.constant 0 : index
    %249 = vector.load %arg8[%c6, %c0_155, %c0_156] : memref<12x1x32xf32, #tpu.memory_space<vmem>>, vector<1x1x32xf32>
    %250 = vector.shape_cast %249 : vector<1x1x32xf32> to vector<1x32xf32>
    %c7 = arith.constant 7 : index
    %c0_157 = arith.constant 0 : index
    %c0_158 = arith.constant 0 : index
    %251 = vector.load %arg8[%c7, %c0_157, %c0_158] : memref<12x1x32xf32, #tpu.memory_space<vmem>>, vector<1x1x32xf32>
    %252 = vector.shape_cast %251 : vector<1x1x32xf32> to vector<1x32xf32>
    %c8_159 = arith.constant 8 : index
    %c0_160 = arith.constant 0 : index
    %c0_161 = arith.constant 0 : index
    %253 = vector.load %arg8[%c8_159, %c0_160, %c0_161] : memref<12x1x32xf32, #tpu.memory_space<vmem>>, vector<1x1x32xf32>
    %254 = vector.shape_cast %253 : vector<1x1x32xf32> to vector<1x32xf32>
    %c9_162 = arith.constant 9 : index
    %c0_163 = arith.constant 0 : index
    %c0_164 = arith.constant 0 : index
    %255 = vector.load %arg8[%c9_162, %c0_163, %c0_164] : memref<12x1x32xf32, #tpu.memory_space<vmem>>, vector<1x1x32xf32>
    %256 = vector.shape_cast %255 : vector<1x1x32xf32> to vector<1x32xf32>
    %c10_165 = arith.constant 10 : index
    %c0_166 = arith.constant 0 : index
    %c0_167 = arith.constant 0 : index
    %257 = vector.load %arg8[%c10_165, %c0_166, %c0_167] : memref<12x1x32xf32, #tpu.memory_space<vmem>>, vector<1x1x32xf32>
    %258 = vector.shape_cast %257 : vector<1x1x32xf32> to vector<1x32xf32>
    %c11_168 = arith.constant 11 : index
    %c0_169 = arith.constant 0 : index
    %c0_170 = arith.constant 0 : index
    %259 = vector.load %arg8[%c11_168, %c0_169, %c0_170] : memref<12x1x32xf32, #tpu.memory_space<vmem>>, vector<1x1x32xf32>
    %260 = vector.shape_cast %259 : vector<1x1x32xf32> to vector<1x32xf32>
    %cst_171 = arith.constant dense<0.000000e+00> : vector<32xf32>
    %261 = vector.multi_reduction <add>, %248, %cst_171 [1] : vector<32x32xf32> to vector<32xf32>
    %262 = vector.shape_cast %261 : vector<32xf32> to vector<32x1xf32>
    %cst_172 = arith.constant 3.200000e+01 : f32
    %263 = vector.broadcast %cst_172 : f32 to vector<32x1xf32>
    %264 = arith.divf %262, %263 : vector<32x1xf32>
    %265 = vector.broadcast %264 : vector<32x1xf32> to vector<32x32xf32>
    %266 = arith.subf %248, %265 : vector<32x32xf32>
    %267 = arith.mulf %266, %266 : vector<32x32xf32>
    %cst_173 = arith.constant dense<0.000000e+00> : vector<32xf32>
    %268 = vector.multi_reduction <add>, %267, %cst_173 [1] : vector<32x32xf32> to vector<32xf32>
    %269 = vector.shape_cast %268 : vector<32xf32> to vector<32x1xf32>
    %cst_174 = arith.constant 3.200000e+01 : f32
    %270 = vector.broadcast %cst_174 : f32 to vector<32x1xf32>
    %271 = arith.divf %269, %270 : vector<32x1xf32>
    %272 = vector.broadcast %264 : vector<32x1xf32> to vector<32x32xf32>
    %273 = arith.subf %248, %272 : vector<32x32xf32>
    %cst_175 = arith.constant 9.99999997E-7 : f32
    %274 = vector.broadcast %cst_175 : f32 to vector<32x1xf32>
    %275 = arith.addf %271, %274 : vector<32x1xf32>
    %276 = math.rsqrt %275 : vector<32x1xf32>
    %277 = vector.broadcast %276 : vector<32x1xf32> to vector<32x32xf32>
    %278 = arith.mulf %273, %277 : vector<32x32xf32>
    %279 = vector.broadcast %250 : vector<1x32xf32> to vector<32x32xf32>
    %280 = arith.mulf %278, %279 : vector<32x32xf32>
    %281 = vector.broadcast %252 : vector<1x32xf32> to vector<32x32xf32>
    %282 = arith.addf %280, %281 : vector<32x32xf32>
    %cst_176 = arith.constant 0.000000e+00 : f32
    %283 = vector.broadcast %cst_176 : f32 to vector<32x32xf32>
    %c4_177 = arith.constant 4 : index
    %c0_178 = arith.constant 0 : index
    %c0_179 = arith.constant 0 : index
    %284 = vector.load %arg5[%c4_177, %c0_178, %c0_179] : memref<24x32x8xf32, #tpu.memory_space<vmem>>, vector<1x32x8xf32>
    %285 = vector.shape_cast %284 : vector<1x32x8xf32> to vector<32x8xf32>
    %cst_180 = arith.constant dense<0.000000e+00> : vector<32x8xf32>
    %286 = tpu.matmul %282, %285, %cst_180 {dimension_numbers = #tpu.dot_dimension_numbers<[1], [0], [0], [1], [0, 0, 1, 1], [], []>} : vector<32x32xf32>, vector<32x8xf32>, vector<32x8xf32> -> vector<32x8xf32>
    %c4_181 = arith.constant 4 : index
    %c0_182 = arith.constant 0 : index
    %c0_183 = arith.constant 0 : index
    %287 = vector.load %arg6[%c4_181, %c0_182, %c0_183] : memref<24x1x8xf32, #tpu.memory_space<vmem>>, vector<1x1x8xf32>
    %288 = vector.shape_cast %287 : vector<1x1x8xf32> to vector<1x8xf32>
    %289 = vector.broadcast %288 : vector<1x8xf32> to vector<32x8xf32>
    %290 = arith.addf %286, %289 : vector<32x8xf32>
    %c12 = arith.constant 12 : index
    %c0_184 = arith.constant 0 : index
    %c0_185 = arith.constant 0 : index
    %291 = vector.load %arg5[%c12, %c0_184, %c0_185] : memref<24x32x8xf32, #tpu.memory_space<vmem>>, vector<1x32x8xf32>
    %292 = vector.shape_cast %291 : vector<1x32x8xf32> to vector<32x8xf32>
    %cst_186 = arith.constant dense<0.000000e+00> : vector<32x8xf32>
    %293 = tpu.matmul %282, %292, %cst_186 {dimension_numbers = #tpu.dot_dimension_numbers<[1], [0], [0], [1], [0, 0, 1, 1], [], []>} : vector<32x32xf32>, vector<32x8xf32>, vector<32x8xf32> -> vector<32x8xf32>
    %c12_187 = arith.constant 12 : index
    %c0_188 = arith.constant 0 : index
    %c0_189 = arith.constant 0 : index
    %294 = vector.load %arg6[%c12_187, %c0_188, %c0_189] : memref<24x1x8xf32, #tpu.memory_space<vmem>>, vector<1x1x8xf32>
    %295 = vector.shape_cast %294 : vector<1x1x8xf32> to vector<1x8xf32>
    %296 = vector.broadcast %295 : vector<1x8xf32> to vector<32x8xf32>
    %297 = arith.addf %293, %296 : vector<32x8xf32>
    %c20 = arith.constant 20 : index
    %c0_190 = arith.constant 0 : index
    %c0_191 = arith.constant 0 : index
    %298 = vector.load %arg5[%c20, %c0_190, %c0_191] : memref<24x32x8xf32, #tpu.memory_space<vmem>>, vector<1x32x8xf32>
    %299 = vector.shape_cast %298 : vector<1x32x8xf32> to vector<32x8xf32>
    %cst_192 = arith.constant dense<0.000000e+00> : vector<32x8xf32>
    %300 = tpu.matmul %282, %299, %cst_192 {dimension_numbers = #tpu.dot_dimension_numbers<[1], [0], [0], [1], [0, 0, 1, 1], [], []>} : vector<32x32xf32>, vector<32x8xf32>, vector<32x8xf32> -> vector<32x8xf32>
    %c20_193 = arith.constant 20 : index
    %c0_194 = arith.constant 0 : index
    %c0_195 = arith.constant 0 : index
    %301 = vector.load %arg6[%c20_193, %c0_194, %c0_195] : memref<24x1x8xf32, #tpu.memory_space<vmem>>, vector<1x1x8xf32>
    %302 = vector.shape_cast %301 : vector<1x1x8xf32> to vector<1x8xf32>
    %303 = vector.broadcast %302 : vector<1x8xf32> to vector<32x8xf32>
    %304 = arith.addf %300, %303 : vector<32x8xf32>
    %cst_196 = arith.constant dense<0.000000e+00> : vector<32x32xf32>
    %305 = tpu.matmul %290, %297, %cst_196 {dimension_numbers = #tpu.dot_dimension_numbers<[1], [1], [0], [0], [0, 0, 1, 0], [], []>} : vector<32x8xf32>, vector<32x8xf32>, vector<32x32xf32> -> vector<32x32xf32>
    %cst_197 = arith.constant 0.353553385 : f32
    %306 = vector.broadcast %cst_197 : f32 to vector<32x32xf32>
    %307 = arith.mulf %305, %306 : vector<32x32xf32>
    %308 = arith.addf %307, %7 : vector<32x32xf32>
    %cst_198 = arith.constant dense<0xFF800000> : vector<32xf32>
    %309 = vector.multi_reduction <maximumf>, %308, %cst_198 [1] : vector<32x32xf32> to vector<32xf32>
    %310 = vector.shape_cast %309 : vector<32xf32> to vector<32x1xf32>
    %311 = vector.broadcast %310 : vector<32x1xf32> to vector<32x32xf32>
    %312 = arith.subf %308, %311 : vector<32x32xf32>
    %313 = math.exp %312 : vector<32x32xf32>
    %cst_199 = arith.constant dense<0.000000e+00> : vector<32xf32>
    %314 = vector.multi_reduction <add>, %313, %cst_199 [1] : vector<32x32xf32> to vector<32xf32>
    %315 = vector.shape_cast %314 : vector<32xf32> to vector<32x1xf32>
    %316 = tpu.reciprocal %315 {approx = true} : vector<32x1xf32> -> vector<32x1xf32>
    %317 = vector.broadcast %316 : vector<32x1xf32> to vector<32x32xf32>
    %318 = arith.mulf %313, %317 : vector<32x32xf32>
    %cst_200 = arith.constant dense<0.000000e+00> : vector<32x8xf32>
    %319 = tpu.matmul %318, %304, %cst_200 {dimension_numbers = #tpu.dot_dimension_numbers<[1], [0], [0], [1], [0, 0, 1, 1], [], []>} : vector<32x32xf32>, vector<32x8xf32>, vector<32x8xf32> -> vector<32x8xf32>
    %c4_201 = arith.constant 4 : index
    %c0_202 = arith.constant 0 : index
    %c0_203 = arith.constant 0 : index
    %320 = vector.load %arg7[%c4_201, %c0_202, %c0_203] : memref<8x8x32xf32, #tpu.memory_space<vmem>>, vector<1x8x32xf32>
    %321 = vector.shape_cast %320 : vector<1x8x32xf32> to vector<8x32xf32>
    %cst_204 = arith.constant dense<0.000000e+00> : vector<32x32xf32>
    %322 = tpu.matmul %319, %321, %cst_204 {dimension_numbers = #tpu.dot_dimension_numbers<[1], [0], [0], [1], [0, 0, 1, 1], [], []>} : vector<32x8xf32>, vector<8x32xf32>, vector<32x32xf32> -> vector<32x32xf32>
    %323 = arith.addf %283, %322 : vector<32x32xf32>
    %c5_205 = arith.constant 5 : index
    %c0_206 = arith.constant 0 : index
    %c0_207 = arith.constant 0 : index
    %324 = vector.load %arg5[%c5_205, %c0_206, %c0_207] : memref<24x32x8xf32, #tpu.memory_space<vmem>>, vector<1x32x8xf32>
    %325 = vector.shape_cast %324 : vector<1x32x8xf32> to vector<32x8xf32>
    %cst_208 = arith.constant dense<0.000000e+00> : vector<32x8xf32>
    %326 = tpu.matmul %282, %325, %cst_208 {dimension_numbers = #tpu.dot_dimension_numbers<[1], [0], [0], [1], [0, 0, 1, 1], [], []>} : vector<32x32xf32>, vector<32x8xf32>, vector<32x8xf32> -> vector<32x8xf32>
    %c5_209 = arith.constant 5 : index
    %c0_210 = arith.constant 0 : index
    %c0_211 = arith.constant 0 : index
    %327 = vector.load %arg6[%c5_209, %c0_210, %c0_211] : memref<24x1x8xf32, #tpu.memory_space<vmem>>, vector<1x1x8xf32>
    %328 = vector.shape_cast %327 : vector<1x1x8xf32> to vector<1x8xf32>
    %329 = vector.broadcast %328 : vector<1x8xf32> to vector<32x8xf32>
    %330 = arith.addf %326, %329 : vector<32x8xf32>
    %c13 = arith.constant 13 : index
    %c0_212 = arith.constant 0 : index
    %c0_213 = arith.constant 0 : index
    %331 = vector.load %arg5[%c13, %c0_212, %c0_213] : memref<24x32x8xf32, #tpu.memory_space<vmem>>, vector<1x32x8xf32>
    %332 = vector.shape_cast %331 : vector<1x32x8xf32> to vector<32x8xf32>
    %cst_214 = arith.constant dense<0.000000e+00> : vector<32x8xf32>
    %333 = tpu.matmul %282, %332, %cst_214 {dimension_numbers = #tpu.dot_dimension_numbers<[1], [0], [0], [1], [0, 0, 1, 1], [], []>} : vector<32x32xf32>, vector<32x8xf32>, vector<32x8xf32> -> vector<32x8xf32>
    %c13_215 = arith.constant 13 : index
    %c0_216 = arith.constant 0 : index
    %c0_217 = arith.constant 0 : index
    %334 = vector.load %arg6[%c13_215, %c0_216, %c0_217] : memref<24x1x8xf32, #tpu.memory_space<vmem>>, vector<1x1x8xf32>
    %335 = vector.shape_cast %334 : vector<1x1x8xf32> to vector<1x8xf32>
    %336 = vector.broadcast %335 : vector<1x8xf32> to vector<32x8xf32>
    %337 = arith.addf %333, %336 : vector<32x8xf32>
    %c21 = arith.constant 21 : index
    %c0_218 = arith.constant 0 : index
    %c0_219 = arith.constant 0 : index
    %338 = vector.load %arg5[%c21, %c0_218, %c0_219] : memref<24x32x8xf32, #tpu.memory_space<vmem>>, vector<1x32x8xf32>
    %339 = vector.shape_cast %338 : vector<1x32x8xf32> to vector<32x8xf32>
    %cst_220 = arith.constant dense<0.000000e+00> : vector<32x8xf32>
    %340 = tpu.matmul %282, %339, %cst_220 {dimension_numbers = #tpu.dot_dimension_numbers<[1], [0], [0], [1], [0, 0, 1, 1], [], []>} : vector<32x32xf32>, vector<32x8xf32>, vector<32x8xf32> -> vector<32x8xf32>
    %c21_221 = arith.constant 21 : index
    %c0_222 = arith.constant 0 : index
    %c0_223 = arith.constant 0 : index
    %341 = vector.load %arg6[%c21_221, %c0_222, %c0_223] : memref<24x1x8xf32, #tpu.memory_space<vmem>>, vector<1x1x8xf32>
    %342 = vector.shape_cast %341 : vector<1x1x8xf32> to vector<1x8xf32>
    %343 = vector.broadcast %342 : vector<1x8xf32> to vector<32x8xf32>
    %344 = arith.addf %340, %343 : vector<32x8xf32>
    %cst_224 = arith.constant dense<0.000000e+00> : vector<32x32xf32>
    %345 = tpu.matmul %330, %337, %cst_224 {dimension_numbers = #tpu.dot_dimension_numbers<[1], [1], [0], [0], [0, 0, 1, 0], [], []>} : vector<32x8xf32>, vector<32x8xf32>, vector<32x32xf32> -> vector<32x32xf32>
    %cst_225 = arith.constant 0.353553385 : f32
    %346 = vector.broadcast %cst_225 : f32 to vector<32x32xf32>
    %347 = arith.mulf %345, %346 : vector<32x32xf32>
    %348 = arith.addf %347, %7 : vector<32x32xf32>
    %cst_226 = arith.constant dense<0xFF800000> : vector<32xf32>
    %349 = vector.multi_reduction <maximumf>, %348, %cst_226 [1] : vector<32x32xf32> to vector<32xf32>
    %350 = vector.shape_cast %349 : vector<32xf32> to vector<32x1xf32>
    %351 = vector.broadcast %350 : vector<32x1xf32> to vector<32x32xf32>
    %352 = arith.subf %348, %351 : vector<32x32xf32>
    %353 = math.exp %352 : vector<32x32xf32>
    %cst_227 = arith.constant dense<0.000000e+00> : vector<32xf32>
    %354 = vector.multi_reduction <add>, %353, %cst_227 [1] : vector<32x32xf32> to vector<32xf32>
    %355 = vector.shape_cast %354 : vector<32xf32> to vector<32x1xf32>
    %356 = tpu.reciprocal %355 {approx = true} : vector<32x1xf32> -> vector<32x1xf32>
    %357 = vector.broadcast %356 : vector<32x1xf32> to vector<32x32xf32>
    %358 = arith.mulf %353, %357 : vector<32x32xf32>
    %cst_228 = arith.constant dense<0.000000e+00> : vector<32x8xf32>
    %359 = tpu.matmul %358, %344, %cst_228 {dimension_numbers = #tpu.dot_dimension_numbers<[1], [0], [0], [1], [0, 0, 1, 1], [], []>} : vector<32x32xf32>, vector<32x8xf32>, vector<32x8xf32> -> vector<32x8xf32>
    %c5_229 = arith.constant 5 : index
    %c0_230 = arith.constant 0 : index
    %c0_231 = arith.constant 0 : index
    %360 = vector.load %arg7[%c5_229, %c0_230, %c0_231] : memref<8x8x32xf32, #tpu.memory_space<vmem>>, vector<1x8x32xf32>
    %361 = vector.shape_cast %360 : vector<1x8x32xf32> to vector<8x32xf32>
    %cst_232 = arith.constant dense<0.000000e+00> : vector<32x32xf32>
    %362 = tpu.matmul %359, %361, %cst_232 {dimension_numbers = #tpu.dot_dimension_numbers<[1], [0], [0], [1], [0, 0, 1, 1], [], []>} : vector<32x8xf32>, vector<8x32xf32>, vector<32x32xf32> -> vector<32x32xf32>
    %363 = arith.addf %323, %362 : vector<32x32xf32>
    %c6_233 = arith.constant 6 : index
    %c0_234 = arith.constant 0 : index
    %c0_235 = arith.constant 0 : index
    %364 = vector.load %arg5[%c6_233, %c0_234, %c0_235] : memref<24x32x8xf32, #tpu.memory_space<vmem>>, vector<1x32x8xf32>
    %365 = vector.shape_cast %364 : vector<1x32x8xf32> to vector<32x8xf32>
    %cst_236 = arith.constant dense<0.000000e+00> : vector<32x8xf32>
    %366 = tpu.matmul %282, %365, %cst_236 {dimension_numbers = #tpu.dot_dimension_numbers<[1], [0], [0], [1], [0, 0, 1, 1], [], []>} : vector<32x32xf32>, vector<32x8xf32>, vector<32x8xf32> -> vector<32x8xf32>
    %c6_237 = arith.constant 6 : index
    %c0_238 = arith.constant 0 : index
    %c0_239 = arith.constant 0 : index
    %367 = vector.load %arg6[%c6_237, %c0_238, %c0_239] : memref<24x1x8xf32, #tpu.memory_space<vmem>>, vector<1x1x8xf32>
    %368 = vector.shape_cast %367 : vector<1x1x8xf32> to vector<1x8xf32>
    %369 = vector.broadcast %368 : vector<1x8xf32> to vector<32x8xf32>
    %370 = arith.addf %366, %369 : vector<32x8xf32>
    %c14 = arith.constant 14 : index
    %c0_240 = arith.constant 0 : index
    %c0_241 = arith.constant 0 : index
    %371 = vector.load %arg5[%c14, %c0_240, %c0_241] : memref<24x32x8xf32, #tpu.memory_space<vmem>>, vector<1x32x8xf32>
    %372 = vector.shape_cast %371 : vector<1x32x8xf32> to vector<32x8xf32>
    %cst_242 = arith.constant dense<0.000000e+00> : vector<32x8xf32>
    %373 = tpu.matmul %282, %372, %cst_242 {dimension_numbers = #tpu.dot_dimension_numbers<[1], [0], [0], [1], [0, 0, 1, 1], [], []>} : vector<32x32xf32>, vector<32x8xf32>, vector<32x8xf32> -> vector<32x8xf32>
    %c14_243 = arith.constant 14 : index
    %c0_244 = arith.constant 0 : index
    %c0_245 = arith.constant 0 : index
    %374 = vector.load %arg6[%c14_243, %c0_244, %c0_245] : memref<24x1x8xf32, #tpu.memory_space<vmem>>, vector<1x1x8xf32>
    %375 = vector.shape_cast %374 : vector<1x1x8xf32> to vector<1x8xf32>
    %376 = vector.broadcast %375 : vector<1x8xf32> to vector<32x8xf32>
    %377 = arith.addf %373, %376 : vector<32x8xf32>
    %c22 = arith.constant 22 : index
    %c0_246 = arith.constant 0 : index
    %c0_247 = arith.constant 0 : index
    %378 = vector.load %arg5[%c22, %c0_246, %c0_247] : memref<24x32x8xf32, #tpu.memory_space<vmem>>, vector<1x32x8xf32>
    %379 = vector.shape_cast %378 : vector<1x32x8xf32> to vector<32x8xf32>
    %cst_248 = arith.constant dense<0.000000e+00> : vector<32x8xf32>
    %380 = tpu.matmul %282, %379, %cst_248 {dimension_numbers = #tpu.dot_dimension_numbers<[1], [0], [0], [1], [0, 0, 1, 1], [], []>} : vector<32x32xf32>, vector<32x8xf32>, vector<32x8xf32> -> vector<32x8xf32>
    %c22_249 = arith.constant 22 : index
    %c0_250 = arith.constant 0 : index
    %c0_251 = arith.constant 0 : index
    %381 = vector.load %arg6[%c22_249, %c0_250, %c0_251] : memref<24x1x8xf32, #tpu.memory_space<vmem>>, vector<1x1x8xf32>
    %382 = vector.shape_cast %381 : vector<1x1x8xf32> to vector<1x8xf32>
    %383 = vector.broadcast %382 : vector<1x8xf32> to vector<32x8xf32>
    %384 = arith.addf %380, %383 : vector<32x8xf32>
    %cst_252 = arith.constant dense<0.000000e+00> : vector<32x32xf32>
    %385 = tpu.matmul %370, %377, %cst_252 {dimension_numbers = #tpu.dot_dimension_numbers<[1], [1], [0], [0], [0, 0, 1, 0], [], []>} : vector<32x8xf32>, vector<32x8xf32>, vector<32x32xf32> -> vector<32x32xf32>
    %cst_253 = arith.constant 0.353553385 : f32
    %386 = vector.broadcast %cst_253 : f32 to vector<32x32xf32>
    %387 = arith.mulf %385, %386 : vector<32x32xf32>
    %388 = arith.addf %387, %7 : vector<32x32xf32>
    %cst_254 = arith.constant dense<0xFF800000> : vector<32xf32>
    %389 = vector.multi_reduction <maximumf>, %388, %cst_254 [1] : vector<32x32xf32> to vector<32xf32>
    %390 = vector.shape_cast %389 : vector<32xf32> to vector<32x1xf32>
    %391 = vector.broadcast %390 : vector<32x1xf32> to vector<32x32xf32>
    %392 = arith.subf %388, %391 : vector<32x32xf32>
    %393 = math.exp %392 : vector<32x32xf32>
    %cst_255 = arith.constant dense<0.000000e+00> : vector<32xf32>
    %394 = vector.multi_reduction <add>, %393, %cst_255 [1] : vector<32x32xf32> to vector<32xf32>
    %395 = vector.shape_cast %394 : vector<32xf32> to vector<32x1xf32>
    %396 = tpu.reciprocal %395 {approx = true} : vector<32x1xf32> -> vector<32x1xf32>
    %397 = vector.broadcast %396 : vector<32x1xf32> to vector<32x32xf32>
    %398 = arith.mulf %393, %397 : vector<32x32xf32>
    %cst_256 = arith.constant dense<0.000000e+00> : vector<32x8xf32>
    %399 = tpu.matmul %398, %384, %cst_256 {dimension_numbers = #tpu.dot_dimension_numbers<[1], [0], [0], [1], [0, 0, 1, 1], [], []>} : vector<32x32xf32>, vector<32x8xf32>, vector<32x8xf32> -> vector<32x8xf32>
    %c6_257 = arith.constant 6 : index
    %c0_258 = arith.constant 0 : index
    %c0_259 = arith.constant 0 : index
    %400 = vector.load %arg7[%c6_257, %c0_258, %c0_259] : memref<8x8x32xf32, #tpu.memory_space<vmem>>, vector<1x8x32xf32>
    %401 = vector.shape_cast %400 : vector<1x8x32xf32> to vector<8x32xf32>
    %cst_260 = arith.constant dense<0.000000e+00> : vector<32x32xf32>
    %402 = tpu.matmul %399, %401, %cst_260 {dimension_numbers = #tpu.dot_dimension_numbers<[1], [0], [0], [1], [0, 0, 1, 1], [], []>} : vector<32x8xf32>, vector<8x32xf32>, vector<32x32xf32> -> vector<32x32xf32>
    %403 = arith.addf %363, %402 : vector<32x32xf32>
    %c7_261 = arith.constant 7 : index
    %c0_262 = arith.constant 0 : index
    %c0_263 = arith.constant 0 : index
    %404 = vector.load %arg5[%c7_261, %c0_262, %c0_263] : memref<24x32x8xf32, #tpu.memory_space<vmem>>, vector<1x32x8xf32>
    %405 = vector.shape_cast %404 : vector<1x32x8xf32> to vector<32x8xf32>
    %cst_264 = arith.constant dense<0.000000e+00> : vector<32x8xf32>
    %406 = tpu.matmul %282, %405, %cst_264 {dimension_numbers = #tpu.dot_dimension_numbers<[1], [0], [0], [1], [0, 0, 1, 1], [], []>} : vector<32x32xf32>, vector<32x8xf32>, vector<32x8xf32> -> vector<32x8xf32>
    %c7_265 = arith.constant 7 : index
    %c0_266 = arith.constant 0 : index
    %c0_267 = arith.constant 0 : index
    %407 = vector.load %arg6[%c7_265, %c0_266, %c0_267] : memref<24x1x8xf32, #tpu.memory_space<vmem>>, vector<1x1x8xf32>
    %408 = vector.shape_cast %407 : vector<1x1x8xf32> to vector<1x8xf32>
    %409 = vector.broadcast %408 : vector<1x8xf32> to vector<32x8xf32>
    %410 = arith.addf %406, %409 : vector<32x8xf32>
    %c15 = arith.constant 15 : index
    %c0_268 = arith.constant 0 : index
    %c0_269 = arith.constant 0 : index
    %411 = vector.load %arg5[%c15, %c0_268, %c0_269] : memref<24x32x8xf32, #tpu.memory_space<vmem>>, vector<1x32x8xf32>
    %412 = vector.shape_cast %411 : vector<1x32x8xf32> to vector<32x8xf32>
    %cst_270 = arith.constant dense<0.000000e+00> : vector<32x8xf32>
    %413 = tpu.matmul %282, %412, %cst_270 {dimension_numbers = #tpu.dot_dimension_numbers<[1], [0], [0], [1], [0, 0, 1, 1], [], []>} : vector<32x32xf32>, vector<32x8xf32>, vector<32x8xf32> -> vector<32x8xf32>
    %c15_271 = arith.constant 15 : index
    %c0_272 = arith.constant 0 : index
    %c0_273 = arith.constant 0 : index
    %414 = vector.load %arg6[%c15_271, %c0_272, %c0_273] : memref<24x1x8xf32, #tpu.memory_space<vmem>>, vector<1x1x8xf32>
    %415 = vector.shape_cast %414 : vector<1x1x8xf32> to vector<1x8xf32>
    %416 = vector.broadcast %415 : vector<1x8xf32> to vector<32x8xf32>
    %417 = arith.addf %413, %416 : vector<32x8xf32>
    %c23 = arith.constant 23 : index
    %c0_274 = arith.constant 0 : index
    %c0_275 = arith.constant 0 : index
    %418 = vector.load %arg5[%c23, %c0_274, %c0_275] : memref<24x32x8xf32, #tpu.memory_space<vmem>>, vector<1x32x8xf32>
    %419 = vector.shape_cast %418 : vector<1x32x8xf32> to vector<32x8xf32>
    %cst_276 = arith.constant dense<0.000000e+00> : vector<32x8xf32>
    %420 = tpu.matmul %282, %419, %cst_276 {dimension_numbers = #tpu.dot_dimension_numbers<[1], [0], [0], [1], [0, 0, 1, 1], [], []>} : vector<32x32xf32>, vector<32x8xf32>, vector<32x8xf32> -> vector<32x8xf32>
    %c23_277 = arith.constant 23 : index
    %c0_278 = arith.constant 0 : index
    %c0_279 = arith.constant 0 : index
    %421 = vector.load %arg6[%c23_277, %c0_278, %c0_279] : memref<24x1x8xf32, #tpu.memory_space<vmem>>, vector<1x1x8xf32>
    %422 = vector.shape_cast %421 : vector<1x1x8xf32> to vector<1x8xf32>
    %423 = vector.broadcast %422 : vector<1x8xf32> to vector<32x8xf32>
    %424 = arith.addf %420, %423 : vector<32x8xf32>
    %cst_280 = arith.constant dense<0.000000e+00> : vector<32x32xf32>
    %425 = tpu.matmul %410, %417, %cst_280 {dimension_numbers = #tpu.dot_dimension_numbers<[1], [1], [0], [0], [0, 0, 1, 0], [], []>} : vector<32x8xf32>, vector<32x8xf32>, vector<32x32xf32> -> vector<32x32xf32>
    %cst_281 = arith.constant 0.353553385 : f32
    %426 = vector.broadcast %cst_281 : f32 to vector<32x32xf32>
    %427 = arith.mulf %425, %426 : vector<32x32xf32>
    %428 = arith.addf %427, %7 : vector<32x32xf32>
    %cst_282 = arith.constant dense<0xFF800000> : vector<32xf32>
    %429 = vector.multi_reduction <maximumf>, %428, %cst_282 [1] : vector<32x32xf32> to vector<32xf32>
    %430 = vector.shape_cast %429 : vector<32xf32> to vector<32x1xf32>
    %431 = vector.broadcast %430 : vector<32x1xf32> to vector<32x32xf32>
    %432 = arith.subf %428, %431 : vector<32x32xf32>
    %433 = math.exp %432 : vector<32x32xf32>
    %cst_283 = arith.constant dense<0.000000e+00> : vector<32xf32>
    %434 = vector.multi_reduction <add>, %433, %cst_283 [1] : vector<32x32xf32> to vector<32xf32>
    %435 = vector.shape_cast %434 : vector<32xf32> to vector<32x1xf32>
    %436 = tpu.reciprocal %435 {approx = true} : vector<32x1xf32> -> vector<32x1xf32>
    %437 = vector.broadcast %436 : vector<32x1xf32> to vector<32x32xf32>
    %438 = arith.mulf %433, %437 : vector<32x32xf32>
    %cst_284 = arith.constant dense<0.000000e+00> : vector<32x8xf32>
    %439 = tpu.matmul %438, %424, %cst_284 {dimension_numbers = #tpu.dot_dimension_numbers<[1], [0], [0], [1], [0, 0, 1, 1], [], []>} : vector<32x32xf32>, vector<32x8xf32>, vector<32x8xf32> -> vector<32x8xf32>
    %c7_285 = arith.constant 7 : index
    %c0_286 = arith.constant 0 : index
    %c0_287 = arith.constant 0 : index
    %440 = vector.load %arg7[%c7_285, %c0_286, %c0_287] : memref<8x8x32xf32, #tpu.memory_space<vmem>>, vector<1x8x32xf32>
    %441 = vector.shape_cast %440 : vector<1x8x32xf32> to vector<8x32xf32>
    %cst_288 = arith.constant dense<0.000000e+00> : vector<32x32xf32>
    %442 = tpu.matmul %439, %441, %cst_288 {dimension_numbers = #tpu.dot_dimension_numbers<[1], [0], [0], [1], [0, 0, 1, 1], [], []>} : vector<32x8xf32>, vector<8x32xf32>, vector<32x32xf32> -> vector<32x32xf32>
    %443 = arith.addf %403, %442 : vector<32x32xf32>
    %444 = arith.addf %248, %443 : vector<32x32xf32>
    %445 = vector.broadcast %254 : vector<1x32xf32> to vector<32x32xf32>
    %446 = arith.addf %444, %445 : vector<32x32xf32>
    %cst_289 = arith.constant dense<0.000000e+00> : vector<32xf32>
    %447 = vector.multi_reduction <add>, %446, %cst_289 [1] : vector<32x32xf32> to vector<32xf32>
    %448 = vector.shape_cast %447 : vector<32xf32> to vector<32x1xf32>
    %cst_290 = arith.constant 3.200000e+01 : f32
    %449 = vector.broadcast %cst_290 : f32 to vector<32x1xf32>
    %450 = arith.divf %448, %449 : vector<32x1xf32>
    %451 = vector.broadcast %450 : vector<32x1xf32> to vector<32x32xf32>
    %452 = arith.subf %446, %451 : vector<32x32xf32>
    %453 = arith.mulf %452, %452 : vector<32x32xf32>
    %cst_291 = arith.constant dense<0.000000e+00> : vector<32xf32>
    %454 = vector.multi_reduction <add>, %453, %cst_291 [1] : vector<32x32xf32> to vector<32xf32>
    %455 = vector.shape_cast %454 : vector<32xf32> to vector<32x1xf32>
    %cst_292 = arith.constant 3.200000e+01 : f32
    %456 = vector.broadcast %cst_292 : f32 to vector<32x1xf32>
    %457 = arith.divf %455, %456 : vector<32x1xf32>
    %458 = vector.broadcast %450 : vector<32x1xf32> to vector<32x32xf32>
    %459 = arith.subf %446, %458 : vector<32x32xf32>
    %cst_293 = arith.constant 9.99999997E-7 : f32
    %460 = vector.broadcast %cst_293 : f32 to vector<32x1xf32>
    %461 = arith.addf %457, %460 : vector<32x1xf32>
    %462 = math.rsqrt %461 : vector<32x1xf32>
    %463 = vector.broadcast %462 : vector<32x1xf32> to vector<32x32xf32>
    %464 = arith.mulf %459, %463 : vector<32x32xf32>
    %465 = vector.broadcast %256 : vector<1x32xf32> to vector<32x32xf32>
    %466 = arith.mulf %464, %465 : vector<32x32xf32>
    %467 = vector.broadcast %258 : vector<1x32xf32> to vector<32x32xf32>
    %468 = arith.addf %466, %467 : vector<32x32xf32>
    %c1_294 = arith.constant 1 : index
    %c0_295 = arith.constant 0 : index
    %c0_296 = arith.constant 0 : index
    %469 = vector.load %arg9[%c1_294, %c0_295, %c0_296] : memref<2x33x128xf32, #tpu.memory_space<vmem>>, vector<1x33x128xf32>
    %470 = vector.shape_cast %469 : vector<1x33x128xf32> to vector<33x128xf32>
    %471 = vector.extract_strided_slice %470 {offsets = [0, 0], sizes = [32, 128], strides = [1, 1]} : vector<33x128xf32> to vector<32x128xf32>
    %cst_297 = arith.constant dense<0.000000e+00> : vector<32x128xf32>
    %472 = tpu.matmul %468, %471, %cst_297 {dimension_numbers = #tpu.dot_dimension_numbers<[1], [0], [0], [1], [0, 0, 1, 1], [], []>} : vector<32x32xf32>, vector<32x128xf32>, vector<32x128xf32> -> vector<32x128xf32>
    %473 = vector.extract_strided_slice %470 {offsets = [32, 0], sizes = [1, 128], strides = [1, 1]} : vector<33x128xf32> to vector<1x128xf32>
    %474 = vector.broadcast %473 : vector<1x128xf32> to vector<32x128xf32>
    %475 = arith.addf %472, %474 : vector<32x128xf32>
    %cst_298 = arith.constant 5.000000e-01 : f32
    %476 = vector.broadcast %cst_298 : f32 to vector<32x128xf32>
    %477 = arith.mulf %476, %475 : vector<32x128xf32>
    %cst_299 = arith.constant 0.707106769 : f32
    %478 = vector.broadcast %cst_299 : f32 to vector<32x128xf32>
    %479 = arith.mulf %475, %478 : vector<32x128xf32>
    %480 = math.erf %479 : vector<32x128xf32>
    %cst_300 = arith.constant 1.000000e+00 : f32
    %481 = vector.broadcast %cst_300 : f32 to vector<32x128xf32>
    %482 = arith.addf %481, %480 : vector<32x128xf32>
    %483 = arith.mulf %477, %482 : vector<32x128xf32>
    %c1_301 = arith.constant 1 : index
    %c0_302 = arith.constant 0 : index
    %c0_303 = arith.constant 0 : index
    %484 = vector.load %arg10[%c1_301, %c0_302, %c0_303] : memref<2x128x32xf32, #tpu.memory_space<vmem>>, vector<1x128x32xf32>
    %485 = vector.shape_cast %484 : vector<1x128x32xf32> to vector<128x32xf32>
    %cst_304 = arith.constant dense<0.000000e+00> : vector<32x32xf32>
    %486 = tpu.matmul %483, %485, %cst_304 {dimension_numbers = #tpu.dot_dimension_numbers<[1], [0], [0], [1], [0, 0, 1, 1], [], []>} : vector<32x128xf32>, vector<128x32xf32>, vector<32x32xf32> -> vector<32x32xf32>
    %487 = vector.broadcast %260 : vector<1x32xf32> to vector<32x32xf32>
    %488 = arith.addf %486, %487 : vector<32x32xf32>
    %489 = arith.addf %446, %488 : vector<32x32xf32>
    %c0_305 = arith.constant 0 : index
    %c0_306 = arith.constant 0 : index
    %c0_307 = arith.constant 0 : index
    %490 = vector.load %arg11[%c0_305, %c0_306, %c0_307] : memref<2x1x32xf32, #tpu.memory_space<vmem>>, vector<1x1x32xf32>
    %491 = vector.shape_cast %490 : vector<1x1x32xf32> to vector<1x32xf32>
    %c1_308 = arith.constant 1 : index
    %c0_309 = arith.constant 0 : index
    %c0_310 = arith.constant 0 : index
    %492 = vector.load %arg11[%c1_308, %c0_309, %c0_310] : memref<2x1x32xf32, #tpu.memory_space<vmem>>, vector<1x1x32xf32>
    %493 = vector.shape_cast %492 : vector<1x1x32xf32> to vector<1x32xf32>
    %cst_311 = arith.constant dense<0.000000e+00> : vector<32xf32>
    %494 = vector.multi_reduction <add>, %489, %cst_311 [1] : vector<32x32xf32> to vector<32xf32>
    %495 = vector.shape_cast %494 : vector<32xf32> to vector<32x1xf32>
    %cst_312 = arith.constant 3.200000e+01 : f32
    %496 = vector.broadcast %cst_312 : f32 to vector<32x1xf32>
    %497 = arith.divf %495, %496 : vector<32x1xf32>
    %498 = vector.broadcast %497 : vector<32x1xf32> to vector<32x32xf32>
    %499 = arith.subf %489, %498 : vector<32x32xf32>
    %500 = arith.mulf %499, %499 : vector<32x32xf32>
    %cst_313 = arith.constant dense<0.000000e+00> : vector<32xf32>
    %501 = vector.multi_reduction <add>, %500, %cst_313 [1] : vector<32x32xf32> to vector<32xf32>
    %502 = vector.shape_cast %501 : vector<32xf32> to vector<32x1xf32>
    %cst_314 = arith.constant 3.200000e+01 : f32
    %503 = vector.broadcast %cst_314 : f32 to vector<32x1xf32>
    %504 = arith.divf %502, %503 : vector<32x1xf32>
    %505 = vector.broadcast %497 : vector<32x1xf32> to vector<32x32xf32>
    %506 = arith.subf %489, %505 : vector<32x32xf32>
    %cst_315 = arith.constant 9.99999997E-7 : f32
    %507 = vector.broadcast %cst_315 : f32 to vector<32x1xf32>
    %508 = arith.addf %504, %507 : vector<32x1xf32>
    %509 = math.rsqrt %508 : vector<32x1xf32>
    %510 = vector.broadcast %509 : vector<32x1xf32> to vector<32x32xf32>
    %511 = arith.mulf %506, %510 : vector<32x32xf32>
    %512 = vector.broadcast %491 : vector<1x32xf32> to vector<32x32xf32>
    %513 = arith.mulf %511, %512 : vector<32x32xf32>
    %514 = vector.broadcast %493 : vector<1x32xf32> to vector<32x32xf32>
    %515 = arith.addf %513, %514 : vector<32x32xf32>
    %c0_316 = arith.constant 0 : index
    %c0_317 = arith.constant 0 : index
    %516 = vector.load %arg12[%c0_316, %c0_317] : memref<33x128xf32, #tpu.memory_space<vmem>>, vector<33x128xf32>
    %517 = vector.extract_strided_slice %516 {offsets = [0, 0], sizes = [32, 128], strides = [1, 1]} : vector<33x128xf32> to vector<32x128xf32>
    %cst_318 = arith.constant dense<0.000000e+00> : vector<32x128xf32>
    %518 = tpu.matmul %515, %517, %cst_318 {dimension_numbers = #tpu.dot_dimension_numbers<[1], [0], [0], [1], [0, 0, 1, 1], [], []>} : vector<32x32xf32>, vector<32x128xf32>, vector<32x128xf32> -> vector<32x128xf32>
    %519 = vector.extract_strided_slice %516 {offsets = [32, 0], sizes = [1, 128], strides = [1, 1]} : vector<33x128xf32> to vector<1x128xf32>
    %520 = vector.broadcast %519 : vector<1x128xf32> to vector<32x128xf32>
    %521 = arith.addf %518, %520 : vector<32x128xf32>
    %c0_319 = arith.constant 0 : index
    %c0_320 = arith.constant 0 : index
    %c0_321 = arith.constant 0 : index
    %522 = vector.load %arg13[%c0_319, %c0_320, %c0_321] : memref<1x32x128xf32, #tpu.memory_space<vmem>>, vector<1x32x128xf32>
    %523 = vector.shape_cast %522 : vector<1x32x128xf32> to vector<32x128xf32>
    %524 = vector.shape_cast %521 : vector<32x128xf32> to vector<1x32x128xf32>
    tpu.vector_store %arg13[%c0_319, %c0_320, %c0_321], %524 {strides = array<i32>} : memref<1x32x128xf32, #tpu.memory_space<vmem>>, vector<1x32x128xf32>,
    return
  }
  func.func @transform_0(%arg0: i32) -> (i32, i32, i32) {
    %c0_i32 = arith.constant 0 : i32
    %c0_i32_0 = arith.constant 0 : i32
    %c0_i32_1 = arith.constant 0 : i32
    return %arg0, %c0_i32, %c0_i32_0 : i32, i32, i32
  }
  func.func @transform_1(%arg0: i32) -> (i32, i32) {
    %c0_i32 = arith.constant 0 : i32
    %c0_i32_0 = arith.constant 0 : i32
    %c0_i32_1 = arith.constant 0 : i32
    return %c0_i32, %c0_i32_0 : i32, i32
  }
  func.func @transform_2(%arg0: i32) -> (i32, i32) {
    %c0_i32 = arith.constant 0 : i32
    %c0_i32_0 = arith.constant 0 : i32
    %c0_i32_1 = arith.constant 0 : i32
    return %c0_i32, %c0_i32_0 : i32, i32
  }
  func.func @transform_3(%arg0: i32) -> (i32, i32) {
    %c0_i32 = arith.constant 0 : i32
    %c0_i32_0 = arith.constant 0 : i32
    %c0_i32_1 = arith.constant 0 : i32
    return %c0_i32, %c0_i32_0 : i32, i32
  }
  func.func @transform_4(%arg0: i32) -> (i32, i32, i32) {
    %c0_i32 = arith.constant 0 : i32
    %c0_i32_0 = arith.constant 0 : i32
    %c0_i32_1 = arith.constant 0 : i32
    %c0_i32_2 = arith.constant 0 : i32
    return %c0_i32, %c0_i32_0, %c0_i32_1 : i32, i32, i32
  }
  func.func @transform_5(%arg0: i32) -> (i32, i32, i32) {
    %c0_i32 = arith.constant 0 : i32
    %c0_i32_0 = arith.constant 0 : i32
    %c0_i32_1 = arith.constant 0 : i32
    %c0_i32_2 = arith.constant 0 : i32
    return %c0_i32, %c0_i32_0, %c0_i32_1 : i32, i32, i32
  }
  func.func @transform_6(%arg0: i32) -> (i32, i32, i32) {
    %c0_i32 = arith.constant 0 : i32
    %c0_i32_0 = arith.constant 0 : i32
    %c0_i32_1 = arith.constant 0 : i32
    %c0_i32_2 = arith.constant 0 : i32
    return %c0_i32, %c0_i32_0, %c0_i32_1 : i32, i32, i32
  }
  func.func @transform_7(%arg0: i32) -> (i32, i32, i32) {
    %c0_i32 = arith.constant 0 : i32
    %c0_i32_0 = arith.constant 0 : i32
    %c0_i32_1 = arith.constant 0 : i32
    %c0_i32_2 = arith.constant 0 : i32
    return %c0_i32, %c0_i32_0, %c0_i32_1 : i32, i32, i32
  }
  func.func @transform_8(%arg0: i32) -> (i32, i32, i32) {
    %c0_i32 = arith.constant 0 : i32
    %c0_i32_0 = arith.constant 0 : i32
    %c0_i32_1 = arith.constant 0 : i32
    %c0_i32_2 = arith.constant 0 : i32
    return %c0_i32, %c0_i32_0, %c0_i32_1 : i32, i32, i32
  }
  func.func @transform_9(%arg0: i32) -> (i32, i32, i32) {
    %c0_i32 = arith.constant 0 : i32
    %c0_i32_0 = arith.constant 0 : i32
    %c0_i32_1 = arith.constant 0 : i32
    %c0_i32_2 = arith.constant 0 : i32
    return %c0_i32, %c0_i32_0, %c0_i32_1 : i32, i32, i32
  }
  func.func @transform_10(%arg0: i32) -> (i32, i32, i32) {
    %c0_i32 = arith.constant 0 : i32
    %c0_i32_0 = arith.constant 0 : i32
    %c0_i32_1 = arith.constant 0 : i32
    %c0_i32_2 = arith.constant 0 : i32
    return %c0_i32, %c0_i32_0, %c0_i32_1 : i32, i32, i32
  }
  func.func @transform_11(%arg0: i32) -> (i32, i32) {
    %c0_i32 = arith.constant 0 : i32
    %c0_i32_0 = arith.constant 0 : i32
    %c0_i32_1 = arith.constant 0 : i32
    return %c0_i32, %c0_i32_0 : i32, i32
  }
  func.func @transform_12(%arg0: i32) -> (i32, i32, i32) {
    %c0_i32 = arith.constant 0 : i32
    %c0_i32_0 = arith.constant 0 : i32
    %c0_i32_1 = arith.constant 0 : i32
    return %arg0, %c0_i32, %c0_i32_0 : i32, i32, i32
  }
}

</mosaic_0001>

<llo_original>
// kernel: vpt_vit3d_forward.2
$region0: #{vpt_vit3d_forward.2}
  #allocation0 [shape = 'u32[]', space=smem, size = 0x4, offset = 0x4, fixed_abs, tag = 'smem constant byte address 0x4 - core index']
  #allocation1 [shape = 'u32[144,128]{1,0:T(1,128)}', space=vmem, size = 0x12000, scoped, tag = 'internal scratch']
  %s0 = inlined_call_operand.vmem [shape: f32[16,32], index: 0, kind: input, shape index: {}]
  %s1 = inlined_call_operand.vmem [shape: f32[32,32], index: 1, kind: input, shape index: {}]
  %s2 = inlined_call_operand.vmem [shape: f32[512,32], index: 2, kind: input, shape index: {}]
  %s3 = inlined_call_operand.vmem [shape: f32[24,32,8], index: 3, kind: input, shape index: {}]
  %s4 = inlined_call_operand.vmem [shape: f32[24,1,8], index: 4, kind: input, shape index: {}]
  %s5 = inlined_call_operand.vmem [shape: f32[8,8,32], index: 5, kind: input, shape index: {}]
  %s6 = inlined_call_operand.vmem [shape: f32[12,1,32], index: 6, kind: input, shape index: {}]
  %s7 = inlined_call_operand.vmem [shape: f32[2,33,128], index: 7, kind: input, shape index: {}]
  %s8 = inlined_call_operand.vmem [shape: f32[2,128,32], index: 8, kind: input, shape index: {}]
  %s9 = inlined_call_operand.vmem [shape: f32[2,1,32], index: 9, kind: input, shape index: {}]
  %s10 = inlined_call_operand.vmem [shape: f32[33,128], index: 10, kind: input, shape index: {}]
  %s11 = inlined_call_operand.vmem [shape: f32[1,32,512], index: 11, kind: input, shape index: {}]
  %s12 = inlined_call_operand.vmem [shape: f32[1,32,128], index: 12, kind: output, shape index: {}]
  %s13 = sld [smem:[#allocation0]]
  $region58: #{vpt_vit3d_forward.2} parent=0
    _
  %s15 = ssub.s32 1, %s13
  %s16 = scalar_select 0, %s15, %s13
  // Predicated region
  $region2: #{vpt_vit3d_forward.2} parent=0 // pred_check
    _
  $region3: #{vpt_vit3d_forward.2} parent=0 // pred_check_branch
    %18 = sbr.rel (0) target = $region5
  $region4: #{vpt_vit3d_forward.2} parent=0 // pred_region
    _
  $region5: #{vpt_vit3d_forward.2} parent=0 // pred_fallthru
    _
  // Predicated region
  $region6: #{vpt_vit3d_forward.2} parent=0 // pred_check
    _
  $region7: #{vpt_vit3d_forward.2} parent=0 // pred_check_branch
    %20 = sbr.rel (0) target = $region9
  $region8: #{vpt_vit3d_forward.2} parent=0 // pred_region
    _
  $region9: #{vpt_vit3d_forward.2} parent=0 // pred_fallthru
    _
  // Predicated region
  $region10: #{vpt_vit3d_forward.2} parent=0 // pred_check
    _
  $region11: #{vpt_vit3d_forward.2} parent=0 // pred_check_branch
    %22 = sbr.rel (0) target = $region13
  $region12: #{vpt_vit3d_forward.2} parent=0 // pred_region
    _
  $region13: #{vpt_vit3d_forward.2} parent=0 // pred_fallthru
    _
  // Predicated region
  $region14: #{vpt_vit3d_forward.2} parent=0 // pred_check
    _
  $region15: #{vpt_vit3d_forward.2} parent=0 // pred_check_branch
    %24 = sbr.rel (0) target = $region17
  $region16: #{vpt_vit3d_forward.2} parent=0 // pred_region
    _
  $region17: #{vpt_vit3d_forward.2} parent=0 // pred_fallthru
    _
  // Predicated region
  $region18: #{vpt_vit3d_forward.2} parent=0 // pred_check
    _
  $region19: #{vpt_vit3d_forward.2} parent=0 // pred_check_branch
    %26 = sbr.rel (0) target = $region21
  $region20: #{vpt_vit3d_forward.2} parent=0 // pred_region
    _
  $region21: #{vpt_vit3d_forward.2} parent=0 // pred_fallthru
    _
  // Predicated region
  $region22: #{vpt_vit3d_forward.2} parent=0 // pred_check
    _
  $region23: #{vpt_vit3d_forward.2} parent=0 // pred_check_branch
    %28 = sbr.rel (0) target = $region25
  $region24: #{vpt_vit3d_forward.2} parent=0 // pred_region
    _
  $region25: #{vpt_vit3d_forward.2} parent=0 // pred_fallthru
    _
  // Predicated region
  $region26: #{vpt_vit3d_forward.2} parent=0 // pred_check
    _
  $region27: #{vpt_vit3d_forward.2} parent=0 // pred_check_branch
    %30 = sbr.rel (0) target = $region29
  $region28: #{vpt_vit3d_forward.2} parent=0 // pred_region
    _
  $region29: #{vpt_vit3d_forward.2} parent=0 // pred_fallthru
    _
  // Predicated region
  $region30: #{vpt_vit3d_forward.2} parent=0 // pred_check
    _
  $region31: #{vpt_vit3d_forward.2} parent=0 // pred_check_branch
    %32 = sbr.rel (0) target = $region33
  $region32: #{vpt_vit3d_forward.2} parent=0 // pred_region
    _
  $region33: #{vpt_vit3d_forward.2} parent=0 // pred_fallthru
    _
  // Predicated region
  $region34: #{vpt_vit3d_forward.2} parent=0 // pred_check
    _
  $region35: #{vpt_vit3d_forward.2} parent=0 // pred_check_branch
    %34 = sbr.rel (0) target = $region37
  $region36: #{vpt_vit3d_forward.2} parent=0 // pred_region
    _
  $region37: #{vpt_vit3d_forward.2} parent=0 // pred_fallthru
    _
  // Predicated region
  $region38: #{vpt_vit3d_forward.2} parent=0 // pred_check
    _
  $region39: #{vpt_vit3d_forward.2} parent=0 // pred_check_branch
    %36 = sbr.rel (0) target = $region41
  $region40: #{vpt_vit3d_forward.2} parent=0 // pred_region
    _
  $region41: #{vpt_vit3d_forward.2} parent=0 // pred_fallthru
    _
  // Predicated region
  $region42: #{vpt_vit3d_forward.2} parent=0 // pred_check
    _
  $region43: #{vpt_vit3d_forward.2} parent=0 // pred_check_branch
    %38 = sbr.rel (0) target = $region45
  $region44: #{vpt_vit3d_forward.2} parent=0 // pred_region
    _
  $region45: #{vpt_vit3d_forward.2} parent=0 // pred_fallthru
    _
  // Predicated region
  $region46: #{vpt_vit3d_forward.2} parent=0 // pred_check
    _
  $region47: #{vpt_vit3d_forward.2} parent=0 // pred_check_branch
    %40 = sbr.rel (0) target = $region49
  $region48: #{vpt_vit3d_forward.2} parent=0 // pred_region
    _
  $region49: #{vpt_vit3d_forward.2} parent=0 // pred_fallthru
    _
  %v41 = vld [vmem:[%s0] sm:$0xff]
  %v42 = vld [vmem:[%s0 + $0x8] sm:$0xff]
  %v43 = vld [vmem:[%s11] sm:$0xff]
  %v44 = vld [vmem:[%s11 + $0x8] sm:$0xff]
  %v45 = vld [vmem:[%s11 + $0x10] sm:$0xff]
  %v46 = vld [vmem:[%s11 + $0x18] sm:$0xff]
  %v47 = vld [vmem:[%s11 + $0x20] sm:$0xff]
  %v48 = vld [vmem:[%s11 + $0x28] sm:$0xff]
  %v49 = vld [vmem:[%s11 + $0x30] sm:$0xff]
  %v50 = vld [vmem:[%s11 + $0x38] sm:$0xff]
  %v51 = vld [vmem:[%s11 + $0x40] sm:$0xff]
  %v52 = vld [vmem:[%s11 + $0x48] sm:$0xff]
  %v53 = vld [vmem:[%s11 + $0x50] sm:$0xff]
  %v54 = vld [vmem:[%s11 + $0x58] sm:$0xff]
  %v55 = vld [vmem:[%s11 + $0x60] sm:$0xff]
  %v56 = vld [vmem:[%s11 + $0x68] sm:$0xff]
  %v57 = vld [vmem:[%s11 + $0x70] sm:$0xff]
  %v58 = vld [vmem:[%s11 + $0x78] sm:$0xff]
  %v59 = vld [vmem:[%s2] sm:$0xff]
  %v60 = vld [vmem:[%s2 + $0x8] sm:$0xff]
  %v61 = vld [vmem:[%s2 + $0x10] sm:$0xff]
  %v62 = vld [vmem:[%s2 + $0x18] sm:$0xff]
  %v63 = vld [vmem:[%s2 + $0x20] sm:$0xff]
  %v64 = vld [vmem:[%s2 + $0x28] sm:$0xff]
  %v65 = vld [vmem:[%s2 + $0x30] sm:$0xff]
  %v66 = vld [vmem:[%s2 + $0x38] sm:$0xff]
  %v67 = vld [vmem:[%s2 + $0x40] sm:$0xff]
  %v68 = vld [vmem:[%s2 + $0x48] sm:$0xff]
  %v69 = vld [vmem:[%s2 + $0x50] sm:$0xff]
  %v70 = vld [vmem:[%s2 + $0x58] sm:$0xff]
  %v71 = vld [vmem:[%s2 + $0x60] sm:$0xff]
  %v72 = vld [vmem:[%s2 + $0x68] sm:$0xff]
  %v73 = vld [vmem:[%s2 + $0x70] sm:$0xff]
  %v74 = vld [vmem:[%s2 + $0x78] sm:$0xff]
  %v75 = vld [vmem:[%s2 + $0x80] sm:$0xff]
  %v76 = vld [vmem:[%s2 + $0x88] sm:$0xff]
  %v77 = vld [vmem:[%s2 + $0x90] sm:$0xff]
  %v78 = vld [vmem:[%s2 + $0x98] sm:$0xff]
  %v79 = vld [vmem:[%s2 + $0xa0] sm:$0xff]
  %v80 = vld [vmem:[%s2 + $0xa8] sm:$0xff]
  %v81 = vld [vmem:[%s2 + $0xb0] sm:$0xff]
  %v82 = vld [vmem:[%s2 + $0xb8] sm:$0xff]
  %v83 = vld [vmem:[%s2 + $0xc0] sm:$0xff]
  %v84 = vld [vmem:[%s2 + $0xc8] sm:$0xff]
  %v85 = vld [vmem:[%s2 + $0xd0] sm:$0xff]
  %v86 = vld [vmem:[%s2 + $0xd8] sm:$0xff]
  %v87 = vld [vmem:[%s2 + $0xe0] sm:$0xff]
  %v88 = vld [vmem:[%s2 + $0xe8] sm:$0xff]
  %v89 = vld [vmem:[%s2 + $0xf0] sm:$0xff]
  %v90 = vld [vmem:[%s2 + $0xf8] sm:$0xff]
  %v91 = vld [vmem:[%s2 + $0x100] sm:$0xff]
  %v92 = vld [vmem:[%s2 + $0x108] sm:$0xff]
  %v93 = vld [vmem:[%s2 + $0x110] sm:$0xff]
  %v94 = vld [vmem:[%s2 + $0x118] sm:$0xff]
  %v95 = vld [vmem:[%s2 + $0x120] sm:$0xff]
  %v96 = vld [vmem:[%s2 + $0x128] sm:$0xff]
  %v97 = vld [vmem:[%s2 + $0x130] sm:$0xff]
  %v98 = vld [vmem:[%s2 + $0x138] sm:$0xff]
  %v99 = vld [vmem:[%s2 + $0x140] sm:$0xff]
  %v100 = vld [vmem:[%s2 + $0x148] sm:$0xff]
  %v101 = vld [vmem:[%s2 + $0x150] sm:$0xff]
  %v102 = vld [vmem:[%s2 + $0x158] sm:$0xff]
  %v103 = vld [vmem:[%s2 + $0x160] sm:$0xff]
  %v104 = vld [vmem:[%s2 + $0x168] sm:$0xff]
  %v105 = vld [vmem:[%s2 + $0x170] sm:$0xff]
  %v106 = vld [vmem:[%s2 + $0x178] sm:$0xff]
  %v107 = vld [vmem:[%s2 + $0x180] sm:$0xff]
  %v108 = vld [vmem:[%s2 + $0x188] sm:$0xff]
  %v109 = vld [vmem:[%s2 + $0x190] sm:$0xff]
  %v110 = vld [vmem:[%s2 + $0x198] sm:$0xff]
  %v111 = vld [vmem:[%s2 + $0x1a0] sm:$0xff]
  %v112 = vld [vmem:[%s2 + $0x1a8] sm:$0xff]
  %v113 = vld [vmem:[%s2 + $0x1b0] sm:$0xff]
  %v114 = vld [vmem:[%s2 + $0x1b8] sm:$0xff]
  %v115 = vld [vmem:[%s2 + $0x1c0] sm:$0xff]
  %v116 = vld [vmem:[%s2 + $0x1c8] sm:$0xff]
  %v117 = vld [vmem:[%s2 + $0x1d0] sm:$0xff]
  %v118 = vld [vmem:[%s2 + $0x1d8] sm:$0xff]
  %v119 = vld [vmem:[%s2 + $0x1e0] sm:$0xff]
  %v120 = vld [vmem:[%s2 + $0x1e8] sm:$0xff]
  %v121 = vld [vmem:[%s2 + $0x1f0] sm:$0xff]
  %v122 = vld [vmem:[%s2 + $0x1f8] sm:$0xff]
  %123 = vmatprep.subr.mxu0 0.0
  %124 = vmatpush1.msra.mxu0 %v59
  %125 = vmatprep.subr.mxu0 0.0
  %126 = vmatpush1.msra.mxu0 %v60
  %127 = vmatprep.subr.mxu0 0.0
  %128 = vmatpush1.msra.mxu0 %v61
  %129 = vmatprep.subr.mxu0 0.0
  %130 = vmatpush1.msra.mxu0 %v62
  %131 = vmatprep.subr.mxu0 0.0
  %132 = vmatpush1.msra.mxu0 %v63
  %133 = vmatprep.subr.mxu0 0.0
  %134 = vmatpush1.msra.mxu0 %v64
  %135 = vmatprep.subr.mxu0 0.0
  %136 = vmatpush1.msra.mxu0 %v65
  %137 = vmatprep.subr.mxu0 0.0
  %138 = vmatpush1.msra.mxu0 %v66
  %139 = vmatprep.subr.mxu0 0.0
  %140 = vmatpush1.msra.mxu0 %v67
  %141 = vmatprep.subr.mxu0 0.0
  %142 = vmatpush1.msra.mxu0 %v68
  %143 = vmatprep.subr.mxu0 0.0
  %144 = vmatpush1.msra.mxu0 %v69
  %145 = vmatprep.subr.mxu0 0.0
  %146 = vmatpush1.msra.mxu0 %v70
  %147 = vmatprep.subr.mxu0 0.0
  %148 = vmatpush1.msra.mxu0 %v71
  %149 = vmatprep.subr.mxu0 0.0
  %150 = vmatpush1.msra.mxu0 %v72
  %151 = vmatprep.subr.mxu0 0.0
  %152 = vmatpush1.msra.mxu0 %v73
  %153 = vmatprep.subr.mxu0 0.0
  %154 = vmatpush1.msra.mxu0 %v74
  %155 = vmatprep.subr.mxu0 0.0
  %156 = vmatpush1.msra.mxu0 %v75
  %157 = vmatprep.subr.mxu0 0.0
  %158 = vmatpush1.msra.mxu0 %v76
  %159 = vmatprep.subr.mxu0 0.0
  %160 = vmatpush1.msra.mxu0 %v77
  %161 = vmatprep.subr.mxu0 0.0
  %162 = vmatpush1.msra.mxu0 %v78
  %163 = vmatprep.subr.mxu0 0.0
  %164 = vmatpush1.msra.mxu0 %v79
  %165 = vmatprep.subr.mxu0 0.0
  %166 = vmatpush1.msra.mxu0 %v80
  %167 = vmatprep.subr.mxu0 0.0
  %168 = vmatpush1.msra.mxu0 %v81
  %169 = vmatprep.subr.mxu0 0.0
  %170 = vmatpush1.msra.mxu0 %v82
  %171 = vmatprep.subr.mxu0 0.0
  %172 = vmatpush1.msra.mxu0 %v83
  %173 = vmatprep.subr.mxu0 0.0
  %174 = vmatpush1.msra.mxu0 %v84
  %175 = vmatprep.subr.mxu0 0.0
  %176 = vmatpush1.msra.mxu0 %v85
  %177 = vmatprep.subr.mxu0 0.0
  %178 = vmatpush1.msra.mxu0 %v86
  %179 = vmatprep.subr.mxu0 0.0
  %180 = vmatpush1.msra.mxu0 %v87
  %181 = vmatprep.subr.mxu0 0.0
  %182 = vmatpush1.msra.mxu0 %v88
  %183 = vmatprep.subr.mxu0 0.0
  %184 = vmatpush1.msra.mxu0 %v89
  %185 = vmatprep.subr.mxu0 0.0
  %186 = vmatpush1.msra.mxu0 %v90
  %187 = vmatprep.mubr.f32.mxu0 %v44
  %188 = vmatmul.mubr.f32.gmra.mrb[0].mxu0 %v43
  %v189 = vpop.f32.mrb[0].mxu0
  %v190 = vadd.f32 %v41, %v189
  %v191 = vpop.f32.mrb[0].mxu0
  %192 = vmatprep.mubr.f32.mxu0 %v48
  %193 = vmatmul.mubr.f32.gmra.mrb[0].mxu0 %v47
  %v194 = vpop.f32.mrb[0].mxu0
  %v195 = vadd.f32 %v42, %v194
  %v196 = vpop.f32.mrb[0].mxu0
  %197 = vmatprep.mubr.f32.mxu0 %v52
  %198 = vmatmul.mubr.f32.gmra.mrb[0].mxu0 %v51
  %v199 = vpop.f32.mrb[0].mxu0
  %v200 = vadd.f32 %v41, %v199
  %v201 = vpop.f32.mrb[0].mxu0
  %202 = vmatprep.mubr.f32.mxu0 %v56
  %203 = vmatmul.mubr.f32.gmra.mrb[0].mxu0 %v55
  %v204 = vpop.f32.mrb[0].mxu0
  %v205 = vadd.f32 %v42, %v204
  %v206 = vpop.f32.mrb[0].mxu0
  %207 = vdwg.mxu0
  %208 = vmatprep.subr.mxu0 0.0
  %209 = vmatpush1.msra.mxu0 %v91
  %210 = vmatprep.subr.mxu0 0.0
  %211 = vmatpush1.msra.mxu0 %v92
  %212 = vmatprep.subr.mxu0 0.0
  %213 = vmatpush1.msra.mxu0 %v93
  %214 = vmatprep.subr.mxu0 0.0
  %215 = vmatpush1.msra.mxu0 %v94
  %216 = vmatprep.subr.mxu0 0.0
  %217 = vmatpush1.msra.mxu0 %v95
  %218 = vmatprep.subr.mxu0 0.0
  %219 = vmatpush1.msra.mxu0 %v96
  %220 = vmatprep.subr.mxu0 0.0
  %221 = vmatpush1.msra.mxu0 %v97
  %222 = vmatprep.subr.mxu0 0.0
  %223 = vmatpush1.msra.mxu0 %v98
  %224 = vmatprep.subr.mxu0 0.0
  %225 = vmatpush1.msra.mxu0 %v99
  %226 = vmatprep.subr.mxu0 0.0
  %227 = vmatpush1.msra.mxu0 %v100
  %228 = vmatprep.subr.mxu0 0.0
  %229 = vmatpush1.msra.mxu0 %v101
  %230 = vmatprep.subr.mxu0 0.0
  %231 = vmatpush1.msra.mxu0 %v102
  %232 = vmatprep.subr.mxu0 0.0
  %233 = vmatpush1.msra.mxu0 %v103
  %234 = vmatprep.subr.mxu0 0.0
  %235 = vmatpush1.msra.mxu0 %v104
  %236 = vmatprep.subr.mxu0 0.0
  %237 = vmatpush1.msra.mxu0 %v105
  %238 = vmatprep.subr.mxu0 0.0
  %239 = vmatpush1.msra.mxu0 %v106
  %240 = vmatprep.subr.mxu0 0.0
  %241 = vmatpush1.msra.mxu0 %v107
  %242 = vmatprep.subr.mxu0 0.0
  %243 = vmatpush1.msra.mxu0 %v108
  %244 = vmatprep.subr.mxu0 0.0
  %245 = vmatpush1.msra.mxu0 %v109
  %246 = vmatprep.subr.mxu0 0.0
  %247 = vmatpush1.msra.mxu0 %v110
  %248 = vmatprep.subr.mxu0 0.0
  %249 = vmatpush1.msra.mxu0 %v111
  %250 = vmatprep.subr.mxu0 0.0
  %251 = vmatpush1.msra.mxu0 %v112
  %252 = vmatprep.subr.mxu0 0.0
  %253 = vmatpush1.msra.mxu0 %v113
  %254 = vmatprep.subr.mxu0 0.0
  %255 = vmatpush1.msra.mxu0 %v114
  %256 = vmatprep.subr.mxu0 0.0
  %257 = vmatpush1.msra.mxu0 %v115
  %258 = vmatprep.subr.mxu0 0.0
  %259 = vmatpush1.msra.mxu0 %v116
  %260 = vmatprep.subr.mxu0 0.0
  %261 = vmatpush1.msra.mxu0 %v117
  %262 = vmatprep.subr.mxu0 0.0
  %263 = vmatpush1.msra.mxu0 %v118
  %264 = vmatprep.subr.mxu0 0.0
  %265 = vmatpush1.msra.mxu0 %v119
  %266 = vmatprep.subr.mxu0 0.0
  %267 = vmatpush1.msra.mxu0 %v120
  %268 = vmatprep.subr.mxu0 0.0
  %269 = vmatpush1.msra.mxu0 %v121
  %270 = vmatprep.subr.mxu0 0.0
  %271 = vmatpush1.msra.mxu0 %v122
  %272 = vmatprep.mubr.f32.mxu0 %v46
  %273 = vmatmul.mubr.f32.gmra.mrb[0].mxu0 %v45
  %v274 = vpop.f32.mrb[0].mxu0
  %v275 = vadd.f32 %v190, %v274
  %v276 = vpop.f32.mrb[0].mxu0
  %277 = vmatprep.mubr.f32.mxu0 %v50
  %278 = vmatmul.mubr.f32.gmra.mrb[0].mxu0 %v49
  %v279 = vpop.f32.mrb[0].mxu0
  %v280 = vadd.f32 %v195, %v279
  %v281 = vpop.f32.mrb[0].mxu0
  %282 = vmatprep.mubr.f32.mxu0 %v54
  %283 = vmatmul.mubr.f32.gmra.mrb[0].mxu0 %v53
  %v284 = vpop.f32.mrb[0].mxu0
  %v285 = vadd.f32 %v200, %v284
  %v286 = vpop.f32.mrb[0].mxu0
  %287 = vmatprep.mubr.f32.mxu0 %v58
  %288 = vmatmul.mubr.f32.gmra.mrb[0].mxu0 %v57
  %v289 = vpop.f32.mrb[0].mxu0
  %v290 = vadd.f32 %v205, %v289
  %v291 = vpop.f32.mrb[0].mxu0
  %292 = vdwg.mxu0
  %v293 = vld [vmem:[%s1] sm:$0xff]
  %v294 = vld [vmem:[%s1 + $0x8] sm:$0xff]
  %v295 = vld [vmem:[%s1 + $0x10] sm:$0xff]
  %v296 = vld [vmem:[%s1 + $0x18] sm:$0xff]
  %v297 = vld [vmem:[%s6] sm:$0x1]
  %s298 = scalar_lea.vmem %s6, 1
  %v299 = vld [vmem:[%s298] sm:$0x1]
  %s300 = scalar_lea.vmem %s6, 2
  %v301 = vld [vmem:[%s300] sm:$0x1]
  %s302 = scalar_lea.vmem %s6, 3
  %v303 = vld [vmem:[%s302] sm:$0x1]
  %s304 = scalar_lea.vmem %s6, 4
  %v305 = vld [vmem:[%s304] sm:$0x1]
  %s306 = scalar_lea.vmem %s6, 5
  %v307 = vld [vmem:[%s306] sm:$0x1]
  %vm308 = vcmask 261120
  %v309 = vsel %vm308, %v275, 0.0
  %310 = vadd.xlane.f32.xlu0 %v309
  %v311 = vpop.xlane.xlu0 %310
  %v312 = vsel %vm308, %v280, 0.0
  %313 = vadd.xlane.f32.xlu0 %v312
  %v314 = vpop.xlane.xlu0 %313
  %v315 = vsel %vm308, %v285, 0.0
  %316 = vadd.xlane.f32.xlu0 %v315
  %v317 = vpop.xlane.xlu0 %316
  %v318 = vsel %vm308, %v290, 0.0
  %319 = vadd.xlane.f32.xlu0 %v318
  %v320 = vpop.xlane.xlu0 %319
  %v321 = vrcp.pop 32.0
  %v322 = vmul.f32 %v311, %v321
  %v323 = vmul.f32 %v314, %v321
  %v324 = vmul.f32 %v317, %v321
  %v325 = vmul.f32 %v320, %v321
  %v326 = vsub.f32 %v275, %v322
  %v327 = vsub.f32 %v280, %v323
  %v328 = vsub.f32 %v285, %v324
  %v329 = vsub.f32 %v290, %v325
  %v330 = vmul.f32 %v326, %v326
  %v331 = vmul.f32 %v327, %v327
  %v332 = vmul.f32 %v328, %v328
  %v333 = vmul.f32 %v329, %v329
  %v334 = vsel %vm308, %v330, 0.0
  %335 = vadd.xlane.f32.xlu0 %v334
  %v336 = vpop.xlane.xlu0 %335
  %v337 = vsel %vm308, %v331, 0.0
  %338 = vadd.xlane.f32.xlu0 %v337
  %v339 = vpop.xlane.xlu0 %338
  %v340 = vsel %vm308, %v332, 0.0
  %341 = vadd.xlane.f32.xlu0 %v340
  %v342 = vpop.xlane.xlu0 %341
  %v343 = vsel %vm308, %v333, 0.0
  %344 = vadd.xlane.f32.xlu0 %v343
  %v345 = vpop.xlane.xlu0 %344
  %v346 = vmul.f32 %v336, %v321
  %v347 = vmul.f32 %v339, %v321
  %v348 = vmul.f32 %v342, %v321
  %v349 = vmul.f32 %v345, %v321
  %v350 = vadd.f32 %v346, 1e-06
  %v351 = vadd.f32 %v347, 1e-06
  %v352 = vadd.f32 %v348, 1e-06
  %v353 = vadd.f32 %v349, 1e-06
  %v354 = vrsqrt.pop %v350
  %v355 = vrsqrt.pop %v351
  %v356 = vrsqrt.pop %v352
  %v357 = vrsqrt.pop %v353
  %v358 = vmul.f32 %v326, %v354
  %v359 = vmul.f32 %v327, %v355
  %v360 = vmul.f32 %v328, %v356
  %v361 = vmul.f32 %v329, %v357
  %v363 = vlaneseq
  %v364 = vshrl.u32 %v363, 7
  %v365 = vsub.s32 0, %v364
  %v366 = vrot.slane %v297, %v365
  %v368 = vmul.f32 %v358, %v366
  %v369 = vmul.f32 %v359, %v366
  %v370 = vmul.f32 %v360, %v366
  %v371 = vmul.f32 %v361, %v366
  %v373 = vlaneseq
  %v374 = vshrl.u32 %v373, 7
  %v375 = vsub.s32 0, %v374
  %v376 = vrot.slane %v299, %v375
  %v378 = vadd.f32 %v368, %v376
  %v379 = vadd.f32 %v369, %v376
  %v380 = vadd.f32 %v370, %v376
  %v381 = vadd.f32 %v371, %v376
  %v382 = vld [vmem:[%s3] sm:$0xff]
  %v383 = vld [vmem:[%s3 + $0x8] sm:$0xff]
  %v384 = vld [vmem:[%s3 + $0x10] sm:$0xff]
  %v385 = vld [vmem:[%s3 + $0x18] sm:$0xff]
  %v386 = vld [vmem:[%s4] sm:$0x1]
  %v388 = vlaneseq
  %v389 = vshrl.u32 %v388, 7
  %v390 = vsub.s32 0, %v389
  %v391 = vrot.slane %v386, %v390
  %v394 = vsel %vm308, %v378, 0
  %v397 = vsel %vm308, %v379, 0
  %v400 = vsel %vm308, %v380, 0
  %v403 = vsel %vm308, %v381, 0
  %405 = vmatprep.subr.mxu0 0.0
  %406 = vmatpush1.msra.mxu0 %v382
  %407 = vmatprep.subr.mxu0 0.0
  %408 = vmatpush1.msra.mxu0 %v383
  %409 = vmatprep.subr.mxu0 0.0
  %410 = vmatpush1.msra.mxu0 %v384
  %411 = vmatprep.subr.mxu0 0.0
  %412 = vmatpush1.msra.mxu0 %v385
  %413 = vmatprep.subr.mxu0 0.0
  %414 = vmatpush1.msra.mxu0 0.0
  %415 = vmatprep.subr.mxu0 0.0
  %416 = vmatpush1.msra.mxu0 0.0
  %417 = vmatprep.subr.mxu0 0.0
  %418 = vmatpush1.msra.mxu0 0.0
  %419 = vmatprep.subr.mxu0 0.0
  %420 = vmatpush1.msra.mxu0 0.0
  %421 = vmatprep.subr.mxu0 0.0
  %422 = vmatpush1.msra.mxu0 0.0
  %423 = vmatprep.subr.mxu0 0.0
  %424 = vmatpush1.msra.mxu0 0.0
  %425 = vmatprep.subr.mxu0 0.0
  %426 = vmatpush1.msra.mxu0 0.0
  %427 = vmatprep.subr.mxu0 0.0
  %428 = vmatpush1.msra.mxu0 0.0
  %429 = vmatprep.subr.mxu0 0.0
  %430 = vmatpush1.msra.mxu0 0.0
  %431 = vmatprep.subr.mxu0 0.0
  %432 = vmatpush1.msra.mxu0 0.0
  %433 = vmatprep.subr.mxu0 0.0
  %434 = vmatpush1.msra.mxu0 0.0
  %435 = vmatprep.subr.mxu0 0.0
  %436 = vmatpush1.msra.mxu0 0.0
  %437 = vmatprep.subr.mxu0 0.0
  %438 = vmatpush1.msra.mxu0 0.0
  %439 = vmatprep.subr.mxu0 0.0
  %440 = vmatpush1.msra.mxu0 0.0
  %441 = vmatprep.subr.mxu0 0.0
  %442 = vmatpush1.msra.mxu0 0.0
  %443 = vmatprep.subr.mxu0 0.0
  %444 = vmatpush1.msra.mxu0 0.0
  %445 = vmatprep.subr.mxu0 0.0
  %446 = vmatpush1.msra.mxu0 0.0
  %447 = vmatprep.subr.mxu0 0.0
  %448 = vmatpush1.msra.mxu0 0.0
  %449 = vmatprep.subr.mxu0 0.0
  %450 = vmatpush1.msra.mxu0 0.0
  %451 = vmatprep.subr.mxu0 0.0
  %452 = vmatpush1.msra.mxu0 0.0
  %453 = vmatprep.subr.mxu0 0.0
  %454 = vmatpush1.msra.mxu0 0.0
  %455 = vmatprep.subr.mxu0 0.0
  %456 = vmatpush1.msra.mxu0 0.0
  %457 = vmatprep.subr.mxu0 0.0
  %458 = vmatpush1.msra.mxu0 0.0
  %459 = vmatprep.subr.mxu0 0.0
  %460 = vmatpush1.msra.mxu0 0.0
  %461 = vmatprep.subr.mxu0 0.0
  %462 = vmatpush1.msra.mxu0 0.0
  %463 = vmatprep.subr.mxu0 0.0
  %464 = vmatpush1.msra.mxu0 0.0
  %465 = vmatprep.subr.mxu0 0.0
  %466 = vmatpush1.msra.mxu0 0.0
  %467 = vmatprep.subr.mxu0 0.0
  %468 = vmatpush1.msra.mxu0 0.0
  %469 = vmatprep.mubr.f32.mxu0 0.0
  %470 = vmatmul.mubr.f32.gmra.mrb[0].mxu0 %v394
  %v471 = vpop.f32.mrb[0].mxu0
  %v472 = vadd.f32 %v391, %v471
  %v473 = vpop.f32.mrb[0].mxu0
  %474 = vmatprep.mubr.f32.mxu0 0.0
  %475 = vmatmul.mubr.f32.gmra.mrb[0].mxu0 %v397
  %v476 = vpop.f32.mrb[0].mxu0
  %v477 = vadd.f32 %v391, %v476
  %v478 = vpop.f32.mrb[0].mxu0
  %479 = vmatprep.mubr.f32.mxu0 0.0
  %480 = vmatmul.mubr.f32.gmra.mrb[0].mxu0 %v400
  %v481 = vpop.f32.mrb[0].mxu0
  %v482 = vadd.f32 %v391, %v481
  %v483 = vpop.f32.mrb[0].mxu0
  %484 = vmatprep.mubr.f32.mxu0 0.0
  %485 = vmatmul.mubr.f32.gmra.mrb[0].mxu0 %v403
  %v486 = vpop.f32.mrb[0].mxu0
  %v487 = vadd.f32 %v391, %v486
  %v488 = vpop.f32.mrb[0].mxu0
  %489 = vdwg.mxu0
  %s490 = scalar_lea.vmem %s3, 256
  %v491 = vld [vmem:[%s490] sm:$0xff]
  %v492 = vld [vmem:[%s490 + $0x8] sm:$0xff]
  %v493 = vld [vmem:[%s490 + $0x10] sm:$0xff]
  %v494 = vld [vmem:[%s490 + $0x18] sm:$0xff]
  %s495 = scalar_lea.vmem %s4, 8
  %v496 = vld [vmem:[%s495] sm:$0x1]
  %v498 = vlaneseq
  %v499 = vshrl.u32 %v498, 7
  %v500 = vsub.s32 0, %v499
  %v501 = vrot.slane %v496, %v500
  %503 = vmatprep.subr.mxu0 0.0
  %504 = vmatpush1.msra.mxu0 %v491
  %505 = vmatprep.subr.mxu0 0.0
  %506 = vmatpush1.msra.mxu0 %v492
  %507 = vmatprep.subr.mxu0 0.0
  %508 = vmatpush1.msra.mxu0 %v493
  %509 = vmatprep.subr.mxu0 0.0
  %510 = vmatpush1.msra.mxu0 %v494
  %511 = vmatprep.subr.mxu0 0.0
  %512 = vmatpush1.msra.mxu0 0.0
  %513 = vmatprep.subr.mxu0 0.0
  %514 = vmatpush1.msra.mxu0 0.0
  %515 = vmatprep.subr.mxu0 0.0
  %516 = vmatpush1.msra.mxu0 0.0
  %517 = vmatprep.subr.mxu0 0.0
  %518 = vmatpush1.msra.mxu0 0.0
  %519 = vmatprep.subr.mxu0 0.0
  %520 = vmatpush1.msra.mxu0 0.0
  %521 = vmatprep.subr.mxu0 0.0
  %522 = vmatpush1.msra.mxu0 0.0
  %523 = vmatprep.subr.mxu0 0.0
  %524 = vmatpush1.msra.mxu0 0.0
  %525 = vmatprep.subr.mxu0 0.0
  %526 = vmatpush1.msra.mxu0 0.0
  %527 = vmatprep.subr.mxu0 0.0
  %528 = vmatpush1.msra.mxu0 0.0
  %529 = vmatprep.subr.mxu0 0.0
  %530 = vmatpush1.msra.mxu0 0.0
  %531 = vmatprep.subr.mxu0 0.0
  %532 = vmatpush1.msra.mxu0 0.0
  %533 = vmatprep.subr.mxu0 0.0
  %534 = vmatpush1.msra.mxu0 0.0
  %535 = vmatprep.subr.mxu0 0.0
  %536 = vmatpush1.msra.mxu0 0.0
  %537 = vmatprep.subr.mxu0 0.0
  %538 = vmatpush1.msra.mxu0 0.0
  %539 = vmatprep.subr.mxu0 0.0
  %540 = vmatpush1.msra.mxu0 0.0
  %541 = vmatprep.subr.mxu0 0.0
  %542 = vmatpush1.msra.mxu0 0.0
  %543 = vmatprep.subr.mxu0 0.0
  %544 = vmatpush1.msra.mxu0 0.0
  %545 = vmatprep.subr.mxu0 0.0
  %546 = vmatpush1.msra.mxu0 0.0
  %547 = vmatprep.subr.mxu0 0.0
  %548 = vmatpush1.msra.mxu0 0.0
  %549 = vmatprep.subr.mxu0 0.0
  %550 = vmatpush1.msra.mxu0 0.0
  %551 = vmatprep.subr.mxu0 0.0
  %552 = vmatpush1.msra.mxu0 0.0
  %553 = vmatprep.subr.mxu0 0.0
  %554 = vmatpush1.msra.mxu0 0.0
  %555 = vmatprep.subr.mxu0 0.0
  %556 = vmatpush1.msra.mxu0 0.0
  %557 = vmatprep.subr.mxu0 0.0
  %558 = vmatpush1.msra.mxu0 0.0
  %559 = vmatprep.subr.mxu0 0.0
  %560 = vmatpush1.msra.mxu0 0.0
  %561 = vmatprep.subr.mxu0 0.0
  %562 = vmatpush1.msra.mxu0 0.0
  %563 = vmatprep.subr.mxu0 0.0
  %564 = vmatpush1.msra.mxu0 0.0
  %565 = vmatprep.subr.mxu0 0.0
  %566 = vmatpush1.msra.mxu0 0.0
  %567 = vmatprep.mubr.f32.mxu0 0.0
  %568 = vmatmul.mubr.f32.gmra.mrb[0].mxu0 %v394
  %v569 = vpop.f32.mrb[0].mxu0
  %v570 = vadd.f32 %v501, %v569
  %v571 = vpop.f32.mrb[0].mxu0
  %572 = vmatprep.mubr.f32.mxu0 0.0
  %573 = vmatmul.mubr.f32.gmra.mrb[0].mxu0 %v397
  %v574 = vpop.f32.mrb[0].mxu0
  %v575 = vadd.f32 %v501, %v574
  %v576 = vpop.f32.mrb[0].mxu0
  %577 = vmatprep.mubr.f32.mxu0 0.0
  %578 = vmatmul.mubr.f32.gmra.mrb[0].mxu0 %v400
  %v579 = vpop.f32.mrb[0].mxu0
  %v580 = vadd.f32 %v501, %v579
  %v581 = vpop.f32.mrb[0].mxu0
  %582 = vmatprep.mubr.f32.mxu0 0.0
  %583 = vmatmul.mubr.f32.gmra.mrb[0].mxu0 %v403
  %v584 = vpop.f32.mrb[0].mxu0
  %v585 = vadd.f32 %v501, %v584
  %v586 = vpop.f32.mrb[0].mxu0
  %587 = vdwg.mxu0
  %s588 = scalar_lea.vmem %s3, 512
  %v589 = vld [vmem:[%s588] sm:$0xff]
  %v590 = vld [vmem:[%s588 + $0x8] sm:$0xff]
  %v591 = vld [vmem:[%s588 + $0x10] sm:$0xff]
  %v592 = vld [vmem:[%s588 + $0x18] sm:$0xff]
  %s593 = scalar_lea.vmem %s4, 16
  %v594 = vld [vmem:[%s593] sm:$0x1]
  %v596 = vlaneseq
  %v597 = vshrl.u32 %v596, 7
  %v598 = vsub.s32 0, %v597
  %v599 = vrot.slane %v594, %v598
  %601 = vmatprep.subr.mxu0 0.0
  %602 = vmatpush1.msra.mxu0 %v589
  %603 = vmatprep.subr.mxu0 0.0
  %604 = vmatpush1.msra.mxu0 %v590
  %605 = vmatprep.subr.mxu0 0.0
  %606 = vmatpush1.msra.mxu0 %v591
  %607 = vmatprep.subr.mxu0 0.0
  %608 = vmatpush1.msra.mxu0 %v592
  %609 = vmatprep.subr.mxu0 0.0
  %610 = vmatpush1.msra.mxu0 0.0
  %611 = vmatprep.subr.mxu0 0.0
  %612 = vmatpush1.msra.mxu0 0.0
  %613 = vmatprep.subr.mxu0 0.0
  %614 = vmatpush1.msra.mxu0 0.0
  %615 = vmatprep.subr.mxu0 0.0
  %616 = vmatpush1.msra.mxu0 0.0
  %617 = vmatprep.subr.mxu0 0.0
  %618 = vmatpush1.msra.mxu0 0.0
  %619 = vmatprep.subr.mxu0 0.0
  %620 = vmatpush1.msra.mxu0 0.0
  %621 = vmatprep.subr.mxu0 0.0
  %622 = vmatpush1.msra.mxu0 0.0
  %623 = vmatprep.subr.mxu0 0.0
  %624 = vmatpush1.msra.mxu0 0.0
  %625 = vmatprep.subr.mxu0 0.0
  %626 = vmatpush1.msra.mxu0 0.0
  %627 = vmatprep.subr.mxu0 0.0
  %628 = vmatpush1.msra.mxu0 0.0
  %629 = vmatprep.subr.mxu0 0.0
  %630 = vmatpush1.msra.mxu0 0.0
  %631 = vmatprep.subr.mxu0 0.0
  %632 = vmatpush1.msra.mxu0 0.0
  %633 = vmatprep.subr.mxu0 0.0
  %634 = vmatpush1.msra.mxu0 0.0
  %635 = vmatprep.subr.mxu0 0.0
  %636 = vmatpush1.msra.mxu0 0.0
  %637 = vmatprep.subr.mxu0 0.0
  %638 = vmatpush1.msra.mxu0 0.0
  %639 = vmatprep.subr.mxu0 0.0
  %640 = vmatpush1.msra.mxu0 0.0
  %641 = vmatprep.subr.mxu0 0.0
  %642 = vmatpush1.msra.mxu0 0.0
  %643 = vmatprep.subr.mxu0 0.0
  %644 = vmatpush1.msra.mxu0 0.0
  %645 = vmatprep.subr.mxu0 0.0
  %646 = vmatpush1.msra.mxu0 0.0
  %647 = vmatprep.subr.mxu0 0.0
  %648 = vmatpush1.msra.mxu0 0.0
  %649 = vmatprep.subr.mxu0 0.0
  %650 = vmatpush1.msra.mxu0 0.0
  %651 = vmatprep.subr.mxu0 0.0
  %652 = vmatpush1.msra.mxu0 0.0
  %653 = vmatprep.subr.mxu0 0.0
  %654 = vmatpush1.msra.mxu0 0.0
  %655 = vmatprep.subr.mxu0 0.0
  %656 = vmatpush1.msra.mxu0 0.0
  %657 = vmatprep.subr.mxu0 0.0
  %658 = vmatpush1.msra.mxu0 0.0
  %659 = vmatprep.subr.mxu0 0.0
  %660 = vmatpush1.msra.mxu0 0.0
  %661 = vmatprep.subr.mxu0 0.0
  %662 = vmatpush1.msra.mxu0 0.0
  %663 = vmatprep.subr.mxu0 0.0
  %664 = vmatpush1.msra.mxu0 0.0
  %665 = vmatprep.mubr.f32.mxu0 0.0
  %666 = vmatmul.mubr.f32.gmra.mrb[0].mxu0 %v394
  %v667 = vpop.f32.mrb[0].mxu0
  %v668 = vadd.f32 %v599, %v667
  %v669 = vpop.f32.mrb[0].mxu0
  %670 = vmatprep.mubr.f32.mxu0 0.0
  %671 = vmatmul.mubr.f32.gmra.mrb[0].mxu0 %v397
  %v672 = vpop.f32.mrb[0].mxu0
  %v673 = vadd.f32 %v599, %v672
  %v674 = vpop.f32.mrb[0].mxu0
  %675 = vmatprep.mubr.f32.mxu0 0.0
  %676 = vmatmul.mubr.f32.gmra.mrb[0].mxu0 %v400
  %v677 = vpop.f32.mrb[0].mxu0
  %v678 = vadd.f32 %v599, %v677
  %v679 = vpop.f32.mrb[0].mxu0
  %680 = vmatprep.mubr.f32.mxu0 0.0
  %681 = vmatmul.mubr.f32.gmra.mrb[0].mxu0 %v403
  %v682 = vpop.f32.mrb[0].mxu0
  %v683 = vadd.f32 %v599, %v682
  %v684 = vpop.f32.mrb[0].mxu0
  %685 = vdwg.mxu0
  %vm686 = vcmask 64512
  %v688 = vsel %vm686, %v472, 0
  %v691 = vsel %vm686, %v477, 0
  %v694 = vsel %vm686, %v482, 0
  %v697 = vsel %vm686, %v487, 0
  %v700 = vsel %vm686, %v570, 0
  %v703 = vsel %vm686, %v575, 0
  %v706 = vsel %vm686, %v580, 0
  %v709 = vsel %vm686, %v585, 0
  %711 = vmatprep.subr.mxu0 0.0
  %712 = vmatpush1.xpose.msra.mxu0 %v700
  %713 = vmatprep.subr.mxu0 0.0
  %714 = vmatpush1.xpose.msra.mxu0 %v703
  %715 = vmatprep.subr.mxu0 0.0
  %716 = vmatpush1.xpose.msra.mxu0 %v706
  %717 = vmatprep.subr.mxu0 0.0
  %718 = vmatpush1.xpose.msra.mxu0 %v709
  %719 = vmatprep.subr.mxu0 0.0
  %720 = vmatpush1.xpose.msra.mxu0 0.0
  %721 = vmatprep.subr.mxu0 0.0
  %722 = vmatpush1.xpose.msra.mxu0 0.0
  %723 = vmatprep.subr.mxu0 0.0
  %724 = vmatpush1.xpose.msra.mxu0 0.0
  %725 = vmatprep.subr.mxu0 0.0
  %726 = vmatpush1.xpose.msra.mxu0 0.0
  %727 = vmatprep.subr.mxu0 0.0
  %728 = vmatpush1.xpose.msra.mxu0 0.0
  %729 = vmatprep.subr.mxu0 0.0
  %730 = vmatpush1.xpose.msra.mxu0 0.0
  %731 = vmatprep.subr.mxu0 0.0
  %732 = vmatpush1.xpose.msra.mxu0 0.0
  %733 = vmatprep.subr.mxu0 0.0
  %734 = vmatpush1.xpose.msra.mxu0 0.0
  %735 = vmatprep.subr.mxu0 0.0
  %736 = vmatpush1.xpose.msra.mxu0 0.0
  %737 = vmatprep.subr.mxu0 0.0
  %738 = vmatpush1.xpose.msra.mxu0 0.0
  %739 = vmatprep.subr.mxu0 0.0
  %740 = vmatpush1.xpose.msra.mxu0 0.0
  %741 = vmatprep.subr.mxu0 0.0
  %742 = vmatpush1.xpose.msra.mxu0 0.0
  %743 = vmatprep.subr.mxu0 0.0
  %744 = vmatpush1.xpose.msra.mxu0 0.0
  %745 = vmatprep.subr.mxu0 0.0
  %746 = vmatpush1.xpose.msra.mxu0 0.0
  %747 = vmatprep.subr.mxu0 0.0
  %748 = vmatpush1.xpose.msra.mxu0 0.0
  %749 = vmatprep.subr.mxu0 0.0
  %750 = vmatpush1.xpose.msra.mxu0 0.0
  %751 = vmatprep.subr.mxu0 0.0
  %752 = vmatpush1.xpose.msra.mxu0 0.0
  %753 = vmatprep.subr.mxu0 0.0
  %754 = vmatpush1.xpose.msra.mxu0 0.0
  %755 = vmatprep.subr.mxu0 0.0
  %756 = vmatpush1.xpose.msra.mxu0 0.0
  %757 = vmatprep.subr.mxu0 0.0
  %758 = vmatpush1.xpose.msra.mxu0 0.0
  %759 = vmatprep.subr.mxu0 0.0
  %760 = vmatpush1.xpose.msra.mxu0 0.0
  %761 = vmatprep.subr.mxu0 0.0
  %762 = vmatpush1.xpose.msra.mxu0 0.0
  %763 = vmatprep.subr.mxu0 0.0
  %764 = vmatpush1.xpose.msra.mxu0 0.0
  %765 = vmatprep.subr.mxu0 0.0
  %766 = vmatpush1.xpose.msra.mxu0 0.0
  %767 = vmatprep.subr.mxu0 0.0
  %768 = vmatpush1.xpose.msra.mxu0 0.0
  %769 = vmatprep.subr.mxu0 0.0
  %770 = vmatpush1.xpose.msra.mxu0 0.0
  %771 = vmatprep.subr.mxu0 0.0
  %772 = vmatpush1.xpose.msra.mxu0 0.0
  %773 = vmatprep.subr.mxu0 0.0
  %774 = vmatpush1.xpose.msra.mxu0 0.0
  %775 = vmatprep.mubr.f32.mxu0 0.0
  %776 = vmatmul.mubr.f32.gmra.mrb[0].mxu0 %v688
  %v777 = vpop.f32.mrb[0].mxu0
  %v778 = vadd.f32 0.0, %v777
  %v779 = vpop.f32.mrb[0].mxu0
  %780 = vmatprep.mubr.f32.mxu0 0.0
  %781 = vmatmul.mubr.f32.gmra.mrb[0].mxu0 %v691
  %v782 = vpop.f32.mrb[0].mxu0
  %v783 = vadd.f32 0.0, %v782
  %v784 = vpop.f32.mrb[0].mxu0
  %785 = vmatprep.mubr.f32.mxu0 0.0
  %786 = vmatmul.mubr.f32.gmra.mrb[0].mxu0 %v694
  %v787 = vpop.f32.mrb[0].mxu0
  %v788 = vadd.f32 0.0, %v787
  %v789 = vpop.f32.mrb[0].mxu0
  %790 = vmatprep.mubr.f32.mxu0 0.0
  %791 = vmatmul.mubr.f32.gmra.mrb[0].mxu0 %v697
  %v792 = vpop.f32.mrb[0].mxu0
  %v793 = vadd.f32 0.0, %v792
  %v794 = vpop.f32.mrb[0].mxu0
  %795 = vdwg.mxu0
  %v796 = vmul.f32 %v778, 0.35355338
  %v797 = vmul.f32 %v783, 0.35355338
  %v798 = vmul.f32 %v788, 0.35355338
  %v799 = vmul.f32 %v793, 0.35355338
  %v800 = vadd.f32 %v796, %v293
  %v801 = vadd.f32 %v797, %v294
  %v802 = vadd.f32 %v798, %v295
  %v803 = vadd.f32 %v799, %v296
  %v804 = vsel %vm308, %v800, -inf
  %805 = vmax.xlane.f32.xlu0 %v804
  %v806 = vpop.xlane.xlu0 %805
  %v807 = vsel %vm308, %v801, -inf
  %808 = vmax.xlane.f32.xlu0 %v807
  %v809 = vpop.xlane.xlu0 %808
  %v810 = vsel %vm308, %v802, -inf
  %811 = vmax.xlane.f32.xlu0 %v810
  %v812 = vpop.xlane.xlu0 %811
  %v813 = vsel %vm308, %v803, -inf
  %814 = vmax.xlane.f32.xlu0 %v813
  %v815 = vpop.xlane.xlu0 %814
  %v816 = vsub.f32 %v800, %v806
  %v817 = vsub.f32 %v801, %v809
  %v818 = vsub.f32 %v802, %v812
  %v819 = vsub.f32 %v803, %v815
  %v820 = vmul.f32 %v816, 1.442695
  %v821 = vpow.pop %v820
  %v822 = vmul.f32 %v817, 1.442695
  %v823 = vpow.pop %v822
  %v824 = vmul.f32 %v818, 1.442695
  %v825 = vpow.pop %v824
  %v826 = vmul.f32 %v819, 1.442695
  %v827 = vpow.pop %v826
  %v828 = vsel %vm308, %v821, 0.0
  %829 = vadd.xlane.f32.xlu0 %v828
  %v830 = vpop.xlane.xlu0 %829
  %v831 = vsel %vm308, %v823, 0.0
  %832 = vadd.xlane.f32.xlu0 %v831
  %v833 = vpop.xlane.xlu0 %832
  %v834 = vsel %vm308, %v825, 0.0
  %835 = vadd.xlane.f32.xlu0 %v834
  %v836 = vpop.xlane.xlu0 %835
  %v837 = vsel %vm308, %v827, 0.0
  %838 = vadd.xlane.f32.xlu0 %v837
  %v839 = vpop.xlane.xlu0 %838
  %v840 = vrcp.pop %v830
  %v841 = vrcp.pop %v833
  %v842 = vrcp.pop %v836
  %v843 = vrcp.pop %v839
  %v844 = vmul.f32 %v821, %v840
  %v845 = vmul.f32 %v823, %v841
  %v846 = vmul.f32 %v825, %v842
  %v847 = vmul.f32 %v827, %v843
  %v849 = vsel %vm308, %v844, 0
  %v852 = vsel %vm308, %v845, 0
  %v855 = vsel %vm308, %v846, 0
  %v858 = vsel %vm308, %v847, 0
  %860 = vmatprep.subr.mxu0 0.0
  %861 = vmatpush1.msra.mxu0 %v668
  %862 = vmatprep.subr.mxu0 0.0
  %863 = vmatpush1.msra.mxu0 %v673
  %864 = vmatprep.subr.mxu0 0.0
  %865 = vmatpush1.msra.mxu0 %v678
  %866 = vmatprep.subr.mxu0 0.0
  %867 = vmatpush1.msra.mxu0 %v683
  %868 = vmatprep.subr.mxu0 0.0
  %869 = vmatpush1.msra.mxu0 0.0
  %870 = vmatprep.subr.mxu0 0.0
  %871 = vmatpush1.msra.mxu0 0.0
  %872 = vmatprep.subr.mxu0 0.0
  %873 = vmatpush1.msra.mxu0 0.0
  %874 = vmatprep.subr.mxu0 0.0
  %875 = vmatpush1.msra.mxu0 0.0
  %876 = vmatprep.subr.mxu0 0.0
  %877 = vmatpush1.msra.mxu0 0.0
  %878 = vmatprep.subr.mxu0 0.0
  %879 = vmatpush1.msra.mxu0 0.0
  %880 = vmatprep.subr.mxu0 0.0
  %881 = vmatpush1.msra.mxu0 0.0
  %882 = vmatprep.subr.mxu0 0.0
  %883 = vmatpush1.msra.mxu0 0.0
  %884 = vmatprep.subr.mxu0 0.0
  %885 = vmatpush1.msra.mxu0 0.0
  %886 = vmatprep.subr.mxu0 0.0
  %887 = vmatpush1.msra.mxu0 0.0
  %888 = vmatprep.subr.mxu0 0.0
  %889 = vmatpush1.msra.mxu0 0.0
  %890 = vmatprep.subr.mxu0 0.0
  %891 = vmatpush1.msra.mxu0 0.0
  %892 = vmatprep.subr.mxu0 0.0
  %893 = vmatpush1.msra.mxu0 0.0
  %894 = vmatprep.subr.mxu0 0.0
  %895 = vmatpush1.msra.mxu0 0.0
  %896 = vmatprep.subr.mxu0 0.0
  %897 = vmatpush1.msra.mxu0 0.0
  %898 = vmatprep.subr.mxu0 0.0
  %899 = vmatpush1.msra.mxu0 0.0
  %900 = vmatprep.subr.mxu0 0.0
  %901 = vmatpush1.msra.mxu0 0.0
  %902 = vmatprep.subr.mxu0 0.0
  %903 = vmatpush1.msra.mxu0 0.0
  %904 = vmatprep.subr.mxu0 0.0
  %905 = vmatpush1.msra.mxu0 0.0
  %906 = vmatprep.subr.mxu0 0.0
  %907 = vmatpush1.msra.mxu0 0.0
  %908 = vmatprep.subr.mxu0 0.0
  %909 = vmatpush1.msra.mxu0 0.0
  %910 = vmatprep.subr.mxu0 0.0
  %911 = vmatpush1.msra.mxu0 0.0
  %912 = vmatprep.subr.mxu0 0.0
  %913 = vmatpush1.msra.mxu0 0.0
  %914 = vmatprep.subr.mxu0 0.0
  %915 = vmatpush1.msra.mxu0 0.0
  %916 = vmatprep.subr.mxu0 0.0
  %917 = vmatpush1.msra.mxu0 0.0
  %918 = vmatprep.subr.mxu0 0.0
  %919 = vmatpush1.msra.mxu0 0.0
  %920 = vmatprep.subr.mxu0 0.0
  %921 = vmatpush1.msra.mxu0 0.0
  %922 = vmatprep.subr.mxu0 0.0
  %923 = vmatpush1.msra.mxu0 0.0
  %924 = vmatprep.mubr.f32.mxu0 0.0
  %925 = vmatmul.mubr.f32.gmra.mrb[0].mxu0 %v849
  %v926 = vpop.f32.mrb[0].mxu0
  %v927 = vadd.f32 0.0, %v926
  %v928 = vpop.f32.mrb[0].mxu0
  %929 = vmatprep.mubr.f32.mxu0 0.0
  %930 = vmatmul.mubr.f32.gmra.mrb[0].mxu0 %v852
  %v931 = vpop.f32.mrb[0].mxu0
  %v932 = vadd.f32 0.0, %v931
  %v933 = vpop.f32.mrb[0].mxu0
  %934 = vmatprep.mubr.f32.mxu0 0.0
  %935 = vmatmul.mubr.f32.gmra.mrb[0].mxu0 %v855
  %v936 = vpop.f32.mrb[0].mxu0
  %v937 = vadd.f32 0.0, %v936
  %v938 = vpop.f32.mrb[0].mxu0
  %939 = vmatprep.mubr.f32.mxu0 0.0
  %940 = vmatmul.mubr.f32.gmra.mrb[0].mxu0 %v858
  %v941 = vpop.f32.mrb[0].mxu0
  %v942 = vadd.f32 0.0, %v941
  %v943 = vpop.f32.mrb[0].mxu0
  %944 = vdwg.mxu0
  %v945 = vld [vmem:[%s5] sm:$0xff]
  %s946 = scalar_lea.vmem %s3, 32
  %v947 = vld [vmem:[%s946] sm:$0xff]
  %v948 = vld [vmem:[%s946 + $0x8] sm:$0xff]
  %v949 = vld [vmem:[%s946 + $0x10] sm:$0xff]
  %v950 = vld [vmem:[%s946 + $0x18] sm:$0xff]
  %s951 = scalar_lea.vmem %s4, 1
  %v952 = vld [vmem:[%s951] sm:$0x1]
  %v954 = vlaneseq
  %v955 = vshrl.u32 %v954, 7
  %v956 = vsub.s32 0, %v955
  %v957 = vrot.slane %v952, %v956
  %959 = vmatprep.subr.mxu0 0.0
  %960 = vmatpush1.msra.mxu0 %v947
  %961 = vmatprep.subr.mxu0 0.0
  %962 = vmatpush1.msra.mxu0 %v948
  %963 = vmatprep.subr.mxu0 0.0
  %964 = vmatpush1.msra.mxu0 %v949
  %965 = vmatprep.subr.mxu0 0.0
  %966 = vmatpush1.msra.mxu0 %v950
  %967 = vmatprep.subr.mxu0 0.0
  %968 = vmatpush1.msra.mxu0 0.0
  %969 = vmatprep.subr.mxu0 0.0
  %970 = vmatpush1.msra.mxu0 0.0
  %971 = vmatprep.subr.mxu0 0.0
  %972 = vmatpush1.msra.mxu0 0.0
  %973 = vmatprep.subr.mxu0 0.0
  %974 = vmatpush1.msra.mxu0 0.0
  %975 = vmatprep.subr.mxu0 0.0
  %976 = vmatpush1.msra.mxu0 0.0
  %977 = vmatprep.subr.mxu0 0.0
  %978 = vmatpush1.msra.mxu0 0.0
  %979 = vmatprep.subr.mxu0 0.0
  %980 = vmatpush1.msra.mxu0 0.0
  %981 = vmatprep.subr.mxu0 0.0
  %982 = vmatpush1.msra.mxu0 0.0
  %983 = vmatprep.subr.mxu0 0.0
  %984 = vmatpush1.msra.mxu0 0.0
  %985 = vmatprep.subr.mxu0 0.0
  %986 = vmatpush1.msra.mxu0 0.0
  %987 = vmatprep.subr.mxu0 0.0
  %988 = vmatpush1.msra.mxu0 0.0
  %989 = vmatprep.subr.mxu0 0.0
  %990 = vmatpush1.msra.mxu0 0.0
  %991 = vmatprep.subr.mxu0 0.0
  %992 = vmatpush1.msra.mxu0 0.0
  %993 = vmatprep.subr.mxu0 0.0
  %994 = vmatpush1.msra.mxu0 0.0
  %995 = vmatprep.subr.mxu0 0.0
  %996 = vmatpush1.msra.mxu0 0.0
  %997 = vmatprep.subr.mxu0 0.0
  %998 = vmatpush1.msra.mxu0 0.0
  %999 = vmatprep.subr.mxu0 0.0
  %1000 = vmatpush1.msra.mxu0 0.0
  %1001 = vmatprep.subr.mxu0 0.0
  %1002 = vmatpush1.msra.mxu0 0.0
  %1003 = vmatprep.subr.mxu0 0.0
  %1004 = vmatpush1.msra.mxu0 0.0
  %1005 = vmatprep.subr.mxu0 0.0
  %1006 = vmatpush1.msra.mxu0 0.0
  %1007 = vmatprep.subr.mxu0 0.0
  %1008 = vmatpush1.msra.mxu0 0.0
  %1009 = vmatprep.subr.mxu0 0.0
  %1010 = vmatpush1.msra.mxu0 0.0
  %1011 = vmatprep.subr.mxu0 0.0
  %1012 = vmatpush1.msra.mxu0 0.0
  %1013 = vmatprep.subr.mxu0 0.0
  %1014 = vmatpush1.msra.mxu0 0.0
  %1015 = vmatprep.subr.mxu0 0.0
  %1016 = vmatpush1.msra.mxu0 0.0
  %1017 = vmatprep.subr.mxu0 0.0
  %1018 = vmatpush1.msra.mxu0 0.0
  %1019 = vmatprep.subr.mxu0 0.0
  %1020 = vmatpush1.msra.mxu0 0.0
  %1021 = vmatprep.subr.mxu0 0.0
  %1022 = vmatpush1.msra.mxu0 0.0
  %1023 = vmatprep.mubr.f32.mxu0 0.0
  %1024 = vmatmul.mubr.f32.gmra.mrb[0].mxu0 %v394
  %v1025 = vpop.f32.mrb[0].mxu0
  %v1026 = vadd.f32 %v957, %v1025
  %v1027 = vpop.f32.mrb[0].mxu0
  %1028 = vmatprep.mubr.f32.mxu0 0.0
  %1029 = vmatmul.mubr.f32.gmra.mrb[0].mxu0 %v397
  %v1030 = vpop.f32.mrb[0].mxu0
  %v1031 = vadd.f32 %v957, %v1030
  %v1032 = vpop.f32.mrb[0].mxu0
  %1033 = vmatprep.mubr.f32.mxu0 0.0
  %1034 = vmatmul.mubr.f32.gmra.mrb[0].mxu0 %v400
  %v1035 = vpop.f32.mrb[0].mxu0
  %v1036 = vadd.f32 %v957, %v1035
  %v1037 = vpop.f32.mrb[0].mxu0
  %1038 = vmatprep.mubr.f32.mxu0 0.0
  %1039 = vmatmul.mubr.f32.gmra.mrb[0].mxu0 %v403
  %v1040 = vpop.f32.mrb[0].mxu0
  %v1041 = vadd.f32 %v957, %v1040
  %v1042 = vpop.f32.mrb[0].mxu0
  %1043 = vdwg.mxu0
  %s1044 = scalar_lea.vmem %s3, 288
  %v1045 = vld [vmem:[%s1044] sm:$0xff]
  %v1046 = vld [vmem:[%s1044 + $0x8] sm:$0xff]
  %v1047 = vld [vmem:[%s1044 + $0x10] sm:$0xff]
  %v1048 = vld [vmem:[%s1044 + $0x18] sm:$0xff]
  %s1049 = scalar_lea.vmem %s4, 9
  %v1050 = vld [vmem:[%s1049] sm:$0x1]
  %v1052 = vlaneseq
  %v1053 = vshrl.u32 %v1052, 7
  %v1054 = vsub.s32 0, %v1053
  %v1055 = vrot.slane %v1050, %v1054
  %1057 = vmatprep.subr.mxu0 0.0
  %1058 = vmatpush1.msra.mxu0 %v1045
  %1059 = vmatprep.subr.mxu0 0.0
  %1060 = vmatpush1.msra.mxu0 %v1046
  %1061 = vmatprep.subr.mxu0 0.0
  %1062 = vmatpush1.msra.mxu0 %v1047
  %1063 = vmatprep.subr.mxu0 0.0
  %1064 = vmatpush1.msra.mxu0 %v1048
  %1065 = vmatprep.subr.mxu0 0.0
  %1066 = vmatpush1.msra.mxu0 0.0
  %1067 = vmatprep.subr.mxu0 0.0
  %1068 = vmatpush1.msra.mxu0 0.0
  %1069 = vmatprep.subr.mxu0 0.0
  %1070 = vmatpush1.msra.mxu0 0.0
  %1071 = vmatprep.subr.mxu0 0.0
  %1072 = vmatpush1.msra.mxu0 0.0
  %1073 = vmatprep.subr.mxu0 0.0
  %1074 = vmatpush1.msra.mxu0 0.0
  %1075 = vmatprep.subr.mxu0 0.0
  %1076 = vmatpush1.msra.mxu0 0.0
  %1077 = vmatprep.subr.mxu0 0.0
  %1078 = vmatpush1.msra.mxu0 0.0
  %1079 = vmatprep.subr.mxu0 0.0
  %1080 = vmatpush1.msra.mxu0 0.0
  %1081 = vmatprep.subr.mxu0 0.0
  %1082 = vmatpush1.msra.mxu0 0.0
  %1083 = vmatprep.subr.mxu0 0.0
  %1084 = vmatpush1.msra.mxu0 0.0
  %1085 = vmatprep.subr.mxu0 0.0
  %1086 = vmatpush1.msra.mxu0 0.0
  %1087 = vmatprep.subr.mxu0 0.0
  %1088 = vmatpush1.msra.mxu0 0.0
  %1089 = vmatprep.subr.mxu0 0.0
  %1090 = vmatpush1.msra.mxu0 0.0
  %1091 = vmatprep.subr.mxu0 0.0
  %1092 = vmatpush1.msra.mxu0 0.0
  %1093 = vmatprep.subr.mxu0 0.0
  %1094 = vmatpush1.msra.mxu0 0.0
  %1095 = vmatprep.subr.mxu0 0.0
  %1096 = vmatpush1.msra.mxu0 0.0
  %1097 = vmatprep.subr.mxu0 0.0
  %1098 = vmatpush1.msra.mxu0 0.0
  %1099 = vmatprep.subr.mxu0 0.0
  %1100 = vmatpush1.msra.mxu0 0.0
  %1101 = vmatprep.subr.mxu0 0.0
  %1102 = vmatpush1.msra.mxu0 0.0
  %1103 = vmatprep.subr.mxu0 0.0
  %1104 = vmatpush1.msra.mxu0 0.0
  %1105 = vmatprep.subr.mxu0 0.0
  %1106 = vmatpush1.msra.mxu0 0.0
  %1107 = vmatprep.subr.mxu0 0.0
  %1108 = vmatpush1.msra.mxu0 0.0
  %1109 = vmatprep.subr.mxu0 0.0
  %1110 = vmatpush1.msra.mxu0 0.0
  %1111 = vmatprep.subr.mxu0 0.0
  %1112 = vmatpush1.msra.mxu0 0.0
  %1113 = vmatprep.subr.mxu0 0.0
  %1114 = vmatpush1.msra.mxu0 0.0
  %1115 = vmatprep.subr.mxu0 0.0
  %1116 = vmatpush1.msra.mxu0 0.0
  %1117 = vmatprep.subr.mxu0 0.0
  %1118 = vmatpush1.msra.mxu0 0.0
  %1119 = vmatprep.subr.mxu0 0.0
  %1120 = vmatpush1.msra.mxu0 0.0
  %1121 = vmatprep.mubr.f32.mxu0 0.0
  %1122 = vmatmul.mubr.f32.gmra.mrb[0].mxu0 %v394
  %v1123 = vpop.f32.mrb[0].mxu0
  %v1124 = vadd.f32 %v1055, %v1123
  %v1125 = vpop.f32.mrb[0].mxu0
  %1126 = vmatprep.mubr.f32.mxu0 0.0
  %1127 = vmatmul.mubr.f32.gmra.mrb[0].mxu0 %v397
  %v1128 = vpop.f32.mrb[0].mxu0
  %v1129 = vadd.f32 %v1055, %v1128
  %v1130 = vpop.f32.mrb[0].mxu0
  %1131 = vmatprep.mubr.f32.mxu0 0.0
  %1132 = vmatmul.mubr.f32.gmra.mrb[0].mxu0 %v400
  %v1133 = vpop.f32.mrb[0].mxu0
  %v1134 = vadd.f32 %v1055, %v1133
  %v1135 = vpop.f32.mrb[0].mxu0
  %1136 = vmatprep.mubr.f32.mxu0 0.0
  %1137 = vmatmul.mubr.f32.gmra.mrb[0].mxu0 %v403
  %v1138 = vpop.f32.mrb[0].mxu0
  %v1139 = vadd.f32 %v1055, %v1138
  %v1140 = vpop.f32.mrb[0].mxu0
  %1141 = vdwg.mxu0
  %s1142 = scalar_lea.vmem %s3, 544
  %v1143 = vld [vmem:[%s1142] sm:$0xff]
  %v1144 = vld [vmem:[%s1142 + $0x8] sm:$0xff]
  %v1145 = vld [vmem:[%s1142 + $0x10] sm:$0xff]
  %v1146 = vld [vmem:[%s1142 + $0x18] sm:$0xff]
  %s1147 = scalar_lea.vmem %s4, 17
  %v1148 = vld [vmem:[%s1147] sm:$0x1]
  %v1150 = vlaneseq
  %v1151 = vshrl.u32 %v1150, 7
  %v1152 = vsub.s32 0, %v1151
  %v1153 = vrot.slane %v1148, %v1152
  %1155 = vmatprep.subr.mxu0 0.0
  %1156 = vmatpush1.msra.mxu0 %v1143
  %1157 = vmatprep.subr.mxu0 0.0
  %1158 = vmatpush1.msra.mxu0 %v1144
  %1159 = vmatprep.subr.mxu0 0.0
  %1160 = vmatpush1.msra.mxu0 %v1145
  %1161 = vmatprep.subr.mxu0 0.0
  %1162 = vmatpush1.msra.mxu0 %v1146
  %1163 = vmatprep.subr.mxu0 0.0
  %1164 = vmatpush1.msra.mxu0 0.0
  %1165 = vmatprep.subr.mxu0 0.0
  %1166 = vmatpush1.msra.mxu0 0.0
  %1167 = vmatprep.subr.mxu0 0.0
  %1168 = vmatpush1.msra.mxu0 0.0
  %1169 = vmatprep.subr.mxu0 0.0
  %1170 = vmatpush1.msra.mxu0 0.0
  %1171 = vmatprep.subr.mxu0 0.0
  %1172 = vmatpush1.msra.mxu0 0.0
  %1173 = vmatprep.subr.mxu0 0.0
  %1174 = vmatpush1.msra.mxu0 0.0
  %1175 = vmatprep.subr.mxu0 0.0
  %1176 = vmatpush1.msra.mxu0 0.0
  %1177 = vmatprep.subr.mxu0 0.0
  %1178 = vmatpush1.msra.mxu0 0.0
  %1179 = vmatprep.subr.mxu0 0.0
  %1180 = vmatpush1.msra.mxu0 0.0
  %1181 = vmatprep.subr.mxu0 0.0
  %1182 = vmatpush1.msra.mxu0 0.0
  %1183 = vmatprep.subr.mxu0 0.0
  %1184 = vmatpush1.msra.mxu0 0.0
  %1185 = vmatprep.subr.mxu0 0.0
  %1186 = vmatpush1.msra.mxu0 0.0
  %1187 = vmatprep.subr.mxu0 0.0
  %1188 = vmatpush1.msra.mxu0 0.0
  %1189 = vmatprep.subr.mxu0 0.0
  %1190 = vmatpush1.msra.mxu0 0.0
  %1191 = vmatprep.subr.mxu0 0.0
  %1192 = vmatpush1.msra.mxu0 0.0
  %1193 = vmatprep.subr.mxu0 0.0
  %1194 = vmatpush1.msra.mxu0 0.0
  %1195 = vmatprep.subr.mxu0 0.0
  %1196 = vmatpush1.msra.mxu0 0.0
  %1197 = vmatprep.subr.mxu0 0.0
  %1198 = vmatpush1.msra.mxu0 0.0
  %1199 = vmatprep.subr.mxu0 0.0
  %1200 = vmatpush1.msra.mxu0 0.0
  %1201 = vmatprep.subr.mxu0 0.0
  %1202 = vmatpush1.msra.mxu0 0.0
  %1203 = vmatprep.subr.mxu0 0.0
  %1204 = vmatpush1.msra.mxu0 0.0
  %1205 = vmatprep.subr.mxu0 0.0
  %1206 = vmatpush1.msra.mxu0 0.0
  %1207 = vmatprep.subr.mxu0 0.0
  %1208 = vmatpush1.msra.mxu0 0.0
  %1209 = vmatprep.subr.mxu0 0.0
  %1210 = vmatpush1.msra.mxu0 0.0
  %1211 = vmatprep.subr.mxu0 0.0
  %1212 = vmatpush1.msra.mxu0 0.0
  %1213 = vmatprep.subr.mxu0 0.0
  %1214 = vmatpush1.msra.mxu0 0.0
  %1215 = vmatprep.subr.mxu0 0.0
  %1216 = vmatpush1.msra.mxu0 0.0
  %1217 = vmatprep.subr.mxu0 0.0
  %1218 = vmatpush1.msra.mxu0 0.0
  %1219 = vmatprep.mubr.f32.mxu0 0.0
  %1220 = vmatmul.mubr.f32.gmra.mrb[0].mxu0 %v394
  %v1221 = vpop.f32.mrb[0].mxu0
  %v1222 = vadd.f32 %v1153, %v1221
  %v1223 = vpop.f32.mrb[0].mxu0
  %1224 = vmatprep.mubr.f32.mxu0 0.0
  %1225 = vmatmul.mubr.f32.gmra.mrb[0].mxu0 %v397
  %v1226 = vpop.f32.mrb[0].mxu0
  %v1227 = vadd.f32 %v1153, %v1226
  %v1228 = vpop.f32.mrb[0].mxu0
  %1229 = vmatprep.mubr.f32.mxu0 0.0
  %1230 = vmatmul.mubr.f32.gmra.mrb[0].mxu0 %v400
  %v1231 = vpop.f32.mrb[0].mxu0
  %v1232 = vadd.f32 %v1153, %v1231
  %v1233 = vpop.f32.mrb[0].mxu0
  %1234 = vmatprep.mubr.f32.mxu0 0.0
  %1235 = vmatmul.mubr.f32.gmra.mrb[0].mxu0 %v403
  %v1236 = vpop.f32.mrb[0].mxu0
  %v1237 = vadd.f32 %v1153, %v1236
  %v1238 = vpop.f32.mrb[0].mxu0
  %1239 = vdwg.mxu0
  %v1241 = vsel %vm686, %v1026, 0
  %v1244 = vsel %vm686, %v1031, 0
  %v1247 = vsel %vm686, %v1036, 0
  %v1250 = vsel %vm686, %v1041, 0
  %v1253 = vsel %vm686, %v1124, 0
  %v1256 = vsel %vm686, %v1129, 0
  %v1259 = vsel %vm686, %v1134, 0
  %v1262 = vsel %vm686, %v1139, 0
  %1264 = vmatprep.subr.mxu0 0.0
  %1265 = vmatpush1.xpose.msra.mxu0 %v1253
  %1266 = vmatprep.subr.mxu0 0.0
  %1267 = vmatpush1.xpose.msra.mxu0 %v1256
  %1268 = vmatprep.subr.mxu0 0.0
  %1269 = vmatpush1.xpose.msra.mxu0 %v1259
  %1270 = vmatprep.subr.mxu0 0.0
  %1271 = vmatpush1.xpose.msra.mxu0 %v1262
  %1272 = vmatprep.subr.mxu0 0.0
  %1273 = vmatpush1.xpose.msra.mxu0 0.0
  %1274 = vmatprep.subr.mxu0 0.0
  %1275 = vmatpush1.xpose.msra.mxu0 0.0
  %1276 = vmatprep.subr.mxu0 0.0
  %1277 = vmatpush1.xpose.msra.mxu0 0.0
  %1278 = vmatprep.subr.mxu0 0.0
  %1279 = vmatpush1.xpose.msra.mxu0 0.0
  %1280 = vmatprep.subr.mxu0 0.0
  %1281 = vmatpush1.xpose.msra.mxu0 0.0
  %1282 = vmatprep.subr.mxu0 0.0
  %1283 = vmatpush1.xpose.msra.mxu0 0.0
  %1284 = vmatprep.subr.mxu0 0.0
  %1285 = vmatpush1.xpose.msra.mxu0 0.0
  %1286 = vmatprep.subr.mxu0 0.0
  %1287 = vmatpush1.xpose.msra.mxu0 0.0
  %1288 = vmatprep.subr.mxu0 0.0
  %1289 = vmatpush1.xpose.msra.mxu0 0.0
  %1290 = vmatprep.subr.mxu0 0.0
  %1291 = vmatpush1.xpose.msra.mxu0 0.0
  %1292 = vmatprep.subr.mxu0 0.0
  %1293 = vmatpush1.xpose.msra.mxu0 0.0
  %1294 = vmatprep.subr.mxu0 0.0
  %1295 = vmatpush1.xpose.msra.mxu0 0.0
  %1296 = vmatprep.subr.mxu0 0.0
  %1297 = vmatpush1.xpose.msra.mxu0 0.0
  %1298 = vmatprep.subr.mxu0 0.0
  %1299 = vmatpush1.xpose.msra.mxu0 0.0
  %1300 = vmatprep.subr.mxu0 0.0
  %1301 = vmatpush1.xpose.msra.mxu0 0.0
  %1302 = vmatprep.subr.mxu0 0.0
  %1303 = vmatpush1.xpose.msra.mxu0 0.0
  %1304 = vmatprep.subr.mxu0 0.0
  %1305 = vmatpush1.xpose.msra.mxu0 0.0
  %1306 = vmatprep.subr.mxu0 0.0
  %1307 = vmatpush1.xpose.msra.mxu0 0.0
  %1308 = vmatprep.subr.mxu0 0.0
  %1309 = vmatpush1.xpose.msra.mxu0 0.0
  %1310 = vmatprep.subr.mxu0 0.0
  %1311 = vmatpush1.xpose.msra.mxu0 0.0
  %1312 = vmatprep.subr.mxu0 0.0
  %1313 = vmatpush1.xpose.msra.mxu0 0.0
  %1314 = vmatprep.subr.mxu0 0.0
  %1315 = vmatpush1.xpose.msra.mxu0 0.0
  %1316 = vmatprep.subr.mxu0 0.0
  %1317 = vmatpush1.xpose.msra.mxu0 0.0
  %1318 = vmatprep.subr.mxu0 0.0
  %1319 = vmatpush1.xpose.msra.mxu0 0.0
  %1320 = vmatprep.subr.mxu0 0.0
  %1321 = vmatpush1.xpose.msra.mxu0 0.0
  %1322 = vmatprep.subr.mxu0 0.0
  %1323 = vmatpush1.xpose.msra.mxu0 0.0
  %1324 = vmatprep.subr.mxu0 0.0
  %1325 = vmatpush1.xpose.msra.mxu0 0.0
  %1326 = vmatprep.subr.mxu0 0.0
  %1327 = vmatpush1.xpose.msra.mxu0 0.0
  %1328 = vmatprep.mubr.f32.mxu0 0.0
  %1329 = vmatmul.mubr.f32.gmra.mrb[0].mxu0 %v1241
  %v1330 = vpop.f32.mrb[0].mxu0
  %v1331 = vadd.f32 0.0, %v1330
  %v1332 = vpop.f32.mrb[0].mxu0
  %1333 = vmatprep.mubr.f32.mxu0 0.0
  %1334 = vmatmul.mubr.f32.gmra.mrb[0].mxu0 %v1244
  %v1335 = vpop.f32.mrb[0].mxu0
  %v1336 = vadd.f32 0.0, %v1335
  %v1337 = vpop.f32.mrb[0].mxu0
  %1338 = vmatprep.mubr.f32.mxu0 0.0
  %1339 = vmatmul.mubr.f32.gmra.mrb[0].mxu0 %v1247
  %v1340 = vpop.f32.mrb[0].mxu0
  %v1341 = vadd.f32 0.0, %v1340
  %v1342 = vpop.f32.mrb[0].mxu0
  %1343 = vmatprep.mubr.f32.mxu0 0.0
  %1344 = vmatmul.mubr.f32.gmra.mrb[0].mxu0 %v1250
  %v1345 = vpop.f32.mrb[0].mxu0
  %v1346 = vadd.f32 0.0, %v1345
  %v1347 = vpop.f32.mrb[0].mxu0
  %1348 = vdwg.mxu0
  %v1349 = vmul.f32 %v1331, 0.35355338
  %v1350 = vmul.f32 %v1336, 0.35355338
  %v1351 = vmul.f32 %v1341, 0.35355338
  %v1352 = vmul.f32 %v1346, 0.35355338
  %v1353 = vadd.f32 %v1349, %v293
  %v1354 = vadd.f32 %v1350, %v294
  %v1355 = vadd.f32 %v1351, %v295
  %v1356 = vadd.f32 %v1352, %v296
  %v1357 = vsel %vm308, %v1353, -inf
  %1358 = vmax.xlane.f32.xlu0 %v1357
  %v1359 = vpop.xlane.xlu0 %1358
  %v1360 = vsel %vm308, %v1354, -inf
  %1361 = vmax.xlane.f32.xlu0 %v1360
  %v1362 = vpop.xlane.xlu0 %1361
  %v1363 = vsel %vm308, %v1355, -inf
  %1364 = vmax.xlane.f32.xlu0 %v1363
  %v1365 = vpop.xlane.xlu0 %1364
  %v1366 = vsel %vm308, %v1356, -inf
  %1367 = vmax.xlane.f32.xlu0 %v1366
  %v1368 = vpop.xlane.xlu0 %1367
  %v1369 = vsub.f32 %v1353, %v1359
  %v1370 = vsub.f32 %v1354, %v1362
  %v1371 = vsub.f32 %v1355, %v1365
  %v1372 = vsub.f32 %v1356, %v1368
  %v1373 = vmul.f32 %v1369, 1.442695
  %v1374 = vpow.pop %v1373
  %v1375 = vmul.f32 %v1370, 1.442695
  %v1376 = vpow.pop %v1375
  %v1377 = vmul.f32 %v1371, 1.442695
  %v1378 = vpow.pop %v1377
  %v1379 = vmul.f32 %v1372, 1.442695
  %v1380 = vpow.pop %v1379
  %v1381 = vsel %vm308, %v1374, 0.0
  %1382 = vadd.xlane.f32.xlu0 %v1381
  %v1383 = vpop.xlane.xlu0 %1382
  %v1384 = vsel %vm308, %v1376, 0.0
  %1385 = vadd.xlane.f32.xlu0 %v1384
  %v1386 = vpop.xlane.xlu0 %1385
  %v1387 = vsel %vm308, %v1378, 0.0
  %1388 = vadd.xlane.f32.xlu0 %v1387
  %v1389 = vpop.xlane.xlu0 %1388
  %v1390 = vsel %vm308, %v1380, 0.0
  %1391 = vadd.xlane.f32.xlu0 %v1390
  %v1392 = vpop.xlane.xlu0 %1391
  %v1393 = vrcp.pop %v1383
  %v1394 = vrcp.pop %v1386
  %v1395 = vrcp.pop %v1389
  %v1396 = vrcp.pop %v1392
  %v1397 = vmul.f32 %v1374, %v1393
  %v1398 = vmul.f32 %v1376, %v1394
  %v1399 = vmul.f32 %v1378, %v1395
  %v1400 = vmul.f32 %v1380, %v1396
  %v1402 = vsel %vm308, %v1397, 0
  %v1405 = vsel %vm308, %v1398, 0
  %v1408 = vsel %vm308, %v1399, 0
  %v1411 = vsel %vm308, %v1400, 0
  %1413 = vmatprep.subr.mxu0 0.0
  %1414 = vmatpush1.msra.mxu0 %v1222
  %1415 = vmatprep.subr.mxu0 0.0
  %1416 = vmatpush1.msra.mxu0 %v1227
  %1417 = vmatprep.subr.mxu0 0.0
  %1418 = vmatpush1.msra.mxu0 %v1232
  %1419 = vmatprep.subr.mxu0 0.0
  %1420 = vmatpush1.msra.mxu0 %v1237
  %1421 = vmatprep.subr.mxu0 0.0
  %1422 = vmatpush1.msra.mxu0 0.0
  %1423 = vmatprep.subr.mxu0 0.0
  %1424 = vmatpush1.msra.mxu0 0.0
  %1425 = vmatprep.subr.mxu0 0.0
  %1426 = vmatpush1.msra.mxu0 0.0
  %1427 = vmatprep.subr.mxu0 0.0
  %1428 = vmatpush1.msra.mxu0 0.0
  %1429 = vmatprep.subr.mxu0 0.0
  %1430 = vmatpush1.msra.mxu0 0.0
  %1431 = vmatprep.subr.mxu0 0.0
  %1432 = vmatpush1.msra.mxu0 0.0
  %1433 = vmatprep.subr.mxu0 0.0
  %1434 = vmatpush1.msra.mxu0 0.0
  %1435 = vmatprep.subr.mxu0 0.0
  %1436 = vmatpush1.msra.mxu0 0.0
  %1437 = vmatprep.subr.mxu0 0.0
  %1438 = vmatpush1.msra.mxu0 0.0
  %1439 = vmatprep.subr.mxu0 0.0
  %1440 = vmatpush1.msra.mxu0 0.0
  %1441 = vmatprep.subr.mxu0 0.0
  %1442 = vmatpush1.msra.mxu0 0.0
  %1443 = vmatprep.subr.mxu0 0.0
  %1444 = vmatpush1.msra.mxu0 0.0
  %1445 = vmatprep.subr.mxu0 0.0
  %1446 = vmatpush1.msra.mxu0 0.0
  %1447 = vmatprep.subr.mxu0 0.0
  %1448 = vmatpush1.msra.mxu0 0.0
  %1449 = vmatprep.subr.mxu0 0.0
  %1450 = vmatpush1.msra.mxu0 0.0
  %1451 = vmatprep.subr.mxu0 0.0
  %1452 = vmatpush1.msra.mxu0 0.0
  %1453 = vmatprep.subr.mxu0 0.0
  %1454 = vmatpush1.msra.mxu0 0.0
  %1455 = vmatprep.subr.mxu0 0.0
  %1456 = vmatpush1.msra.mxu0 0.0
  %1457 = vmatprep.subr.mxu0 0.0
  %1458 = vmatpush1.msra.mxu0 0.0
  %1459 = vmatprep.subr.mxu0 0.0
  %1460 = vmatpush1.msra.mxu0 0.0
  %1461 = vmatprep.subr.mxu0 0.0
  %1462 = vmatpush1.msra.mxu0 0.0
  %1463 = vmatprep.subr.mxu0 0.0
  %1464 = vmatpush1.msra.mxu0 0.0
  %1465 = vmatprep.subr.mxu0 0.0
  %1466 = vmatpush1.msra.mxu0 0.0
  %1467 = vmatprep.subr.mxu0 0.0
  %1468 = vmatpush1.msra.mxu0 0.0
  %1469 = vmatprep.subr.mxu0 0.0
  %1470 = vmatpush1.msra.mxu0 0.0
  %1471 = vmatprep.subr.mxu0 0.0
  %1472 = vmatpush1.msra.mxu0 0.0
  %1473 = vmatprep.subr.mxu0 0.0
  %1474 = vmatpush1.msra.mxu0 0.0
  %1475 = vmatprep.subr.mxu0 0.0
  %1476 = vmatpush1.msra.mxu0 0.0
  %1477 = vmatprep.mubr.f32.mxu0 0.0
  %1478 = vmatmul.mubr.f32.gmra.mrb[0].mxu0 %v1402
  %v1479 = vpop.f32.mrb[0].mxu0
  %v1480 = vadd.f32 0.0, %v1479
  %v1481 = vpop.f32.mrb[0].mxu0
  %1482 = vmatprep.mubr.f32.mxu0 0.0
  %1483 = vmatmul.mubr.f32.gmra.mrb[0].mxu0 %v1405
  %v1484 = vpop.f32.mrb[0].mxu0
  %v1485 = vadd.f32 0.0, %v1484
  %v1486 = vpop.f32.mrb[0].mxu0
  %1487 = vmatprep.mubr.f32.mxu0 0.0
  %1488 = vmatmul.mubr.f32.gmra.mrb[0].mxu0 %v1408
  %v1489 = vpop.f32.mrb[0].mxu0
  %v1490 = vadd.f32 0.0, %v1489
  %v1491 = vpop.f32.mrb[0].mxu0
  %1492 = vmatprep.mubr.f32.mxu0 0.0
  %1493 = vmatmul.mubr.f32.gmra.mrb[0].mxu0 %v1411
  %v1494 = vpop.f32.mrb[0].mxu0
  %v1495 = vadd.f32 0.0, %v1494
  %v1496 = vpop.f32.mrb[0].mxu0
  %1497 = vdwg.mxu0
  %s1498 = scalar_lea.vmem %s5, 8
  %v1499 = vld [vmem:[%s1498] sm:$0xff]
  %v1501 = vsel %vm686, %v1480, 0
  %v1504 = vsel %vm686, %v1485, 0
  %v1507 = vsel %vm686, %v1490, 0
  %v1510 = vsel %vm686, %v1495, 0
  %1512 = vmatprep.subr.mxu0 0.0
  %1513 = vmatpush1.msra.mxu0 %v1499
  %1514 = vmatprep.subr.mxu0 0.0
  %1515 = vmatpush1.msra.mxu0 0.0
  %1516 = vmatprep.subr.mxu0 0.0
  %1517 = vmatpush1.msra.mxu0 0.0
  %1518 = vmatprep.subr.mxu0 0.0
  %1519 = vmatpush1.msra.mxu0 0.0
  %1520 = vmatprep.subr.mxu0 0.0
  %1521 = vmatpush1.msra.mxu0 0.0
  %1522 = vmatprep.subr.mxu0 0.0
  %1523 = vmatpush1.msra.mxu0 0.0
  %1524 = vmatprep.subr.mxu0 0.0
  %1525 = vmatpush1.msra.mxu0 0.0
  %1526 = vmatprep.subr.mxu0 0.0
  %1527 = vmatpush1.msra.mxu0 0.0
  %1528 = vmatprep.subr.mxu0 0.0
  %1529 = vmatpush1.msra.mxu0 0.0
  %1530 = vmatprep.subr.mxu0 0.0
  %1531 = vmatpush1.msra.mxu0 0.0
  %1532 = vmatprep.subr.mxu0 0.0
  %1533 = vmatpush1.msra.mxu0 0.0
  %1534 = vmatprep.subr.mxu0 0.0
  %1535 = vmatpush1.msra.mxu0 0.0
  %1536 = vmatprep.subr.mxu0 0.0
  %1537 = vmatpush1.msra.mxu0 0.0
  %1538 = vmatprep.subr.mxu0 0.0
  %1539 = vmatpush1.msra.mxu0 0.0
  %1540 = vmatprep.subr.mxu0 0.0
  %1541 = vmatpush1.msra.mxu0 0.0
  %1542 = vmatprep.subr.mxu0 0.0
  %1543 = vmatpush1.msra.mxu0 0.0
  %1544 = vmatprep.subr.mxu0 0.0
  %1545 = vmatpush1.msra.mxu0 0.0
  %1546 = vmatprep.subr.mxu0 0.0
  %1547 = vmatpush1.msra.mxu0 0.0
  %1548 = vmatprep.subr.mxu0 0.0
  %1549 = vmatpush1.msra.mxu0 0.0
  %1550 = vmatprep.subr.mxu0 0.0
  %1551 = vmatpush1.msra.mxu0 0.0
  %1552 = vmatprep.subr.mxu0 0.0
  %1553 = vmatpush1.msra.mxu0 0.0
  %1554 = vmatprep.subr.mxu0 0.0
  %1555 = vmatpush1.msra.mxu0 0.0
  %1556 = vmatprep.subr.mxu0 0.0
  %1557 = vmatpush1.msra.mxu0 0.0
  %1558 = vmatprep.subr.mxu0 0.0
  %1559 = vmatpush1.msra.mxu0 0.0
  %1560 = vmatprep.subr.mxu0 0.0
  %1561 = vmatpush1.msra.mxu0 0.0
  %1562 = vmatprep.subr.mxu0 0.0
  %1563 = vmatpush1.msra.mxu0 0.0
  %1564 = vmatprep.subr.mxu0 0.0
  %1565 = vmatpush1.msra.mxu0 0.0
  %1566 = vmatprep.subr.mxu0 0.0
  %1567 = vmatpush1.msra.mxu0 0.0
  %1568 = vmatprep.subr.mxu0 0.0
  %1569 = vmatpush1.msra.mxu0 0.0
  %1570 = vmatprep.subr.mxu0 0.0
  %1571 = vmatpush1.msra.mxu0 0.0
  %1572 = vmatprep.subr.mxu0 0.0
  %1573 = vmatpush1.msra.mxu0 0.0
  %1574 = vmatprep.subr.mxu0 0.0
  %1575 = vmatpush1.msra.mxu0 0.0
  %1576 = vmatprep.mubr.f32.mxu0 0.0
  %1577 = vmatmul.mubr.f32.gmra.mrb[0].mxu0 %v1501
  %v1578 = vpop.f32.mrb[0].mxu0
  %v1579 = vadd.f32 0.0, %v1578
  %v1580 = vpop.f32.mrb[0].mxu0
  %1581 = vmatprep.mubr.f32.mxu0 0.0
  %1582 = vmatmul.mubr.f32.gmra.mrb[0].mxu0 %v1504
  %v1583 = vpop.f32.mrb[0].mxu0
  %v1584 = vadd.f32 0.0, %v1583
  %v1585 = vpop.f32.mrb[0].mxu0
  %1586 = vmatprep.mubr.f32.mxu0 0.0
  %1587 = vmatmul.mubr.f32.gmra.mrb[0].mxu0 %v1507
  %v1588 = vpop.f32.mrb[0].mxu0
  %v1589 = vadd.f32 0.0, %v1588
  %v1590 = vpop.f32.mrb[0].mxu0
  %1591 = vmatprep.mubr.f32.mxu0 0.0
  %1592 = vmatmul.mubr.f32.gmra.mrb[0].mxu0 %v1510
  %v1593 = vpop.f32.mrb[0].mxu0
  %v1594 = vadd.f32 0.0, %v1593
  %v1595 = vpop.f32.mrb[0].mxu0
  %1596 = vdwg.mxu0
  %v1598 = vsel %vm686, %v927, 0
  %v1601 = vsel %vm686, %v932, 0
  %v1604 = vsel %vm686, %v937, 0
  %v1607 = vsel %vm686, %v942, 0
  %1609 = vmatprep.subr.mxu0 0.0
  %1610 = vmatpush1.msra.mxu0 %v945
  %1611 = vmatprep.subr.mxu0 0.0
  %1612 = vmatpush1.msra.mxu0 0.0
  %1613 = vmatprep.subr.mxu0 0.0
  %1614 = vmatpush1.msra.mxu0 0.0
  %1615 = vmatprep.subr.mxu0 0.0
  %1616 = vmatpush1.msra.mxu0 0.0
  %1617 = vmatprep.subr.mxu0 0.0
  %1618 = vmatpush1.msra.mxu0 0.0
  %1619 = vmatprep.subr.mxu0 0.0
  %1620 = vmatpush1.msra.mxu0 0.0
  %1621 = vmatprep.subr.mxu0 0.0
  %1622 = vmatpush1.msra.mxu0 0.0
  %1623 = vmatprep.subr.mxu0 0.0
  %1624 = vmatpush1.msra.mxu0 0.0
  %1625 = vmatprep.subr.mxu0 0.0
  %1626 = vmatpush1.msra.mxu0 0.0
  %1627 = vmatprep.subr.mxu0 0.0
  %1628 = vmatpush1.msra.mxu0 0.0
  %1629 = vmatprep.subr.mxu0 0.0
  %1630 = vmatpush1.msra.mxu0 0.0
  %1631 = vmatprep.subr.mxu0 0.0
  %1632 = vmatpush1.msra.mxu0 0.0
  %1633 = vmatprep.subr.mxu0 0.0
  %1634 = vmatpush1.msra.mxu0 0.0
  %1635 = vmatprep.subr.mxu0 0.0
  %1636 = vmatpush1.msra.mxu0 0.0
  %1637 = vmatprep.subr.mxu0 0.0
  %1638 = vmatpush1.msra.mxu0 0.0
  %1639 = vmatprep.subr.mxu0 0.0
  %1640 = vmatpush1.msra.mxu0 0.0
  %1641 = vmatprep.subr.mxu0 0.0
  %1642 = vmatpush1.msra.mxu0 0.0
  %1643 = vmatprep.subr.mxu0 0.0
  %1644 = vmatpush1.msra.mxu0 0.0
  %1645 = vmatprep.subr.mxu0 0.0
  %1646 = vmatpush1.msra.mxu0 0.0
  %1647 = vmatprep.subr.mxu0 0.0
  %1648 = vmatpush1.msra.mxu0 0.0
  %1649 = vmatprep.subr.mxu0 0.0
  %1650 = vmatpush1.msra.mxu0 0.0
  %1651 = vmatprep.subr.mxu0 0.0
  %1652 = vmatpush1.msra.mxu0 0.0
  %1653 = vmatprep.subr.mxu0 0.0
  %1654 = vmatpush1.msra.mxu0 0.0
  %1655 = vmatprep.subr.mxu0 0.0
  %1656 = vmatpush1.msra.mxu0 0.0
  %1657 = vmatprep.subr.mxu0 0.0
  %1658 = vmatpush1.msra.mxu0 0.0
  %1659 = vmatprep.subr.mxu0 0.0
  %1660 = vmatpush1.msra.mxu0 0.0
  %1661 = vmatprep.subr.mxu0 0.0
  %1662 = vmatpush1.msra.mxu0 0.0
  %1663 = vmatprep.subr.mxu0 0.0
  %1664 = vmatpush1.msra.mxu0 0.0
  %1665 = vmatprep.subr.mxu0 0.0
  %1666 = vmatpush1.msra.mxu0 0.0
  %1667 = vmatprep.subr.mxu0 0.0
  %1668 = vmatpush1.msra.mxu0 0.0
  %1669 = vmatprep.subr.mxu0 0.0
  %1670 = vmatpush1.msra.mxu0 0.0
  %1671 = vmatprep.subr.mxu0 0.0
  %1672 = vmatpush1.msra.mxu0 0.0
  %1673 = vmatprep.mubr.f32.mxu0 0.0
  %1674 = vmatmul.mubr.f32.gmra.mrb[0].mxu0 %v1598
  %v1675 = vpop.f32.mrb[0].mxu0
  %v1676 = vadd.f32 %v1579, %v1675
  %v1677 = vpop.f32.mrb[0].mxu0
  %1678 = vmatprep.mubr.f32.mxu0 0.0
  %1679 = vmatmul.mubr.f32.gmra.mrb[0].mxu0 %v1601
  %v1680 = vpop.f32.mrb[0].mxu0
  %v1681 = vadd.f32 %v1584, %v1680
  %v1682 = vpop.f32.mrb[0].mxu0
  %1683 = vmatprep.mubr.f32.mxu0 0.0
  %1684 = vmatmul.mubr.f32.gmra.mrb[0].mxu0 %v1604
  %v1685 = vpop.f32.mrb[0].mxu0
  %v1686 = vadd.f32 %v1589, %v1685
  %v1687 = vpop.f32.mrb[0].mxu0
  %1688 = vmatprep.mubr.f32.mxu0 0.0
  %1689 = vmatmul.mubr.f32.gmra.mrb[0].mxu0 %v1607
  %v1690 = vpop.f32.mrb[0].mxu0
  %v1691 = vadd.f32 %v1594, %v1690
  %v1692 = vpop.f32.mrb[0].mxu0
  %1693 = vdwg.mxu0
  %s1694 = scalar_lea.vmem %s3, 64
  %v1695 = vld [vmem:[%s1694] sm:$0xff]
  %v1696 = vld [vmem:[%s1694 + $0x8] sm:$0xff]
  %v1697 = vld [vmem:[%s1694 + $0x10] sm:$0xff]
  %v1698 = vld [vmem:[%s1694 + $0x18] sm:$0xff]
  %s1699 = scalar_lea.vmem %s4, 2
  %v1700 = vld [vmem:[%s1699] sm:$0x1]
  %v1702 = vlaneseq
  %v1703 = vshrl.u32 %v1702, 7
  %v1704 = vsub.s32 0, %v1703
  %v1705 = vrot.slane %v1700, %v1704
  %1707 = vmatprep.subr.mxu0 0.0
  %1708 = vmatpush1.msra.mxu0 %v1695
  %1709 = vmatprep.subr.mxu0 0.0
  %1710 = vmatpush1.msra.mxu0 %v1696
  %1711 = vmatprep.subr.mxu0 0.0
  %1712 = vmatpush1.msra.mxu0 %v1697
  %1713 = vmatprep.subr.mxu0 0.0
  %1714 = vmatpush1.msra.mxu0 %v1698
  %1715 = vmatprep.subr.mxu0 0.0
  %1716 = vmatpush1.msra.mxu0 0.0
  %1717 = vmatprep.subr.mxu0 0.0
  %1718 = vmatpush1.msra.mxu0 0.0
  %1719 = vmatprep.subr.mxu0 0.0
  %1720 = vmatpush1.msra.mxu0 0.0
  %1721 = vmatprep.subr.mxu0 0.0
  %1722 = vmatpush1.msra.mxu0 0.0
  %1723 = vmatprep.subr.mxu0 0.0
  %1724 = vmatpush1.msra.mxu0 0.0
  %1725 = vmatprep.subr.mxu0 0.0
  %1726 = vmatpush1.msra.mxu0 0.0
  %1727 = vmatprep.subr.mxu0 0.0
  %1728 = vmatpush1.msra.mxu0 0.0
  %1729 = vmatprep.subr.mxu0 0.0
  %1730 = vmatpush1.msra.mxu0 0.0
  %1731 = vmatprep.subr.mxu0 0.0
  %1732 = vmatpush1.msra.mxu0 0.0
  %1733 = vmatprep.subr.mxu0 0.0
  %1734 = vmatpush1.msra.mxu0 0.0
  %1735 = vmatprep.subr.mxu0 0.0
  %1736 = vmatpush1.msra.mxu0 0.0
  %1737 = vmatprep.subr.mxu0 0.0
  %1738 = vmatpush1.msra.mxu0 0.0
  %1739 = vmatprep.subr.mxu0 0.0
  %1740 = vmatpush1.msra.mxu0 0.0
  %1741 = vmatprep.subr.mxu0 0.0
  %1742 = vmatpush1.msra.mxu0 0.0
  %1743 = vmatprep.subr.mxu0 0.0
  %1744 = vmatpush1.msra.mxu0 0.0
  %1745 = vmatprep.subr.mxu0 0.0
  %1746 = vmatpush1.msra.mxu0 0.0
  %1747 = vmatprep.subr.mxu0 0.0
  %1748 = vmatpush1.msra.mxu0 0.0
  %1749 = vmatprep.subr.mxu0 0.0
  %1750 = vmatpush1.msra.mxu0 0.0
  %1751 = vmatprep.subr.mxu0 0.0
  %1752 = vmatpush1.msra.mxu0 0.0
  %1753 = vmatprep.subr.mxu0 0.0
  %1754 = vmatpush1.msra.mxu0 0.0
  %1755 = vmatprep.subr.mxu0 0.0
  %1756 = vmatpush1.msra.mxu0 0.0
  %1757 = vmatprep.subr.mxu0 0.0
  %1758 = vmatpush1.msra.mxu0 0.0
  %1759 = vmatprep.subr.mxu0 0.0
  %1760 = vmatpush1.msra.mxu0 0.0
  %1761 = vmatprep.subr.mxu0 0.0
  %1762 = vmatpush1.msra.mxu0 0.0
  %1763 = vmatprep.subr.mxu0 0.0
  %1764 = vmatpush1.msra.mxu0 0.0
  %1765 = vmatprep.subr.mxu0 0.0
  %1766 = vmatpush1.msra.mxu0 0.0
  %1767 = vmatprep.subr.mxu0 0.0
  %1768 = vmatpush1.msra.mxu0 0.0
  %1769 = vmatprep.subr.mxu0 0.0
  %1770 = vmatpush1.msra.mxu0 0.0
  %1771 = vmatprep.mubr.f32.mxu0 0.0
  %1772 = vmatmul.mubr.f32.gmra.mrb[0].mxu0 %v394
  %v1773 = vpop.f32.mrb[0].mxu0
  %v1774 = vadd.f32 %v1705, %v1773
  %v1775 = vpop.f32.mrb[0].mxu0
  %1776 = vmatprep.mubr.f32.mxu0 0.0
  %1777 = vmatmul.mubr.f32.gmra.mrb[0].mxu0 %v397
  %v1778 = vpop.f32.mrb[0].mxu0
  %v1779 = vadd.f32 %v1705, %v1778
  %v1780 = vpop.f32.mrb[0].mxu0
  %1781 = vmatprep.mubr.f32.mxu0 0.0
  %1782 = vmatmul.mubr.f32.gmra.mrb[0].mxu0 %v400
  %v1783 = vpop.f32.mrb[0].mxu0
  %v1784 = vadd.f32 %v1705, %v1783
  %v1785 = vpop.f32.mrb[0].mxu0
  %1786 = vmatprep.mubr.f32.mxu0 0.0
  %1787 = vmatmul.mubr.f32.gmra.mrb[0].mxu0 %v403
  %v1788 = vpop.f32.mrb[0].mxu0
  %v1789 = vadd.f32 %v1705, %v1788
  %v1790 = vpop.f32.mrb[0].mxu0
  %1791 = vdwg.mxu0
  %s1792 = scalar_lea.vmem %s3, 320
  %v1793 = vld [vmem:[%s1792] sm:$0xff]
  %v1794 = vld [vmem:[%s1792 + $0x8] sm:$0xff]
  %v1795 = vld [vmem:[%s1792 + $0x10] sm:$0xff]
  %v1796 = vld [vmem:[%s1792 + $0x18] sm:$0xff]
  %s1797 = scalar_lea.vmem %s4, 10
  %v1798 = vld [vmem:[%s1797] sm:$0x1]
  %v1800 = vlaneseq
  %v1801 = vshrl.u32 %v1800, 7
  %v1802 = vsub.s32 0, %v1801
  %v1803 = vrot.slane %v1798, %v1802
  %1805 = vmatprep.subr.mxu0 0.0
  %1806 = vmatpush1.msra.mxu0 %v1793
  %1807 = vmatprep.subr.mxu0 0.0
  %1808 = vmatpush1.msra.mxu0 %v1794
  %1809 = vmatprep.subr.mxu0 0.0
  %1810 = vmatpush1.msra.mxu0 %v1795
  %1811 = vmatprep.subr.mxu0 0.0
  %1812 = vmatpush1.msra.mxu0 %v1796
  %1813 = vmatprep.subr.mxu0 0.0
  %1814 = vmatpush1.msra.mxu0 0.0
  %1815 = vmatprep.subr.mxu0 0.0
  %1816 = vmatpush1.msra.mxu0 0.0
  %1817 = vmatprep.subr.mxu0 0.0
  %1818 = vmatpush1.msra.mxu0 0.0
  %1819 = vmatprep.subr.mxu0 0.0
  %1820 = vmatpush1.msra.mxu0 0.0
  %1821 = vmatprep.subr.mxu0 0.0
  %1822 = vmatpush1.msra.mxu0 0.0
  %1823 = vmatprep.subr.mxu0 0.0
  %1824 = vmatpush1.msra.mxu0 0.0
  %1825 = vmatprep.subr.mxu0 0.0
  %1826 = vmatpush1.msra.mxu0 0.0
  %1827 = vmatprep.subr.mxu0 0.0
  %1828 = vmatpush1.msra.mxu0 0.0
  %1829 = vmatprep.subr.mxu0 0.0
  %1830 = vmatpush1.msra.mxu0 0.0
  %1831 = vmatprep.subr.mxu0 0.0
  %1832 = vmatpush1.msra.mxu0 0.0
  %1833 = vmatprep.subr.mxu0 0.0
  %1834 = vmatpush1.msra.mxu0 0.0
  %1835 = vmatprep.subr.mxu0 0.0
  %1836 = vmatpush1.msra.mxu0 0.0
  %1837 = vmatprep.subr.mxu0 0.0
  %1838 = vmatpush1.msra.mxu0 0.0
  %1839 = vmatprep.subr.mxu0 0.0
  %1840 = vmatpush1.msra.mxu0 0.0
  %1841 = vmatprep.subr.mxu0 0.0
  %1842 = vmatpush1.msra.mxu0 0.0
  %1843 = vmatprep.subr.mxu0 0.0
  %1844 = vmatpush1.msra.mxu0 0.0
  %1845 = vmatprep.subr.mxu0 0.0
  %1846 = vmatpush1.msra.mxu0 0.0
  %1847 = vmatprep.subr.mxu0 0.0
  %1848 = vmatpush1.msra.mxu0 0.0
  %1849 = vmatprep.subr.mxu0 0.0
  %1850 = vmatpush1.msra.mxu0 0.0
  %1851 = vmatprep.subr.mxu0 0.0
  %1852 = vmatpush1.msra.mxu0 0.0
  %1853 = vmatprep.subr.mxu0 0.0
  %1854 = vmatpush1.msra.mxu0 0.0
  %1855 = vmatprep.subr.mxu0 0.0
  %1856 = vmatpush1.msra.mxu0 0.0
  %1857 = vmatprep.subr.mxu0 0.0
  %1858 = vmatpush1.msra.mxu0 0.0
  %1859 = vmatprep.subr.mxu0 0.0
  %1860 = vmatpush1.msra.mxu0 0.0
  %1861 = vmatprep.subr.mxu0 0.0
  %1862 = vmatpush1.msra.mxu0 0.0
  %1863 = vmatprep.subr.mxu0 0.0
  %1864 = vmatpush1.msra.mxu0 0.0
  %1865 = vmatprep.subr.mxu0 0.0
  %1866 = vmatpush1.msra.mxu0 0.0
  %1867 = vmatprep.subr.mxu0 0.0
  %1868 = vmatpush1.msra.mxu0 0.0
  %1869 = vmatprep.mubr.f32.mxu0 0.0
  %1870 = vmatmul.mubr.f32.gmra.mrb[0].mxu0 %v394
  %v1871 = vpop.f32.mrb[0].mxu0
  %v1872 = vadd.f32 %v1803, %v1871
  %v1873 = vpop.f32.mrb[0].mxu0
  %1874 = vmatprep.mubr.f32.mxu0 0.0
  %1875 = vmatmul.mubr.f32.gmra.mrb[0].mxu0 %v397
  %v1876 = vpop.f32.mrb[0].mxu0
  %v1877 = vadd.f32 %v1803, %v1876
  %v1878 = vpop.f32.mrb[0].mxu0
  %1879 = vmatprep.mubr.f32.mxu0 0.0
  %1880 = vmatmul.mubr.f32.gmra.mrb[0].mxu0 %v400
  %v1881 = vpop.f32.mrb[0].mxu0
  %v1882 = vadd.f32 %v1803, %v1881
  %v1883 = vpop.f32.mrb[0].mxu0
  %1884 = vmatprep.mubr.f32.mxu0 0.0
  %1885 = vmatmul.mubr.f32.gmra.mrb[0].mxu0 %v403
  %v1886 = vpop.f32.mrb[0].mxu0
  %v1887 = vadd.f32 %v1803, %v1886
  %v1888 = vpop.f32.mrb[0].mxu0
  %1889 = vdwg.mxu0
  %s1890 = scalar_lea.vmem %s3, 576
  %v1891 = vld [vmem:[%s1890] sm:$0xff]
  %v1892 = vld [vmem:[%s1890 + $0x8] sm:$0xff]
  %v1893 = vld [vmem:[%s1890 + $0x10] sm:$0xff]
  %v1894 = vld [vmem:[%s1890 + $0x18] sm:$0xff]
  %s1895 = scalar_lea.vmem %s4, 18
  %v1896 = vld [vmem:[%s1895] sm:$0x1]
  %v1898 = vlaneseq
  %v1899 = vshrl.u32 %v1898, 7
  %v1900 = vsub.s32 0, %v1899
  %v1901 = vrot.slane %v1896, %v1900
  %1903 = vmatprep.subr.mxu0 0.0
  %1904 = vmatpush1.msra.mxu0 %v1891
  %1905 = vmatprep.subr.mxu0 0.0
  %1906 = vmatpush1.msra.mxu0 %v1892
  %1907 = vmatprep.subr.mxu0 0.0
  %1908 = vmatpush1.msra.mxu0 %v1893
  %1909 = vmatprep.subr.mxu0 0.0
  %1910 = vmatpush1.msra.mxu0 %v1894
  %1911 = vmatprep.subr.mxu0 0.0
  %1912 = vmatpush1.msra.mxu0 0.0
  %1913 = vmatprep.subr.mxu0 0.0
  %1914 = vmatpush1.msra.mxu0 0.0
  %1915 = vmatprep.subr.mxu0 0.0
  %1916 = vmatpush1.msra.mxu0 0.0
  %1917 = vmatprep.subr.mxu0 0.0
  %1918 = vmatpush1.msra.mxu0 0.0
  %1919 = vmatprep.subr.mxu0 0.0
  %1920 = vmatpush1.msra.mxu0 0.0
  %1921 = vmatprep.subr.mxu0 0.0
  %1922 = vmatpush1.msra.mxu0 0.0
  %1923 = vmatprep.subr.mxu0 0.0
  %1924 = vmatpush1.msra.mxu0 0.0
  %1925 = vmatprep.subr.mxu0 0.0
  %1926 = vmatpush1.msra.mxu0 0.0
  %1927 = vmatprep.subr.mxu0 0.0
  %1928 = vmatpush1.msra.mxu0 0.0
  %1929 = vmatprep.subr.mxu0 0.0
  %1930 = vmatpush1.msra.mxu0 0.0
  %1931 = vmatprep.subr.mxu0 0.0
  %1932 = vmatpush1.msra.mxu0 0.0
  %1933 = vmatprep.subr.mxu0 0.0
  %1934 = vmatpush1.msra.mxu0 0.0
  %1935 = vmatprep.subr.mxu0 0.0
  %1936 = vmatpush1.msra.mxu0 0.0
  %1937 = vmatprep.subr.mxu0 0.0
  %1938 = vmatpush1.msra.mxu0 0.0
  %1939 = vmatprep.subr.mxu0 0.0
  %1940 = vmatpush1.msra.mxu0 0.0
  %1941 = vmatprep.subr.mxu0 0.0
  %1942 = vmatpush1.msra.mxu0 0.0
  %1943 = vmatprep.subr.mxu0 0.0
  %1944 = vmatpush1.msra.mxu0 0.0
  %1945 = vmatprep.subr.mxu0 0.0
  %1946 = vmatpush1.msra.mxu0 0.0
  %1947 = vmatprep.subr.mxu0 0.0
  %1948 = vmatpush1.msra.mxu0 0.0
  %1949 = vmatprep.subr.mxu0 0.0
  %1950 = vmatpush1.msra.mxu0 0.0
  %1951 = vmatprep.subr.mxu0 0.0
  %1952 = vmatpush1.msra.mxu0 0.0
  %1953 = vmatprep.subr.mxu0 0.0
  %1954 = vmatpush1.msra.mxu0 0.0
  %1955 = vmatprep.subr.mxu0 0.0
  %1956 = vmatpush1.msra.mxu0 0.0
  %1957 = vmatprep.subr.mxu0 0.0
  %1958 = vmatpush1.msra.mxu0 0.0
  %1959 = vmatprep.subr.mxu0 0.0
  %1960 = vmatpush1.msra.mxu0 0.0
  %1961 = vmatprep.subr.mxu0 0.0
  %1962 = vmatpush1.msra.mxu0 0.0
  %1963 = vmatprep.subr.mxu0 0.0
  %1964 = vmatpush1.msra.mxu0 0.0
  %1965 = vmatprep.subr.mxu0 0.0
  %1966 = vmatpush1.msra.mxu0 0.0
  %1967 = vmatprep.mubr.f32.mxu0 0.0
  %1968 = vmatmul.mubr.f32.gmra.mrb[0].mxu0 %v394
  %v1969 = vpop.f32.mrb[0].mxu0
  %v1970 = vadd.f32 %v1901, %v1969
  %v1971 = vpop.f32.mrb[0].mxu0
  %1972 = vmatprep.mubr.f32.mxu0 0.0
  %1973 = vmatmul.mubr.f32.gmra.mrb[0].mxu0 %v397
  %v1974 = vpop.f32.mrb[0].mxu0
  %v1975 = vadd.f32 %v1901, %v1974
  %v1976 = vpop.f32.mrb[0].mxu0
  %1977 = vmatprep.mubr.f32.mxu0 0.0
  %1978 = vmatmul.mubr.f32.gmra.mrb[0].mxu0 %v400
  %v1979 = vpop.f32.mrb[0].mxu0
  %v1980 = vadd.f32 %v1901, %v1979
  %v1981 = vpop.f32.mrb[0].mxu0
  %1982 = vmatprep.mubr.f32.mxu0 0.0
  %1983 = vmatmul.mubr.f32.gmra.mrb[0].mxu0 %v403
  %v1984 = vpop.f32.mrb[0].mxu0
  %v1985 = vadd.f32 %v1901, %v1984
  %v1986 = vpop.f32.mrb[0].mxu0
  %1987 = vdwg.mxu0
  %v1989 = vsel %vm686, %v1774, 0
  %v1992 = vsel %vm686, %v1779, 0
  %v1995 = vsel %vm686, %v1784, 0
  %v1998 = vsel %vm686, %v1789, 0
  %v2001 = vsel %vm686, %v1872, 0
  %v2004 = vsel %vm686, %v1877, 0
  %v2007 = vsel %vm686, %v1882, 0
  %v2010 = vsel %vm686, %v1887, 0
  %2012 = vmatprep.subr.mxu0 0.0
  %2013 = vmatpush1.xpose.msra.mxu0 %v2001
  %2014 = vmatprep.subr.mxu0 0.0
  %2015 = vmatpush1.xpose.msra.mxu0 %v2004
  %2016 = vmatprep.subr.mxu0 0.0
  %2017 = vmatpush1.xpose.msra.mxu0 %v2007
  %2018 = vmatprep.subr.mxu0 0.0
  %2019 = vmatpush1.xpose.msra.mxu0 %v2010
  %2020 = vmatprep.subr.mxu0 0.0
  %2021 = vmatpush1.xpose.msra.mxu0 0.0
  %2022 = vmatprep.subr.mxu0 0.0
  %2023 = vmatpush1.xpose.msra.mxu0 0.0
  %2024 = vmatprep.subr.mxu0 0.0
  %2025 = vmatpush1.xpose.msra.mxu0 0.0
  %2026 = vmatprep.subr.mxu0 0.0
  %2027 = vmatpush1.xpose.msra.mxu0 0.0
  %2028 = vmatprep.subr.mxu0 0.0
  %2029 = vmatpush1.xpose.msra.mxu0 0.0
  %2030 = vmatprep.subr.mxu0 0.0
  %2031 = vmatpush1.xpose.msra.mxu0 0.0
  %2032 = vmatprep.subr.mxu0 0.0
  %2033 = vmatpush1.xpose.msra.mxu0 0.0
  %2034 = vmatprep.subr.mxu0 0.0
  %2035 = vmatpush1.xpose.msra.mxu0 0.0
  %2036 = vmatprep.subr.mxu0 0.0
  %2037 = vmatpush1.xpose.msra.mxu0 0.0
  %2038 = vmatprep.subr.mxu0 0.0
  %2039 = vmatpush1.xpose.msra.mxu0 0.0
  %2040 = vmatprep.subr.mxu0 0.0
  %2041 = vmatpush1.xpose.msra.mxu0 0.0
  %2042 = vmatprep.subr.mxu0 0.0
  %2043 = vmatpush1.xpose.msra.mxu0 0.0
  %2044 = vmatprep.subr.mxu0 0.0
  %2045 = vmatpush1.xpose.msra.mxu0 0.0
  %2046 = vmatprep.subr.mxu0 0.0
  %2047 = vmatpush1.xpose.msra.mxu0 0.0
  %2048 = vmatprep.subr.mxu0 0.0
  %2049 = vmatpush1.xpose.msra.mxu0 0.0
  %2050 = vmatprep.subr.mxu0 0.0
  %2051 = vmatpush1.xpose.msra.mxu0 0.0
  %2052 = vmatprep.subr.mxu0 0.0
  %2053 = vmatpush1.xpose.msra.mxu0 0.0
  %2054 = vmatprep.subr.mxu0 0.0
  %2055 = vmatpush1.xpose.msra.mxu0 0.0
  %2056 = vmatprep.subr.mxu0 0.0
  %2057 = vmatpush1.xpose.msra.mxu0 0.0
  %2058 = vmatprep.subr.mxu0 0.0
  %2059 = vmatpush1.xpose.msra.mxu0 0.0
  %2060 = vmatprep.subr.mxu0 0.0
  %2061 = vmatpush1.xpose.msra.mxu0 0.0
  %2062 = vmatprep.subr.mxu0 0.0
  %2063 = vmatpush1.xpose.msra.mxu0 0.0
  %2064 = vmatprep.subr.mxu0 0.0
  %2065 = vmatpush1.xpose.msra.mxu0 0.0
  %2066 = vmatprep.subr.mxu0 0.0
  %2067 = vmatpush1.xpose.msra.mxu0 0.0
  %2068 = vmatprep.subr.mxu0 0.0
  %2069 = vmatpush1.xpose.msra.mxu0 0.0
  %2070 = vmatprep.subr.mxu0 0.0
  %2071 = vmatpush1.xpose.msra.mxu0 0.0
  %2072 = vmatprep.subr.mxu0 0.0
  %2073 = vmatpush1.xpose.msra.mxu0 0.0
  %2074 = vmatprep.subr.mxu0 0.0
  %2075 = vmatpush1.xpose.msra.mxu0 0.0
  %2076 = vmatprep.mubr.f32.mxu0 0.0
  %2077 = vmatmul.mubr.f32.gmra.mrb[0].mxu0 %v1989
  %v2078 = vpop.f32.mrb[0].mxu0
  %v2079 = vadd.f32 0.0, %v2078
  %v2080 = vpop.f32.mrb[0].mxu0
  %2081 = vmatprep.mubr.f32.mxu0 0.0
  %2082 = vmatmul.mubr.f32.gmra.mrb[0].mxu0 %v1992
  %v2083 = vpop.f32.mrb[0].mxu0
  %v2084 = vadd.f32 0.0, %v2083
  %v2085 = vpop.f32.mrb[0].mxu0
  %2086 = vmatprep.mubr.f32.mxu0 0.0
  %2087 = vmatmul.mubr.f32.gmra.mrb[0].mxu0 %v1995
  %v2088 = vpop.f32.mrb[0].mxu0
  %v2089 = vadd.f32 0.0, %v2088
  %v2090 = vpop.f32.mrb[0].mxu0
  %2091 = vmatprep.mubr.f32.mxu0 0.0
  %2092 = vmatmul.mubr.f32.gmra.mrb[0].mxu0 %v1998
  %v2093 = vpop.f32.mrb[0].mxu0
  %v2094 = vadd.f32 0.0, %v2093
  %v2095 = vpop.f32.mrb[0].mxu0
  %2096 = vdwg.mxu0
  %v2097 = vmul.f32 %v2079, 0.35355338
  %v2098 = vmul.f32 %v2084, 0.35355338
  %v2099 = vmul.f32 %v2089, 0.35355338
  %v2100 = vmul.f32 %v2094, 0.35355338
  %v2101 = vadd.f32 %v2097, %v293
  %v2102 = vadd.f32 %v2098, %v294
  %v2103 = vadd.f32 %v2099, %v295
  %v2104 = vadd.f32 %v2100, %v296
  %v2105 = vsel %vm308, %v2101, -inf
  %2106 = vmax.xlane.f32.xlu0 %v2105
  %v2107 = vpop.xlane.xlu0 %2106
  %v2108 = vsel %vm308, %v2102, -inf
  %2109 = vmax.xlane.f32.xlu0 %v2108
  %v2110 = vpop.xlane.xlu0 %2109
  %v2111 = vsel %vm308, %v2103, -inf
  %2112 = vmax.xlane.f32.xlu0 %v2111
  %v2113 = vpop.xlane.xlu0 %2112
  %v2114 = vsel %vm308, %v2104, -inf
  %2115 = vmax.xlane.f32.xlu0 %v2114
  %v2116 = vpop.xlane.xlu0 %2115
  %v2117 = vsub.f32 %v2101, %v2107
  %v2118 = vsub.f32 %v2102, %v2110
  %v2119 = vsub.f32 %v2103, %v2113
  %v2120 = vsub.f32 %v2104, %v2116
  %v2121 = vmul.f32 %v2117, 1.442695
  %v2122 = vpow.pop %v2121
  %v2123 = vmul.f32 %v2118, 1.442695
  %v2124 = vpow.pop %v2123
  %v2125 = vmul.f32 %v2119, 1.442695
  %v2126 = vpow.pop %v2125
  %v2127 = vmul.f32 %v2120, 1.442695
  %v2128 = vpow.pop %v2127
  %v2129 = vsel %vm308, %v2122, 0.0
  %2130 = vadd.xlane.f32.xlu0 %v2129
  %v2131 = vpop.xlane.xlu0 %2130
  %v2132 = vsel %vm308, %v2124, 0.0
  %2133 = vadd.xlane.f32.xlu0 %v2132
  %v2134 = vpop.xlane.xlu0 %2133
  %v2135 = vsel %vm308, %v2126, 0.0
  %2136 = vadd.xlane.f32.xlu0 %v2135
  %v2137 = vpop.xlane.xlu0 %2136
  %v2138 = vsel %vm308, %v2128, 0.0
  %2139 = vadd.xlane.f32.xlu0 %v2138
  %v2140 = vpop.xlane.xlu0 %2139
  %v2141 = vrcp.pop %v2131
  %v2142 = vrcp.pop %v2134
  %v2143 = vrcp.pop %v2137
  %v2144 = vrcp.pop %v2140
  %v2145 = vmul.f32 %v2122, %v2141
  %v2146 = vmul.f32 %v2124, %v2142
  %v2147 = vmul.f32 %v2126, %v2143
  %v2148 = vmul.f32 %v2128, %v2144
  %v2150 = vsel %vm308, %v2145, 0
  %v2153 = vsel %vm308, %v2146, 0
  %v2156 = vsel %vm308, %v2147, 0
  %v2159 = vsel %vm308, %v2148, 0
  %2161 = vmatprep.subr.mxu0 0.0
  %2162 = vmatpush1.msra.mxu0 %v1970
  %2163 = vmatprep.subr.mxu0 0.0
  %2164 = vmatpush1.msra.mxu0 %v1975
  %2165 = vmatprep.subr.mxu0 0.0
  %2166 = vmatpush1.msra.mxu0 %v1980
  %2167 = vmatprep.subr.mxu0 0.0
  %2168 = vmatpush1.msra.mxu0 %v1985
  %2169 = vmatprep.subr.mxu0 0.0
  %2170 = vmatpush1.msra.mxu0 0.0
  %2171 = vmatprep.subr.mxu0 0.0
  %2172 = vmatpush1.msra.mxu0 0.0
  %2173 = vmatprep.subr.mxu0 0.0
  %2174 = vmatpush1.msra.mxu0 0.0
  %2175 = vmatprep.subr.mxu0 0.0
  %2176 = vmatpush1.msra.mxu0 0.0
  %2177 = vmatprep.subr.mxu0 0.0
  %2178 = vmatpush1.msra.mxu0 0.0
  %2179 = vmatprep.subr.mxu0 0.0
  %2180 = vmatpush1.msra.mxu0 0.0
  %2181 = vmatprep.subr.mxu0 0.0
  %2182 = vmatpush1.msra.mxu0 0.0
  %2183 = vmatprep.subr.mxu0 0.0
  %2184 = vmatpush1.msra.mxu0 0.0
  %2185 = vmatprep.subr.mxu0 0.0
  %2186 = vmatpush1.msra.mxu0 0.0
  %2187 = vmatprep.subr.mxu0 0.0
  %2188 = vmatpush1.msra.mxu0 0.0
  %2189 = vmatprep.subr.mxu0 0.0
  %2190 = vmatpush1.msra.mxu0 0.0
  %2191 = vmatprep.subr.mxu0 0.0
  %2192 = vmatpush1.msra.mxu0 0.0
  %2193 = vmatprep.subr.mxu0 0.0
  %2194 = vmatpush1.msra.mxu0 0.0
  %2195 = vmatprep.subr.mxu0 0.0
  %2196 = vmatpush1.msra.mxu0 0.0
  %2197 = vmatprep.subr.mxu0 0.0
  %2198 = vmatpush1.msra.mxu0 0.0
  %2199 = vmatprep.subr.mxu0 0.0
  %2200 = vmatpush1.msra.mxu0 0.0
  %2201 = vmatprep.subr.mxu0 0.0
  %2202 = vmatpush1.msra.mxu0 0.0
  %2203 = vmatprep.subr.mxu0 0.0
  %2204 = vmatpush1.msra.mxu0 0.0
  %2205 = vmatprep.subr.mxu0 0.0
  %2206 = vmatpush1.msra.mxu0 0.0
  %2207 = vmatprep.subr.mxu0 0.0
  %2208 = vmatpush1.msra.mxu0 0.0
  %2209 = vmatprep.subr.mxu0 0.0
  %2210 = vmatpush1.msra.mxu0 0.0
  %2211 = vmatprep.subr.mxu0 0.0
  %2212 = vmatpush1.msra.mxu0 0.0
  %2213 = vmatprep.subr.mxu0 0.0
  %2214 = vmatpush1.msra.mxu0 0.0
  %2215 = vmatprep.subr.mxu0 0.0
  %2216 = vmatpush1.msra.mxu0 0.0
  %2217 = vmatprep.subr.mxu0 0.0
  %2218 = vmatpush1.msra.mxu0 0.0
  %2219 = vmatprep.subr.mxu0 0.0
  %2220 = vmatpush1.msra.mxu0 0.0
  %2221 = vmatprep.subr.mxu0 0.0
  %2222 = vmatpush1.msra.mxu0 0.0
  %2223 = vmatprep.subr.mxu0 0.0
  %2224 = vmatpush1.msra.mxu0 0.0
  %2225 = vmatprep.mubr.f32.mxu0 0.0
  %2226 = vmatmul.mubr.f32.gmra.mrb[0].mxu0 %v2150
  %v2227 = vpop.f32.mrb[0].mxu0
  %v2228 = vadd.f32 0.0, %v2227
  %v2229 = vpop.f32.mrb[0].mxu0
  %2230 = vmatprep.mubr.f32.mxu0 0.0
  %2231 = vmatmul.mubr.f32.gmra.mrb[0].mxu0 %v2153
  %v2232 = vpop.f32.mrb[0].mxu0
  %v2233 = vadd.f32 0.0, %v2232
  %v2234 = vpop.f32.mrb[0].mxu0
  %2235 = vmatprep.mubr.f32.mxu0 0.0
  %2236 = vmatmul.mubr.f32.gmra.mrb[0].mxu0 %v2156
  %v2237 = vpop.f32.mrb[0].mxu0
  %v2238 = vadd.f32 0.0, %v2237
  %v2239 = vpop.f32.mrb[0].mxu0
  %2240 = vmatprep.mubr.f32.mxu0 0.0
  %2241 = vmatmul.mubr.f32.gmra.mrb[0].mxu0 %v2159
  %v2242 = vpop.f32.mrb[0].mxu0
  %v2243 = vadd.f32 0.0, %v2242
  %v2244 = vpop.f32.mrb[0].mxu0
  %2245 = vdwg.mxu0
  %s2246 = scalar_lea.vmem %s5, 16
  %v2247 = vld [vmem:[%s2246] sm:$0xff]
  %v2249 = vsel %vm686, %v2228, 0
  %v2252 = vsel %vm686, %v2233, 0
  %v2255 = vsel %vm686, %v2238, 0
  %v2258 = vsel %vm686, %v2243, 0
  %2260 = vmatprep.subr.mxu0 0.0
  %2261 = vmatpush1.msra.mxu0 %v2247
  %2262 = vmatprep.subr.mxu0 0.0
  %2263 = vmatpush1.msra.mxu0 0.0
  %2264 = vmatprep.subr.mxu0 0.0
  %2265 = vmatpush1.msra.mxu0 0.0
  %2266 = vmatprep.subr.mxu0 0.0
  %2267 = vmatpush1.msra.mxu0 0.0
  %2268 = vmatprep.subr.mxu0 0.0
  %2269 = vmatpush1.msra.mxu0 0.0
  %2270 = vmatprep.subr.mxu0 0.0
  %2271 = vmatpush1.msra.mxu0 0.0
  %2272 = vmatprep.subr.mxu0 0.0
  %2273 = vmatpush1.msra.mxu0 0.0
  %2274 = vmatprep.subr.mxu0 0.0
  %2275 = vmatpush1.msra.mxu0 0.0
  %2276 = vmatprep.subr.mxu0 0.0
  %2277 = vmatpush1.msra.mxu0 0.0
  %2278 = vmatprep.subr.mxu0 0.0
  %2279 = vmatpush1.msra.mxu0 0.0
  %2280 = vmatprep.subr.mxu0 0.0
  %2281 = vmatpush1.msra.mxu0 0.0
  %2282 = vmatprep.subr.mxu0 0.0
  %2283 = vmatpush1.msra.mxu0 0.0
  %2284 = vmatprep.subr.mxu0 0.0
  %2285 = vmatpush1.msra.mxu0 0.0
  %2286 = vmatprep.subr.mxu0 0.0
  %2287 = vmatpush1.msra.mxu0 0.0
  %2288 = vmatprep.subr.mxu0 0.0
  %2289 = vmatpush1.msra.mxu0 0.0
  %2290 = vmatprep.subr.mxu0 0.0
  %2291 = vmatpush1.msra.mxu0 0.0
  %2292 = vmatprep.subr.mxu0 0.0
  %2293 = vmatpush1.msra.mxu0 0.0
  %2294 = vmatprep.subr.mxu0 0.0
  %2295 = vmatpush1.msra.mxu0 0.0
  %2296 = vmatprep.subr.mxu0 0.0
  %2297 = vmatpush1.msra.mxu0 0.0
  %2298 = vmatprep.subr.mxu0 0.0
  %2299 = vmatpush1.msra.mxu0 0.0
  %2300 = vmatprep.subr.mxu0 0.0
  %2301 = vmatpush1.msra.mxu0 0.0
  %2302 = vmatprep.subr.mxu0 0.0
  %2303 = vmatpush1.msra.mxu0 0.0
  %2304 = vmatprep.subr.mxu0 0.0
  %2305 = vmatpush1.msra.mxu0 0.0
  %2306 = vmatprep.subr.mxu0 0.0
  %2307 = vmatpush1.msra.mxu0 0.0
  %2308 = vmatprep.subr.mxu0 0.0
  %2309 = vmatpush1.msra.mxu0 0.0
  %2310 = vmatprep.subr.mxu0 0.0
  %2311 = vmatpush1.msra.mxu0 0.0
  %2312 = vmatprep.subr.mxu0 0.0
  %2313 = vmatpush1.msra.mxu0 0.0
  %2314 = vmatprep.subr.mxu0 0.0
  %2315 = vmatpush1.msra.mxu0 0.0
  %2316 = vmatprep.subr.mxu0 0.0
  %2317 = vmatpush1.msra.mxu0 0.0
  %2318 = vmatprep.subr.mxu0 0.0
  %2319 = vmatpush1.msra.mxu0 0.0
  %2320 = vmatprep.subr.mxu0 0.0
  %2321 = vmatpush1.msra.mxu0 0.0
  %2322 = vmatprep.subr.mxu0 0.0
  %2323 = vmatpush1.msra.mxu0 0.0
  %2324 = vmatprep.mubr.f32.mxu0 0.0
  %2325 = vmatmul.mubr.f32.gmra.mrb[0].mxu0 %v2249
  %v2326 = vpop.f32.mrb[0].mxu0
  %v2327 = vadd.f32 0.0, %v2326
  %v2328 = vpop.f32.mrb[0].mxu0
  %2329 = vmatprep.mubr.f32.mxu0 0.0
  %2330 = vmatmul.mubr.f32.gmra.mrb[0].mxu0 %v2252
  %v2331 = vpop.f32.mrb[0].mxu0
  %v2332 = vadd.f32 0.0, %v2331
  %v2333 = vpop.f32.mrb[0].mxu0
  %2334 = vmatprep.mubr.f32.mxu0 0.0
  %2335 = vmatmul.mubr.f32.gmra.mrb[0].mxu0 %v2255
  %v2336 = vpop.f32.mrb[0].mxu0
  %v2337 = vadd.f32 0.0, %v2336
  %v2338 = vpop.f32.mrb[0].mxu0
  %2339 = vmatprep.mubr.f32.mxu0 0.0
  %2340 = vmatmul.mubr.f32.gmra.mrb[0].mxu0 %v2258
  %v2341 = vpop.f32.mrb[0].mxu0
  %v2342 = vadd.f32 0.0, %v2341
  %v2343 = vpop.f32.mrb[0].mxu0
  %2344 = vdwg.mxu0
  %v2345 = vadd.f32 %v1676, %v2327
  %v2346 = vadd.f32 %v1681, %v2332
  %v2347 = vadd.f32 %v1686, %v2337
  %v2348 = vadd.f32 %v1691, %v2342
  %s2349 = scalar_lea.vmem %s3, 96
  %v2350 = vld [vmem:[%s2349] sm:$0xff]
  %v2351 = vld [vmem:[%s2349 + $0x8] sm:$0xff]
  %v2352 = vld [vmem:[%s2349 + $0x10] sm:$0xff]
  %v2353 = vld [vmem:[%s2349 + $0x18] sm:$0xff]
  %s2354 = scalar_lea.vmem %s4, 3
  %v2355 = vld [vmem:[%s2354] sm:$0x1]
  %v2357 = vlaneseq
  %v2358 = vshrl.u32 %v2357, 7
  %v2359 = vsub.s32 0, %v2358
  %v2360 = vrot.slane %v2355, %v2359
  %2362 = vmatprep.subr.mxu0 0.0
  %2363 = vmatpush1.msra.mxu0 %v2350
  %2364 = vmatprep.subr.mxu0 0.0
  %2365 = vmatpush1.msra.mxu0 %v2351
  %2366 = vmatprep.subr.mxu0 0.0
  %2367 = vmatpush1.msra.mxu0 %v2352
  %2368 = vmatprep.subr.mxu0 0.0
  %2369 = vmatpush1.msra.mxu0 %v2353
  %2370 = vmatprep.subr.mxu0 0.0
  %2371 = vmatpush1.msra.mxu0 0.0
  %2372 = vmatprep.subr.mxu0 0.0
  %2373 = vmatpush1.msra.mxu0 0.0
  %2374 = vmatprep.subr.mxu0 0.0
  %2375 = vmatpush1.msra.mxu0 0.0
  %2376 = vmatprep.subr.mxu0 0.0
  %2377 = vmatpush1.msra.mxu0 0.0
  %2378 = vmatprep.subr.mxu0 0.0
  %2379 = vmatpush1.msra.mxu0 0.0
  %2380 = vmatprep.subr.mxu0 0.0
  %2381 = vmatpush1.msra.mxu0 0.0
  %2382 = vmatprep.subr.mxu0 0.0
  %2383 = vmatpush1.msra.mxu0 0.0
  %2384 = vmatprep.subr.mxu0 0.0
  %2385 = vmatpush1.msra.mxu0 0.0
  %2386 = vmatprep.subr.mxu0 0.0
  %2387 = vmatpush1.msra.mxu0 0.0
  %2388 = vmatprep.subr.mxu0 0.0
  %2389 = vmatpush1.msra.mxu0 0.0
  %2390 = vmatprep.subr.mxu0 0.0
  %2391 = vmatpush1.msra.mxu0 0.0
  %2392 = vmatprep.subr.mxu0 0.0
  %2393 = vmatpush1.msra.mxu0 0.0
  %2394 = vmatprep.subr.mxu0 0.0
  %2395 = vmatpush1.msra.mxu0 0.0
  %2396 = vmatprep.subr.mxu0 0.0
  %2397 = vmatpush1.msra.mxu0 0.0
  %2398 = vmatprep.subr.mxu0 0.0
  %2399 = vmatpush1.msra.mxu0 0.0
  %2400 = vmatprep.subr.mxu0 0.0
  %2401 = vmatpush1.msra.mxu0 0.0
  %2402 = vmatprep.subr.mxu0 0.0
  %2403 = vmatpush1.msra.mxu0 0.0
  %2404 = vmatprep.subr.mxu0 0.0
  %2405 = vmatpush1.msra.mxu0 0.0
  %2406 = vmatprep.subr.mxu0 0.0
  %2407 = vmatpush1.msra.mxu0 0.0
  %2408 = vmatprep.subr.mxu0 0.0
  %2409 = vmatpush1.msra.mxu0 0.0
  %2410 = vmatprep.subr.mxu0 0.0
  %2411 = vmatpush1.msra.mxu0 0.0
  %2412 = vmatprep.subr.mxu0 0.0
  %2413 = vmatpush1.msra.mxu0 0.0
  %2414 = vmatprep.subr.mxu0 0.0
  %2415 = vmatpush1.msra.mxu0 0.0
  %2416 = vmatprep.subr.mxu0 0.0
  %2417 = vmatpush1.msra.mxu0 0.0
  %2418 = vmatprep.subr.mxu0 0.0
  %2419 = vmatpush1.msra.mxu0 0.0
  %2420 = vmatprep.subr.mxu0 0.0
  %2421 = vmatpush1.msra.mxu0 0.0
  %2422 = vmatprep.subr.mxu0 0.0
  %2423 = vmatpush1.msra.mxu0 0.0
  %2424 = vmatprep.subr.mxu0 0.0
  %2425 = vmatpush1.msra.mxu0 0.0
  %2426 = vmatprep.mubr.f32.mxu0 0.0
  %2427 = vmatmul.mubr.f32.gmra.mrb[0].mxu0 %v394
  %v2428 = vpop.f32.mrb[0].mxu0
  %v2429 = vadd.f32 %v2360, %v2428
  %v2430 = vpop.f32.mrb[0].mxu0
  %2431 = vmatprep.mubr.f32.mxu0 0.0
  %2432 = vmatmul.mubr.f32.gmra.mrb[0].mxu0 %v397
  %v2433 = vpop.f32.mrb[0].mxu0
  %v2434 = vadd.f32 %v2360, %v2433
  %v2435 = vpop.f32.mrb[0].mxu0
  %2436 = vmatprep.mubr.f32.mxu0 0.0
  %2437 = vmatmul.mubr.f32.gmra.mrb[0].mxu0 %v400
  %v2438 = vpop.f32.mrb[0].mxu0
  %v2439 = vadd.f32 %v2360, %v2438
  %v2440 = vpop.f32.mrb[0].mxu0
  %2441 = vmatprep.mubr.f32.mxu0 0.0
  %2442 = vmatmul.mubr.f32.gmra.mrb[0].mxu0 %v403
  %v2443 = vpop.f32.mrb[0].mxu0
  %v2444 = vadd.f32 %v2360, %v2443
  %v2445 = vpop.f32.mrb[0].mxu0
  %2446 = vdwg.mxu0
  %s2447 = scalar_lea.vmem %s3, 352
  %v2448 = vld [vmem:[%s2447] sm:$0xff]
  %v2449 = vld [vmem:[%s2447 + $0x8] sm:$0xff]
  %v2450 = vld [vmem:[%s2447 + $0x10] sm:$0xff]
  %v2451 = vld [vmem:[%s2447 + $0x18] sm:$0xff]
  %s2452 = scalar_lea.vmem %s4, 11
  %v2453 = vld [vmem:[%s2452] sm:$0x1]
  %v2455 = vlaneseq
  %v2456 = vshrl.u32 %v2455, 7
  %v2457 = vsub.s32 0, %v2456
  %v2458 = vrot.slane %v2453, %v2457
  %2460 = vmatprep.subr.mxu0 0.0
  %2461 = vmatpush1.msra.mxu0 %v2448
  %2462 = vmatprep.subr.mxu0 0.0
  %2463 = vmatpush1.msra.mxu0 %v2449
  %2464 = vmatprep.subr.mxu0 0.0
  %2465 = vmatpush1.msra.mxu0 %v2450
  %2466 = vmatprep.subr.mxu0 0.0
  %2467 = vmatpush1.msra.mxu0 %v2451
  %2468 = vmatprep.subr.mxu0 0.0
  %2469 = vmatpush1.msra.mxu0 0.0
  %2470 = vmatprep.subr.mxu0 0.0
  %2471 = vmatpush1.msra.mxu0 0.0
  %2472 = vmatprep.subr.mxu0 0.0
  %2473 = vmatpush1.msra.mxu0 0.0
  %2474 = vmatprep.subr.mxu0 0.0
  %2475 = vmatpush1.msra.mxu0 0.0
  %2476 = vmatprep.subr.mxu0 0.0
  %2477 = vmatpush1.msra.mxu0 0.0
  %2478 = vmatprep.subr.mxu0 0.0
  %2479 = vmatpush1.msra.mxu0 0.0
  %2480 = vmatprep.subr.mxu0 0.0
  %2481 = vmatpush1.msra.mxu0 0.0
  %2482 = vmatprep.subr.mxu0 0.0
  %2483 = vmatpush1.msra.mxu0 0.0
  %2484 = vmatprep.subr.mxu0 0.0
  %2485 = vmatpush1.msra.mxu0 0.0
  %2486 = vmatprep.subr.mxu0 0.0
  %2487 = vmatpush1.msra.mxu0 0.0
  %2488 = vmatprep.subr.mxu0 0.0
  %2489 = vmatpush1.msra.mxu0 0.0
  %2490 = vmatprep.subr.mxu0 0.0
  %2491 = vmatpush1.msra.mxu0 0.0
  %2492 = vmatprep.subr.mxu0 0.0
  %2493 = vmatpush1.msra.mxu0 0.0
  %2494 = vmatprep.subr.mxu0 0.0
  %2495 = vmatpush1.msra.mxu0 0.0
  %2496 = vmatprep.subr.mxu0 0.0
  %2497 = vmatpush1.msra.mxu0 0.0
  %2498 = vmatprep.subr.mxu0 0.0
  %2499 = vmatpush1.msra.mxu0 0.0
  %2500 = vmatprep.subr.mxu0 0.0
  %2501 = vmatpush1.msra.mxu0 0.0
  %2502 = vmatprep.subr.mxu0 0.0
  %2503 = vmatpush1.msra.mxu0 0.0
  %2504 = vmatprep.subr.mxu0 0.0
  %2505 = vmatpush1.msra.mxu0 0.0
  %2506 = vmatprep.subr.mxu0 0.0
  %2507 = vmatpush1.msra.mxu0 0.0
  %2508 = vmatprep.subr.mxu0 0.0
  %2509 = vmatpush1.msra.mxu0 0.0
  %2510 = vmatprep.subr.mxu0 0.0
  %2511 = vmatpush1.msra.mxu0 0.0
  %2512 = vmatprep.subr.mxu0 0.0
  %2513 = vmatpush1.msra.mxu0 0.0
  %2514 = vmatprep.subr.mxu0 0.0
  %2515 = vmatpush1.msra.mxu0 0.0
  %2516 = vmatprep.subr.mxu0 0.0
  %2517 = vmatpush1.msra.mxu0 0.0
  %2518 = vmatprep.subr.mxu0 0.0
  %2519 = vmatpush1.msra.mxu0 0.0
  %2520 = vmatprep.subr.mxu0 0.0
  %2521 = vmatpush1.msra.mxu0 0.0
  %2522 = vmatprep.subr.mxu0 0.0
  %2523 = vmatpush1.msra.mxu0 0.0
  %2524 = vmatprep.mubr.f32.mxu0 0.0
  %2525 = vmatmul.mubr.f32.gmra.mrb[0].mxu0 %v394
  %v2526 = vpop.f32.mrb[0].mxu0
  %v2527 = vadd.f32 %v2458, %v2526
  %v2528 = vpop.f32.mrb[0].mxu0
  %2529 = vmatprep.mubr.f32.mxu0 0.0
  %2530 = vmatmul.mubr.f32.gmra.mrb[0].mxu0 %v397
  %v2531 = vpop.f32.mrb[0].mxu0
  %v2532 = vadd.f32 %v2458, %v2531
  %v2533 = vpop.f32.mrb[0].mxu0
  %2534 = vmatprep.mubr.f32.mxu0 0.0
  %2535 = vmatmul.mubr.f32.gmra.mrb[0].mxu0 %v400
  %v2536 = vpop.f32.mrb[0].mxu0
  %v2537 = vadd.f32 %v2458, %v2536
  %v2538 = vpop.f32.mrb[0].mxu0
  %2539 = vmatprep.mubr.f32.mxu0 0.0
  %2540 = vmatmul.mubr.f32.gmra.mrb[0].mxu0 %v403
  %v2541 = vpop.f32.mrb[0].mxu0
  %v2542 = vadd.f32 %v2458, %v2541
  %v2543 = vpop.f32.mrb[0].mxu0
  %2544 = vdwg.mxu0
  %s2545 = scalar_lea.vmem %s3, 608
  %v2546 = vld [vmem:[%s2545] sm:$0xff]
  %v2547 = vld [vmem:[%s2545 + $0x8] sm:$0xff]
  %v2548 = vld [vmem:[%s2545 + $0x10] sm:$0xff]
  %v2549 = vld [vmem:[%s2545 + $0x18] sm:$0xff]
  %s2550 = scalar_lea.vmem %s4, 19
  %v2551 = vld [vmem:[%s2550] sm:$0x1]
  %v2553 = vlaneseq
  %v2554 = vshrl.u32 %v2553, 7
  %v2555 = vsub.s32 0, %v2554
  %v2556 = vrot.slane %v2551, %v2555
  %2558 = vmatprep.subr.mxu0 0.0
  %2559 = vmatpush1.msra.mxu0 %v2546
  %2560 = vmatprep.subr.mxu0 0.0
  %2561 = vmatpush1.msra.mxu0 %v2547
  %2562 = vmatprep.subr.mxu0 0.0
  %2563 = vmatpush1.msra.mxu0 %v2548
  %2564 = vmatprep.subr.mxu0 0.0
  %2565 = vmatpush1.msra.mxu0 %v2549
  %2566 = vmatprep.subr.mxu0 0.0
  %2567 = vmatpush1.msra.mxu0 0.0
  %2568 = vmatprep.subr.mxu0 0.0
  %2569 = vmatpush1.msra.mxu0 0.0
  %2570 = vmatprep.subr.mxu0 0.0
  %2571 = vmatpush1.msra.mxu0 0.0
  %2572 = vmatprep.subr.mxu0 0.0
  %2573 = vmatpush1.msra.mxu0 0.0
  %2574 = vmatprep.subr.mxu0 0.0
  %2575 = vmatpush1.msra.mxu0 0.0
  %2576 = vmatprep.subr.mxu0 0.0
  %2577 = vmatpush1.msra.mxu0 0.0
  %2578 = vmatprep.subr.mxu0 0.0
  %2579 = vmatpush1.msra.mxu0 0.0
  %2580 = vmatprep.subr.mxu0 0.0
  %2581 = vmatpush1.msra.mxu0 0.0
  %2582 = vmatprep.subr.mxu0 0.0
  %2583 = vmatpush1.msra.mxu0 0.0
  %2584 = vmatprep.subr.mxu0 0.0
  %2585 = vmatpush1.msra.mxu0 0.0
  %2586 = vmatprep.subr.mxu0 0.0
  %2587 = vmatpush1.msra.mxu0 0.0
  %2588 = vmatprep.subr.mxu0 0.0
  %2589 = vmatpush1.msra.mxu0 0.0
  %2590 = vmatprep.subr.mxu0 0.0
  %2591 = vmatpush1.msra.mxu0 0.0
  %2592 = vmatprep.subr.mxu0 0.0
  %2593 = vmatpush1.msra.mxu0 0.0
  %2594 = vmatprep.subr.mxu0 0.0
  %2595 = vmatpush1.msra.mxu0 0.0
  %2596 = vmatprep.subr.mxu0 0.0
  %2597 = vmatpush1.msra.mxu0 0.0
  %2598 = vmatprep.subr.mxu0 0.0
  %2599 = vmatpush1.msra.mxu0 0.0
  %2600 = vmatprep.subr.mxu0 0.0
  %2601 = vmatpush1.msra.mxu0 0.0
  %2602 = vmatprep.subr.mxu0 0.0
  %2603 = vmatpush1.msra.mxu0 0.0
  %2604 = vmatprep.subr.mxu0 0.0
  %2605 = vmatpush1.msra.mxu0 0.0
  %2606 = vmatprep.subr.mxu0 0.0
  %2607 = vmatpush1.msra.mxu0 0.0
  %2608 = vmatprep.subr.mxu0 0.0
  %2609 = vmatpush1.msra.mxu0 0.0
  %2610 = vmatprep.subr.mxu0 0.0
  %2611 = vmatpush1.msra.mxu0 0.0
  %2612 = vmatprep.subr.mxu0 0.0
  %2613 = vmatpush1.msra.mxu0 0.0
  %2614 = vmatprep.subr.mxu0 0.0
  %2615 = vmatpush1.msra.mxu0 0.0
  %2616 = vmatprep.subr.mxu0 0.0
  %2617 = vmatpush1.msra.mxu0 0.0
  %2618 = vmatprep.subr.mxu0 0.0
  %2619 = vmatpush1.msra.mxu0 0.0
  %2620 = vmatprep.subr.mxu0 0.0
  %2621 = vmatpush1.msra.mxu0 0.0
  %2622 = vmatprep.mubr.f32.mxu0 0.0
  %2623 = vmatmul.mubr.f32.gmra.mrb[0].mxu0 %v394
  %v2624 = vpop.f32.mrb[0].mxu0
  %v2625 = vadd.f32 %v2556, %v2624
  %v2626 = vpop.f32.mrb[0].mxu0
  %2627 = vmatprep.mubr.f32.mxu0 0.0
  %2628 = vmatmul.mubr.f32.gmra.mrb[0].mxu0 %v397
  %v2629 = vpop.f32.mrb[0].mxu0
  %v2630 = vadd.f32 %v2556, %v2629
  %v2631 = vpop.f32.mrb[0].mxu0
  %2632 = vmatprep.mubr.f32.mxu0 0.0
  %2633 = vmatmul.mubr.f32.gmra.mrb[0].mxu0 %v400
  %v2634 = vpop.f32.mrb[0].mxu0
  %v2635 = vadd.f32 %v2556, %v2634
  %v2636 = vpop.f32.mrb[0].mxu0
  %2637 = vmatprep.mubr.f32.mxu0 0.0
  %2638 = vmatmul.mubr.f32.gmra.mrb[0].mxu0 %v403
  %v2639 = vpop.f32.mrb[0].mxu0
  %v2640 = vadd.f32 %v2556, %v2639
  %v2641 = vpop.f32.mrb[0].mxu0
  %2642 = vdwg.mxu0
  %v2644 = vsel %vm686, %v2429, 0
  %v2647 = vsel %vm686, %v2434, 0
  %v2650 = vsel %vm686, %v2439, 0
  %v2653 = vsel %vm686, %v2444, 0
  %v2656 = vsel %vm686, %v2527, 0
  %v2659 = vsel %vm686, %v2532, 0
  %v2662 = vsel %vm686, %v2537, 0
  %v2665 = vsel %vm686, %v2542, 0
  %2667 = vmatprep.subr.mxu0 0.0
  %2668 = vmatpush1.xpose.msra.mxu0 %v2656
  %2669 = vmatprep.subr.mxu0 0.0
  %2670 = vmatpush1.xpose.msra.mxu0 %v2659
  %2671 = vmatprep.subr.mxu0 0.0
  %2672 = vmatpush1.xpose.msra.mxu0 %v2662
  %2673 = vmatprep.subr.mxu0 0.0
  %2674 = vmatpush1.xpose.msra.mxu0 %v2665
  %2675 = vmatprep.subr.mxu0 0.0
  %2676 = vmatpush1.xpose.msra.mxu0 0.0
  %2677 = vmatprep.subr.mxu0 0.0
  %2678 = vmatpush1.xpose.msra.mxu0 0.0
  %2679 = vmatprep.subr.mxu0 0.0
  %2680 = vmatpush1.xpose.msra.mxu0 0.0
  %2681 = vmatprep.subr.mxu0 0.0
  %2682 = vmatpush1.xpose.msra.mxu0 0.0
  %2683 = vmatprep.subr.mxu0 0.0
  %2684 = vmatpush1.xpose.msra.mxu0 0.0
  %2685 = vmatprep.subr.mxu0 0.0
  %2686 = vmatpush1.xpose.msra.mxu0 0.0
  %2687 = vmatprep.subr.mxu0 0.0
  %2688 = vmatpush1.xpose.msra.mxu0 0.0
  %2689 = vmatprep.subr.mxu0 0.0
  %2690 = vmatpush1.xpose.msra.mxu0 0.0
  %2691 = vmatprep.subr.mxu0 0.0
  %2692 = vmatpush1.xpose.msra.mxu0 0.0
  %2693 = vmatprep.subr.mxu0 0.0
  %2694 = vmatpush1.xpose.msra.mxu0 0.0
  %2695 = vmatprep.subr.mxu0 0.0
  %2696 = vmatpush1.xpose.msra.mxu0 0.0
  %2697 = vmatprep.subr.mxu0 0.0
  %2698 = vmatpush1.xpose.msra.mxu0 0.0
  %2699 = vmatprep.subr.mxu0 0.0
  %2700 = vmatpush1.xpose.msra.mxu0 0.0
  %2701 = vmatprep.subr.mxu0 0.0
  %2702 = vmatpush1.xpose.msra.mxu0 0.0
  %2703 = vmatprep.subr.mxu0 0.0
  %2704 = vmatpush1.xpose.msra.mxu0 0.0
  %2705 = vmatprep.subr.mxu0 0.0
  %2706 = vmatpush1.xpose.msra.mxu0 0.0
  %2707 = vmatprep.subr.mxu0 0.0
  %2708 = vmatpush1.xpose.msra.mxu0 0.0
  %2709 = vmatprep.subr.mxu0 0.0
  %2710 = vmatpush1.xpose.msra.mxu0 0.0
  %2711 = vmatprep.subr.mxu0 0.0
  %2712 = vmatpush1.xpose.msra.mxu0 0.0
  %2713 = vmatprep.subr.mxu0 0.0
  %2714 = vmatpush1.xpose.msra.mxu0 0.0
  %2715 = vmatprep.subr.mxu0 0.0
  %2716 = vmatpush1.xpose.msra.mxu0 0.0
  %2717 = vmatprep.subr.mxu0 0.0
  %2718 = vmatpush1.xpose.msra.mxu0 0.0
  %2719 = vmatprep.subr.mxu0 0.0
  %2720 = vmatpush1.xpose.msra.mxu0 0.0
  %2721 = vmatprep.subr.mxu0 0.0
  %2722 = vmatpush1.xpose.msra.mxu0 0.0
  %2723 = vmatprep.subr.mxu0 0.0
  %2724 = vmatpush1.xpose.msra.mxu0 0.0
  %2725 = vmatprep.subr.mxu0 0.0
  %2726 = vmatpush1.xpose.msra.mxu0 0.0
  %2727 = vmatprep.subr.mxu0 0.0
  %2728 = vmatpush1.xpose.msra.mxu0 0.0
  %2729 = vmatprep.subr.mxu0 0.0
  %2730 = vmatpush1.xpose.msra.mxu0 0.0
  %2731 = vmatprep.mubr.f32.mxu0 0.0
  %2732 = vmatmul.mubr.f32.gmra.mrb[0].mxu0 %v2644
  %v2733 = vpop.f32.mrb[0].mxu0
  %v2734 = vadd.f32 0.0, %v2733
  %v2735 = vpop.f32.mrb[0].mxu0
  %2736 = vmatprep.mubr.f32.mxu0 0.0
  %2737 = vmatmul.mubr.f32.gmra.mrb[0].mxu0 %v2647
  %v2738 = vpop.f32.mrb[0].mxu0
  %v2739 = vadd.f32 0.0, %v2738
  %v2740 = vpop.f32.mrb[0].mxu0
  %2741 = vmatprep.mubr.f32.mxu0 0.0
  %2742 = vmatmul.mubr.f32.gmra.mrb[0].mxu0 %v2650
  %v2743 = vpop.f32.mrb[0].mxu0
  %v2744 = vadd.f32 0.0, %v2743
  %v2745 = vpop.f32.mrb[0].mxu0
  %2746 = vmatprep.mubr.f32.mxu0 0.0
  %2747 = vmatmul.mubr.f32.gmra.mrb[0].mxu0 %v2653
  %v2748 = vpop.f32.mrb[0].mxu0
  %v2749 = vadd.f32 0.0, %v2748
  %v2750 = vpop.f32.mrb[0].mxu0
  %2751 = vdwg.mxu0
  %v2752 = vmul.f32 %v2734, 0.35355338
  %v2753 = vmul.f32 %v2739, 0.35355338
  %v2754 = vmul.f32 %v2744, 0.35355338
  %v2755 = vmul.f32 %v2749, 0.35355338
  %v2756 = vadd.f32 %v2752, %v293
  %v2757 = vadd.f32 %v2753, %v294
  %v2758 = vadd.f32 %v2754, %v295
  %v2759 = vadd.f32 %v2755, %v296
  %v2760 = vsel %vm308, %v2756, -inf
  %2761 = vmax.xlane.f32.xlu0 %v2760
  %v2762 = vpop.xlane.xlu0 %2761
  %v2763 = vsel %vm308, %v2757, -inf
  %2764 = vmax.xlane.f32.xlu0 %v2763
  %v2765 = vpop.xlane.xlu0 %2764
  %v2766 = vsel %vm308, %v2758, -inf
  %2767 = vmax.xlane.f32.xlu0 %v2766
  %v2768 = vpop.xlane.xlu0 %2767
  %v2769 = vsel %vm308, %v2759, -inf
  %2770 = vmax.xlane.f32.xlu0 %v2769
  %v2771 = vpop.xlane.xlu0 %2770
  %v2772 = vsub.f32 %v2756, %v2762
  %v2773 = vsub.f32 %v2757, %v2765
  %v2774 = vsub.f32 %v2758, %v2768
  %v2775 = vsub.f32 %v2759, %v2771
  %v2776 = vmul.f32 %v2772, 1.442695
  %v2777 = vpow.pop %v2776
  %v2778 = vmul.f32 %v2773, 1.442695
  %v2779 = vpow.pop %v2778
  %v2780 = vmul.f32 %v2774, 1.442695
  %v2781 = vpow.pop %v2780
  %v2782 = vmul.f32 %v2775, 1.442695
  %v2783 = vpow.pop %v2782
  %v2784 = vsel %vm308, %v2777, 0.0
  %2785 = vadd.xlane.f32.xlu0 %v2784
  %v2786 = vpop.xlane.xlu0 %2785
  %v2787 = vsel %vm308, %v2779, 0.0
  %2788 = vadd.xlane.f32.xlu0 %v2787
  %v2789 = vpop.xlane.xlu0 %2788
  %v2790 = vsel %vm308, %v2781, 0.0
  %2791 = vadd.xlane.f32.xlu0 %v2790
  %v2792 = vpop.xlane.xlu0 %2791
  %v2793 = vsel %vm308, %v2783, 0.0
  %2794 = vadd.xlane.f32.xlu0 %v2793
  %v2795 = vpop.xlane.xlu0 %2794
  %v2796 = vrcp.pop %v2786
  %v2797 = vrcp.pop %v2789
  %v2798 = vrcp.pop %v2792
  %v2799 = vrcp.pop %v2795
  %v2800 = vmul.f32 %v2777, %v2796
  %v2801 = vmul.f32 %v2779, %v2797
  %v2802 = vmul.f32 %v2781, %v2798
  %v2803 = vmul.f32 %v2783, %v2799
  %v2805 = vsel %vm308, %v2800, 0
  %v2808 = vsel %vm308, %v2801, 0
  %v2811 = vsel %vm308, %v2802, 0
  %v2814 = vsel %vm308, %v2803, 0
  %2816 = vmatprep.subr.mxu0 0.0
  %2817 = vmatpush1.msra.mxu0 %v2625
  %2818 = vmatprep.subr.mxu0 0.0
  %2819 = vmatpush1.msra.mxu0 %v2630
  %2820 = vmatprep.subr.mxu0 0.0
  %2821 = vmatpush1.msra.mxu0 %v2635
  %2822 = vmatprep.subr.mxu0 0.0
  %2823 = vmatpush1.msra.mxu0 %v2640
  %2824 = vmatprep.subr.mxu0 0.0
  %2825 = vmatpush1.msra.mxu0 0.0
  %2826 = vmatprep.subr.mxu0 0.0
  %2827 = vmatpush1.msra.mxu0 0.0
  %2828 = vmatprep.subr.mxu0 0.0
  %2829 = vmatpush1.msra.mxu0 0.0
  %2830 = vmatprep.subr.mxu0 0.0
  %2831 = vmatpush1.msra.mxu0 0.0
  %2832 = vmatprep.subr.mxu0 0.0
  %2833 = vmatpush1.msra.mxu0 0.0
  %2834 = vmatprep.subr.mxu0 0.0
  %2835 = vmatpush1.msra.mxu0 0.0
  %2836 = vmatprep.subr.mxu0 0.0
  %2837 = vmatpush1.msra.mxu0 0.0
  %2838 = vmatprep.subr.mxu0 0.0
  %2839 = vmatpush1.msra.mxu0 0.0
  %2840 = vmatprep.subr.mxu0 0.0
  %2841 = vmatpush1.msra.mxu0 0.0
  %2842 = vmatprep.subr.mxu0 0.0
  %2843 = vmatpush1.msra.mxu0 0.0
  %2844 = vmatprep.subr.mxu0 0.0
  %2845 = vmatpush1.msra.mxu0 0.0
  %2846 = vmatprep.subr.mxu0 0.0
  %2847 = vmatpush1.msra.mxu0 0.0
  %2848 = vmatprep.subr.mxu0 0.0
  %2849 = vmatpush1.msra.mxu0 0.0
  %2850 = vmatprep.subr.mxu0 0.0
  %2851 = vmatpush1.msra.mxu0 0.0
  %2852 = vmatprep.subr.mxu0 0.0
  %2853 = vmatpush1.msra.mxu0 0.0
  %2854 = vmatprep.subr.mxu0 0.0
  %2855 = vmatpush1.msra.mxu0 0.0
  %2856 = vmatprep.subr.mxu0 0.0
  %2857 = vmatpush1.msra.mxu0 0.0
  %2858 = vmatprep.subr.mxu0 0.0
  %2859 = vmatpush1.msra.mxu0 0.0
  %2860 = vmatprep.subr.mxu0 0.0
  %2861 = vmatpush1.msra.mxu0 0.0
  %2862 = vmatprep.subr.mxu0 0.0
  %2863 = vmatpush1.msra.mxu0 0.0
  %2864 = vmatprep.subr.mxu0 0.0
  %2865 = vmatpush1.msra.mxu0 0.0
  %2866 = vmatprep.subr.mxu0 0.0
  %2867 = vmatpush1.msra.mxu0 0.0
  %2868 = vmatprep.subr.mxu0 0.0
  %2869 = vmatpush1.msra.mxu0 0.0
  %2870 = vmatprep.subr.mxu0 0.0
  %2871 = vmatpush1.msra.mxu0 0.0
  %2872 = vmatprep.subr.mxu0 0.0
  %2873 = vmatpush1.msra.mxu0 0.0
  %2874 = vmatprep.subr.mxu0 0.0
  %2875 = vmatpush1.msra.mxu0 0.0
  %2876 = vmatprep.subr.mxu0 0.0
  %2877 = vmatpush1.msra.mxu0 0.0
  %2878 = vmatprep.subr.mxu0 0.0
  %2879 = vmatpush1.msra.mxu0 0.0
  %2880 = vmatprep.mubr.f32.mxu0 0.0
  %2881 = vmatmul.mubr.f32.gmra.mrb[0].mxu0 %v2805
  %v2882 = vpop.f32.mrb[0].mxu0
  %v2883 = vadd.f32 0.0, %v2882
  %v2884 = vpop.f32.mrb[0].mxu0
  %2885 = vmatprep.mubr.f32.mxu0 0.0
  %2886 = vmatmul.mubr.f32.gmra.mrb[0].mxu0 %v2808
  %v2887 = vpop.f32.mrb[0].mxu0
  %v2888 = vadd.f32 0.0, %v2887
  %v2889 = vpop.f32.mrb[0].mxu0
  %2890 = vmatprep.mubr.f32.mxu0 0.0
  %2891 = vmatmul.mubr.f32.gmra.mrb[0].mxu0 %v2811
  %v2892 = vpop.f32.mrb[0].mxu0
  %v2893 = vadd.f32 0.0, %v2892
  %v2894 = vpop.f32.mrb[0].mxu0
  %2895 = vmatprep.mubr.f32.mxu0 0.0
  %2896 = vmatmul.mubr.f32.gmra.mrb[0].mxu0 %v2814
  %v2897 = vpop.f32.mrb[0].mxu0
  %v2898 = vadd.f32 0.0, %v2897
  %v2899 = vpop.f32.mrb[0].mxu0
  %2900 = vdwg.mxu0
  %s2901 = scalar_lea.vmem %s5, 24
  %v2902 = vld [vmem:[%s2901] sm:$0xff]
  %v2904 = vsel %vm686, %v2883, 0
  %v2907 = vsel %vm686, %v2888, 0
  %v2910 = vsel %vm686, %v2893, 0
  %v2913 = vsel %vm686, %v2898, 0
  %2915 = vmatprep.subr.mxu0 0.0
  %2916 = vmatpush1.msra.mxu0 %v2902
  %2917 = vmatprep.subr.mxu0 0.0
  %2918 = vmatpush1.msra.mxu0 0.0
  %2919 = vmatprep.subr.mxu0 0.0
  %2920 = vmatpush1.msra.mxu0 0.0
  %2921 = vmatprep.subr.mxu0 0.0
  %2922 = vmatpush1.msra.mxu0 0.0
  %2923 = vmatprep.subr.mxu0 0.0
  %2924 = vmatpush1.msra.mxu0 0.0
  %2925 = vmatprep.subr.mxu0 0.0
  %2926 = vmatpush1.msra.mxu0 0.0
  %2927 = vmatprep.subr.mxu0 0.0
  %2928 = vmatpush1.msra.mxu0 0.0
  %2929 = vmatprep.subr.mxu0 0.0
  %2930 = vmatpush1.msra.mxu0 0.0
  %2931 = vmatprep.subr.mxu0 0.0
  %2932 = vmatpush1.msra.mxu0 0.0
  %2933 = vmatprep.subr.mxu0 0.0
  %2934 = vmatpush1.msra.mxu0 0.0
  %2935 = vmatprep.subr.mxu0 0.0
  %2936 = vmatpush1.msra.mxu0 0.0
  %2937 = vmatprep.subr.mxu0 0.0
  %2938 = vmatpush1.msra.mxu0 0.0
  %2939 = vmatprep.subr.mxu0 0.0
  %2940 = vmatpush1.msra.mxu0 0.0
  %2941 = vmatprep.subr.mxu0 0.0
  %2942 = vmatpush1.msra.mxu0 0.0
  %2943 = vmatprep.subr.mxu0 0.0
  %2944 = vmatpush1.msra.mxu0 0.0
  %2945 = vmatprep.subr.mxu0 0.0
  %2946 = vmatpush1.msra.mxu0 0.0
  %2947 = vmatprep.subr.mxu0 0.0
  %2948 = vmatpush1.msra.mxu0 0.0
  %2949 = vmatprep.subr.mxu0 0.0
  %2950 = vmatpush1.msra.mxu0 0.0
  %2951 = vmatprep.subr.mxu0 0.0
  %2952 = vmatpush1.msra.mxu0 0.0
  %2953 = vmatprep.subr.mxu0 0.0
  %2954 = vmatpush1.msra.mxu0 0.0
  %2955 = vmatprep.subr.mxu0 0.0
  %2956 = vmatpush1.msra.mxu0 0.0
  %2957 = vmatprep.subr.mxu0 0.0
  %2958 = vmatpush1.msra.mxu0 0.0
  %2959 = vmatprep.subr.mxu0 0.0
  %2960 = vmatpush1.msra.mxu0 0.0
  %2961 = vmatprep.subr.mxu0 0.0
  %2962 = vmatpush1.msra.mxu0 0.0
  %2963 = vmatprep.subr.mxu0 0.0
  %2964 = vmatpush1.msra.mxu0 0.0
  %2965 = vmatprep.subr.mxu0 0.0
  %2966 = vmatpush1.msra.mxu0 0.0
  %2967 = vmatprep.subr.mxu0 0.0
  %2968 = vmatpush1.msra.mxu0 0.0
  %2969 = vmatprep.subr.mxu0 0.0
  %2970 = vmatpush1.msra.mxu0 0.0
  %2971 = vmatprep.subr.mxu0 0.0
  %2972 = vmatpush1.msra.mxu0 0.0
  %2973 = vmatprep.subr.mxu0 0.0
  %2974 = vmatpush1.msra.mxu0 0.0
  %2975 = vmatprep.subr.mxu0 0.0
  %2976 = vmatpush1.msra.mxu0 0.0
  %2977 = vmatprep.subr.mxu0 0.0
  %2978 = vmatpush1.msra.mxu0 0.0
  %2979 = vmatprep.mubr.f32.mxu0 0.0
  %2980 = vmatmul.mubr.f32.gmra.mrb[0].mxu0 %v2904
  %v2981 = vpop.f32.mrb[0].mxu0
  %v2982 = vadd.f32 0.0, %v2981
  %v2983 = vpop.f32.mrb[0].mxu0
  %2984 = vmatprep.mubr.f32.mxu0 0.0
  %2985 = vmatmul.mubr.f32.gmra.mrb[0].mxu0 %v2907
  %v2986 = vpop.f32.mrb[0].mxu0
  %v2987 = vadd.f32 0.0, %v2986
  %v2988 = vpop.f32.mrb[0].mxu0
  %2989 = vmatprep.mubr.f32.mxu0 0.0
  %2990 = vmatmul.mubr.f32.gmra.mrb[0].mxu0 %v2910
  %v2991 = vpop.f32.mrb[0].mxu0
  %v2992 = vadd.f32 0.0, %v2991
  %v2993 = vpop.f32.mrb[0].mxu0
  %2994 = vmatprep.mubr.f32.mxu0 0.0
  %2995 = vmatmul.mubr.f32.gmra.mrb[0].mxu0 %v2913
  %v2996 = vpop.f32.mrb[0].mxu0
  %v2997 = vadd.f32 0.0, %v2996
  %v2998 = vpop.f32.mrb[0].mxu0
  %2999 = vdwg.mxu0
  %v3000 = vadd.f32 %v2345, %v2982
  %v3001 = vadd.f32 %v2346, %v2987
  %v3002 = vadd.f32 %v2347, %v2992
  %v3003 = vadd.f32 %v2348, %v2997
  %v3004 = vadd.f32 %v275, %v3000
  %v3005 = vadd.f32 %v280, %v3001
  %v3006 = vadd.f32 %v285, %v3002
  %v3007 = vadd.f32 %v290, %v3003
  %v3009 = vlaneseq
  %v3010 = vshrl.u32 %v3009, 7
  %v3011 = vsub.s32 0, %v3010
  %v3012 = vrot.slane %v301, %v3011
  %v3014 = vadd.f32 %v3004, %v3012
  %v3015 = vadd.f32 %v3005, %v3012
  %v3016 = vadd.f32 %v3006, %v3012
  %v3017 = vadd.f32 %v3007, %v3012
  %v3018 = vsel %vm308, %v3014, 0.0
  %3019 = vadd.xlane.f32.xlu0 %v3018
  %v3020 = vpop.xlane.xlu0 %3019
  %v3021 = vsel %vm308, %v3015, 0.0
  %3022 = vadd.xlane.f32.xlu0 %v3021
  %v3023 = vpop.xlane.xlu0 %3022
  %v3024 = vsel %vm308, %v3016, 0.0
  %3025 = vadd.xlane.f32.xlu0 %v3024
  %v3026 = vpop.xlane.xlu0 %3025
  %v3027 = vsel %vm308, %v3017, 0.0
  %3028 = vadd.xlane.f32.xlu0 %v3027
  %v3029 = vpop.xlane.xlu0 %3028
  %v3030 = vmul.f32 %v3020, %v321
  %v3031 = vmul.f32 %v3023, %v321
  %v3032 = vmul.f32 %v3026, %v321
  %v3033 = vmul.f32 %v3029, %v321
  %v3034 = vsub.f32 %v3014, %v3030
  %v3035 = vsub.f32 %v3015, %v3031
  %v3036 = vsub.f32 %v3016, %v3032
  %v3037 = vsub.f32 %v3017, %v3033
  %v3038 = vmul.f32 %v3034, %v3034
  %v3039 = vmul.f32 %v3035, %v3035
  %v3040 = vmul.f32 %v3036, %v3036
  %v3041 = vmul.f32 %v3037, %v3037
  %v3042 = vsel %vm308, %v3038, 0.0
  %3043 = vadd.xlane.f32.xlu0 %v3042
  %v3044 = vpop.xlane.xlu0 %3043
  %v3045 = vsel %vm308, %v3039, 0.0
  %3046 = vadd.xlane.f32.xlu0 %v3045
  %v3047 = vpop.xlane.xlu0 %3046
  %v3048 = vsel %vm308, %v3040, 0.0
  %3049 = vadd.xlane.f32.xlu0 %v3048
  %v3050 = vpop.xlane.xlu0 %3049
  %v3051 = vsel %vm308, %v3041, 0.0
  %3052 = vadd.xlane.f32.xlu0 %v3051
  %v3053 = vpop.xlane.xlu0 %3052
  %v3054 = vmul.f32 %v3044, %v321
  %v3055 = vmul.f32 %v3047, %v321
  %v3056 = vmul.f32 %v3050, %v321
  %v3057 = vmul.f32 %v3053, %v321
  %v3058 = vadd.f32 %v3054, 1e-06
  %v3059 = vadd.f32 %v3055, 1e-06
  %v3060 = vadd.f32 %v3056, 1e-06
  %v3061 = vadd.f32 %v3057, 1e-06
  %v3062 = vrsqrt.pop %v3058
  %v3063 = vrsqrt.pop %v3059
  %v3064 = vrsqrt.pop %v3060
  %v3065 = vrsqrt.pop %v3061
  %v3066 = vmul.f32 %v3034, %v3062
  %v3067 = vmul.f32 %v3035, %v3063
  %v3068 = vmul.f32 %v3036, %v3064
  %v3069 = vmul.f32 %v3037, %v3065
  %v3071 = vlaneseq
  %v3072 = vshrl.u32 %v3071, 7
  %v3073 = vsub.s32 0, %v3072
  %v3074 = vrot.slane %v303, %v3073
  %v3076 = vmul.f32 %v3066, %v3074
  %v3077 = vmul.f32 %v3067, %v3074
  %v3078 = vmul.f32 %v3068, %v3074
  %v3079 = vmul.f32 %v3069, %v3074
  %v3081 = vlaneseq
  %v3082 = vshrl.u32 %v3081, 7
  %v3083 = vsub.s32 0, %v3082
  %v3084 = vrot.slane %v305, %v3083
  %v3086 = vadd.f32 %v3076, %v3084
  %v3087 = vadd.f32 %v3077, %v3084
  %v3088 = vadd.f32 %v3078, %v3084
  %v3089 = vadd.f32 %v3079, %v3084
  %v3090 = vld [vmem:[%s7] sm:$0xff]
  %v3091 = vld [vmem:[%s7 + $0x8] sm:$0xff]
  %v3092 = vld [vmem:[%s7 + $0x10] sm:$0xff]
  %v3093 = vld [vmem:[%s7 + $0x18] sm:$0xff]
  %v3094 = vld [vmem:[%s7 + $0x20] sm:$0x1]
  %v3095 = vlaneseq
  %v3096 = vshrl.u32 %v3095, 7
  %v3097 = vsub.s32 0, %v3096
  %v3098 = vrot.slane %v3094, %v3097
  %v3100 = vsel %vm308, %v3086, 0
  %v3103 = vsel %vm308, %v3087, 0
  %v3106 = vsel %vm308, %v3088, 0
  %v3109 = vsel %vm308, %v3089, 0
  %3111 = vmatprep.subr.mxu0 0.0
  %3112 = vmatpush1.msra.mxu0 %v3090
  %3113 = vmatprep.subr.mxu0 0.0
  %3114 = vmatpush1.msra.mxu0 %v3091
  %3115 = vmatprep.subr.mxu0 0.0
  %3116 = vmatpush1.msra.mxu0 %v3092
  %3117 = vmatprep.subr.mxu0 0.0
  %3118 = vmatpush1.msra.mxu0 %v3093
  %3119 = vmatprep.subr.mxu0 0.0
  %3120 = vmatpush1.msra.mxu0 0.0
  %3121 = vmatprep.subr.mxu0 0.0
  %3122 = vmatpush1.msra.mxu0 0.0
  %3123 = vmatprep.subr.mxu0 0.0
  %3124 = vmatpush1.msra.mxu0 0.0
  %3125 = vmatprep.subr.mxu0 0.0
  %3126 = vmatpush1.msra.mxu0 0.0
  %3127 = vmatprep.subr.mxu0 0.0
  %3128 = vmatpush1.msra.mxu0 0.0
  %3129 = vmatprep.subr.mxu0 0.0
  %3130 = vmatpush1.msra.mxu0 0.0
  %3131 = vmatprep.subr.mxu0 0.0
  %3132 = vmatpush1.msra.mxu0 0.0
  %3133 = vmatprep.subr.mxu0 0.0
  %3134 = vmatpush1.msra.mxu0 0.0
  %3135 = vmatprep.subr.mxu0 0.0
  %3136 = vmatpush1.msra.mxu0 0.0
  %3137 = vmatprep.subr.mxu0 0.0
  %3138 = vmatpush1.msra.mxu0 0.0
  %3139 = vmatprep.subr.mxu0 0.0
  %3140 = vmatpush1.msra.mxu0 0.0
  %3141 = vmatprep.subr.mxu0 0.0
  %3142 = vmatpush1.msra.mxu0 0.0
  %3143 = vmatprep.subr.mxu0 0.0
  %3144 = vmatpush1.msra.mxu0 0.0
  %3145 = vmatprep.subr.mxu0 0.0
  %3146 = vmatpush1.msra.mxu0 0.0
  %3147 = vmatprep.subr.mxu0 0.0
  %3148 = vmatpush1.msra.mxu0 0.0
  %3149 = vmatprep.subr.mxu0 0.0
  %3150 = vmatpush1.msra.mxu0 0.0
  %3151 = vmatprep.subr.mxu0 0.0
  %3152 = vmatpush1.msra.mxu0 0.0
  %3153 = vmatprep.subr.mxu0 0.0
  %3154 = vmatpush1.msra.mxu0 0.0
  %3155 = vmatprep.subr.mxu0 0.0
  %3156 = vmatpush1.msra.mxu0 0.0
  %3157 = vmatprep.subr.mxu0 0.0
  %3158 = vmatpush1.msra.mxu0 0.0
  %3159 = vmatprep.subr.mxu0 0.0
  %3160 = vmatpush1.msra.mxu0 0.0
  %3161 = vmatprep.subr.mxu0 0.0
  %3162 = vmatpush1.msra.mxu0 0.0
  %3163 = vmatprep.subr.mxu0 0.0
  %3164 = vmatpush1.msra.mxu0 0.0
  %3165 = vmatprep.subr.mxu0 0.0
  %3166 = vmatpush1.msra.mxu0 0.0
  %3167 = vmatprep.subr.mxu0 0.0
  %3168 = vmatpush1.msra.mxu0 0.0
  %3169 = vmatprep.subr.mxu0 0.0
  %3170 = vmatpush1.msra.mxu0 0.0
  %3171 = vmatprep.subr.mxu0 0.0
  %3172 = vmatpush1.msra.mxu0 0.0
  %3173 = vmatprep.subr.mxu0 0.0
  %3174 = vmatpush1.msra.mxu0 0.0
  %3175 = vmatprep.mubr.f32.mxu0 0.0
  %3176 = vmatmul.mubr.f32.gmra.mrb[0].mxu0 %v3100
  %v3177 = vpop.f32.mrb[0].mxu0
  %v3178 = vadd.f32 %v3098, %v3177
  %v3179 = vpop.f32.mrb[0].mxu0
  %3180 = vmatprep.mubr.f32.mxu0 0.0
  %3181 = vmatmul.mubr.f32.gmra.mrb[0].mxu0 %v3103
  %v3182 = vpop.f32.mrb[0].mxu0
  %v3183 = vadd.f32 %v3098, %v3182
  %v3184 = vpop.f32.mrb[0].mxu0
  %3185 = vmatprep.mubr.f32.mxu0 0.0
  %3186 = vmatmul.mubr.f32.gmra.mrb[0].mxu0 %v3106
  %v3187 = vpop.f32.mrb[0].mxu0
  %v3188 = vadd.f32 %v3098, %v3187
  %v3189 = vpop.f32.mrb[0].mxu0
  %3190 = vmatprep.mubr.f32.mxu0 0.0
  %3191 = vmatmul.mubr.f32.gmra.mrb[0].mxu0 %v3109
  %v3192 = vpop.f32.mrb[0].mxu0
  %v3193 = vadd.f32 %v3098, %v3192
  %v3194 = vpop.f32.mrb[0].mxu0
  %3195 = vdwg.mxu0
  %v3196 = vmul.f32 %v3178, 0.5
  %v3197 = vmul.f32 %v3183, 0.5
  %v3198 = vmul.f32 %v3188, 0.5
  %v3199 = vmul.f32 %v3193, 0.5
  %v3200 = vmul.f32 %v3178, 0.70710677
  %v3201 = vmul.f32 %v3183, 0.70710677
  %v3202 = vmul.f32 %v3188, 0.70710677
  %v3203 = vmul.f32 %v3193, 0.70710677
  %v3204 = verf.f32.pop %v3200
  %v3205 = verf.f32.pop %v3201
  %v3206 = verf.f32.pop %v3202
  %v3207 = verf.f32.pop %v3203
  %v3208 = vadd.f32 %v3204, 1.0
  %v3209 = vadd.f32 %v3205, 1.0
  %v3210 = vadd.f32 %v3206, 1.0
  %v3211 = vadd.f32 %v3207, 1.0
  %v3212 = vmul.f32 %v3196, %v3208
  %v3213 = vmul.f32 %v3197, %v3209
  %v3214 = vmul.f32 %v3198, %v3210
  %v3215 = vmul.f32 %v3199, %v3211
  %v3216 = vld [vmem:[%s8] sm:$0xff]
  %v3217 = vld [vmem:[%s8 + $0x8] sm:$0xff]
  %v3218 = vld [vmem:[%s8 + $0x10] sm:$0xff]
  %v3219 = vld [vmem:[%s8 + $0x18] sm:$0xff]
  %v3220 = vld [vmem:[%s8 + $0x20] sm:$0xff]
  %v3221 = vld [vmem:[%s8 + $0x28] sm:$0xff]
  %v3222 = vld [vmem:[%s8 + $0x30] sm:$0xff]
  %v3223 = vld [vmem:[%s8 + $0x38] sm:$0xff]
  %v3224 = vld [vmem:[%s8 + $0x40] sm:$0xff]
  %v3225 = vld [vmem:[%s8 + $0x48] sm:$0xff]
  %v3226 = vld [vmem:[%s8 + $0x50] sm:$0xff]
  %v3227 = vld [vmem:[%s8 + $0x58] sm:$0xff]
  %v3228 = vld [vmem:[%s8 + $0x60] sm:$0xff]
  %v3229 = vld [vmem:[%s8 + $0x68] sm:$0xff]
  %v3230 = vld [vmem:[%s8 + $0x70] sm:$0xff]
  %v3231 = vld [vmem:[%s8 + $0x78] sm:$0xff]
  %v3233 = vlaneseq
  %v3234 = vshrl.u32 %v3233, 7
  %v3235 = vsub.s32 0, %v3234
  %v3236 = vrot.slane %v307, %v3235
  %3238 = vmatprep.subr.mxu0 0.0
  %3239 = vmatpush1.msra.mxu0 %v3216
  %3240 = vmatprep.subr.mxu0 0.0
  %3241 = vmatpush1.msra.mxu0 %v3217
  %3242 = vmatprep.subr.mxu0 0.0
  %3243 = vmatpush1.msra.mxu0 %v3218
  %3244 = vmatprep.subr.mxu0 0.0
  %3245 = vmatpush1.msra.mxu0 %v3219
  %3246 = vmatprep.subr.mxu0 0.0
  %3247 = vmatpush1.msra.mxu0 %v3220
  %3248 = vmatprep.subr.mxu0 0.0
  %3249 = vmatpush1.msra.mxu0 %v3221
  %3250 = vmatprep.subr.mxu0 0.0
  %3251 = vmatpush1.msra.mxu0 %v3222
  %3252 = vmatprep.subr.mxu0 0.0
  %3253 = vmatpush1.msra.mxu0 %v3223
  %3254 = vmatprep.subr.mxu0 0.0
  %3255 = vmatpush1.msra.mxu0 %v3224
  %3256 = vmatprep.subr.mxu0 0.0
  %3257 = vmatpush1.msra.mxu0 %v3225
  %3258 = vmatprep.subr.mxu0 0.0
  %3259 = vmatpush1.msra.mxu0 %v3226
  %3260 = vmatprep.subr.mxu0 0.0
  %3261 = vmatpush1.msra.mxu0 %v3227
  %3262 = vmatprep.subr.mxu0 0.0
  %3263 = vmatpush1.msra.mxu0 %v3228
  %3264 = vmatprep.subr.mxu0 0.0
  %3265 = vmatpush1.msra.mxu0 %v3229
  %3266 = vmatprep.subr.mxu0 0.0
  %3267 = vmatpush1.msra.mxu0 %v3230
  %3268 = vmatprep.subr.mxu0 0.0
  %3269 = vmatpush1.msra.mxu0 %v3231
  %3270 = vmatprep.subr.mxu0 0.0
  %3271 = vmatpush1.msra.mxu0 0.0
  %3272 = vmatprep.subr.mxu0 0.0
  %3273 = vmatpush1.msra.mxu0 0.0
  %3274 = vmatprep.subr.mxu0 0.0
  %3275 = vmatpush1.msra.mxu0 0.0
  %3276 = vmatprep.subr.mxu0 0.0
  %3277 = vmatpush1.msra.mxu0 0.0
  %3278 = vmatprep.subr.mxu0 0.0
  %3279 = vmatpush1.msra.mxu0 0.0
  %3280 = vmatprep.subr.mxu0 0.0
  %3281 = vmatpush1.msra.mxu0 0.0
  %3282 = vmatprep.subr.mxu0 0.0
  %3283 = vmatpush1.msra.mxu0 0.0
  %3284 = vmatprep.subr.mxu0 0.0
  %3285 = vmatpush1.msra.mxu0 0.0
  %3286 = vmatprep.subr.mxu0 0.0
  %3287 = vmatpush1.msra.mxu0 0.0
  %3288 = vmatprep.subr.mxu0 0.0
  %3289 = vmatpush1.msra.mxu0 0.0
  %3290 = vmatprep.subr.mxu0 0.0
  %3291 = vmatpush1.msra.mxu0 0.0
  %3292 = vmatprep.subr.mxu0 0.0
  %3293 = vmatpush1.msra.mxu0 0.0
  %3294 = vmatprep.subr.mxu0 0.0
  %3295 = vmatpush1.msra.mxu0 0.0
  %3296 = vmatprep.subr.mxu0 0.0
  %3297 = vmatpush1.msra.mxu0 0.0
  %3298 = vmatprep.subr.mxu0 0.0
  %3299 = vmatpush1.msra.mxu0 0.0
  %3300 = vmatprep.subr.mxu0 0.0
  %3301 = vmatpush1.msra.mxu0 0.0
  %3302 = vmatprep.mubr.f32.mxu0 0.0
  %3303 = vmatmul.mubr.f32.gmra.mrb[0].mxu0 %v3212
  %v3304 = vpop.f32.mrb[0].mxu0
  %v3305 = vadd.f32 %v3236, %v3304
  %v3306 = vpop.f32.mrb[0].mxu0
  %3307 = vmatprep.mubr.f32.mxu0 0.0
  %3308 = vmatmul.mubr.f32.gmra.mrb[0].mxu0 %v3213
  %v3309 = vpop.f32.mrb[0].mxu0
  %v3310 = vadd.f32 %v3236, %v3309
  %v3311 = vpop.f32.mrb[0].mxu0
  %3312 = vmatprep.mubr.f32.mxu0 0.0
  %3313 = vmatmul.mubr.f32.gmra.mrb[0].mxu0 %v3214
  %v3314 = vpop.f32.mrb[0].mxu0
  %v3315 = vadd.f32 %v3236, %v3314
  %v3316 = vpop.f32.mrb[0].mxu0
  %3317 = vmatprep.mubr.f32.mxu0 0.0
  %3318 = vmatmul.mubr.f32.gmra.mrb[0].mxu0 %v3215
  %v3319 = vpop.f32.mrb[0].mxu0
  %v3320 = vadd.f32 %v3236, %v3319
  %v3321 = vpop.f32.mrb[0].mxu0
  %3322 = vdwg.mxu0
  %v3323 = vadd.f32 %v3014, %v3305
  %v3324 = vadd.f32 %v3015, %v3310
  %v3325 = vadd.f32 %v3016, %v3315
  %v3326 = vadd.f32 %v3017, %v3320
  %s3327 = scalar_lea.vmem %s6, 6
  %v3328 = vld [vmem:[%s3327] sm:$0x1]
  %s3329 = scalar_lea.vmem %s6, 7
  %v3330 = vld [vmem:[%s3329] sm:$0x1]
  %s3331 = scalar_lea.vmem %s6, 8
  %v3332 = vld [vmem:[%s3331] sm:$0x1]
  %s3333 = scalar_lea.vmem %s6, 9
  %v3334 = vld [vmem:[%s3333] sm:$0x1]
  %s3335 = scalar_lea.vmem %s6, 10
  %v3336 = vld [vmem:[%s3335] sm:$0x1]
  %s3337 = scalar_lea.vmem %s6, 11
  %v3338 = vld [vmem:[%s3337] sm:$0x1]
  %v3339 = vsel %vm308, %v3323, 0.0
  %3340 = vadd.xlane.f32.xlu0 %v3339
  %v3341 = vpop.xlane.xlu0 %3340
  %v3342 = vsel %vm308, %v3324, 0.0
  %3343 = vadd.xlane.f32.xlu0 %v3342
  %v3344 = vpop.xlane.xlu0 %3343
  %v3345 = vsel %vm308, %v3325, 0.0
  %3346 = vadd.xlane.f32.xlu0 %v3345
  %v3347 = vpop.xlane.xlu0 %3346
  %v3348 = vsel %vm308, %v3326, 0.0
  %3349 = vadd.xlane.f32.xlu0 %v3348
  %v3350 = vpop.xlane.xlu0 %3349
  %v3351 = vmul.f32 %v3341, %v321
  %v3352 = vmul.f32 %v3344, %v321
  %v3353 = vmul.f32 %v3347, %v321
  %v3354 = vmul.f32 %v3350, %v321
  %v3355 = vsub.f32 %v3323, %v3351
  %v3356 = vsub.f32 %v3324, %v3352
  %v3357 = vsub.f32 %v3325, %v3353
  %v3358 = vsub.f32 %v3326, %v3354
  %v3359 = vmul.f32 %v3355, %v3355
  %v3360 = vmul.f32 %v3356, %v3356
  %v3361 = vmul.f32 %v3357, %v3357
  %v3362 = vmul.f32 %v3358, %v3358
  %v3363 = vsel %vm308, %v3359, 0.0
  %3364 = vadd.xlane.f32.xlu0 %v3363
  %v3365 = vpop.xlane.xlu0 %3364
  %v3366 = vsel %vm308, %v3360, 0.0
  %3367 = vadd.xlane.f32.xlu0 %v3366
  %v3368 = vpop.xlane.xlu0 %3367
  %v3369 = vsel %vm308, %v3361, 0.0
  %3370 = vadd.xlane.f32.xlu0 %v3369
  %v3371 = vpop.xlane.xlu0 %3370
  %v3372 = vsel %vm308, %v3362, 0.0
  %3373 = vadd.xlane.f32.xlu0 %v3372
  %v3374 = vpop.xlane.xlu0 %3373
  %v3375 = vmul.f32 %v3365, %v321
  %v3376 = vmul.f32 %v3368, %v321
  %v3377 = vmul.f32 %v3371, %v321
  %v3378 = vmul.f32 %v3374, %v321
  %v3379 = vadd.f32 %v3375, 1e-06
  %v3380 = vadd.f32 %v3376, 1e-06
  %v3381 = vadd.f32 %v3377, 1e-06
  %v3382 = vadd.f32 %v3378, 1e-06
  %v3383 = vrsqrt.pop %v3379
  %v3384 = vrsqrt.pop %v3380
  %v3385 = vrsqrt.pop %v3381
  %v3386 = vrsqrt.pop %v3382
  %v3387 = vmul.f32 %v3355, %v3383
  %v3388 = vmul.f32 %v3356, %v3384
  %v3389 = vmul.f32 %v3357, %v3385
  %v3390 = vmul.f32 %v3358, %v3386
  %v3392 = vlaneseq
  %v3393 = vshrl.u32 %v3392, 7
  %v3394 = vsub.s32 0, %v3393
  %v3395 = vrot.slane %v3328, %v3394
  %v3397 = vmul.f32 %v3387, %v3395
  %v3398 = vmul.f32 %v3388, %v3395
  %v3399 = vmul.f32 %v3389, %v3395
  %v3400 = vmul.f32 %v3390, %v3395
  %v3402 = vlaneseq
  %v3403 = vshrl.u32 %v3402, 7
  %v3404 = vsub.s32 0, %v3403
  %v3405 = vrot.slane %v3330, %v3404
  %v3407 = vadd.f32 %v3397, %v3405
  %v3408 = vadd.f32 %v3398, %v3405
  %v3409 = vadd.f32 %v3399, %v3405
  %v3410 = vadd.f32 %v3400, %v3405
  %s3411 = scalar_lea.vmem %s3, 128
  %v3412 = vld [vmem:[%s3411] sm:$0xff]
  %v3413 = vld [vmem:[%s3411 + $0x8] sm:$0xff]
  %v3414 = vld [vmem:[%s3411 + $0x10] sm:$0xff]
  %v3415 = vld [vmem:[%s3411 + $0x18] sm:$0xff]
  %s3416 = scalar_lea.vmem %s4, 4
  %v3417 = vld [vmem:[%s3416] sm:$0x1]
  %v3419 = vlaneseq
  %v3420 = vshrl.u32 %v3419, 7
  %v3421 = vsub.s32 0, %v3420
  %v3422 = vrot.slane %v3417, %v3421
  %v3425 = vsel %vm308, %v3407, 0
  %v3428 = vsel %vm308, %v3408, 0
  %v3431 = vsel %vm308, %v3409, 0
  %v3434 = vsel %vm308, %v3410, 0
  %3436 = vmatprep.subr.mxu0 0.0
  %3437 = vmatpush1.msra.mxu0 %v3412
  %3438 = vmatprep.subr.mxu0 0.0
  %3439 = vmatpush1.msra.mxu0 %v3413
  %3440 = vmatprep.subr.mxu0 0.0
  %3441 = vmatpush1.msra.mxu0 %v3414
  %3442 = vmatprep.subr.mxu0 0.0
  %3443 = vmatpush1.msra.mxu0 %v3415
  %3444 = vmatprep.subr.mxu0 0.0
  %3445 = vmatpush1.msra.mxu0 0.0
  %3446 = vmatprep.subr.mxu0 0.0
  %3447 = vmatpush1.msra.mxu0 0.0
  %3448 = vmatprep.subr.mxu0 0.0
  %3449 = vmatpush1.msra.mxu0 0.0
  %3450 = vmatprep.subr.mxu0 0.0
  %3451 = vmatpush1.msra.mxu0 0.0
  %3452 = vmatprep.subr.mxu0 0.0
  %3453 = vmatpush1.msra.mxu0 0.0
  %3454 = vmatprep.subr.mxu0 0.0
  %3455 = vmatpush1.msra.mxu0 0.0
  %3456 = vmatprep.subr.mxu0 0.0
  %3457 = vmatpush1.msra.mxu0 0.0
  %3458 = vmatprep.subr.mxu0 0.0
  %3459 = vmatpush1.msra.mxu0 0.0
  %3460 = vmatprep.subr.mxu0 0.0
  %3461 = vmatpush1.msra.mxu0 0.0
  %3462 = vmatprep.subr.mxu0 0.0
  %3463 = vmatpush1.msra.mxu0 0.0
  %3464 = vmatprep.subr.mxu0 0.0
  %3465 = vmatpush1.msra.mxu0 0.0
  %3466 = vmatprep.subr.mxu0 0.0
  %3467 = vmatpush1.msra.mxu0 0.0
  %3468 = vmatprep.subr.mxu0 0.0
  %3469 = vmatpush1.msra.mxu0 0.0
  %3470 = vmatprep.subr.mxu0 0.0
  %3471 = vmatpush1.msra.mxu0 0.0
  %3472 = vmatprep.subr.mxu0 0.0
  %3473 = vmatpush1.msra.mxu0 0.0
  %3474 = vmatprep.subr.mxu0 0.0
  %3475 = vmatpush1.msra.mxu0 0.0
  %3476 = vmatprep.subr.mxu0 0.0
  %3477 = vmatpush1.msra.mxu0 0.0
  %3478 = vmatprep.subr.mxu0 0.0
  %3479 = vmatpush1.msra.mxu0 0.0
  %3480 = vmatprep.subr.mxu0 0.0
  %3481 = vmatpush1.msra.mxu0 0.0
  %3482 = vmatprep.subr.mxu0 0.0
  %3483 = vmatpush1.msra.mxu0 0.0
  %3484 = vmatprep.subr.mxu0 0.0
  %3485 = vmatpush1.msra.mxu0 0.0
  %3486 = vmatprep.subr.mxu0 0.0
  %3487 = vmatpush1.msra.mxu0 0.0
  %3488 = vmatprep.subr.mxu0 0.0
  %3489 = vmatpush1.msra.mxu0 0.0
  %3490 = vmatprep.subr.mxu0 0.0
  %3491 = vmatpush1.msra.mxu0 0.0
  %3492 = vmatprep.subr.mxu0 0.0
  %3493 = vmatpush1.msra.mxu0 0.0
  %3494 = vmatprep.subr.mxu0 0.0
  %3495 = vmatpush1.msra.mxu0 0.0
  %3496 = vmatprep.subr.mxu0 0.0
  %3497 = vmatpush1.msra.mxu0 0.0
  %3498 = vmatprep.subr.mxu0 0.0
  %3499 = vmatpush1.msra.mxu0 0.0
  %3500 = vmatprep.mubr.f32.mxu0 0.0
  %3501 = vmatmul.mubr.f32.gmra.mrb[0].mxu0 %v3425
  %v3502 = vpop.f32.mrb[0].mxu0
  %v3503 = vadd.f32 %v3422, %v3502
  %v3504 = vpop.f32.mrb[0].mxu0
  %3505 = vmatprep.mubr.f32.mxu0 0.0
  %3506 = vmatmul.mubr.f32.gmra.mrb[0].mxu0 %v3428
  %v3507 = vpop.f32.mrb[0].mxu0
  %v3508 = vadd.f32 %v3422, %v3507
  %v3509 = vpop.f32.mrb[0].mxu0
  %3510 = vmatprep.mubr.f32.mxu0 0.0
  %3511 = vmatmul.mubr.f32.gmra.mrb[0].mxu0 %v3431
  %v3512 = vpop.f32.mrb[0].mxu0
  %v3513 = vadd.f32 %v3422, %v3512
  %v3514 = vpop.f32.mrb[0].mxu0
  %3515 = vmatprep.mubr.f32.mxu0 0.0
  %3516 = vmatmul.mubr.f32.gmra.mrb[0].mxu0 %v3434
  %v3517 = vpop.f32.mrb[0].mxu0
  %v3518 = vadd.f32 %v3422, %v3517
  %v3519 = vpop.f32.mrb[0].mxu0
  %3520 = vdwg.mxu0
  %s3521 = scalar_lea.vmem %s3, 384
  %v3522 = vld [vmem:[%s3521] sm:$0xff]
  %v3523 = vld [vmem:[%s3521 + $0x8] sm:$0xff]
  %v3524 = vld [vmem:[%s3521 + $0x10] sm:$0xff]
  %v3525 = vld [vmem:[%s3521 + $0x18] sm:$0xff]
  %s3526 = scalar_lea.vmem %s4, 12
  %v3527 = vld [vmem:[%s3526] sm:$0x1]
  %v3529 = vlaneseq
  %v3530 = vshrl.u32 %v3529, 7
  %v3531 = vsub.s32 0, %v3530
  %v3532 = vrot.slane %v3527, %v3531
  %3534 = vmatprep.subr.mxu0 0.0
  %3535 = vmatpush1.msra.mxu0 %v3522
  %3536 = vmatprep.subr.mxu0 0.0
  %3537 = vmatpush1.msra.mxu0 %v3523
  %3538 = vmatprep.subr.mxu0 0.0
  %3539 = vmatpush1.msra.mxu0 %v3524
  %3540 = vmatprep.subr.mxu0 0.0
  %3541 = vmatpush1.msra.mxu0 %v3525
  %3542 = vmatprep.subr.mxu0 0.0
  %3543 = vmatpush1.msra.mxu0 0.0
  %3544 = vmatprep.subr.mxu0 0.0
  %3545 = vmatpush1.msra.mxu0 0.0
  %3546 = vmatprep.subr.mxu0 0.0
  %3547 = vmatpush1.msra.mxu0 0.0
  %3548 = vmatprep.subr.mxu0 0.0
  %3549 = vmatpush1.msra.mxu0 0.0
  %3550 = vmatprep.subr.mxu0 0.0
  %3551 = vmatpush1.msra.mxu0 0.0
  %3552 = vmatprep.subr.mxu0 0.0
  %3553 = vmatpush1.msra.mxu0 0.0
  %3554 = vmatprep.subr.mxu0 0.0
  %3555 = vmatpush1.msra.mxu0 0.0
  %3556 = vmatprep.subr.mxu0 0.0
  %3557 = vmatpush1.msra.mxu0 0.0
  %3558 = vmatprep.subr.mxu0 0.0
  %3559 = vmatpush1.msra.mxu0 0.0
  %3560 = vmatprep.subr.mxu0 0.0
  %3561 = vmatpush1.msra.mxu0 0.0
  %3562 = vmatprep.subr.mxu0 0.0
  %3563 = vmatpush1.msra.mxu0 0.0
  %3564 = vmatprep.subr.mxu0 0.0
  %3565 = vmatpush1.msra.mxu0 0.0
  %3566 = vmatprep.subr.mxu0 0.0
  %3567 = vmatpush1.msra.mxu0 0.0
  %3568 = vmatprep.subr.mxu0 0.0
  %3569 = vmatpush1.msra.mxu0 0.0
  %3570 = vmatprep.subr.mxu0 0.0
  %3571 = vmatpush1.msra.mxu0 0.0
  %3572 = vmatprep.subr.mxu0 0.0
  %3573 = vmatpush1.msra.mxu0 0.0
  %3574 = vmatprep.subr.mxu0 0.0
  %3575 = vmatpush1.msra.mxu0 0.0
  %3576 = vmatprep.subr.mxu0 0.0
  %3577 = vmatpush1.msra.mxu0 0.0
  %3578 = vmatprep.subr.mxu0 0.0
  %3579 = vmatpush1.msra.mxu0 0.0
  %3580 = vmatprep.subr.mxu0 0.0
  %3581 = vmatpush1.msra.mxu0 0.0
  %3582 = vmatprep.subr.mxu0 0.0
  %3583 = vmatpush1.msra.mxu0 0.0
  %3584 = vmatprep.subr.mxu0 0.0
  %3585 = vmatpush1.msra.mxu0 0.0
  %3586 = vmatprep.subr.mxu0 0.0
  %3587 = vmatpush1.msra.mxu0 0.0
  %3588 = vmatprep.subr.mxu0 0.0
  %3589 = vmatpush1.msra.mxu0 0.0
  %3590 = vmatprep.subr.mxu0 0.0
  %3591 = vmatpush1.msra.mxu0 0.0
  %3592 = vmatprep.subr.mxu0 0.0
  %3593 = vmatpush1.msra.mxu0 0.0
  %3594 = vmatprep.subr.mxu0 0.0
  %3595 = vmatpush1.msra.mxu0 0.0
  %3596 = vmatprep.subr.mxu0 0.0
  %3597 = vmatpush1.msra.mxu0 0.0
  %3598 = vmatprep.mubr.f32.mxu0 0.0
  %3599 = vmatmul.mubr.f32.gmra.mrb[0].mxu0 %v3425
  %v3600 = vpop.f32.mrb[0].mxu0
  %v3601 = vadd.f32 %v3532, %v3600
  %v3602 = vpop.f32.mrb[0].mxu0
  %3603 = vmatprep.mubr.f32.mxu0 0.0
  %3604 = vmatmul.mubr.f32.gmra.mrb[0].mxu0 %v3428
  %v3605 = vpop.f32.mrb[0].mxu0
  %v3606 = vadd.f32 %v3532, %v3605
  %v3607 = vpop.f32.mrb[0].mxu0
  %3608 = vmatprep.mubr.f32.mxu0 0.0
  %3609 = vmatmul.mubr.f32.gmra.mrb[0].mxu0 %v3431
  %v3610 = vpop.f32.mrb[0].mxu0
  %v3611 = vadd.f32 %v3532, %v3610
  %v3612 = vpop.f32.mrb[0].mxu0
  %3613 = vmatprep.mubr.f32.mxu0 0.0
  %3614 = vmatmul.mubr.f32.gmra.mrb[0].mxu0 %v3434
  %v3615 = vpop.f32.mrb[0].mxu0
  %v3616 = vadd.f32 %v3532, %v3615
  %v3617 = vpop.f32.mrb[0].mxu0
  %3618 = vdwg.mxu0
  %s3619 = scalar_lea.vmem %s3, 640
  %v3620 = vld [vmem:[%s3619] sm:$0xff]
  %v3621 = vld [vmem:[%s3619 + $0x8] sm:$0xff]
  %v3622 = vld [vmem:[%s3619 + $0x10] sm:$0xff]
  %v3623 = vld [vmem:[%s3619 + $0x18] sm:$0xff]
  %s3624 = scalar_lea.vmem %s4, 20
  %v3625 = vld [vmem:[%s3624] sm:$0x1]
  %v3627 = vlaneseq
  %v3628 = vshrl.u32 %v3627, 7
  %v3629 = vsub.s32 0, %v3628
  %v3630 = vrot.slane %v3625, %v3629
  %3632 = vmatprep.subr.mxu0 0.0
  %3633 = vmatpush1.msra.mxu0 %v3620
  %3634 = vmatprep.subr.mxu0 0.0
  %3635 = vmatpush1.msra.mxu0 %v3621
  %3636 = vmatprep.subr.mxu0 0.0
  %3637 = vmatpush1.msra.mxu0 %v3622
  %3638 = vmatprep.subr.mxu0 0.0
  %3639 = vmatpush1.msra.mxu0 %v3623
  %3640 = vmatprep.subr.mxu0 0.0
  %3641 = vmatpush1.msra.mxu0 0.0
  %3642 = vmatprep.subr.mxu0 0.0
  %3643 = vmatpush1.msra.mxu0 0.0
  %3644 = vmatprep.subr.mxu0 0.0
  %3645 = vmatpush1.msra.mxu0 0.0
  %3646 = vmatprep.subr.mxu0 0.0
  %3647 = vmatpush1.msra.mxu0 0.0
  %3648 = vmatprep.subr.mxu0 0.0
  %3649 = vmatpush1.msra.mxu0 0.0
  %3650 = vmatprep.subr.mxu0 0.0
  %3651 = vmatpush1.msra.mxu0 0.0
  %3652 = vmatprep.subr.mxu0 0.0
  %3653 = vmatpush1.msra.mxu0 0.0
  %3654 = vmatprep.subr.mxu0 0.0
  %3655 = vmatpush1.msra.mxu0 0.0
  %3656 = vmatprep.subr.mxu0 0.0
  %3657 = vmatpush1.msra.mxu0 0.0
  %3658 = vmatprep.subr.mxu0 0.0
  %3659 = vmatpush1.msra.mxu0 0.0
  %3660 = vmatprep.subr.mxu0 0.0
  %3661 = vmatpush1.msra.mxu0 0.0
  %3662 = vmatprep.subr.mxu0 0.0
  %3663 = vmatpush1.msra.mxu0 0.0
  %3664 = vmatprep.subr.mxu0 0.0
  %3665 = vmatpush1.msra.mxu0 0.0
  %3666 = vmatprep.subr.mxu0 0.0
  %3667 = vmatpush1.msra.mxu0 0.0
  %3668 = vmatprep.subr.mxu0 0.0
  %3669 = vmatpush1.msra.mxu0 0.0
  %3670 = vmatprep.subr.mxu0 0.0
  %3671 = vmatpush1.msra.mxu0 0.0
  %3672 = vmatprep.subr.mxu0 0.0
  %3673 = vmatpush1.msra.mxu0 0.0
  %3674 = vmatprep.subr.mxu0 0.0
  %3675 = vmatpush1.msra.mxu0 0.0
  %3676 = vmatprep.subr.mxu0 0.0
  %3677 = vmatpush1.msra.mxu0 0.0
  %3678 = vmatprep.subr.mxu0 0.0
  %3679 = vmatpush1.msra.mxu0 0.0
  %3680 = vmatprep.subr.mxu0 0.0
  %3681 = vmatpush1.msra.mxu0 0.0
  %3682 = vmatprep.subr.mxu0 0.0
  %3683 = vmatpush1.msra.mxu0 0.0
  %3684 = vmatprep.subr.mxu0 0.0
  %3685 = vmatpush1.msra.mxu0 0.0
  %3686 = vmatprep.subr.mxu0 0.0
  %3687 = vmatpush1.msra.mxu0 0.0
  %3688 = vmatprep.subr.mxu0 0.0
  %3689 = vmatpush1.msra.mxu0 0.0
  %3690 = vmatprep.subr.mxu0 0.0
  %3691 = vmatpush1.msra.mxu0 0.0
  %3692 = vmatprep.subr.mxu0 0.0
  %3693 = vmatpush1.msra.mxu0 0.0
  %3694 = vmatprep.subr.mxu0 0.0
  %3695 = vmatpush1.msra.mxu0 0.0
  %3696 = vmatprep.mubr.f32.mxu0 0.0
  %3697 = vmatmul.mubr.f32.gmra.mrb[0].mxu0 %v3425
  %v3698 = vpop.f32.mrb[0].mxu0
  %v3699 = vadd.f32 %v3630, %v3698
  %v3700 = vpop.f32.mrb[0].mxu0
  %3701 = vmatprep.mubr.f32.mxu0 0.0
  %3702 = vmatmul.mubr.f32.gmra.mrb[0].mxu0 %v3428
  %v3703 = vpop.f32.mrb[0].mxu0
  %v3704 = vadd.f32 %v3630, %v3703
  %v3705 = vpop.f32.mrb[0].mxu0
  %3706 = vmatprep.mubr.f32.mxu0 0.0
  %3707 = vmatmul.mubr.f32.gmra.mrb[0].mxu0 %v3431
  %v3708 = vpop.f32.mrb[0].mxu0
  %v3709 = vadd.f32 %v3630, %v3708
  %v3710 = vpop.f32.mrb[0].mxu0
  %3711 = vmatprep.mubr.f32.mxu0 0.0
  %3712 = vmatmul.mubr.f32.gmra.mrb[0].mxu0 %v3434
  %v3713 = vpop.f32.mrb[0].mxu0
  %v3714 = vadd.f32 %v3630, %v3713
  %v3715 = vpop.f32.mrb[0].mxu0
  %3716 = vdwg.mxu0
  %v3718 = vsel %vm686, %v3503, 0
  %v3721 = vsel %vm686, %v3508, 0
  %v3724 = vsel %vm686, %v3513, 0
  %v3727 = vsel %vm686, %v3518, 0
  %v3730 = vsel %vm686, %v3601, 0
  %v3733 = vsel %vm686, %v3606, 0
  %v3736 = vsel %vm686, %v3611, 0
  %v3739 = vsel %vm686, %v3616, 0
  %3741 = vmatprep.subr.mxu0 0.0
  %3742 = vmatpush1.xpose.msra.mxu0 %v3730
  %3743 = vmatprep.subr.mxu0 0.0
  %3744 = vmatpush1.xpose.msra.mxu0 %v3733
  %3745 = vmatprep.subr.mxu0 0.0
  %3746 = vmatpush1.xpose.msra.mxu0 %v3736
  %3747 = vmatprep.subr.mxu0 0.0
  %3748 = vmatpush1.xpose.msra.mxu0 %v3739
  %3749 = vmatprep.subr.mxu0 0.0
  %3750 = vmatpush1.xpose.msra.mxu0 0.0
  %3751 = vmatprep.subr.mxu0 0.0
  %3752 = vmatpush1.xpose.msra.mxu0 0.0
  %3753 = vmatprep.subr.mxu0 0.0
  %3754 = vmatpush1.xpose.msra.mxu0 0.0
  %3755 = vmatprep.subr.mxu0 0.0
  %3756 = vmatpush1.xpose.msra.mxu0 0.0
  %3757 = vmatprep.subr.mxu0 0.0
  %3758 = vmatpush1.xpose.msra.mxu0 0.0
  %3759 = vmatprep.subr.mxu0 0.0
  %3760 = vmatpush1.xpose.msra.mxu0 0.0
  %3761 = vmatprep.subr.mxu0 0.0
  %3762 = vmatpush1.xpose.msra.mxu0 0.0
  %3763 = vmatprep.subr.mxu0 0.0
  %3764 = vmatpush1.xpose.msra.mxu0 0.0
  %3765 = vmatprep.subr.mxu0 0.0
  %3766 = vmatpush1.xpose.msra.mxu0 0.0
  %3767 = vmatprep.subr.mxu0 0.0
  %3768 = vmatpush1.xpose.msra.mxu0 0.0
  %3769 = vmatprep.subr.mxu0 0.0
  %3770 = vmatpush1.xpose.msra.mxu0 0.0
  %3771 = vmatprep.subr.mxu0 0.0
  %3772 = vmatpush1.xpose.msra.mxu0 0.0
  %3773 = vmatprep.subr.mxu0 0.0
  %3774 = vmatpush1.xpose.msra.mxu0 0.0
  %3775 = vmatprep.subr.mxu0 0.0
  %3776 = vmatpush1.xpose.msra.mxu0 0.0
  %3777 = vmatprep.subr.mxu0 0.0
  %3778 = vmatpush1.xpose.msra.mxu0 0.0
  %3779 = vmatprep.subr.mxu0 0.0
  %3780 = vmatpush1.xpose.msra.mxu0 0.0
  %3781 = vmatprep.subr.mxu0 0.0
  %3782 = vmatpush1.xpose.msra.mxu0 0.0
  %3783 = vmatprep.subr.mxu0 0.0
  %3784 = vmatpush1.xpose.msra.mxu0 0.0
  %3785 = vmatprep.subr.mxu0 0.0
  %3786 = vmatpush1.xpose.msra.mxu0 0.0
  %3787 = vmatprep.subr.mxu0 0.0
  %3788 = vmatpush1.xpose.msra.mxu0 0.0
  %3789 = vmatprep.subr.mxu0 0.0
  %3790 = vmatpush1.xpose.msra.mxu0 0.0
  %3791 = vmatprep.subr.mxu0 0.0
  %3792 = vmatpush1.xpose.msra.mxu0 0.0
  %3793 = vmatprep.subr.mxu0 0.0
  %3794 = vmatpush1.xpose.msra.mxu0 0.0
  %3795 = vmatprep.subr.mxu0 0.0
  %3796 = vmatpush1.xpose.msra.mxu0 0.0
  %3797 = vmatprep.subr.mxu0 0.0
  %3798 = vmatpush1.xpose.msra.mxu0 0.0
  %3799 = vmatprep.subr.mxu0 0.0
  %3800 = vmatpush1.xpose.msra.mxu0 0.0
  %3801 = vmatprep.subr.mxu0 0.0
  %3802 = vmatpush1.xpose.msra.mxu0 0.0
  %3803 = vmatprep.subr.mxu0 0.0
  %3804 = vmatpush1.xpose.msra.mxu0 0.0
  %3805 = vmatprep.mubr.f32.mxu0 0.0
  %3806 = vmatmul.mubr.f32.gmra.mrb[0].mxu0 %v3718
  %v3807 = vpop.f32.mrb[0].mxu0
  %v3808 = vadd.f32 0.0, %v3807
  %v3809 = vpop.f32.mrb[0].mxu0
  %3810 = vmatprep.mubr.f32.mxu0 0.0
  %3811 = vmatmul.mubr.f32.gmra.mrb[0].mxu0 %v3721
  %v3812 = vpop.f32.mrb[0].mxu0
  %v3813 = vadd.f32 0.0, %v3812
  %v3814 = vpop.f32.mrb[0].mxu0
  %3815 = vmatprep.mubr.f32.mxu0 0.0
  %3816 = vmatmul.mubr.f32.gmra.mrb[0].mxu0 %v3724
  %v3817 = vpop.f32.mrb[0].mxu0
  %v3818 = vadd.f32 0.0, %v3817
  %v3819 = vpop.f32.mrb[0].mxu0
  %3820 = vmatprep.mubr.f32.mxu0 0.0
  %3821 = vmatmul.mubr.f32.gmra.mrb[0].mxu0 %v3727
  %v3822 = vpop.f32.mrb[0].mxu0
  %v3823 = vadd.f32 0.0, %v3822
  %v3824 = vpop.f32.mrb[0].mxu0
  %3825 = vdwg.mxu0
  %v3826 = vmul.f32 %v3808, 0.35355338
  %v3827 = vmul.f32 %v3813, 0.35355338
  %v3828 = vmul.f32 %v3818, 0.35355338
  %v3829 = vmul.f32 %v3823, 0.35355338
  %v3830 = vadd.f32 %v3826, %v293
  %v3831 = vadd.f32 %v3827, %v294
  %v3832 = vadd.f32 %v3828, %v295
  %v3833 = vadd.f32 %v3829, %v296
  %v3834 = vsel %vm308, %v3830, -inf
  %3835 = vmax.xlane.f32.xlu0 %v3834
  %v3836 = vpop.xlane.xlu0 %3835
  %v3837 = vsel %vm308, %v3831, -inf
  %3838 = vmax.xlane.f32.xlu0 %v3837
  %v3839 = vpop.xlane.xlu0 %3838
  %v3840 = vsel %vm308, %v3832, -inf
  %3841 = vmax.xlane.f32.xlu0 %v3840
  %v3842 = vpop.xlane.xlu0 %3841
  %v3843 = vsel %vm308, %v3833, -inf
  %3844 = vmax.xlane.f32.xlu0 %v3843
  %v3845 = vpop.xlane.xlu0 %3844
  %v3846 = vsub.f32 %v3830, %v3836
  %v3847 = vsub.f32 %v3831, %v3839
  %v3848 = vsub.f32 %v3832, %v3842
  %v3849 = vsub.f32 %v3833, %v3845
  %v3850 = vmul.f32 %v3846, 1.442695
  %v3851 = vpow.pop %v3850
  %v3852 = vmul.f32 %v3847, 1.442695
  %v3853 = vpow.pop %v3852
  %v3854 = vmul.f32 %v3848, 1.442695
  %v3855 = vpow.pop %v3854
  %v3856 = vmul.f32 %v3849, 1.442695
  %v3857 = vpow.pop %v3856
  %v3858 = vsel %vm308, %v3851, 0.0
  %3859 = vadd.xlane.f32.xlu0 %v3858
  %v3860 = vpop.xlane.xlu0 %3859
  %v3861 = vsel %vm308, %v3853, 0.0
  %3862 = vadd.xlane.f32.xlu0 %v3861
  %v3863 = vpop.xlane.xlu0 %3862
  %v3864 = vsel %vm308, %v3855, 0.0
  %3865 = vadd.xlane.f32.xlu0 %v3864
  %v3866 = vpop.xlane.xlu0 %3865
  %v3867 = vsel %vm308, %v3857, 0.0
  %3868 = vadd.xlane.f32.xlu0 %v3867
  %v3869 = vpop.xlane.xlu0 %3868
  %v3870 = vrcp.pop %v3860
  %v3871 = vrcp.pop %v3863
  %v3872 = vrcp.pop %v3866
  %v3873 = vrcp.pop %v3869
  %v3874 = vmul.f32 %v3851, %v3870
  %v3875 = vmul.f32 %v3853, %v3871
  %v3876 = vmul.f32 %v3855, %v3872
  %v3877 = vmul.f32 %v3857, %v3873
  %v3879 = vsel %vm308, %v3874, 0
  %v3882 = vsel %vm308, %v3875, 0
  %v3885 = vsel %vm308, %v3876, 0
  %v3888 = vsel %vm308, %v3877, 0
  %3890 = vmatprep.subr.mxu0 0.0
  %3891 = vmatpush1.msra.mxu0 %v3699
  %3892 = vmatprep.subr.mxu0 0.0
  %3893 = vmatpush1.msra.mxu0 %v3704
  %3894 = vmatprep.subr.mxu0 0.0
  %3895 = vmatpush1.msra.mxu0 %v3709
  %3896 = vmatprep.subr.mxu0 0.0
  %3897 = vmatpush1.msra.mxu0 %v3714
  %3898 = vmatprep.subr.mxu0 0.0
  %3899 = vmatpush1.msra.mxu0 0.0
  %3900 = vmatprep.subr.mxu0 0.0
  %3901 = vmatpush1.msra.mxu0 0.0
  %3902 = vmatprep.subr.mxu0 0.0
  %3903 = vmatpush1.msra.mxu0 0.0
  %3904 = vmatprep.subr.mxu0 0.0
  %3905 = vmatpush1.msra.mxu0 0.0
  %3906 = vmatprep.subr.mxu0 0.0
  %3907 = vmatpush1.msra.mxu0 0.0
  %3908 = vmatprep.subr.mxu0 0.0
  %3909 = vmatpush1.msra.mxu0 0.0
  %3910 = vmatprep.subr.mxu0 0.0
  %3911 = vmatpush1.msra.mxu0 0.0
  %3912 = vmatprep.subr.mxu0 0.0
  %3913 = vmatpush1.msra.mxu0 0.0
  %3914 = vmatprep.subr.mxu0 0.0
  %3915 = vmatpush1.msra.mxu0 0.0
  %3916 = vmatprep.subr.mxu0 0.0
  %3917 = vmatpush1.msra.mxu0 0.0
  %3918 = vmatprep.subr.mxu0 0.0
  %3919 = vmatpush1.msra.mxu0 0.0
  %3920 = vmatprep.subr.mxu0 0.0
  %3921 = vmatpush1.msra.mxu0 0.0
  %3922 = vmatprep.subr.mxu0 0.0
  %3923 = vmatpush1.msra.mxu0 0.0
  %3924 = vmatprep.subr.mxu0 0.0
  %3925 = vmatpush1.msra.mxu0 0.0
  %3926 = vmatprep.subr.mxu0 0.0
  %3927 = vmatpush1.msra.mxu0 0.0
  %3928 = vmatprep.subr.mxu0 0.0
  %3929 = vmatpush1.msra.mxu0 0.0
  %3930 = vmatprep.subr.mxu0 0.0
  %3931 = vmatpush1.msra.mxu0 0.0
  %3932 = vmatprep.subr.mxu0 0.0
  %3933 = vmatpush1.msra.mxu0 0.0
  %3934 = vmatprep.subr.mxu0 0.0
  %3935 = vmatpush1.msra.mxu0 0.0
  %3936 = vmatprep.subr.mxu0 0.0
  %3937 = vmatpush1.msra.mxu0 0.0
  %3938 = vmatprep.subr.mxu0 0.0
  %3939 = vmatpush1.msra.mxu0 0.0
  %3940 = vmatprep.subr.mxu0 0.0
  %3941 = vmatpush1.msra.mxu0 0.0
  %3942 = vmatprep.subr.mxu0 0.0
  %3943 = vmatpush1.msra.mxu0 0.0
  %3944 = vmatprep.subr.mxu0 0.0
  %3945 = vmatpush1.msra.mxu0 0.0
  %3946 = vmatprep.subr.mxu0 0.0
  %3947 = vmatpush1.msra.mxu0 0.0
  %3948 = vmatprep.subr.mxu0 0.0
  %3949 = vmatpush1.msra.mxu0 0.0
  %3950 = vmatprep.subr.mxu0 0.0
  %3951 = vmatpush1.msra.mxu0 0.0
  %3952 = vmatprep.subr.mxu0 0.0
  %3953 = vmatpush1.msra.mxu0 0.0
  %3954 = vmatprep.mubr.f32.mxu0 0.0
  %3955 = vmatmul.mubr.f32.gmra.mrb[0].mxu0 %v3879
  %v3956 = vpop.f32.mrb[0].mxu0
  %v3957 = vadd.f32 0.0, %v3956
  %v3958 = vpop.f32.mrb[0].mxu0
  %3959 = vmatprep.mubr.f32.mxu0 0.0
  %3960 = vmatmul.mubr.f32.gmra.mrb[0].mxu0 %v3882
  %v3961 = vpop.f32.mrb[0].mxu0
  %v3962 = vadd.f32 0.0, %v3961
  %v3963 = vpop.f32.mrb[0].mxu0
  %3964 = vmatprep.mubr.f32.mxu0 0.0
  %3965 = vmatmul.mubr.f32.gmra.mrb[0].mxu0 %v3885
  %v3966 = vpop.f32.mrb[0].mxu0
  %v3967 = vadd.f32 0.0, %v3966
  %v3968 = vpop.f32.mrb[0].mxu0
  %3969 = vmatprep.mubr.f32.mxu0 0.0
  %3970 = vmatmul.mubr.f32.gmra.mrb[0].mxu0 %v3888
  %v3971 = vpop.f32.mrb[0].mxu0
  %v3972 = vadd.f32 0.0, %v3971
  %v3973 = vpop.f32.mrb[0].mxu0
  %3974 = vdwg.mxu0
  %s3975 = scalar_lea.vmem %s5, 32
  %v3976 = vld [vmem:[%s3975] sm:$0xff]
  %s3977 = scalar_lea.vmem %s3, 160
  %v3978 = vld [vmem:[%s3977] sm:$0xff]
  %v3979 = vld [vmem:[%s3977 + $0x8] sm:$0xff]
  %v3980 = vld [vmem:[%s3977 + $0x10] sm:$0xff]
  %v3981 = vld [vmem:[%s3977 + $0x18] sm:$0xff]
  %s3982 = scalar_lea.vmem %s4, 5
  %v3983 = vld [vmem:[%s3982] sm:$0x1]
  %v3985 = vlaneseq
  %v3986 = vshrl.u32 %v3985, 7
  %v3987 = vsub.s32 0, %v3986
  %v3988 = vrot.slane %v3983, %v3987
  %3990 = vmatprep.subr.mxu0 0.0
  %3991 = vmatpush1.msra.mxu0 %v3978
  %3992 = vmatprep.subr.mxu0 0.0
  %3993 = vmatpush1.msra.mxu0 %v3979
  %3994 = vmatprep.subr.mxu0 0.0
  %3995 = vmatpush1.msra.mxu0 %v3980
  %3996 = vmatprep.subr.mxu0 0.0
  %3997 = vmatpush1.msra.mxu0 %v3981
  %3998 = vmatprep.subr.mxu0 0.0
  %3999 = vmatpush1.msra.mxu0 0.0
  %4000 = vmatprep.subr.mxu0 0.0
  %4001 = vmatpush1.msra.mxu0 0.0
  %4002 = vmatprep.subr.mxu0 0.0
  %4003 = vmatpush1.msra.mxu0 0.0
  %4004 = vmatprep.subr.mxu0 0.0
  %4005 = vmatpush1.msra.mxu0 0.0
  %4006 = vmatprep.subr.mxu0 0.0
  %4007 = vmatpush1.msra.mxu0 0.0
  %4008 = vmatprep.subr.mxu0 0.0
  %4009 = vmatpush1.msra.mxu0 0.0
  %4010 = vmatprep.subr.mxu0 0.0
  %4011 = vmatpush1.msra.mxu0 0.0
  %4012 = vmatprep.subr.mxu0 0.0
  %4013 = vmatpush1.msra.mxu0 0.0
  %4014 = vmatprep.subr.mxu0 0.0
  %4015 = vmatpush1.msra.mxu0 0.0
  %4016 = vmatprep.subr.mxu0 0.0
  %4017 = vmatpush1.msra.mxu0 0.0
  %4018 = vmatprep.subr.mxu0 0.0
  %4019 = vmatpush1.msra.mxu0 0.0
  %4020 = vmatprep.subr.mxu0 0.0
  %4021 = vmatpush1.msra.mxu0 0.0
  %4022 = vmatprep.subr.mxu0 0.0
  %4023 = vmatpush1.msra.mxu0 0.0
  %4024 = vmatprep.subr.mxu0 0.0
  %4025 = vmatpush1.msra.mxu0 0.0
  %4026 = vmatprep.subr.mxu0 0.0
  %4027 = vmatpush1.msra.mxu0 0.0
  %4028 = vmatprep.subr.mxu0 0.0
  %4029 = vmatpush1.msra.mxu0 0.0
  %4030 = vmatprep.subr.mxu0 0.0
  %4031 = vmatpush1.msra.mxu0 0.0
  %4032 = vmatprep.subr.mxu0 0.0
  %4033 = vmatpush1.msra.mxu0 0.0
  %4034 = vmatprep.subr.mxu0 0.0
  %4035 = vmatpush1.msra.mxu0 0.0
  %4036 = vmatprep.subr.mxu0 0.0
  %4037 = vmatpush1.msra.mxu0 0.0
  %4038 = vmatprep.subr.mxu0 0.0
  %4039 = vmatpush1.msra.mxu0 0.0
  %4040 = vmatprep.subr.mxu0 0.0
  %4041 = vmatpush1.msra.mxu0 0.0
  %4042 = vmatprep.subr.mxu0 0.0
  %4043 = vmatpush1.msra.mxu0 0.0
  %4044 = vmatprep.subr.mxu0 0.0
  %4045 = vmatpush1.msra.mxu0 0.0
  %4046 = vmatprep.subr.mxu0 0.0
  %4047 = vmatpush1.msra.mxu0 0.0
  %4048 = vmatprep.subr.mxu0 0.0
  %4049 = vmatpush1.msra.mxu0 0.0
  %4050 = vmatprep.subr.mxu0 0.0
  %4051 = vmatpush1.msra.mxu0 0.0
  %4052 = vmatprep.subr.mxu0 0.0
  %4053 = vmatpush1.msra.mxu0 0.0
  %4054 = vmatprep.mubr.f32.mxu0 0.0
  %4055 = vmatmul.mubr.f32.gmra.mrb[0].mxu0 %v3425
  %v4056 = vpop.f32.mrb[0].mxu0
  %v4057 = vadd.f32 %v3988, %v4056
  %v4058 = vpop.f32.mrb[0].mxu0
  %4059 = vmatprep.mubr.f32.mxu0 0.0
  %4060 = vmatmul.mubr.f32.gmra.mrb[0].mxu0 %v3428
  %v4061 = vpop.f32.mrb[0].mxu0
  %v4062 = vadd.f32 %v3988, %v4061
  %v4063 = vpop.f32.mrb[0].mxu0
  %4064 = vmatprep.mubr.f32.mxu0 0.0
  %4065 = vmatmul.mubr.f32.gmra.mrb[0].mxu0 %v3431
  %v4066 = vpop.f32.mrb[0].mxu0
  %v4067 = vadd.f32 %v3988, %v4066
  %v4068 = vpop.f32.mrb[0].mxu0
  %4069 = vmatprep.mubr.f32.mxu0 0.0
  %4070 = vmatmul.mubr.f32.gmra.mrb[0].mxu0 %v3434
  %v4071 = vpop.f32.mrb[0].mxu0
  %v4072 = vadd.f32 %v3988, %v4071
  %v4073 = vpop.f32.mrb[0].mxu0
  %4074 = vdwg.mxu0
  %s4075 = scalar_lea.vmem %s3, 416
  %v4076 = vld [vmem:[%s4075] sm:$0xff]
  %v4077 = vld [vmem:[%s4075 + $0x8] sm:$0xff]
  %v4078 = vld [vmem:[%s4075 + $0x10] sm:$0xff]
  %v4079 = vld [vmem:[%s4075 + $0x18] sm:$0xff]
  %s4080 = scalar_lea.vmem %s4, 13
  %v4081 = vld [vmem:[%s4080] sm:$0x1]
  %v4083 = vlaneseq
  %v4084 = vshrl.u32 %v4083, 7
  %v4085 = vsub.s32 0, %v4084
  %v4086 = vrot.slane %v4081, %v4085
  %4088 = vmatprep.subr.mxu0 0.0
  %4089 = vmatpush1.msra.mxu0 %v4076
  %4090 = vmatprep.subr.mxu0 0.0
  %4091 = vmatpush1.msra.mxu0 %v4077
  %4092 = vmatprep.subr.mxu0 0.0
  %4093 = vmatpush1.msra.mxu0 %v4078
  %4094 = vmatprep.subr.mxu0 0.0
  %4095 = vmatpush1.msra.mxu0 %v4079
  %4096 = vmatprep.subr.mxu0 0.0
  %4097 = vmatpush1.msra.mxu0 0.0
  %4098 = vmatprep.subr.mxu0 0.0
  %4099 = vmatpush1.msra.mxu0 0.0
  %4100 = vmatprep.subr.mxu0 0.0
  %4101 = vmatpush1.msra.mxu0 0.0
  %4102 = vmatprep.subr.mxu0 0.0
  %4103 = vmatpush1.msra.mxu0 0.0
  %4104 = vmatprep.subr.mxu0 0.0
  %4105 = vmatpush1.msra.mxu0 0.0
  %4106 = vmatprep.subr.mxu0 0.0
  %4107 = vmatpush1.msra.mxu0 0.0
  %4108 = vmatprep.subr.mxu0 0.0
  %4109 = vmatpush1.msra.mxu0 0.0
  %4110 = vmatprep.subr.mxu0 0.0
  %4111 = vmatpush1.msra.mxu0 0.0
  %4112 = vmatprep.subr.mxu0 0.0
  %4113 = vmatpush1.msra.mxu0 0.0
  %4114 = vmatprep.subr.mxu0 0.0
  %4115 = vmatpush1.msra.mxu0 0.0
  %4116 = vmatprep.subr.mxu0 0.0
  %4117 = vmatpush1.msra.mxu0 0.0
  %4118 = vmatprep.subr.mxu0 0.0
  %4119 = vmatpush1.msra.mxu0 0.0
  %4120 = vmatprep.subr.mxu0 0.0
  %4121 = vmatpush1.msra.mxu0 0.0
  %4122 = vmatprep.subr.mxu0 0.0
  %4123 = vmatpush1.msra.mxu0 0.0
  %4124 = vmatprep.subr.mxu0 0.0
  %4125 = vmatpush1.msra.mxu0 0.0
  %4126 = vmatprep.subr.mxu0 0.0
  %4127 = vmatpush1.msra.mxu0 0.0
  %4128 = vmatprep.subr.mxu0 0.0
  %4129 = vmatpush1.msra.mxu0 0.0
  %4130 = vmatprep.subr.mxu0 0.0
  %4131 = vmatpush1.msra.mxu0 0.0
  %4132 = vmatprep.subr.mxu0 0.0
  %4133 = vmatpush1.msra.mxu0 0.0
  %4134 = vmatprep.subr.mxu0 0.0
  %4135 = vmatpush1.msra.mxu0 0.0
  %4136 = vmatprep.subr.mxu0 0.0
  %4137 = vmatpush1.msra.mxu0 0.0
  %4138 = vmatprep.subr.mxu0 0.0
  %4139 = vmatpush1.msra.mxu0 0.0
  %4140 = vmatprep.subr.mxu0 0.0
  %4141 = vmatpush1.msra.mxu0 0.0
  %4142 = vmatprep.subr.mxu0 0.0
  %4143 = vmatpush1.msra.mxu0 0.0
  %4144 = vmatprep.subr.mxu0 0.0
  %4145 = vmatpush1.msra.mxu0 0.0
  %4146 = vmatprep.subr.mxu0 0.0
  %4147 = vmatpush1.msra.mxu0 0.0
  %4148 = vmatprep.subr.mxu0 0.0
  %4149 = vmatpush1.msra.mxu0 0.0
  %4150 = vmatprep.subr.mxu0 0.0
  %4151 = vmatpush1.msra.mxu0 0.0
  %4152 = vmatprep.mubr.f32.mxu0 0.0
  %4153 = vmatmul.mubr.f32.gmra.mrb[0].mxu0 %v3425
  %v4154 = vpop.f32.mrb[0].mxu0
  %v4155 = vadd.f32 %v4086, %v4154
  %v4156 = vpop.f32.mrb[0].mxu0
  %4157 = vmatprep.mubr.f32.mxu0 0.0
  %4158 = vmatmul.mubr.f32.gmra.mrb[0].mxu0 %v3428
  %v4159 = vpop.f32.mrb[0].mxu0
  %v4160 = vadd.f32 %v4086, %v4159
  %v4161 = vpop.f32.mrb[0].mxu0
  %4162 = vmatprep.mubr.f32.mxu0 0.0
  %4163 = vmatmul.mubr.f32.gmra.mrb[0].mxu0 %v3431
  %v4164 = vpop.f32.mrb[0].mxu0
  %v4165 = vadd.f32 %v4086, %v4164
  %v4166 = vpop.f32.mrb[0].mxu0
  %4167 = vmatprep.mubr.f32.mxu0 0.0
  %4168 = vmatmul.mubr.f32.gmra.mrb[0].mxu0 %v3434
  %v4169 = vpop.f32.mrb[0].mxu0
  %v4170 = vadd.f32 %v4086, %v4169
  %v4171 = vpop.f32.mrb[0].mxu0
  %4172 = vdwg.mxu0
  %s4173 = scalar_lea.vmem %s3, 672
  %v4174 = vld [vmem:[%s4173] sm:$0xff]
  %v4175 = vld [vmem:[%s4173 + $0x8] sm:$0xff]
  %v4176 = vld [vmem:[%s4173 + $0x10] sm:$0xff]
  %v4177 = vld [vmem:[%s4173 + $0x18] sm:$0xff]
  %s4178 = scalar_lea.vmem %s4, 21
  %v4179 = vld [vmem:[%s4178] sm:$0x1]
  %v4181 = vlaneseq
  %v4182 = vshrl.u32 %v4181, 7
  %v4183 = vsub.s32 0, %v4182
  %v4184 = vrot.slane %v4179, %v4183
  %4186 = vmatprep.subr.mxu0 0.0
  %4187 = vmatpush1.msra.mxu0 %v4174
  %4188 = vmatprep.subr.mxu0 0.0
  %4189 = vmatpush1.msra.mxu0 %v4175
  %4190 = vmatprep.subr.mxu0 0.0
  %4191 = vmatpush1.msra.mxu0 %v4176
  %4192 = vmatprep.subr.mxu0 0.0
  %4193 = vmatpush1.msra.mxu0 %v4177
  %4194 = vmatprep.subr.mxu0 0.0
  %4195 = vmatpush1.msra.mxu0 0.0
  %4196 = vmatprep.subr.mxu0 0.0
  %4197 = vmatpush1.msra.mxu0 0.0
  %4198 = vmatprep.subr.mxu0 0.0
  %4199 = vmatpush1.msra.mxu0 0.0
  %4200 = vmatprep.subr.mxu0 0.0
  %4201 = vmatpush1.msra.mxu0 0.0
  %4202 = vmatprep.subr.mxu0 0.0
  %4203 = vmatpush1.msra.mxu0 0.0
  %4204 = vmatprep.subr.mxu0 0.0
  %4205 = vmatpush1.msra.mxu0 0.0
  %4206 = vmatprep.subr.mxu0 0.0
  %4207 = vmatpush1.msra.mxu0 0.0
  %4208 = vmatprep.subr.mxu0 0.0
  %4209 = vmatpush1.msra.mxu0 0.0
  %4210 = vmatprep.subr.mxu0 0.0
  %4211 = vmatpush1.msra.mxu0 0.0
  %4212 = vmatprep.subr.mxu0 0.0
  %4213 = vmatpush1.msra.mxu0 0.0
  %4214 = vmatprep.subr.mxu0 0.0
  %4215 = vmatpush1.msra.mxu0 0.0
  %4216 = vmatprep.subr.mxu0 0.0
  %4217 = vmatpush1.msra.mxu0 0.0
  %4218 = vmatprep.subr.mxu0 0.0
  %4219 = vmatpush1.msra.mxu0 0.0
  %4220 = vmatprep.subr.mxu0 0.0
  %4221 = vmatpush1.msra.mxu0 0.0
  %4222 = vmatprep.subr.mxu0 0.0
  %4223 = vmatpush1.msra.mxu0 0.0
  %4224 = vmatprep.subr.mxu0 0.0
  %4225 = vmatpush1.msra.mxu0 0.0
  %4226 = vmatprep.subr.mxu0 0.0
  %4227 = vmatpush1.msra.mxu0 0.0
  %4228 = vmatprep.subr.mxu0 0.0
  %4229 = vmatpush1.msra.mxu0 0.0
  %4230 = vmatprep.subr.mxu0 0.0
  %4231 = vmatpush1.msra.mxu0 0.0
  %4232 = vmatprep.subr.mxu0 0.0
  %4233 = vmatpush1.msra.mxu0 0.0
  %4234 = vmatprep.subr.mxu0 0.0
  %4235 = vmatpush1.msra.mxu0 0.0
  %4236 = vmatprep.subr.mxu0 0.0
  %4237 = vmatpush1.msra.mxu0 0.0
  %4238 = vmatprep.subr.mxu0 0.0
  %4239 = vmatpush1.msra.mxu0 0.0
  %4240 = vmatprep.subr.mxu0 0.0
  %4241 = vmatpush1.msra.mxu0 0.0
  %4242 = vmatprep.subr.mxu0 0.0
  %4243 = vmatpush1.msra.mxu0 0.0
  %4244 = vmatprep.subr.mxu0 0.0
  %4245 = vmatpush1.msra.mxu0 0.0
  %4246 = vmatprep.subr.mxu0 0.0
  %4247 = vmatpush1.msra.mxu0 0.0
  %4248 = vmatprep.subr.mxu0 0.0
  %4249 = vmatpush1.msra.mxu0 0.0
  %4250 = vmatprep.mubr.f32.mxu0 0.0
  %4251 = vmatmul.mubr.f32.gmra.mrb[0].mxu0 %v3425
  %v4252 = vpop.f32.mrb[0].mxu0
  %v4253 = vadd.f32 %v4184, %v4252
  %v4254 = vpop.f32.mrb[0].mxu0
  %4255 = vmatprep.mubr.f32.mxu0 0.0
  %4256 = vmatmul.mubr.f32.gmra.mrb[0].mxu0 %v3428
  %v4257 = vpop.f32.mrb[0].mxu0
  %v4258 = vadd.f32 %v4184, %v4257
  %v4259 = vpop.f32.mrb[0].mxu0
  %4260 = vmatprep.mubr.f32.mxu0 0.0
  %4261 = vmatmul.mubr.f32.gmra.mrb[0].mxu0 %v3431
  %v4262 = vpop.f32.mrb[0].mxu0
  %v4263 = vadd.f32 %v4184, %v4262
  %v4264 = vpop.f32.mrb[0].mxu0
  %4265 = vmatprep.mubr.f32.mxu0 0.0
  %4266 = vmatmul.mubr.f32.gmra.mrb[0].mxu0 %v3434
  %v4267 = vpop.f32.mrb[0].mxu0
  %v4268 = vadd.f32 %v4184, %v4267
  %v4269 = vpop.f32.mrb[0].mxu0
  %4270 = vdwg.mxu0
  %v4272 = vsel %vm686, %v4057, 0
  %v4275 = vsel %vm686, %v4062, 0
  %v4278 = vsel %vm686, %v4067, 0
  %v4281 = vsel %vm686, %v4072, 0
  %v4284 = vsel %vm686, %v4155, 0
  %v4287 = vsel %vm686, %v4160, 0
  %v4290 = vsel %vm686, %v4165, 0
  %v4293 = vsel %vm686, %v4170, 0
  %4295 = vmatprep.subr.mxu0 0.0
  %4296 = vmatpush1.xpose.msra.mxu0 %v4284
  %4297 = vmatprep.subr.mxu0 0.0
  %4298 = vmatpush1.xpose.msra.mxu0 %v4287
  %4299 = vmatprep.subr.mxu0 0.0
  %4300 = vmatpush1.xpose.msra.mxu0 %v4290
  %4301 = vmatprep.subr.mxu0 0.0
  %4302 = vmatpush1.xpose.msra.mxu0 %v4293
  %4303 = vmatprep.subr.mxu0 0.0
  %4304 = vmatpush1.xpose.msra.mxu0 0.0
  %4305 = vmatprep.subr.mxu0 0.0
  %4306 = vmatpush1.xpose.msra.mxu0 0.0
  %4307 = vmatprep.subr.mxu0 0.0
  %4308 = vmatpush1.xpose.msra.mxu0 0.0
  %4309 = vmatprep.subr.mxu0 0.0
  %4310 = vmatpush1.xpose.msra.mxu0 0.0
  %4311 = vmatprep.subr.mxu0 0.0
  %4312 = vmatpush1.xpose.msra.mxu0 0.0
  %4313 = vmatprep.subr.mxu0 0.0
  %4314 = vmatpush1.xpose.msra.mxu0 0.0
  %4315 = vmatprep.subr.mxu0 0.0
  %4316 = vmatpush1.xpose.msra.mxu0 0.0
  %4317 = vmatprep.subr.mxu0 0.0
  %4318 = vmatpush1.xpose.msra.mxu0 0.0
  %4319 = vmatprep.subr.mxu0 0.0
  %4320 = vmatpush1.xpose.msra.mxu0 0.0
  %4321 = vmatprep.subr.mxu0 0.0
  %4322 = vmatpush1.xpose.msra.mxu0 0.0
  %4323 = vmatprep.subr.mxu0 0.0
  %4324 = vmatpush1.xpose.msra.mxu0 0.0
  %4325 = vmatprep.subr.mxu0 0.0
  %4326 = vmatpush1.xpose.msra.mxu0 0.0
  %4327 = vmatprep.subr.mxu0 0.0
  %4328 = vmatpush1.xpose.msra.mxu0 0.0
  %4329 = vmatprep.subr.mxu0 0.0
  %4330 = vmatpush1.xpose.msra.mxu0 0.0
  %4331 = vmatprep.subr.mxu0 0.0
  %4332 = vmatpush1.xpose.msra.mxu0 0.0
  %4333 = vmatprep.subr.mxu0 0.0
  %4334 = vmatpush1.xpose.msra.mxu0 0.0
  %4335 = vmatprep.subr.mxu0 0.0
  %4336 = vmatpush1.xpose.msra.mxu0 0.0
  %4337 = vmatprep.subr.mxu0 0.0
  %4338 = vmatpush1.xpose.msra.mxu0 0.0
  %4339 = vmatprep.subr.mxu0 0.0
  %4340 = vmatpush1.xpose.msra.mxu0 0.0
  %4341 = vmatprep.subr.mxu0 0.0
  %4342 = vmatpush1.xpose.msra.mxu0 0.0
  %4343 = vmatprep.subr.mxu0 0.0
  %4344 = vmatpush1.xpose.msra.mxu0 0.0
  %4345 = vmatprep.subr.mxu0 0.0
  %4346 = vmatpush1.xpose.msra.mxu0 0.0
  %4347 = vmatprep.subr.mxu0 0.0
  %4348 = vmatpush1.xpose.msra.mxu0 0.0
  %4349 = vmatprep.subr.mxu0 0.0
  %4350 = vmatpush1.xpose.msra.mxu0 0.0
  %4351 = vmatprep.subr.mxu0 0.0
  %4352 = vmatpush1.xpose.msra.mxu0 0.0
  %4353 = vmatprep.subr.mxu0 0.0
  %4354 = vmatpush1.xpose.msra.mxu0 0.0
  %4355 = vmatprep.subr.mxu0 0.0
  %4356 = vmatpush1.xpose.msra.mxu0 0.0
  %4357 = vmatprep.subr.mxu0 0.0
  %4358 = vmatpush1.xpose.msra.mxu0 0.0
  %4359 = vmatprep.mubr.f32.mxu0 0.0
  %4360 = vmatmul.mubr.f32.gmra.mrb[0].mxu0 %v4272
  %v4361 = vpop.f32.mrb[0].mxu0
  %v4362 = vadd.f32 0.0, %v4361
  %v4363 = vpop.f32.mrb[0].mxu0
  %4364 = vmatprep.mubr.f32.mxu0 0.0
  %4365 = vmatmul.mubr.f32.gmra.mrb[0].mxu0 %v4275
  %v4366 = vpop.f32.mrb[0].mxu0
  %v4367 = vadd.f32 0.0, %v4366
  %v4368 = vpop.f32.mrb[0].mxu0
  %4369 = vmatprep.mubr.f32.mxu0 0.0
  %4370 = vmatmul.mubr.f32.gmra.mrb[0].mxu0 %v4278
  %v4371 = vpop.f32.mrb[0].mxu0
  %v4372 = vadd.f32 0.0, %v4371
  %v4373 = vpop.f32.mrb[0].mxu0
  %4374 = vmatprep.mubr.f32.mxu0 0.0
  %4375 = vmatmul.mubr.f32.gmra.mrb[0].mxu0 %v4281
  %v4376 = vpop.f32.mrb[0].mxu0
  %v4377 = vadd.f32 0.0, %v4376
  %v4378 = vpop.f32.mrb[0].mxu0
  %4379 = vdwg.mxu0
  %v4380 = vmul.f32 %v4362, 0.35355338
  %v4381 = vmul.f32 %v4367, 0.35355338
  %v4382 = vmul.f32 %v4372, 0.35355338
  %v4383 = vmul.f32 %v4377, 0.35355338
  %v4384 = vadd.f32 %v4380, %v293
  %v4385 = vadd.f32 %v4381, %v294
  %v4386 = vadd.f32 %v4382, %v295
  %v4387 = vadd.f32 %v4383, %v296
  %v4388 = vsel %vm308, %v4384, -inf
  %4389 = vmax.xlane.f32.xlu0 %v4388
  %v4390 = vpop.xlane.xlu0 %4389
  %v4391 = vsel %vm308, %v4385, -inf
  %4392 = vmax.xlane.f32.xlu0 %v4391
  %v4393 = vpop.xlane.xlu0 %4392
  %v4394 = vsel %vm308, %v4386, -inf
  %4395 = vmax.xlane.f32.xlu0 %v4394
  %v4396 = vpop.xlane.xlu0 %4395
  %v4397 = vsel %vm308, %v4387, -inf
  %4398 = vmax.xlane.f32.xlu0 %v4397
  %v4399 = vpop.xlane.xlu0 %4398
  %v4400 = vsub.f32 %v4384, %v4390
  %v4401 = vsub.f32 %v4385, %v4393
  %v4402 = vsub.f32 %v4386, %v4396
  %v4403 = vsub.f32 %v4387, %v4399
  %v4404 = vmul.f32 %v4400, 1.442695
  %v4405 = vpow.pop %v4404
  %v4406 = vmul.f32 %v4401, 1.442695
  %v4407 = vpow.pop %v4406
  %v4408 = vmul.f32 %v4402, 1.442695
  %v4409 = vpow.pop %v4408
  %v4410 = vmul.f32 %v4403, 1.442695
  %v4411 = vpow.pop %v4410
  %v4412 = vsel %vm308, %v4405, 0.0
  %4413 = vadd.xlane.f32.xlu0 %v4412
  %v4414 = vpop.xlane.xlu0 %4413
  %v4415 = vsel %vm308, %v4407, 0.0
  %4416 = vadd.xlane.f32.xlu0 %v4415
  %v4417 = vpop.xlane.xlu0 %4416
  %v4418 = vsel %vm308, %v4409, 0.0
  %4419 = vadd.xlane.f32.xlu0 %v4418
  %v4420 = vpop.xlane.xlu0 %4419
  %v4421 = vsel %vm308, %v4411, 0.0
  %4422 = vadd.xlane.f32.xlu0 %v4421
  %v4423 = vpop.xlane.xlu0 %4422
  %v4424 = vrcp.pop %v4414
  %v4425 = vrcp.pop %v4417
  %v4426 = vrcp.pop %v4420
  %v4427 = vrcp.pop %v4423
  %v4428 = vmul.f32 %v4405, %v4424
  %v4429 = vmul.f32 %v4407, %v4425
  %v4430 = vmul.f32 %v4409, %v4426
  %v4431 = vmul.f32 %v4411, %v4427
  %v4433 = vsel %vm308, %v4428, 0
  %v4436 = vsel %vm308, %v4429, 0
  %v4439 = vsel %vm308, %v4430, 0
  %v4442 = vsel %vm308, %v4431, 0
  %4444 = vmatprep.subr.mxu0 0.0
  %4445 = vmatpush1.msra.mxu0 %v4253
  %4446 = vmatprep.subr.mxu0 0.0
  %4447 = vmatpush1.msra.mxu0 %v4258
  %4448 = vmatprep.subr.mxu0 0.0
  %4449 = vmatpush1.msra.mxu0 %v4263
  %4450 = vmatprep.subr.mxu0 0.0
  %4451 = vmatpush1.msra.mxu0 %v4268
  %4452 = vmatprep.subr.mxu0 0.0
  %4453 = vmatpush1.msra.mxu0 0.0
  %4454 = vmatprep.subr.mxu0 0.0
  %4455 = vmatpush1.msra.mxu0 0.0
  %4456 = vmatprep.subr.mxu0 0.0
  %4457 = vmatpush1.msra.mxu0 0.0
  %4458 = vmatprep.subr.mxu0 0.0
  %4459 = vmatpush1.msra.mxu0 0.0
  %4460 = vmatprep.subr.mxu0 0.0
  %4461 = vmatpush1.msra.mxu0 0.0
  %4462 = vmatprep.subr.mxu0 0.0
  %4463 = vmatpush1.msra.mxu0 0.0
  %4464 = vmatprep.subr.mxu0 0.0
  %4465 = vmatpush1.msra.mxu0 0.0
  %4466 = vmatprep.subr.mxu0 0.0
  %4467 = vmatpush1.msra.mxu0 0.0
  %4468 = vmatprep.subr.mxu0 0.0
  %4469 = vmatpush1.msra.mxu0 0.0
  %4470 = vmatprep.subr.mxu0 0.0
  %4471 = vmatpush1.msra.mxu0 0.0
  %4472 = vmatprep.subr.mxu0 0.0
  %4473 = vmatpush1.msra.mxu0 0.0
  %4474 = vmatprep.subr.mxu0 0.0
  %4475 = vmatpush1.msra.mxu0 0.0
  %4476 = vmatprep.subr.mxu0 0.0
  %4477 = vmatpush1.msra.mxu0 0.0
  %4478 = vmatprep.subr.mxu0 0.0
  %4479 = vmatpush1.msra.mxu0 0.0
  %4480 = vmatprep.subr.mxu0 0.0
  %4481 = vmatpush1.msra.mxu0 0.0
  %4482 = vmatprep.subr.mxu0 0.0
  %4483 = vmatpush1.msra.mxu0 0.0
  %4484 = vmatprep.subr.mxu0 0.0
  %4485 = vmatpush1.msra.mxu0 0.0
  %4486 = vmatprep.subr.mxu0 0.0
  %4487 = vmatpush1.msra.mxu0 0.0
  %4488 = vmatprep.subr.mxu0 0.0
  %4489 = vmatpush1.msra.mxu0 0.0
  %4490 = vmatprep.subr.mxu0 0.0
  %4491 = vmatpush1.msra.mxu0 0.0
  %4492 = vmatprep.subr.mxu0 0.0
  %4493 = vmatpush1.msra.mxu0 0.0
  %4494 = vmatprep.subr.mxu0 0.0
  %4495 = vmatpush1.msra.mxu0 0.0
  %4496 = vmatprep.subr.mxu0 0.0
  %4497 = vmatpush1.msra.mxu0 0.0
  %4498 = vmatprep.subr.mxu0 0.0
  %4499 = vmatpush1.msra.mxu0 0.0
  %4500 = vmatprep.subr.mxu0 0.0
  %4501 = vmatpush1.msra.mxu0 0.0
  %4502 = vmatprep.subr.mxu0 0.0
  %4503 = vmatpush1.msra.mxu0 0.0
  %4504 = vmatprep.subr.mxu0 0.0
  %4505 = vmatpush1.msra.mxu0 0.0
  %4506 = vmatprep.subr.mxu0 0.0
  %4507 = vmatpush1.msra.mxu0 0.0
  %4508 = vmatprep.mubr.f32.mxu0 0.0
  %4509 = vmatmul.mubr.f32.gmra.mrb[0].mxu0 %v4433
  %v4510 = vpop.f32.mrb[0].mxu0
  %v4511 = vadd.f32 0.0, %v4510
  %v4512 = vpop.f32.mrb[0].mxu0
  %4513 = vmatprep.mubr.f32.mxu0 0.0
  %4514 = vmatmul.mubr.f32.gmra.mrb[0].mxu0 %v4436
  %v4515 = vpop.f32.mrb[0].mxu0
  %v4516 = vadd.f32 0.0, %v4515
  %v4517 = vpop.f32.mrb[0].mxu0
  %4518 = vmatprep.mubr.f32.mxu0 0.0
  %4519 = vmatmul.mubr.f32.gmra.mrb[0].mxu0 %v4439
  %v4520 = vpop.f32.mrb[0].mxu0
  %v4521 = vadd.f32 0.0, %v4520
  %v4522 = vpop.f32.mrb[0].mxu0
  %4523 = vmatprep.mubr.f32.mxu0 0.0
  %4524 = vmatmul.mubr.f32.gmra.mrb[0].mxu0 %v4442
  %v4525 = vpop.f32.mrb[0].mxu0
  %v4526 = vadd.f32 0.0, %v4525
  %v4527 = vpop.f32.mrb[0].mxu0
  %4528 = vdwg.mxu0
  %s4529 = scalar_lea.vmem %s5, 40
  %v4530 = vld [vmem:[%s4529] sm:$0xff]
  %v4532 = vsel %vm686, %v4511, 0
  %v4535 = vsel %vm686, %v4516, 0
  %v4538 = vsel %vm686, %v4521, 0
  %v4541 = vsel %vm686, %v4526, 0
  %4543 = vmatprep.subr.mxu0 0.0
  %4544 = vmatpush1.msra.mxu0 %v4530
  %4545 = vmatprep.subr.mxu0 0.0
  %4546 = vmatpush1.msra.mxu0 0.0
  %4547 = vmatprep.subr.mxu0 0.0
  %4548 = vmatpush1.msra.mxu0 0.0
  %4549 = vmatprep.subr.mxu0 0.0
  %4550 = vmatpush1.msra.mxu0 0.0
  %4551 = vmatprep.subr.mxu0 0.0
  %4552 = vmatpush1.msra.mxu0 0.0
  %4553 = vmatprep.subr.mxu0 0.0
  %4554 = vmatpush1.msra.mxu0 0.0
  %4555 = vmatprep.subr.mxu0 0.0
  %4556 = vmatpush1.msra.mxu0 0.0
  %4557 = vmatprep.subr.mxu0 0.0
  %4558 = vmatpush1.msra.mxu0 0.0
  %4559 = vmatprep.subr.mxu0 0.0
  %4560 = vmatpush1.msra.mxu0 0.0
  %4561 = vmatprep.subr.mxu0 0.0
  %4562 = vmatpush1.msra.mxu0 0.0
  %4563 = vmatprep.subr.mxu0 0.0
  %4564 = vmatpush1.msra.mxu0 0.0
  %4565 = vmatprep.subr.mxu0 0.0
  %4566 = vmatpush1.msra.mxu0 0.0
  %4567 = vmatprep.subr.mxu0 0.0
  %4568 = vmatpush1.msra.mxu0 0.0
  %4569 = vmatprep.subr.mxu0 0.0
  %4570 = vmatpush1.msra.mxu0 0.0
  %4571 = vmatprep.subr.mxu0 0.0
  %4572 = vmatpush1.msra.mxu0 0.0
  %4573 = vmatprep.subr.mxu0 0.0
  %4574 = vmatpush1.msra.mxu0 0.0
  %4575 = vmatprep.subr.mxu0 0.0
  %4576 = vmatpush1.msra.mxu0 0.0
  %4577 = vmatprep.subr.mxu0 0.0
  %4578 = vmatpush1.msra.mxu0 0.0
  %4579 = vmatprep.subr.mxu0 0.0
  %4580 = vmatpush1.msra.mxu0 0.0
  %4581 = vmatprep.subr.mxu0 0.0
  %4582 = vmatpush1.msra.mxu0 0.0
  %4583 = vmatprep.subr.mxu0 0.0
  %4584 = vmatpush1.msra.mxu0 0.0
  %4585 = vmatprep.subr.mxu0 0.0
  %4586 = vmatpush1.msra.mxu0 0.0
  %4587 = vmatprep.subr.mxu0 0.0
  %4588 = vmatpush1.msra.mxu0 0.0
  %4589 = vmatprep.subr.mxu0 0.0
  %4590 = vmatpush1.msra.mxu0 0.0
  %4591 = vmatprep.subr.mxu0 0.0
  %4592 = vmatpush1.msra.mxu0 0.0
  %4593 = vmatprep.subr.mxu0 0.0
  %4594 = vmatpush1.msra.mxu0 0.0
  %4595 = vmatprep.subr.mxu0 0.0
  %4596 = vmatpush1.msra.mxu0 0.0
  %4597 = vmatprep.subr.mxu0 0.0
  %4598 = vmatpush1.msra.mxu0 0.0
  %4599 = vmatprep.subr.mxu0 0.0
  %4600 = vmatpush1.msra.mxu0 0.0
  %4601 = vmatprep.subr.mxu0 0.0
  %4602 = vmatpush1.msra.mxu0 0.0
  %4603 = vmatprep.subr.mxu0 0.0
  %4604 = vmatpush1.msra.mxu0 0.0
  %4605 = vmatprep.subr.mxu0 0.0
  %4606 = vmatpush1.msra.mxu0 0.0
  %4607 = vmatprep.mubr.f32.mxu0 0.0
  %4608 = vmatmul.mubr.f32.gmra.mrb[0].mxu0 %v4532
  %v4609 = vpop.f32.mrb[0].mxu0
  %v4610 = vadd.f32 0.0, %v4609
  %v4611 = vpop.f32.mrb[0].mxu0
  %4612 = vmatprep.mubr.f32.mxu0 0.0
  %4613 = vmatmul.mubr.f32.gmra.mrb[0].mxu0 %v4535
  %v4614 = vpop.f32.mrb[0].mxu0
  %v4615 = vadd.f32 0.0, %v4614
  %v4616 = vpop.f32.mrb[0].mxu0
  %4617 = vmatprep.mubr.f32.mxu0 0.0
  %4618 = vmatmul.mubr.f32.gmra.mrb[0].mxu0 %v4538
  %v4619 = vpop.f32.mrb[0].mxu0
  %v4620 = vadd.f32 0.0, %v4619
  %v4621 = vpop.f32.mrb[0].mxu0
  %4622 = vmatprep.mubr.f32.mxu0 0.0
  %4623 = vmatmul.mubr.f32.gmra.mrb[0].mxu0 %v4541
  %v4624 = vpop.f32.mrb[0].mxu0
  %v4625 = vadd.f32 0.0, %v4624
  %v4626 = vpop.f32.mrb[0].mxu0
  %4627 = vdwg.mxu0
  %v4629 = vsel %vm686, %v3957, 0
  %v4632 = vsel %vm686, %v3962, 0
  %v4635 = vsel %vm686, %v3967, 0
  %v4638 = vsel %vm686, %v3972, 0
  %4640 = vmatprep.subr.mxu0 0.0
  %4641 = vmatpush1.msra.mxu0 %v3976
  %4642 = vmatprep.subr.mxu0 0.0
  %4643 = vmatpush1.msra.mxu0 0.0
  %4644 = vmatprep.subr.mxu0 0.0
  %4645 = vmatpush1.msra.mxu0 0.0
  %4646 = vmatprep.subr.mxu0 0.0
  %4647 = vmatpush1.msra.mxu0 0.0
  %4648 = vmatprep.subr.mxu0 0.0
  %4649 = vmatpush1.msra.mxu0 0.0
  %4650 = vmatprep.subr.mxu0 0.0
  %4651 = vmatpush1.msra.mxu0 0.0
  %4652 = vmatprep.subr.mxu0 0.0
  %4653 = vmatpush1.msra.mxu0 0.0
  %4654 = vmatprep.subr.mxu0 0.0
  %4655 = vmatpush1.msra.mxu0 0.0
  %4656 = vmatprep.subr.mxu0 0.0
  %4657 = vmatpush1.msra.mxu0 0.0
  %4658 = vmatprep.subr.mxu0 0.0
  %4659 = vmatpush1.msra.mxu0 0.0
  %4660 = vmatprep.subr.mxu0 0.0
  %4661 = vmatpush1.msra.mxu0 0.0
  %4662 = vmatprep.subr.mxu0 0.0
  %4663 = vmatpush1.msra.mxu0 0.0
  %4664 = vmatprep.subr.mxu0 0.0
  %4665 = vmatpush1.msra.mxu0 0.0
  %4666 = vmatprep.subr.mxu0 0.0
  %4667 = vmatpush1.msra.mxu0 0.0
  %4668 = vmatprep.subr.mxu0 0.0
  %4669 = vmatpush1.msra.mxu0 0.0
  %4670 = vmatprep.subr.mxu0 0.0
  %4671 = vmatpush1.msra.mxu0 0.0
  %4672 = vmatprep.subr.mxu0 0.0
  %4673 = vmatpush1.msra.mxu0 0.0
  %4674 = vmatprep.subr.mxu0 0.0
  %4675 = vmatpush1.msra.mxu0 0.0
  %4676 = vmatprep.subr.mxu0 0.0
  %4677 = vmatpush1.msra.mxu0 0.0
  %4678 = vmatprep.subr.mxu0 0.0
  %4679 = vmatpush1.msra.mxu0 0.0
  %4680 = vmatprep.subr.mxu0 0.0
  %4681 = vmatpush1.msra.mxu0 0.0
  %4682 = vmatprep.subr.mxu0 0.0
  %4683 = vmatpush1.msra.mxu0 0.0
  %4684 = vmatprep.subr.mxu0 0.0
  %4685 = vmatpush1.msra.mxu0 0.0
  %4686 = vmatprep.subr.mxu0 0.0
  %4687 = vmatpush1.msra.mxu0 0.0
  %4688 = vmatprep.subr.mxu0 0.0
  %4689 = vmatpush1.msra.mxu0 0.0
  %4690 = vmatprep.subr.mxu0 0.0
  %4691 = vmatpush1.msra.mxu0 0.0
  %4692 = vmatprep.subr.mxu0 0.0
  %4693 = vmatpush1.msra.mxu0 0.0
  %4694 = vmatprep.subr.mxu0 0.0
  %4695 = vmatpush1.msra.mxu0 0.0
  %4696 = vmatprep.subr.mxu0 0.0
  %4697 = vmatpush1.msra.mxu0 0.0
  %4698 = vmatprep.subr.mxu0 0.0
  %4699 = vmatpush1.msra.mxu0 0.0
  %4700 = vmatprep.subr.mxu0 0.0
  %4701 = vmatpush1.msra.mxu0 0.0
  %4702 = vmatprep.subr.mxu0 0.0
  %4703 = vmatpush1.msra.mxu0 0.0
  %4704 = vmatprep.mubr.f32.mxu0 0.0
  %4705 = vmatmul.mubr.f32.gmra.mrb[0].mxu0 %v4629
  %v4706 = vpop.f32.mrb[0].mxu0
  %v4707 = vadd.f32 %v4610, %v4706
  %v4708 = vpop.f32.mrb[0].mxu0
  %4709 = vmatprep.mubr.f32.mxu0 0.0
  %4710 = vmatmul.mubr.f32.gmra.mrb[0].mxu0 %v4632
  %v4711 = vpop.f32.mrb[0].mxu0
  %v4712 = vadd.f32 %v4615, %v4711
  %v4713 = vpop.f32.mrb[0].mxu0
  %4714 = vmatprep.mubr.f32.mxu0 0.0
  %4715 = vmatmul.mubr.f32.gmra.mrb[0].mxu0 %v4635
  %v4716 = vpop.f32.mrb[0].mxu0
  %v4717 = vadd.f32 %v4620, %v4716
  %v4718 = vpop.f32.mrb[0].mxu0
  %4719 = vmatprep.mubr.f32.mxu0 0.0
  %4720 = vmatmul.mubr.f32.gmra.mrb[0].mxu0 %v4638
  %v4721 = vpop.f32.mrb[0].mxu0
  %v4722 = vadd.f32 %v4625, %v4721
  %v4723 = vpop.f32.mrb[0].mxu0
  %4724 = vdwg.mxu0
  %s4725 = scalar_lea.vmem %s3, 192
  %v4726 = vld [vmem:[%s4725] sm:$0xff]
  %v4727 = vld [vmem:[%s4725 + $0x8] sm:$0xff]
  %v4728 = vld [vmem:[%s4725 + $0x10] sm:$0xff]
  %v4729 = vld [vmem:[%s4725 + $0x18] sm:$0xff]
  %s4730 = scalar_lea.vmem %s4, 6
  %v4731 = vld [vmem:[%s4730] sm:$0x1]
  %v4733 = vlaneseq
  %v4734 = vshrl.u32 %v4733, 7
  %v4735 = vsub.s32 0, %v4734
  %v4736 = vrot.slane %v4731, %v4735
  %4738 = vmatprep.subr.mxu0 0.0
  %4739 = vmatpush1.msra.mxu0 %v4726
  %4740 = vmatprep.subr.mxu0 0.0
  %4741 = vmatpush1.msra.mxu0 %v4727
  %4742 = vmatprep.subr.mxu0 0.0
  %4743 = vmatpush1.msra.mxu0 %v4728
  %4744 = vmatprep.subr.mxu0 0.0
  %4745 = vmatpush1.msra.mxu0 %v4729
  %4746 = vmatprep.subr.mxu0 0.0
  %4747 = vmatpush1.msra.mxu0 0.0
  %4748 = vmatprep.subr.mxu0 0.0
  %4749 = vmatpush1.msra.mxu0 0.0
  %4750 = vmatprep.subr.mxu0 0.0
  %4751 = vmatpush1.msra.mxu0 0.0
  %4752 = vmatprep.subr.mxu0 0.0
  %4753 = vmatpush1.msra.mxu0 0.0
  %4754 = vmatprep.subr.mxu0 0.0
  %4755 = vmatpush1.msra.mxu0 0.0
  %4756 = vmatprep.subr.mxu0 0.0
  %4757 = vmatpush1.msra.mxu0 0.0
  %4758 = vmatprep.subr.mxu0 0.0
  %4759 = vmatpush1.msra.mxu0 0.0
  %4760 = vmatprep.subr.mxu0 0.0
  %4761 = vmatpush1.msra.mxu0 0.0
  %4762 = vmatprep.subr.mxu0 0.0
  %4763 = vmatpush1.msra.mxu0 0.0
  %4764 = vmatprep.subr.mxu0 0.0
  %4765 = vmatpush1.msra.mxu0 0.0
  %4766 = vmatprep.subr.mxu0 0.0
  %4767 = vmatpush1.msra.mxu0 0.0
  %4768 = vmatprep.subr.mxu0 0.0
  %4769 = vmatpush1.msra.mxu0 0.0
  %4770 = vmatprep.subr.mxu0 0.0
  %4771 = vmatpush1.msra.mxu0 0.0
  %4772 = vmatprep.subr.mxu0 0.0
  %4773 = vmatpush1.msra.mxu0 0.0
  %4774 = vmatprep.subr.mxu0 0.0
  %4775 = vmatpush1.msra.mxu0 0.0
  %4776 = vmatprep.subr.mxu0 0.0
  %4777 = vmatpush1.msra.mxu0 0.0
  %4778 = vmatprep.subr.mxu0 0.0
  %4779 = vmatpush1.msra.mxu0 0.0
  %4780 = vmatprep.subr.mxu0 0.0
  %4781 = vmatpush1.msra.mxu0 0.0
  %4782 = vmatprep.subr.mxu0 0.0
  %4783 = vmatpush1.msra.mxu0 0.0
  %4784 = vmatprep.subr.mxu0 0.0
  %4785 = vmatpush1.msra.mxu0 0.0
  %4786 = vmatprep.subr.mxu0 0.0
  %4787 = vmatpush1.msra.mxu0 0.0
  %4788 = vmatprep.subr.mxu0 0.0
  %4789 = vmatpush1.msra.mxu0 0.0
  %4790 = vmatprep.subr.mxu0 0.0
  %4791 = vmatpush1.msra.mxu0 0.0
  %4792 = vmatprep.subr.mxu0 0.0
  %4793 = vmatpush1.msra.mxu0 0.0
  %4794 = vmatprep.subr.mxu0 0.0
  %4795 = vmatpush1.msra.mxu0 0.0
  %4796 = vmatprep.subr.mxu0 0.0
  %4797 = vmatpush1.msra.mxu0 0.0
  %4798 = vmatprep.subr.mxu0 0.0
  %4799 = vmatpush1.msra.mxu0 0.0
  %4800 = vmatprep.subr.mxu0 0.0
  %4801 = vmatpush1.msra.mxu0 0.0
  %4802 = vmatprep.mubr.f32.mxu0 0.0
  %4803 = vmatmul.mubr.f32.gmra.mrb[0].mxu0 %v3425
  %v4804 = vpop.f32.mrb[0].mxu0
  %v4805 = vadd.f32 %v4736, %v4804
  %v4806 = vpop.f32.mrb[0].mxu0
  %4807 = vmatprep.mubr.f32.mxu0 0.0
  %4808 = vmatmul.mubr.f32.gmra.mrb[0].mxu0 %v3428
  %v4809 = vpop.f32.mrb[0].mxu0
  %v4810 = vadd.f32 %v4736, %v4809
  %v4811 = vpop.f32.mrb[0].mxu0
  %4812 = vmatprep.mubr.f32.mxu0 0.0
  %4813 = vmatmul.mubr.f32.gmra.mrb[0].mxu0 %v3431
  %v4814 = vpop.f32.mrb[0].mxu0
  %v4815 = vadd.f32 %v4736, %v4814
  %v4816 = vpop.f32.mrb[0].mxu0
  %4817 = vmatprep.mubr.f32.mxu0 0.0
  %4818 = vmatmul.mubr.f32.gmra.mrb[0].mxu0 %v3434
  %v4819 = vpop.f32.mrb[0].mxu0
  %v4820 = vadd.f32 %v4736, %v4819
  %v4821 = vpop.f32.mrb[0].mxu0
  %4822 = vdwg.mxu0
  %s4823 = scalar_lea.vmem %s3, 448
  %v4824 = vld [vmem:[%s4823] sm:$0xff]
  %v4825 = vld [vmem:[%s4823 + $0x8] sm:$0xff]
  %v4826 = vld [vmem:[%s4823 + $0x10] sm:$0xff]
  %v4827 = vld [vmem:[%s4823 + $0x18] sm:$0xff]
  %s4828 = scalar_lea.vmem %s4, 14
  %v4829 = vld [vmem:[%s4828] sm:$0x1]
  %v4831 = vlaneseq
  %v4832 = vshrl.u32 %v4831, 7
  %v4833 = vsub.s32 0, %v4832
  %v4834 = vrot.slane %v4829, %v4833
  %4836 = vmatprep.subr.mxu0 0.0
  %4837 = vmatpush1.msra.mxu0 %v4824
  %4838 = vmatprep.subr.mxu0 0.0
  %4839 = vmatpush1.msra.mxu0 %v4825
  %4840 = vmatprep.subr.mxu0 0.0
  %4841 = vmatpush1.msra.mxu0 %v4826
  %4842 = vmatprep.subr.mxu0 0.0
  %4843 = vmatpush1.msra.mxu0 %v4827
  %4844 = vmatprep.subr.mxu0 0.0
  %4845 = vmatpush1.msra.mxu0 0.0
  %4846 = vmatprep.subr.mxu0 0.0
  %4847 = vmatpush1.msra.mxu0 0.0
  %4848 = vmatprep.subr.mxu0 0.0
  %4849 = vmatpush1.msra.mxu0 0.0
  %4850 = vmatprep.subr.mxu0 0.0
  %4851 = vmatpush1.msra.mxu0 0.0
  %4852 = vmatprep.subr.mxu0 0.0
  %4853 = vmatpush1.msra.mxu0 0.0
  %4854 = vmatprep.subr.mxu0 0.0
  %4855 = vmatpush1.msra.mxu0 0.0
  %4856 = vmatprep.subr.mxu0 0.0
  %4857 = vmatpush1.msra.mxu0 0.0
  %4858 = vmatprep.subr.mxu0 0.0
  %4859 = vmatpush1.msra.mxu0 0.0
  %4860 = vmatprep.subr.mxu0 0.0
  %4861 = vmatpush1.msra.mxu0 0.0
  %4862 = vmatprep.subr.mxu0 0.0
  %4863 = vmatpush1.msra.mxu0 0.0
  %4864 = vmatprep.subr.mxu0 0.0
  %4865 = vmatpush1.msra.mxu0 0.0
  %4866 = vmatprep.subr.mxu0 0.0
  %4867 = vmatpush1.msra.mxu0 0.0
  %4868 = vmatprep.subr.mxu0 0.0
  %4869 = vmatpush1.msra.mxu0 0.0
  %4870 = vmatprep.subr.mxu0 0.0
  %4871 = vmatpush1.msra.mxu0 0.0
  %4872 = vmatprep.subr.mxu0 0.0
  %4873 = vmatpush1.msra.mxu0 0.0
  %4874 = vmatprep.subr.mxu0 0.0
  %4875 = vmatpush1.msra.mxu0 0.0
  %4876 = vmatprep.subr.mxu0 0.0
  %4877 = vmatpush1.msra.mxu0 0.0
  %4878 = vmatprep.subr.mxu0 0.0
  %4879 = vmatpush1.msra.mxu0 0.0
  %4880 = vmatprep.subr.mxu0 0.0
  %4881 = vmatpush1.msra.mxu0 0.0
  %4882 = vmatprep.subr.mxu0 0.0
  %4883 = vmatpush1.msra.mxu0 0.0
  %4884 = vmatprep.subr.mxu0 0.0
  %4885 = vmatpush1.msra.mxu0 0.0
  %4886 = vmatprep.subr.mxu0 0.0
  %4887 = vmatpush1.msra.mxu0 0.0
  %4888 = vmatprep.subr.mxu0 0.0
  %4889 = vmatpush1.msra.mxu0 0.0
  %4890 = vmatprep.subr.mxu0 0.0
  %4891 = vmatpush1.msra.mxu0 0.0
  %4892 = vmatprep.subr.mxu0 0.0
  %4893 = vmatpush1.msra.mxu0 0.0
  %4894 = vmatprep.subr.mxu0 0.0
  %4895 = vmatpush1.msra.mxu0 0.0
  %4896 = vmatprep.subr.mxu0 0.0
  %4897 = vmatpush1.msra.mxu0 0.0
  %4898 = vmatprep.subr.mxu0 0.0
  %4899 = vmatpush1.msra.mxu0 0.0
  %4900 = vmatprep.mubr.f32.mxu0 0.0
  %4901 = vmatmul.mubr.f32.gmra.mrb[0].mxu0 %v3425
  %v4902 = vpop.f32.mrb[0].mxu0
  %v4903 = vadd.f32 %v4834, %v4902
  %v4904 = vpop.f32.mrb[0].mxu0
  %4905 = vmatprep.mubr.f32.mxu0 0.0
  %4906 = vmatmul.mubr.f32.gmra.mrb[0].mxu0 %v3428
  %v4907 = vpop.f32.mrb[0].mxu0
  %v4908 = vadd.f32 %v4834, %v4907
  %v4909 = vpop.f32.mrb[0].mxu0
  %4910 = vmatprep.mubr.f32.mxu0 0.0
  %4911 = vmatmul.mubr.f32.gmra.mrb[0].mxu0 %v3431
  %v4912 = vpop.f32.mrb[0].mxu0
  %v4913 = vadd.f32 %v4834, %v4912
  %v4914 = vpop.f32.mrb[0].mxu0
  %4915 = vmatprep.mubr.f32.mxu0 0.0
  %4916 = vmatmul.mubr.f32.gmra.mrb[0].mxu0 %v3434
  %v4917 = vpop.f32.mrb[0].mxu0
  %v4918 = vadd.f32 %v4834, %v4917
  %v4919 = vpop.f32.mrb[0].mxu0
  %4920 = vdwg.mxu0
  %s4921 = scalar_lea.vmem %s3, 704
  %v4922 = vld [vmem:[%s4921] sm:$0xff]
  %v4923 = vld [vmem:[%s4921 + $0x8] sm:$0xff]
  %v4924 = vld [vmem:[%s4921 + $0x10] sm:$0xff]
  %v4925 = vld [vmem:[%s4921 + $0x18] sm:$0xff]
  %s4926 = scalar_lea.vmem %s4, 22
  %v4927 = vld [vmem:[%s4926] sm:$0x1]
  %v4929 = vlaneseq
  %v4930 = vshrl.u32 %v4929, 7
  %v4931 = vsub.s32 0, %v4930
  %v4932 = vrot.slane %v4927, %v4931
  %4934 = vmatprep.subr.mxu0 0.0
  %4935 = vmatpush1.msra.mxu0 %v4922
  %4936 = vmatprep.subr.mxu0 0.0
  %4937 = vmatpush1.msra.mxu0 %v4923
  %4938 = vmatprep.subr.mxu0 0.0
  %4939 = vmatpush1.msra.mxu0 %v4924
  %4940 = vmatprep.subr.mxu0 0.0
  %4941 = vmatpush1.msra.mxu0 %v4925
  %4942 = vmatprep.subr.mxu0 0.0
  %4943 = vmatpush1.msra.mxu0 0.0
  %4944 = vmatprep.subr.mxu0 0.0
  %4945 = vmatpush1.msra.mxu0 0.0
  %4946 = vmatprep.subr.mxu0 0.0
  %4947 = vmatpush1.msra.mxu0 0.0
  %4948 = vmatprep.subr.mxu0 0.0
  %4949 = vmatpush1.msra.mxu0 0.0
  %4950 = vmatprep.subr.mxu0 0.0
  %4951 = vmatpush1.msra.mxu0 0.0
  %4952 = vmatprep.subr.mxu0 0.0
  %4953 = vmatpush1.msra.mxu0 0.0
  %4954 = vmatprep.subr.mxu0 0.0
  %4955 = vmatpush1.msra.mxu0 0.0
  %4956 = vmatprep.subr.mxu0 0.0
  %4957 = vmatpush1.msra.mxu0 0.0
  %4958 = vmatprep.subr.mxu0 0.0
  %4959 = vmatpush1.msra.mxu0 0.0
  %4960 = vmatprep.subr.mxu0 0.0
  %4961 = vmatpush1.msra.mxu0 0.0
  %4962 = vmatprep.subr.mxu0 0.0
  %4963 = vmatpush1.msra.mxu0 0.0
  %4964 = vmatprep.subr.mxu0 0.0
  %4965 = vmatpush1.msra.mxu0 0.0
  %4966 = vmatprep.subr.mxu0 0.0
  %4967 = vmatpush1.msra.mxu0 0.0
  %4968 = vmatprep.subr.mxu0 0.0
  %4969 = vmatpush1.msra.mxu0 0.0
  %4970 = vmatprep.subr.mxu0 0.0
  %4971 = vmatpush1.msra.mxu0 0.0
  %4972 = vmatprep.subr.mxu0 0.0
  %4973 = vmatpush1.msra.mxu0 0.0
  %4974 = vmatprep.subr.mxu0 0.0
  %4975 = vmatpush1.msra.mxu0 0.0
  %4976 = vmatprep.subr.mxu0 0.0
  %4977 = vmatpush1.msra.mxu0 0.0
  %4978 = vmatprep.subr.mxu0 0.0
  %4979 = vmatpush1.msra.mxu0 0.0
  %4980 = vmatprep.subr.mxu0 0.0
  %4981 = vmatpush1.msra.mxu0 0.0
  %4982 = vmatprep.subr.mxu0 0.0
  %4983 = vmatpush1.msra.mxu0 0.0
  %4984 = vmatprep.subr.mxu0 0.0
  %4985 = vmatpush1.msra.mxu0 0.0
  %4986 = vmatprep.subr.mxu0 0.0
  %4987 = vmatpush1.msra.mxu0 0.0
  %4988 = vmatprep.subr.mxu0 0.0
  %4989 = vmatpush1.msra.mxu0 0.0
  %4990 = vmatprep.subr.mxu0 0.0
  %4991 = vmatpush1.msra.mxu0 0.0
  %4992 = vmatprep.subr.mxu0 0.0
  %4993 = vmatpush1.msra.mxu0 0.0
  %4994 = vmatprep.subr.mxu0 0.0
  %4995 = vmatpush1.msra.mxu0 0.0
  %4996 = vmatprep.subr.mxu0 0.0
  %4997 = vmatpush1.msra.mxu0 0.0
  %4998 = vmatprep.mubr.f32.mxu0 0.0
  %4999 = vmatmul.mubr.f32.gmra.mrb[0].mxu0 %v3425
  %v5000 = vpop.f32.mrb[0].mxu0
  %v5001 = vadd.f32 %v4932, %v5000
  %v5002 = vpop.f32.mrb[0].mxu0
  %5003 = vmatprep.mubr.f32.mxu0 0.0
  %5004 = vmatmul.mubr.f32.gmra.mrb[0].mxu0 %v3428
  %v5005 = vpop.f32.mrb[0].mxu0
  %v5006 = vadd.f32 %v4932, %v5005
  %v5007 = vpop.f32.mrb[0].mxu0
  %5008 = vmatprep.mubr.f32.mxu0 0.0
  %5009 = vmatmul.mubr.f32.gmra.mrb[0].mxu0 %v3431
  %v5010 = vpop.f32.mrb[0].mxu0
  %v5011 = vadd.f32 %v4932, %v5010
  %v5012 = vpop.f32.mrb[0].mxu0
  %5013 = vmatprep.mubr.f32.mxu0 0.0
  %5014 = vmatmul.mubr.f32.gmra.mrb[0].mxu0 %v3434
  %v5015 = vpop.f32.mrb[0].mxu0
  %v5016 = vadd.f32 %v4932, %v5015
  %v5017 = vpop.f32.mrb[0].mxu0
  %5018 = vdwg.mxu0
  %v5020 = vsel %vm686, %v4805, 0
  %v5023 = vsel %vm686, %v4810, 0
  %v5026 = vsel %vm686, %v4815, 0
  %v5029 = vsel %vm686, %v4820, 0
  %v5032 = vsel %vm686, %v4903, 0
  %v5035 = vsel %vm686, %v4908, 0
  %v5038 = vsel %vm686, %v4913, 0
  %v5041 = vsel %vm686, %v4918, 0
  %5043 = vmatprep.subr.mxu0 0.0
  %5044 = vmatpush1.xpose.msra.mxu0 %v5032
  %5045 = vmatprep.subr.mxu0 0.0
  %5046 = vmatpush1.xpose.msra.mxu0 %v5035
  %5047 = vmatprep.subr.mxu0 0.0
  %5048 = vmatpush1.xpose.msra.mxu0 %v5038
  %5049 = vmatprep.subr.mxu0 0.0
  %5050 = vmatpush1.xpose.msra.mxu0 %v5041
  %5051 = vmatprep.subr.mxu0 0.0
  %5052 = vmatpush1.xpose.msra.mxu0 0.0
  %5053 = vmatprep.subr.mxu0 0.0
  %5054 = vmatpush1.xpose.msra.mxu0 0.0
  %5055 = vmatprep.subr.mxu0 0.0
  %5056 = vmatpush1.xpose.msra.mxu0 0.0
  %5057 = vmatprep.subr.mxu0 0.0
  %5058 = vmatpush1.xpose.msra.mxu0 0.0
  %5059 = vmatprep.subr.mxu0 0.0
  %5060 = vmatpush1.xpose.msra.mxu0 0.0
  %5061 = vmatprep.subr.mxu0 0.0
  %5062 = vmatpush1.xpose.msra.mxu0 0.0
  %5063 = vmatprep.subr.mxu0 0.0
  %5064 = vmatpush1.xpose.msra.mxu0 0.0
  %5065 = vmatprep.subr.mxu0 0.0
  %5066 = vmatpush1.xpose.msra.mxu0 0.0
  %5067 = vmatprep.subr.mxu0 0.0
  %5068 = vmatpush1.xpose.msra.mxu0 0.0
  %5069 = vmatprep.subr.mxu0 0.0
  %5070 = vmatpush1.xpose.msra.mxu0 0.0
  %5071 = vmatprep.subr.mxu0 0.0
  %5072 = vmatpush1.xpose.msra.mxu0 0.0
  %5073 = vmatprep.subr.mxu0 0.0
  %5074 = vmatpush1.xpose.msra.mxu0 0.0
  %5075 = vmatprep.subr.mxu0 0.0
  %5076 = vmatpush1.xpose.msra.mxu0 0.0
  %5077 = vmatprep.subr.mxu0 0.0
  %5078 = vmatpush1.xpose.msra.mxu0 0.0
  %5079 = vmatprep.subr.mxu0 0.0
  %5080 = vmatpush1.xpose.msra.mxu0 0.0
  %5081 = vmatprep.subr.mxu0 0.0
  %5082 = vmatpush1.xpose.msra.mxu0 0.0
  %5083 = vmatprep.subr.mxu0 0.0
  %5084 = vmatpush1.xpose.msra.mxu0 0.0
  %5085 = vmatprep.subr.mxu0 0.0
  %5086 = vmatpush1.xpose.msra.mxu0 0.0
  %5087 = vmatprep.subr.mxu0 0.0
  %5088 = vmatpush1.xpose.msra.mxu0 0.0
  %5089 = vmatprep.subr.mxu0 0.0
  %5090 = vmatpush1.xpose.msra.mxu0 0.0
  %5091 = vmatprep.subr.mxu0 0.0
  %5092 = vmatpush1.xpose.msra.mxu0 0.0
  %5093 = vmatprep.subr.mxu0 0.0
  %5094 = vmatpush1.xpose.msra.mxu0 0.0
  %5095 = vmatprep.subr.mxu0 0.0
  %5096 = vmatpush1.xpose.msra.mxu0 0.0
  %5097 = vmatprep.subr.mxu0 0.0
  %5098 = vmatpush1.xpose.msra.mxu0 0.0
  %5099 = vmatprep.subr.mxu0 0.0
  %5100 = vmatpush1.xpose.msra.mxu0 0.0
  %5101 = vmatprep.subr.mxu0 0.0
  %5102 = vmatpush1.xpose.msra.mxu0 0.0
  %5103 = vmatprep.subr.mxu0 0.0
  %5104 = vmatpush1.xpose.msra.mxu0 0.0
  %5105 = vmatprep.subr.mxu0 0.0
  %5106 = vmatpush1.xpose.msra.mxu0 0.0
  %5107 = vmatprep.mubr.f32.mxu0 0.0
  %5108 = vmatmul.mubr.f32.gmra.mrb[0].mxu0 %v5020
  %v5109 = vpop.f32.mrb[0].mxu0
  %v5110 = vadd.f32 0.0, %v5109
  %v5111 = vpop.f32.mrb[0].mxu0
  %5112 = vmatprep.mubr.f32.mxu0 0.0
  %5113 = vmatmul.mubr.f32.gmra.mrb[0].mxu0 %v5023
  %v5114 = vpop.f32.mrb[0].mxu0
  %v5115 = vadd.f32 0.0, %v5114
  %v5116 = vpop.f32.mrb[0].mxu0
  %5117 = vmatprep.mubr.f32.mxu0 0.0
  %5118 = vmatmul.mubr.f32.gmra.mrb[0].mxu0 %v5026
  %v5119 = vpop.f32.mrb[0].mxu0
  %v5120 = vadd.f32 0.0, %v5119
  %v5121 = vpop.f32.mrb[0].mxu0
  %5122 = vmatprep.mubr.f32.mxu0 0.0
  %5123 = vmatmul.mubr.f32.gmra.mrb[0].mxu0 %v5029
  %v5124 = vpop.f32.mrb[0].mxu0
  %v5125 = vadd.f32 0.0, %v5124
  %v5126 = vpop.f32.mrb[0].mxu0
  %5127 = vdwg.mxu0
  %v5128 = vmul.f32 %v5110, 0.35355338
  %v5129 = vmul.f32 %v5115, 0.35355338
  %v5130 = vmul.f32 %v5120, 0.35355338
  %v5131 = vmul.f32 %v5125, 0.35355338
  %v5132 = vadd.f32 %v5128, %v293
  %v5133 = vadd.f32 %v5129, %v294
  %v5134 = vadd.f32 %v5130, %v295
  %v5135 = vadd.f32 %v5131, %v296
  %v5136 = vsel %vm308, %v5132, -inf
  %5137 = vmax.xlane.f32.xlu0 %v5136
  %v5138 = vpop.xlane.xlu0 %5137
  %v5139 = vsel %vm308, %v5133, -inf
  %5140 = vmax.xlane.f32.xlu0 %v5139
  %v5141 = vpop.xlane.xlu0 %5140
  %v5142 = vsel %vm308, %v5134, -inf
  %5143 = vmax.xlane.f32.xlu0 %v5142
  %v5144 = vpop.xlane.xlu0 %5143
  %v5145 = vsel %vm308, %v5135, -inf
  %5146 = vmax.xlane.f32.xlu0 %v5145
  %v5147 = vpop.xlane.xlu0 %5146
  %v5148 = vsub.f32 %v5132, %v5138
  %v5149 = vsub.f32 %v5133, %v5141
  %v5150 = vsub.f32 %v5134, %v5144
  %v5151 = vsub.f32 %v5135, %v5147
  %v5152 = vmul.f32 %v5148, 1.442695
  %v5153 = vpow.pop %v5152
  %v5154 = vmul.f32 %v5149, 1.442695
  %v5155 = vpow.pop %v5154
  %v5156 = vmul.f32 %v5150, 1.442695
  %v5157 = vpow.pop %v5156
  %v5158 = vmul.f32 %v5151, 1.442695
  %v5159 = vpow.pop %v5158
  %v5160 = vsel %vm308, %v5153, 0.0
  %5161 = vadd.xlane.f32.xlu0 %v5160
  %v5162 = vpop.xlane.xlu0 %5161
  %v5163 = vsel %vm308, %v5155, 0.0
  %5164 = vadd.xlane.f32.xlu0 %v5163
  %v5165 = vpop.xlane.xlu0 %5164
  %v5166 = vsel %vm308, %v5157, 0.0
  %5167 = vadd.xlane.f32.xlu0 %v5166
  %v5168 = vpop.xlane.xlu0 %5167
  %v5169 = vsel %vm308, %v5159, 0.0
  %5170 = vadd.xlane.f32.xlu0 %v5169
  %v5171 = vpop.xlane.xlu0 %5170
  %v5172 = vrcp.pop %v5162
  %v5173 = vrcp.pop %v5165
  %v5174 = vrcp.pop %v5168
  %v5175 = vrcp.pop %v5171
  %v5176 = vmul.f32 %v5153, %v5172
  %v5177 = vmul.f32 %v5155, %v5173
  %v5178 = vmul.f32 %v5157, %v5174
  %v5179 = vmul.f32 %v5159, %v5175
  %v5181 = vsel %vm308, %v5176, 0
  %v5184 = vsel %vm308, %v5177, 0
  %v5187 = vsel %vm308, %v5178, 0
  %v5190 = vsel %vm308, %v5179, 0
  %5192 = vmatprep.subr.mxu0 0.0
  %5193 = vmatpush1.msra.mxu0 %v5001
  %5194 = vmatprep.subr.mxu0 0.0
  %5195 = vmatpush1.msra.mxu0 %v5006
  %5196 = vmatprep.subr.mxu0 0.0
  %5197 = vmatpush1.msra.mxu0 %v5011
  %5198 = vmatprep.subr.mxu0 0.0
  %5199 = vmatpush1.msra.mxu0 %v5016
  %5200 = vmatprep.subr.mxu0 0.0
  %5201 = vmatpush1.msra.mxu0 0.0
  %5202 = vmatprep.subr.mxu0 0.0
  %5203 = vmatpush1.msra.mxu0 0.0
  %5204 = vmatprep.subr.mxu0 0.0
  %5205 = vmatpush1.msra.mxu0 0.0
  %5206 = vmatprep.subr.mxu0 0.0
  %5207 = vmatpush1.msra.mxu0 0.0
  %5208 = vmatprep.subr.mxu0 0.0
  %5209 = vmatpush1.msra.mxu0 0.0
  %5210 = vmatprep.subr.mxu0 0.0
  %5211 = vmatpush1.msra.mxu0 0.0
  %5212 = vmatprep.subr.mxu0 0.0
  %5213 = vmatpush1.msra.mxu0 0.0
  %5214 = vmatprep.subr.mxu0 0.0
  %5215 = vmatpush1.msra.mxu0 0.0
  %5216 = vmatprep.subr.mxu0 0.0
  %5217 = vmatpush1.msra.mxu0 0.0
  %5218 = vmatprep.subr.mxu0 0.0
  %5219 = vmatpush1.msra.mxu0 0.0
  %5220 = vmatprep.subr.mxu0 0.0
  %5221 = vmatpush1.msra.mxu0 0.0
  %5222 = vmatprep.subr.mxu0 0.0
  %5223 = vmatpush1.msra.mxu0 0.0
  %5224 = vmatprep.subr.mxu0 0.0
  %5225 = vmatpush1.msra.mxu0 0.0
  %5226 = vmatprep.subr.mxu0 0.0
  %5227 = vmatpush1.msra.mxu0 0.0
  %5228 = vmatprep.subr.mxu0 0.0
  %5229 = vmatpush1.msra.mxu0 0.0
  %5230 = vmatprep.subr.mxu0 0.0
  %5231 = vmatpush1.msra.mxu0 0.0
  %5232 = vmatprep.subr.mxu0 0.0
  %5233 = vmatpush1.msra.mxu0 0.0
  %5234 = vmatprep.subr.mxu0 0.0
  %5235 = vmatpush1.msra.mxu0 0.0
  %5236 = vmatprep.subr.mxu0 0.0
  %5237 = vmatpush1.msra.mxu0 0.0
  %5238 = vmatprep.subr.mxu0 0.0
  %5239 = vmatpush1.msra.mxu0 0.0
  %5240 = vmatprep.subr.mxu0 0.0
  %5241 = vmatpush1.msra.mxu0 0.0
  %5242 = vmatprep.subr.mxu0 0.0
  %5243 = vmatpush1.msra.mxu0 0.0
  %5244 = vmatprep.subr.mxu0 0.0
  %5245 = vmatpush1.msra.mxu0 0.0
  %5246 = vmatprep.subr.mxu0 0.0
  %5247 = vmatpush1.msra.mxu0 0.0
  %5248 = vmatprep.subr.mxu0 0.0
  %5249 = vmatpush1.msra.mxu0 0.0
  %5250 = vmatprep.subr.mxu0 0.0
  %5251 = vmatpush1.msra.mxu0 0.0
  %5252 = vmatprep.subr.mxu0 0.0
  %5253 = vmatpush1.msra.mxu0 0.0
  %5254 = vmatprep.subr.mxu0 0.0
  %5255 = vmatpush1.msra.mxu0 0.0
  %5256 = vmatprep.mubr.f32.mxu0 0.0
  %5257 = vmatmul.mubr.f32.gmra.mrb[0].mxu0 %v5181
  %v5258 = vpop.f32.mrb[0].mxu0
  %v5259 = vadd.f32 0.0, %v5258
  %v5260 = vpop.f32.mrb[0].mxu0
  %5261 = vmatprep.mubr.f32.mxu0 0.0
  %5262 = vmatmul.mubr.f32.gmra.mrb[0].mxu0 %v5184
  %v5263 = vpop.f32.mrb[0].mxu0
  %v5264 = vadd.f32 0.0, %v5263
  %v5265 = vpop.f32.mrb[0].mxu0
  %5266 = vmatprep.mubr.f32.mxu0 0.0
  %5267 = vmatmul.mubr.f32.gmra.mrb[0].mxu0 %v5187
  %v5268 = vpop.f32.mrb[0].mxu0
  %v5269 = vadd.f32 0.0, %v5268
  %v5270 = vpop.f32.mrb[0].mxu0
  %5271 = vmatprep.mubr.f32.mxu0 0.0
  %5272 = vmatmul.mubr.f32.gmra.mrb[0].mxu0 %v5190
  %v5273 = vpop.f32.mrb[0].mxu0
  %v5274 = vadd.f32 0.0, %v5273
  %v5275 = vpop.f32.mrb[0].mxu0
  %5276 = vdwg.mxu0
  %s5277 = scalar_lea.vmem %s5, 48
  %v5278 = vld [vmem:[%s5277] sm:$0xff]
  %v5280 = vsel %vm686, %v5259, 0
  %v5283 = vsel %vm686, %v5264, 0
  %v5286 = vsel %vm686, %v5269, 0
  %v5289 = vsel %vm686, %v5274, 0
  %5291 = vmatprep.subr.mxu0 0.0
  %5292 = vmatpush1.msra.mxu0 %v5278
  %5293 = vmatprep.subr.mxu0 0.0
  %5294 = vmatpush1.msra.mxu0 0.0
  %5295 = vmatprep.subr.mxu0 0.0
  %5296 = vmatpush1.msra.mxu0 0.0
  %5297 = vmatprep.subr.mxu0 0.0
  %5298 = vmatpush1.msra.mxu0 0.0
  %5299 = vmatprep.subr.mxu0 0.0
  %5300 = vmatpush1.msra.mxu0 0.0
  %5301 = vmatprep.subr.mxu0 0.0
  %5302 = vmatpush1.msra.mxu0 0.0
  %5303 = vmatprep.subr.mxu0 0.0
  %5304 = vmatpush1.msra.mxu0 0.0
  %5305 = vmatprep.subr.mxu0 0.0
  %5306 = vmatpush1.msra.mxu0 0.0
  %5307 = vmatprep.subr.mxu0 0.0
  %5308 = vmatpush1.msra.mxu0 0.0
  %5309 = vmatprep.subr.mxu0 0.0
  %5310 = vmatpush1.msra.mxu0 0.0
  %5311 = vmatprep.subr.mxu0 0.0
  %5312 = vmatpush1.msra.mxu0 0.0
  %5313 = vmatprep.subr.mxu0 0.0
  %5314 = vmatpush1.msra.mxu0 0.0
  %5315 = vmatprep.subr.mxu0 0.0
  %5316 = vmatpush1.msra.mxu0 0.0
  %5317 = vmatprep.subr.mxu0 0.0
  %5318 = vmatpush1.msra.mxu0 0.0
  %5319 = vmatprep.subr.mxu0 0.0
  %5320 = vmatpush1.msra.mxu0 0.0
  %5321 = vmatprep.subr.mxu0 0.0
  %5322 = vmatpush1.msra.mxu0 0.0
  %5323 = vmatprep.subr.mxu0 0.0
  %5324 = vmatpush1.msra.mxu0 0.0
  %5325 = vmatprep.subr.mxu0 0.0
  %5326 = vmatpush1.msra.mxu0 0.0
  %5327 = vmatprep.subr.mxu0 0.0
  %5328 = vmatpush1.msra.mxu0 0.0
  %5329 = vmatprep.subr.mxu0 0.0
  %5330 = vmatpush1.msra.mxu0 0.0
  %5331 = vmatprep.subr.mxu0 0.0
  %5332 = vmatpush1.msra.mxu0 0.0
  %5333 = vmatprep.subr.mxu0 0.0
  %5334 = vmatpush1.msra.mxu0 0.0
  %5335 = vmatprep.subr.mxu0 0.0
  %5336 = vmatpush1.msra.mxu0 0.0
  %5337 = vmatprep.subr.mxu0 0.0
  %5338 = vmatpush1.msra.mxu0 0.0
  %5339 = vmatprep.subr.mxu0 0.0
  %5340 = vmatpush1.msra.mxu0 0.0
  %5341 = vmatprep.subr.mxu0 0.0
  %5342 = vmatpush1.msra.mxu0 0.0
  %5343 = vmatprep.subr.mxu0 0.0
  %5344 = vmatpush1.msra.mxu0 0.0
  %5345 = vmatprep.subr.mxu0 0.0
  %5346 = vmatpush1.msra.mxu0 0.0
  %5347 = vmatprep.subr.mxu0 0.0
  %5348 = vmatpush1.msra.mxu0 0.0
  %5349 = vmatprep.subr.mxu0 0.0
  %5350 = vmatpush1.msra.mxu0 0.0
  %5351 = vmatprep.subr.mxu0 0.0
  %5352 = vmatpush1.msra.mxu0 0.0
  %5353 = vmatprep.subr.mxu0 0.0
  %5354 = vmatpush1.msra.mxu0 0.0
  %5355 = vmatprep.mubr.f32.mxu0 0.0
  %5356 = vmatmul.mubr.f32.gmra.mrb[0].mxu0 %v5280
  %v5357 = vpop.f32.mrb[0].mxu0
  %v5358 = vadd.f32 0.0, %v5357
  %v5359 = vpop.f32.mrb[0].mxu0
  %5360 = vmatprep.mubr.f32.mxu0 0.0
  %5361 = vmatmul.mubr.f32.gmra.mrb[0].mxu0 %v5283
  %v5362 = vpop.f32.mrb[0].mxu0
  %v5363 = vadd.f32 0.0, %v5362
  %v5364 = vpop.f32.mrb[0].mxu0
  %5365 = vmatprep.mubr.f32.mxu0 0.0
  %5366 = vmatmul.mubr.f32.gmra.mrb[0].mxu0 %v5286
  %v5367 = vpop.f32.mrb[0].mxu0
  %v5368 = vadd.f32 0.0, %v5367
  %v5369 = vpop.f32.mrb[0].mxu0
  %5370 = vmatprep.mubr.f32.mxu0 0.0
  %5371 = vmatmul.mubr.f32.gmra.mrb[0].mxu0 %v5289
  %v5372 = vpop.f32.mrb[0].mxu0
  %v5373 = vadd.f32 0.0, %v5372
  %v5374 = vpop.f32.mrb[0].mxu0
  %5375 = vdwg.mxu0
  %v5376 = vadd.f32 %v4707, %v5358
  %v5377 = vadd.f32 %v4712, %v5363
  %v5378 = vadd.f32 %v4717, %v5368
  %v5379 = vadd.f32 %v4722, %v5373
  %s5380 = scalar_lea.vmem %s3, 224
  %v5381 = vld [vmem:[%s5380] sm:$0xff]
  %v5382 = vld [vmem:[%s5380 + $0x8] sm:$0xff]
  %v5383 = vld [vmem:[%s5380 + $0x10] sm:$0xff]
  %v5384 = vld [vmem:[%s5380 + $0x18] sm:$0xff]
  %s5385 = scalar_lea.vmem %s4, 7
  %v5386 = vld [vmem:[%s5385] sm:$0x1]
  %v5388 = vlaneseq
  %v5389 = vshrl.u32 %v5388, 7
  %v5390 = vsub.s32 0, %v5389
  %v5391 = vrot.slane %v5386, %v5390
  %5393 = vmatprep.subr.mxu0 0.0
  %5394 = vmatpush1.msra.mxu0 %v5381
  %5395 = vmatprep.subr.mxu0 0.0
  %5396 = vmatpush1.msra.mxu0 %v5382
  %5397 = vmatprep.subr.mxu0 0.0
  %5398 = vmatpush1.msra.mxu0 %v5383
  %5399 = vmatprep.subr.mxu0 0.0
  %5400 = vmatpush1.msra.mxu0 %v5384
  %5401 = vmatprep.subr.mxu0 0.0
  %5402 = vmatpush1.msra.mxu0 0.0
  %5403 = vmatprep.subr.mxu0 0.0
  %5404 = vmatpush1.msra.mxu0 0.0
  %5405 = vmatprep.subr.mxu0 0.0
  %5406 = vmatpush1.msra.mxu0 0.0
  %5407 = vmatprep.subr.mxu0 0.0
  %5408 = vmatpush1.msra.mxu0 0.0
  %5409 = vmatprep.subr.mxu0 0.0
  %5410 = vmatpush1.msra.mxu0 0.0
  %5411 = vmatprep.subr.mxu0 0.0
  %5412 = vmatpush1.msra.mxu0 0.0
  %5413 = vmatprep.subr.mxu0 0.0
  %5414 = vmatpush1.msra.mxu0 0.0
  %5415 = vmatprep.subr.mxu0 0.0
  %5416 = vmatpush1.msra.mxu0 0.0
  %5417 = vmatprep.subr.mxu0 0.0
  %5418 = vmatpush1.msra.mxu0 0.0
  %5419 = vmatprep.subr.mxu0 0.0
  %5420 = vmatpush1.msra.mxu0 0.0
  %5421 = vmatprep.subr.mxu0 0.0
  %5422 = vmatpush1.msra.mxu0 0.0
  %5423 = vmatprep.subr.mxu0 0.0
  %5424 = vmatpush1.msra.mxu0 0.0
  %5425 = vmatprep.subr.mxu0 0.0
  %5426 = vmatpush1.msra.mxu0 0.0
  %5427 = vmatprep.subr.mxu0 0.0
  %5428 = vmatpush1.msra.mxu0 0.0
  %5429 = vmatprep.subr.mxu0 0.0
  %5430 = vmatpush1.msra.mxu0 0.0
  %5431 = vmatprep.subr.mxu0 0.0
  %5432 = vmatpush1.msra.mxu0 0.0
  %5433 = vmatprep.subr.mxu0 0.0
  %5434 = vmatpush1.msra.mxu0 0.0
  %5435 = vmatprep.subr.mxu0 0.0
  %5436 = vmatpush1.msra.mxu0 0.0
  %5437 = vmatprep.subr.mxu0 0.0
  %5438 = vmatpush1.msra.mxu0 0.0
  %5439 = vmatprep.subr.mxu0 0.0
  %5440 = vmatpush1.msra.mxu0 0.0
  %5441 = vmatprep.subr.mxu0 0.0
  %5442 = vmatpush1.msra.mxu0 0.0
  %5443 = vmatprep.subr.mxu0 0.0
  %5444 = vmatpush1.msra.mxu0 0.0
  %5445 = vmatprep.subr.mxu0 0.0
  %5446 = vmatpush1.msra.mxu0 0.0
  %5447 = vmatprep.subr.mxu0 0.0
  %5448 = vmatpush1.msra.mxu0 0.0
  %5449 = vmatprep.subr.mxu0 0.0
  %5450 = vmatpush1.msra.mxu0 0.0
  %5451 = vmatprep.subr.mxu0 0.0
  %5452 = vmatpush1.msra.mxu0 0.0
  %5453 = vmatprep.subr.mxu0 0.0
  %5454 = vmatpush1.msra.mxu0 0.0
  %5455 = vmatprep.subr.mxu0 0.0
  %5456 = vmatpush1.msra.mxu0 0.0
  %5457 = vmatprep.mubr.f32.mxu0 0.0
  %5458 = vmatmul.mubr.f32.gmra.mrb[0].mxu0 %v3425
  %v5459 = vpop.f32.mrb[0].mxu0
  %v5460 = vadd.f32 %v5391, %v5459
  %v5461 = vpop.f32.mrb[0].mxu0
  %5462 = vmatprep.mubr.f32.mxu0 0.0
  %5463 = vmatmul.mubr.f32.gmra.mrb[0].mxu0 %v3428
  %v5464 = vpop.f32.mrb[0].mxu0
  %v5465 = vadd.f32 %v5391, %v5464
  %v5466 = vpop.f32.mrb[0].mxu0
  %5467 = vmatprep.mubr.f32.mxu0 0.0
  %5468 = vmatmul.mubr.f32.gmra.mrb[0].mxu0 %v3431
  %v5469 = vpop.f32.mrb[0].mxu0
  %v5470 = vadd.f32 %v5391, %v5469
  %v5471 = vpop.f32.mrb[0].mxu0
  %5472 = vmatprep.mubr.f32.mxu0 0.0
  %5473 = vmatmul.mubr.f32.gmra.mrb[0].mxu0 %v3434
  %v5474 = vpop.f32.mrb[0].mxu0
  %v5475 = vadd.f32 %v5391, %v5474
  %v5476 = vpop.f32.mrb[0].mxu0
  %5477 = vdwg.mxu0
  %s5478 = scalar_lea.vmem %s3, 480
  %v5479 = vld [vmem:[%s5478] sm:$0xff]
  %v5480 = vld [vmem:[%s5478 + $0x8] sm:$0xff]
  %v5481 = vld [vmem:[%s5478 + $0x10] sm:$0xff]
  %v5482 = vld [vmem:[%s5478 + $0x18] sm:$0xff]
  %s5483 = scalar_lea.vmem %s4, 15
  %v5484 = vld [vmem:[%s5483] sm:$0x1]
  %v5486 = vlaneseq
  %v5487 = vshrl.u32 %v5486, 7
  %v5488 = vsub.s32 0, %v5487
  %v5489 = vrot.slane %v5484, %v5488
  %5491 = vmatprep.subr.mxu0 0.0
  %5492 = vmatpush1.msra.mxu0 %v5479
  %5493 = vmatprep.subr.mxu0 0.0
  %5494 = vmatpush1.msra.mxu0 %v5480
  %5495 = vmatprep.subr.mxu0 0.0
  %5496 = vmatpush1.msra.mxu0 %v5481
  %5497 = vmatprep.subr.mxu0 0.0
  %5498 = vmatpush1.msra.mxu0 %v5482
  %5499 = vmatprep.subr.mxu0 0.0
  %5500 = vmatpush1.msra.mxu0 0.0
  %5501 = vmatprep.subr.mxu0 0.0
  %5502 = vmatpush1.msra.mxu0 0.0
  %5503 = vmatprep.subr.mxu0 0.0
  %5504 = vmatpush1.msra.mxu0 0.0
  %5505 = vmatprep.subr.mxu0 0.0
  %5506 = vmatpush1.msra.mxu0 0.0
  %5507 = vmatprep.subr.mxu0 0.0
  %5508 = vmatpush1.msra.mxu0 0.0
  %5509 = vmatprep.subr.mxu0 0.0
  %5510 = vmatpush1.msra.mxu0 0.0
  %5511 = vmatprep.subr.mxu0 0.0
  %5512 = vmatpush1.msra.mxu0 0.0
  %5513 = vmatprep.subr.mxu0 0.0
  %5514 = vmatpush1.msra.mxu0 0.0
  %5515 = vmatprep.subr.mxu0 0.0
  %5516 = vmatpush1.msra.mxu0 0.0
  %5517 = vmatprep.subr.mxu0 0.0
  %5518 = vmatpush1.msra.mxu0 0.0
  %5519 = vmatprep.subr.mxu0 0.0
  %5520 = vmatpush1.msra.mxu0 0.0
  %5521 = vmatprep.subr.mxu0 0.0
  %5522 = vmatpush1.msra.mxu0 0.0
  %5523 = vmatprep.subr.mxu0 0.0
  %5524 = vmatpush1.msra.mxu0 0.0
  %5525 = vmatprep.subr.mxu0 0.0
  %5526 = vmatpush1.msra.mxu0 0.0
  %5527 = vmatprep.subr.mxu0 0.0
  %5528 = vmatpush1.msra.mxu0 0.0
  %5529 = vmatprep.subr.mxu0 0.0
  %5530 = vmatpush1.msra.mxu0 0.0
  %5531 = vmatprep.subr.mxu0 0.0
  %5532 = vmatpush1.msra.mxu0 0.0
  %5533 = vmatprep.subr.mxu0 0.0
  %5534 = vmatpush1.msra.mxu0 0.0
  %5535 = vmatprep.subr.mxu0 0.0
  %5536 = vmatpush1.msra.mxu0 0.0
  %5537 = vmatprep.subr.mxu0 0.0
  %5538 = vmatpush1.msra.mxu0 0.0
  %5539 = vmatprep.subr.mxu0 0.0
  %5540 = vmatpush1.msra.mxu0 0.0
  %5541 = vmatprep.subr.mxu0 0.0
  %5542 = vmatpush1.msra.mxu0 0.0
  %5543 = vmatprep.subr.mxu0 0.0
  %5544 = vmatpush1.msra.mxu0 0.0
  %5545 = vmatprep.subr.mxu0 0.0
  %5546 = vmatpush1.msra.mxu0 0.0
  %5547 = vmatprep.subr.mxu0 0.0
  %5548 = vmatpush1.msra.mxu0 0.0
  %5549 = vmatprep.subr.mxu0 0.0
  %5550 = vmatpush1.msra.mxu0 0.0
  %5551 = vmatprep.subr.mxu0 0.0
  %5552 = vmatpush1.msra.mxu0 0.0
  %5553 = vmatprep.subr.mxu0 0.0
  %5554 = vmatpush1.msra.mxu0 0.0
  %5555 = vmatprep.mubr.f32.mxu0 0.0
  %5556 = vmatmul.mubr.f32.gmra.mrb[0].mxu0 %v3425
  %v5557 = vpop.f32.mrb[0].mxu0
  %v5558 = vadd.f32 %v5489, %v5557
  %v5559 = vpop.f32.mrb[0].mxu0
  %5560 = vmatprep.mubr.f32.mxu0 0.0
  %5561 = vmatmul.mubr.f32.gmra.mrb[0].mxu0 %v3428
  %v5562 = vpop.f32.mrb[0].mxu0
  %v5563 = vadd.f32 %v5489, %v5562
  %v5564 = vpop.f32.mrb[0].mxu0
  %5565 = vmatprep.mubr.f32.mxu0 0.0
  %5566 = vmatmul.mubr.f32.gmra.mrb[0].mxu0 %v3431
  %v5567 = vpop.f32.mrb[0].mxu0
  %v5568 = vadd.f32 %v5489, %v5567
  %v5569 = vpop.f32.mrb[0].mxu0
  %5570 = vmatprep.mubr.f32.mxu0 0.0
  %5571 = vmatmul.mubr.f32.gmra.mrb[0].mxu0 %v3434
  %v5572 = vpop.f32.mrb[0].mxu0
  %v5573 = vadd.f32 %v5489, %v5572
  %v5574 = vpop.f32.mrb[0].mxu0
  %5575 = vdwg.mxu0
  %s5576 = scalar_lea.vmem %s3, 736
  %v5577 = vld [vmem:[%s5576] sm:$0xff]
  %v5578 = vld [vmem:[%s5576 + $0x8] sm:$0xff]
  %v5579 = vld [vmem:[%s5576 + $0x10] sm:$0xff]
  %v5580 = vld [vmem:[%s5576 + $0x18] sm:$0xff]
  %s5581 = scalar_lea.vmem %s4, 23
  %v5582 = vld [vmem:[%s5581] sm:$0x1]
  %v5584 = vlaneseq
  %v5585 = vshrl.u32 %v5584, 7
  %v5586 = vsub.s32 0, %v5585
  %v5587 = vrot.slane %v5582, %v5586
  %5589 = vmatprep.subr.mxu0 0.0
  %5590 = vmatpush1.msra.mxu0 %v5577
  %5591 = vmatprep.subr.mxu0 0.0
  %5592 = vmatpush1.msra.mxu0 %v5578
  %5593 = vmatprep.subr.mxu0 0.0
  %5594 = vmatpush1.msra.mxu0 %v5579
  %5595 = vmatprep.subr.mxu0 0.0
  %5596 = vmatpush1.msra.mxu0 %v5580
  %5597 = vmatprep.subr.mxu0 0.0
  %5598 = vmatpush1.msra.mxu0 0.0
  %5599 = vmatprep.subr.mxu0 0.0
  %5600 = vmatpush1.msra.mxu0 0.0
  %5601 = vmatprep.subr.mxu0 0.0
  %5602 = vmatpush1.msra.mxu0 0.0
  %5603 = vmatprep.subr.mxu0 0.0
  %5604 = vmatpush1.msra.mxu0 0.0
  %5605 = vmatprep.subr.mxu0 0.0
  %5606 = vmatpush1.msra.mxu0 0.0
  %5607 = vmatprep.subr.mxu0 0.0
  %5608 = vmatpush1.msra.mxu0 0.0
  %5609 = vmatprep.subr.mxu0 0.0
  %5610 = vmatpush1.msra.mxu0 0.0
  %5611 = vmatprep.subr.mxu0 0.0
  %5612 = vmatpush1.msra.mxu0 0.0
  %5613 = vmatprep.subr.mxu0 0.0
  %5614 = vmatpush1.msra.mxu0 0.0
  %5615 = vmatprep.subr.mxu0 0.0
  %5616 = vmatpush1.msra.mxu0 0.0
  %5617 = vmatprep.subr.mxu0 0.0
  %5618 = vmatpush1.msra.mxu0 0.0
  %5619 = vmatprep.subr.mxu0 0.0
  %5620 = vmatpush1.msra.mxu0 0.0
  %5621 = vmatprep.subr.mxu0 0.0
  %5622 = vmatpush1.msra.mxu0 0.0
  %5623 = vmatprep.subr.mxu0 0.0
  %5624 = vmatpush1.msra.mxu0 0.0
  %5625 = vmatprep.subr.mxu0 0.0
  %5626 = vmatpush1.msra.mxu0 0.0
  %5627 = vmatprep.subr.mxu0 0.0
  %5628 = vmatpush1.msra.mxu0 0.0
  %5629 = vmatprep.subr.mxu0 0.0
  %5630 = vmatpush1.msra.mxu0 0.0
  %5631 = vmatprep.subr.mxu0 0.0
  %5632 = vmatpush1.msra.mxu0 0.0
  %5633 = vmatprep.subr.mxu0 0.0
  %5634 = vmatpush1.msra.mxu0 0.0
  %5635 = vmatprep.subr.mxu0 0.0
  %5636 = vmatpush1.msra.mxu0 0.0
  %5637 = vmatprep.subr.mxu0 0.0
  %5638 = vmatpush1.msra.mxu0 0.0
  %5639 = vmatprep.subr.mxu0 0.0
  %5640 = vmatpush1.msra.mxu0 0.0
  %5641 = vmatprep.subr.mxu0 0.0
  %5642 = vmatpush1.msra.mxu0 0.0
  %5643 = vmatprep.subr.mxu0 0.0
  %5644 = vmatpush1.msra.mxu0 0.0
  %5645 = vmatprep.subr.mxu0 0.0
  %5646 = vmatpush1.msra.mxu0 0.0
  %5647 = vmatprep.subr.mxu0 0.0
  %5648 = vmatpush1.msra.mxu0 0.0
  %5649 = vmatprep.subr.mxu0 0.0
  %5650 = vmatpush1.msra.mxu0 0.0
  %5651 = vmatprep.subr.mxu0 0.0
  %5652 = vmatpush1.msra.mxu0 0.0
  %5653 = vmatprep.mubr.f32.mxu0 0.0
  %5654 = vmatmul.mubr.f32.gmra.mrb[0].mxu0 %v3425
  %v5655 = vpop.f32.mrb[0].mxu0
  %v5656 = vadd.f32 %v5587, %v5655
  %v5657 = vpop.f32.mrb[0].mxu0
  %5658 = vmatprep.mubr.f32.mxu0 0.0
  %5659 = vmatmul.mubr.f32.gmra.mrb[0].mxu0 %v3428
  %v5660 = vpop.f32.mrb[0].mxu0
  %v5661 = vadd.f32 %v5587, %v5660
  %v5662 = vpop.f32.mrb[0].mxu0
  %5663 = vmatprep.mubr.f32.mxu0 0.0
  %5664 = vmatmul.mubr.f32.gmra.mrb[0].mxu0 %v3431
  %v5665 = vpop.f32.mrb[0].mxu0
  %v5666 = vadd.f32 %v5587, %v5665
  %v5667 = vpop.f32.mrb[0].mxu0
  %5668 = vmatprep.mubr.f32.mxu0 0.0
  %5669 = vmatmul.mubr.f32.gmra.mrb[0].mxu0 %v3434
  %v5670 = vpop.f32.mrb[0].mxu0
  %v5671 = vadd.f32 %v5587, %v5670
  %v5672 = vpop.f32.mrb[0].mxu0
  %5673 = vdwg.mxu0
  %v5675 = vsel %vm686, %v5460, 0
  %v5678 = vsel %vm686, %v5465, 0
  %v5681 = vsel %vm686, %v5470, 0
  %v5684 = vsel %vm686, %v5475, 0
  %v5687 = vsel %vm686, %v5558, 0
  %v5690 = vsel %vm686, %v5563, 0
  %v5693 = vsel %vm686, %v5568, 0
  %v5696 = vsel %vm686, %v5573, 0
  %5698 = vmatprep.subr.mxu0 0.0
  %5699 = vmatpush1.xpose.msra.mxu0 %v5687
  %5700 = vmatprep.subr.mxu0 0.0
  %5701 = vmatpush1.xpose.msra.mxu0 %v5690
  %5702 = vmatprep.subr.mxu0 0.0
  %5703 = vmatpush1.xpose.msra.mxu0 %v5693
  %5704 = vmatprep.subr.mxu0 0.0
  %5705 = vmatpush1.xpose.msra.mxu0 %v5696
  %5706 = vmatprep.subr.mxu0 0.0
  %5707 = vmatpush1.xpose.msra.mxu0 0.0
  %5708 = vmatprep.subr.mxu0 0.0
  %5709 = vmatpush1.xpose.msra.mxu0 0.0
  %5710 = vmatprep.subr.mxu0 0.0
  %5711 = vmatpush1.xpose.msra.mxu0 0.0
  %5712 = vmatprep.subr.mxu0 0.0
  %5713 = vmatpush1.xpose.msra.mxu0 0.0
  %5714 = vmatprep.subr.mxu0 0.0
  %5715 = vmatpush1.xpose.msra.mxu0 0.0
  %5716 = vmatprep.subr.mxu0 0.0
  %5717 = vmatpush1.xpose.msra.mxu0 0.0
  %5718 = vmatprep.subr.mxu0 0.0
  %5719 = vmatpush1.xpose.msra.mxu0 0.0
  %5720 = vmatprep.subr.mxu0 0.0
  %5721 = vmatpush1.xpose.msra.mxu0 0.0
  %5722 = vmatprep.subr.mxu0 0.0
  %5723 = vmatpush1.xpose.msra.mxu0 0.0
  %5724 = vmatprep.subr.mxu0 0.0
  %5725 = vmatpush1.xpose.msra.mxu0 0.0
  %5726 = vmatprep.subr.mxu0 0.0
  %5727 = vmatpush1.xpose.msra.mxu0 0.0
  %5728 = vmatprep.subr.mxu0 0.0
  %5729 = vmatpush1.xpose.msra.mxu0 0.0
  %5730 = vmatprep.subr.mxu0 0.0
  %5731 = vmatpush1.xpose.msra.mxu0 0.0
  %5732 = vmatprep.subr.mxu0 0.0
  %5733 = vmatpush1.xpose.msra.mxu0 0.0
  %5734 = vmatprep.subr.mxu0 0.0
  %5735 = vmatpush1.xpose.msra.mxu0 0.0
  %5736 = vmatprep.subr.mxu0 0.0
  %5737 = vmatpush1.xpose.msra.mxu0 0.0
  %5738 = vmatprep.subr.mxu0 0.0
  %5739 = vmatpush1.xpose.msra.mxu0 0.0
  %5740 = vmatprep.subr.mxu0 0.0
  %5741 = vmatpush1.xpose.msra.mxu0 0.0
  %5742 = vmatprep.subr.mxu0 0.0
  %5743 = vmatpush1.xpose.msra.mxu0 0.0
  %5744 = vmatprep.subr.mxu0 0.0
  %5745 = vmatpush1.xpose.msra.mxu0 0.0
  %5746 = vmatprep.subr.mxu0 0.0
  %5747 = vmatpush1.xpose.msra.mxu0 0.0
  %5748 = vmatprep.subr.mxu0 0.0
  %5749 = vmatpush1.xpose.msra.mxu0 0.0
  %5750 = vmatprep.subr.mxu0 0.0
  %5751 = vmatpush1.xpose.msra.mxu0 0.0
  %5752 = vmatprep.subr.mxu0 0.0
  %5753 = vmatpush1.xpose.msra.mxu0 0.0
  %5754 = vmatprep.subr.mxu0 0.0
  %5755 = vmatpush1.xpose.msra.mxu0 0.0
  %5756 = vmatprep.subr.mxu0 0.0
  %5757 = vmatpush1.xpose.msra.mxu0 0.0
  %5758 = vmatprep.subr.mxu0 0.0
  %5759 = vmatpush1.xpose.msra.mxu0 0.0
  %5760 = vmatprep.subr.mxu0 0.0
  %5761 = vmatpush1.xpose.msra.mxu0 0.0
  %5762 = vmatprep.mubr.f32.mxu0 0.0
  %5763 = vmatmul.mubr.f32.gmra.mrb[0].mxu0 %v5675
  %v5764 = vpop.f32.mrb[0].mxu0
  %v5765 = vadd.f32 0.0, %v5764
  %v5766 = vpop.f32.mrb[0].mxu0
  %5767 = vmatprep.mubr.f32.mxu0 0.0
  %5768 = vmatmul.mubr.f32.gmra.mrb[0].mxu0 %v5678
  %v5769 = vpop.f32.mrb[0].mxu0
  %v5770 = vadd.f32 0.0, %v5769
  %v5771 = vpop.f32.mrb[0].mxu0
  %5772 = vmatprep.mubr.f32.mxu0 0.0
  %5773 = vmatmul.mubr.f32.gmra.mrb[0].mxu0 %v5681
  %v5774 = vpop.f32.mrb[0].mxu0
  %v5775 = vadd.f32 0.0, %v5774
  %v5776 = vpop.f32.mrb[0].mxu0
  %5777 = vmatprep.mubr.f32.mxu0 0.0
  %5778 = vmatmul.mubr.f32.gmra.mrb[0].mxu0 %v5684
  %v5779 = vpop.f32.mrb[0].mxu0
  %v5780 = vadd.f32 0.0, %v5779
  %v5781 = vpop.f32.mrb[0].mxu0
  %5782 = vdwg.mxu0
  %v5783 = vmul.f32 %v5765, 0.35355338
  %v5784 = vmul.f32 %v5770, 0.35355338
  %v5785 = vmul.f32 %v5775, 0.35355338
  %v5786 = vmul.f32 %v5780, 0.35355338
  %v5787 = vadd.f32 %v5783, %v293
  %v5788 = vadd.f32 %v5784, %v294
  %v5789 = vadd.f32 %v5785, %v295
  %v5790 = vadd.f32 %v5786, %v296
  %v5791 = vsel %vm308, %v5787, -inf
  %5792 = vmax.xlane.f32.xlu0 %v5791
  %v5793 = vpop.xlane.xlu0 %5792
  %v5794 = vsel %vm308, %v5788, -inf
  %5795 = vmax.xlane.f32.xlu0 %v5794
  %v5796 = vpop.xlane.xlu0 %5795
  %v5797 = vsel %vm308, %v5789, -inf
  %5798 = vmax.xlane.f32.xlu0 %v5797
  %v5799 = vpop.xlane.xlu0 %5798
  %v5800 = vsel %vm308, %v5790, -inf
  %5801 = vmax.xlane.f32.xlu0 %v5800
  %v5802 = vpop.xlane.xlu0 %5801
  %v5803 = vsub.f32 %v5787, %v5793
  %v5804 = vsub.f32 %v5788, %v5796
  %v5805 = vsub.f32 %v5789, %v5799
  %v5806 = vsub.f32 %v5790, %v5802
  %v5807 = vmul.f32 %v5803, 1.442695
  %v5808 = vpow.pop %v5807
  %v5809 = vmul.f32 %v5804, 1.442695
  %v5810 = vpow.pop %v5809
  %v5811 = vmul.f32 %v5805, 1.442695
  %v5812 = vpow.pop %v5811
  %v5813 = vmul.f32 %v5806, 1.442695
  %v5814 = vpow.pop %v5813
  %v5815 = vsel %vm308, %v5808, 0.0
  %5816 = vadd.xlane.f32.xlu0 %v5815
  %v5817 = vpop.xlane.xlu0 %5816
  %v5818 = vsel %vm308, %v5810, 0.0
  %5819 = vadd.xlane.f32.xlu0 %v5818
  %v5820 = vpop.xlane.xlu0 %5819
  %v5821 = vsel %vm308, %v5812, 0.0
  %5822 = vadd.xlane.f32.xlu0 %v5821
  %v5823 = vpop.xlane.xlu0 %5822
  %v5824 = vsel %vm308, %v5814, 0.0
  %5825 = vadd.xlane.f32.xlu0 %v5824
  %v5826 = vpop.xlane.xlu0 %5825
  %v5827 = vrcp.pop %v5817
  %v5828 = vrcp.pop %v5820
  %v5829 = vrcp.pop %v5823
  %v5830 = vrcp.pop %v5826
  %v5831 = vmul.f32 %v5808, %v5827
  %v5832 = vmul.f32 %v5810, %v5828
  %v5833 = vmul.f32 %v5812, %v5829
  %v5834 = vmul.f32 %v5814, %v5830
  %v5836 = vsel %vm308, %v5831, 0
  %v5839 = vsel %vm308, %v5832, 0
  %v5842 = vsel %vm308, %v5833, 0
  %v5845 = vsel %vm308, %v5834, 0
  %5847 = vmatprep.subr.mxu0 0.0
  %5848 = vmatpush1.msra.mxu0 %v5656
  %5849 = vmatprep.subr.mxu0 0.0
  %5850 = vmatpush1.msra.mxu0 %v5661
  %5851 = vmatprep.subr.mxu0 0.0
  %5852 = vmatpush1.msra.mxu0 %v5666
  %5853 = vmatprep.subr.mxu0 0.0
  %5854 = vmatpush1.msra.mxu0 %v5671
  %5855 = vmatprep.subr.mxu0 0.0
  %5856 = vmatpush1.msra.mxu0 0.0
  %5857 = vmatprep.subr.mxu0 0.0
  %5858 = vmatpush1.msra.mxu0 0.0
  %5859 = vmatprep.subr.mxu0 0.0
  %5860 = vmatpush1.msra.mxu0 0.0
  %5861 = vmatprep.subr.mxu0 0.0
  %5862 = vmatpush1.msra.mxu0 0.0
  %5863 = vmatprep.subr.mxu0 0.0
  %5864 = vmatpush1.msra.mxu0 0.0
  %5865 = vmatprep.subr.mxu0 0.0
  %5866 = vmatpush1.msra.mxu0 0.0
  %5867 = vmatprep.subr.mxu0 0.0
  %5868 = vmatpush1.msra.mxu0 0.0
  %5869 = vmatprep.subr.mxu0 0.0
  %5870 = vmatpush1.msra.mxu0 0.0
  %5871 = vmatprep.subr.mxu0 0.0
  %5872 = vmatpush1.msra.mxu0 0.0
  %5873 = vmatprep.subr.mxu0 0.0
  %5874 = vmatpush1.msra.mxu0 0.0
  %5875 = vmatprep.subr.mxu0 0.0
  %5876 = vmatpush1.msra.mxu0 0.0
  %5877 = vmatprep.subr.mxu0 0.0
  %5878 = vmatpush1.msra.mxu0 0.0
  %5879 = vmatprep.subr.mxu0 0.0
  %5880 = vmatpush1.msra.mxu0 0.0
  %5881 = vmatprep.subr.mxu0 0.0
  %5882 = vmatpush1.msra.mxu0 0.0
  %5883 = vmatprep.subr.mxu0 0.0
  %5884 = vmatpush1.msra.mxu0 0.0
  %5885 = vmatprep.subr.mxu0 0.0
  %5886 = vmatpush1.msra.mxu0 0.0
  %5887 = vmatprep.subr.mxu0 0.0
  %5888 = vmatpush1.msra.mxu0 0.0
  %5889 = vmatprep.subr.mxu0 0.0
  %5890 = vmatpush1.msra.mxu0 0.0
  %5891 = vmatprep.subr.mxu0 0.0
  %5892 = vmatpush1.msra.mxu0 0.0
  %5893 = vmatprep.subr.mxu0 0.0
  %5894 = vmatpush1.msra.mxu0 0.0
  %5895 = vmatprep.subr.mxu0 0.0
  %5896 = vmatpush1.msra.mxu0 0.0
  %5897 = vmatprep.subr.mxu0 0.0
  %5898 = vmatpush1.msra.mxu0 0.0
  %5899 = vmatprep.subr.mxu0 0.0
  %5900 = vmatpush1.msra.mxu0 0.0
  %5901 = vmatprep.subr.mxu0 0.0
  %5902 = vmatpush1.msra.mxu0 0.0
  %5903 = vmatprep.subr.mxu0 0.0
  %5904 = vmatpush1.msra.mxu0 0.0
  %5905 = vmatprep.subr.mxu0 0.0
  %5906 = vmatpush1.msra.mxu0 0.0
  %5907 = vmatprep.subr.mxu0 0.0
  %5908 = vmatpush1.msra.mxu0 0.0
  %5909 = vmatprep.subr.mxu0 0.0
  %5910 = vmatpush1.msra.mxu0 0.0
  %5911 = vmatprep.mubr.f32.mxu0 0.0
  %5912 = vmatmul.mubr.f32.gmra.mrb[0].mxu0 %v5836
  %v5913 = vpop.f32.mrb[0].mxu0
  %v5914 = vadd.f32 0.0, %v5913
  %v5915 = vpop.f32.mrb[0].mxu0
  %5916 = vmatprep.mubr.f32.mxu0 0.0
  %5917 = vmatmul.mubr.f32.gmra.mrb[0].mxu0 %v5839
  %v5918 = vpop.f32.mrb[0].mxu0
  %v5919 = vadd.f32 0.0, %v5918
  %v5920 = vpop.f32.mrb[0].mxu0
  %5921 = vmatprep.mubr.f32.mxu0 0.0
  %5922 = vmatmul.mubr.f32.gmra.mrb[0].mxu0 %v5842
  %v5923 = vpop.f32.mrb[0].mxu0
  %v5924 = vadd.f32 0.0, %v5923
  %v5925 = vpop.f32.mrb[0].mxu0
  %5926 = vmatprep.mubr.f32.mxu0 0.0
  %5927 = vmatmul.mubr.f32.gmra.mrb[0].mxu0 %v5845
  %v5928 = vpop.f32.mrb[0].mxu0
  %v5929 = vadd.f32 0.0, %v5928
  %v5930 = vpop.f32.mrb[0].mxu0
  %5931 = vdwg.mxu0
  %s5932 = scalar_lea.vmem %s5, 56
  %v5933 = vld [vmem:[%s5932] sm:$0xff]
  %v5935 = vsel %vm686, %v5914, 0
  %v5938 = vsel %vm686, %v5919, 0
  %v5941 = vsel %vm686, %v5924, 0
  %v5944 = vsel %vm686, %v5929, 0
  %5946 = vmatprep.subr.mxu0 0.0
  %5947 = vmatpush1.msra.mxu0 %v5933
  %5948 = vmatprep.subr.mxu0 0.0
  %5949 = vmatpush1.msra.mxu0 0.0
  %5950 = vmatprep.subr.mxu0 0.0
  %5951 = vmatpush1.msra.mxu0 0.0
  %5952 = vmatprep.subr.mxu0 0.0
  %5953 = vmatpush1.msra.mxu0 0.0
  %5954 = vmatprep.subr.mxu0 0.0
  %5955 = vmatpush1.msra.mxu0 0.0
  %5956 = vmatprep.subr.mxu0 0.0
  %5957 = vmatpush1.msra.mxu0 0.0
  %5958 = vmatprep.subr.mxu0 0.0
  %5959 = vmatpush1.msra.mxu0 0.0
  %5960 = vmatprep.subr.mxu0 0.0
  %5961 = vmatpush1.msra.mxu0 0.0
  %5962 = vmatprep.subr.mxu0 0.0
  %5963 = vmatpush1.msra.mxu0 0.0
  %5964 = vmatprep.subr.mxu0 0.0
  %5965 = vmatpush1.msra.mxu0 0.0
  %5966 = vmatprep.subr.mxu0 0.0
  %5967 = vmatpush1.msra.mxu0 0.0
  %5968 = vmatprep.subr.mxu0 0.0
  %5969 = vmatpush1.msra.mxu0 0.0
  %5970 = vmatprep.subr.mxu0 0.0
  %5971 = vmatpush1.msra.mxu0 0.0
  %5972 = vmatprep.subr.mxu0 0.0
  %5973 = vmatpush1.msra.mxu0 0.0
  %5974 = vmatprep.subr.mxu0 0.0
  %5975 = vmatpush1.msra.mxu0 0.0
  %5976 = vmatprep.subr.mxu0 0.0
  %5977 = vmatpush1.msra.mxu0 0.0
  %5978 = vmatprep.subr.mxu0 0.0
  %5979 = vmatpush1.msra.mxu0 0.0
  %5980 = vmatprep.subr.mxu0 0.0
  %5981 = vmatpush1.msra.mxu0 0.0
  %5982 = vmatprep.subr.mxu0 0.0
  %5983 = vmatpush1.msra.mxu0 0.0
  %5984 = vmatprep.subr.mxu0 0.0
  %5985 = vmatpush1.msra.mxu0 0.0
  %5986 = vmatprep.subr.mxu0 0.0
  %5987 = vmatpush1.msra.mxu0 0.0
  %5988 = vmatprep.subr.mxu0 0.0
  %5989 = vmatpush1.msra.mxu0 0.0
  %5990 = vmatprep.subr.mxu0 0.0
  %5991 = vmatpush1.msra.mxu0 0.0
  %5992 = vmatprep.subr.mxu0 0.0
  %5993 = vmatpush1.msra.mxu0 0.0
  %5994 = vmatprep.subr.mxu0 0.0
  %5995 = vmatpush1.msra.mxu0 0.0
  %5996 = vmatprep.subr.mxu0 0.0
  %5997 = vmatpush1.msra.mxu0 0.0
  %5998 = vmatprep.subr.mxu0 0.0
  %5999 = vmatpush1.msra.mxu0 0.0
  %6000 = vmatprep.subr.mxu0 0.0
  %6001 = vmatpush1.msra.mxu0 0.0
  %6002 = vmatprep.subr.mxu0 0.0
  %6003 = vmatpush1.msra.mxu0 0.0
  %6004 = vmatprep.subr.mxu0 0.0
  %6005 = vmatpush1.msra.mxu0 0.0
  %6006 = vmatprep.subr.mxu0 0.0
  %6007 = vmatpush1.msra.mxu0 0.0
  %6008 = vmatprep.subr.mxu0 0.0
  %6009 = vmatpush1.msra.mxu0 0.0
  %6010 = vmatprep.mubr.f32.mxu0 0.0
  %6011 = vmatmul.mubr.f32.gmra.mrb[0].mxu0 %v5935
  %v6012 = vpop.f32.mrb[0].mxu0
  %v6013 = vadd.f32 0.0, %v6012
  %v6014 = vpop.f32.mrb[0].mxu0
  %6015 = vmatprep.mubr.f32.mxu0 0.0
  %6016 = vmatmul.mubr.f32.gmra.mrb[0].mxu0 %v5938
  %v6017 = vpop.f32.mrb[0].mxu0
  %v6018 = vadd.f32 0.0, %v6017
  %v6019 = vpop.f32.mrb[0].mxu0
  %6020 = vmatprep.mubr.f32.mxu0 0.0
  %6021 = vmatmul.mubr.f32.gmra.mrb[0].mxu0 %v5941
  %v6022 = vpop.f32.mrb[0].mxu0
  %v6023 = vadd.f32 0.0, %v6022
  %v6024 = vpop.f32.mrb[0].mxu0
  %6025 = vmatprep.mubr.f32.mxu0 0.0
  %6026 = vmatmul.mubr.f32.gmra.mrb[0].mxu0 %v5944
  %v6027 = vpop.f32.mrb[0].mxu0
  %v6028 = vadd.f32 0.0, %v6027
  %v6029 = vpop.f32.mrb[0].mxu0
  %6030 = vdwg.mxu0
  %v6031 = vadd.f32 %v5376, %v6013
  %v6032 = vadd.f32 %v5377, %v6018
  %v6033 = vadd.f32 %v5378, %v6023
  %v6034 = vadd.f32 %v5379, %v6028
  %v6035 = vadd.f32 %v3323, %v6031
  %v6036 = vadd.f32 %v3324, %v6032
  %v6037 = vadd.f32 %v3325, %v6033
  %v6038 = vadd.f32 %v3326, %v6034
  %v6040 = vlaneseq
  %v6041 = vshrl.u32 %v6040, 7
  %v6042 = vsub.s32 0, %v6041
  %v6043 = vrot.slane %v3332, %v6042
  %v6045 = vadd.f32 %v6035, %v6043
  %v6046 = vadd.f32 %v6036, %v6043
  %v6047 = vadd.f32 %v6037, %v6043
  %v6048 = vadd.f32 %v6038, %v6043
  %v6049 = vsel %vm308, %v6045, 0.0
  %6050 = vadd.xlane.f32.xlu0 %v6049
  %v6051 = vpop.xlane.xlu0 %6050
  %v6052 = vsel %vm308, %v6046, 0.0
  %6053 = vadd.xlane.f32.xlu0 %v6052
  %v6054 = vpop.xlane.xlu0 %6053
  %v6055 = vsel %vm308, %v6047, 0.0
  %6056 = vadd.xlane.f32.xlu0 %v6055
  %v6057 = vpop.xlane.xlu0 %6056
  %v6058 = vsel %vm308, %v6048, 0.0
  %6059 = vadd.xlane.f32.xlu0 %v6058
  %v6060 = vpop.xlane.xlu0 %6059
  %v6061 = vmul.f32 %v6051, %v321
  %v6062 = vmul.f32 %v6054, %v321
  %v6063 = vmul.f32 %v6057, %v321
  %v6064 = vmul.f32 %v6060, %v321
  %v6065 = vsub.f32 %v6045, %v6061
  %v6066 = vsub.f32 %v6046, %v6062
  %v6067 = vsub.f32 %v6047, %v6063
  %v6068 = vsub.f32 %v6048, %v6064
  %v6069 = vmul.f32 %v6065, %v6065
  %v6070 = vmul.f32 %v6066, %v6066
  %v6071 = vmul.f32 %v6067, %v6067
  %v6072 = vmul.f32 %v6068, %v6068
  %v6073 = vsel %vm308, %v6069, 0.0
  %6074 = vadd.xlane.f32.xlu0 %v6073
  %v6075 = vpop.xlane.xlu0 %6074
  %v6076 = vsel %vm308, %v6070, 0.0
  %6077 = vadd.xlane.f32.xlu0 %v6076
  %v6078 = vpop.xlane.xlu0 %6077
  %v6079 = vsel %vm308, %v6071, 0.0
  %6080 = vadd.xlane.f32.xlu0 %v6079
  %v6081 = vpop.xlane.xlu0 %6080
  %v6082 = vsel %vm308, %v6072, 0.0
  %6083 = vadd.xlane.f32.xlu0 %v6082
  %v6084 = vpop.xlane.xlu0 %6083
  %v6085 = vmul.f32 %v6075, %v321
  %v6086 = vmul.f32 %v6078, %v321
  %v6087 = vmul.f32 %v6081, %v321
  %v6088 = vmul.f32 %v6084, %v321
  %v6089 = vadd.f32 %v6085, 1e-06
  %v6090 = vadd.f32 %v6086, 1e-06
  %v6091 = vadd.f32 %v6087, 1e-06
  %v6092 = vadd.f32 %v6088, 1e-06
  %v6093 = vrsqrt.pop %v6089
  %v6094 = vrsqrt.pop %v6090
  %v6095 = vrsqrt.pop %v6091
  %v6096 = vrsqrt.pop %v6092
  %v6097 = vmul.f32 %v6065, %v6093
  %v6098 = vmul.f32 %v6066, %v6094
  %v6099 = vmul.f32 %v6067, %v6095
  %v6100 = vmul.f32 %v6068, %v6096
  %v6102 = vlaneseq
  %v6103 = vshrl.u32 %v6102, 7
  %v6104 = vsub.s32 0, %v6103
  %v6105 = vrot.slane %v3334, %v6104
  %v6107 = vmul.f32 %v6097, %v6105
  %v6108 = vmul.f32 %v6098, %v6105
  %v6109 = vmul.f32 %v6099, %v6105
  %v6110 = vmul.f32 %v6100, %v6105
  %v6112 = vlaneseq
  %v6113 = vshrl.u32 %v6112, 7
  %v6114 = vsub.s32 0, %v6113
  %v6115 = vrot.slane %v3336, %v6114
  %v6117 = vadd.f32 %v6107, %v6115
  %v6118 = vadd.f32 %v6108, %v6115
  %v6119 = vadd.f32 %v6109, %v6115
  %v6120 = vadd.f32 %v6110, %v6115
  %s6121 = scalar_lea.vmem %s7, 40
  %v6122 = vld [vmem:[%s6121] sm:$0xff]
  %v6123 = vld [vmem:[%s6121 + $0x8] sm:$0xff]
  %v6124 = vld [vmem:[%s6121 + $0x10] sm:$0xff]
  %v6125 = vld [vmem:[%s6121 + $0x18] sm:$0xff]
  %v6126 = vld [vmem:[%s6121 + $0x20] sm:$0x1]
  %v6127 = vlaneseq
  %v6128 = vshrl.u32 %v6127, 7
  %v6129 = vsub.s32 0, %v6128
  %v6130 = vrot.slane %v6126, %v6129
  %v6132 = vsel %vm308, %v6117, 0
  %v6135 = vsel %vm308, %v6118, 0
  %v6138 = vsel %vm308, %v6119, 0
  %v6141 = vsel %vm308, %v6120, 0
  %6143 = vmatprep.subr.mxu0 0.0
  %6144 = vmatpush1.msra.mxu0 %v6122
  %6145 = vmatprep.subr.mxu0 0.0
  %6146 = vmatpush1.msra.mxu0 %v6123
  %6147 = vmatprep.subr.mxu0 0.0
  %6148 = vmatpush1.msra.mxu0 %v6124
  %6149 = vmatprep.subr.mxu0 0.0
  %6150 = vmatpush1.msra.mxu0 %v6125
  %6151 = vmatprep.subr.mxu0 0.0
  %6152 = vmatpush1.msra.mxu0 0.0
  %6153 = vmatprep.subr.mxu0 0.0
  %6154 = vmatpush1.msra.mxu0 0.0
  %6155 = vmatprep.subr.mxu0 0.0
  %6156 = vmatpush1.msra.mxu0 0.0
  %6157 = vmatprep.subr.mxu0 0.0
  %6158 = vmatpush1.msra.mxu0 0.0
  %6159 = vmatprep.subr.mxu0 0.0
  %6160 = vmatpush1.msra.mxu0 0.0
  %6161 = vmatprep.subr.mxu0 0.0
  %6162 = vmatpush1.msra.mxu0 0.0
  %6163 = vmatprep.subr.mxu0 0.0
  %6164 = vmatpush1.msra.mxu0 0.0
  %6165 = vmatprep.subr.mxu0 0.0
  %6166 = vmatpush1.msra.mxu0 0.0
  %6167 = vmatprep.subr.mxu0 0.0
  %6168 = vmatpush1.msra.mxu0 0.0
  %6169 = vmatprep.subr.mxu0 0.0
  %6170 = vmatpush1.msra.mxu0 0.0
  %6171 = vmatprep.subr.mxu0 0.0
  %6172 = vmatpush1.msra.mxu0 0.0
  %6173 = vmatprep.subr.mxu0 0.0
  %6174 = vmatpush1.msra.mxu0 0.0
  %6175 = vmatprep.subr.mxu0 0.0
  %6176 = vmatpush1.msra.mxu0 0.0
  %6177 = vmatprep.subr.mxu0 0.0
  %6178 = vmatpush1.msra.mxu0 0.0
  %6179 = vmatprep.subr.mxu0 0.0
  %6180 = vmatpush1.msra.mxu0 0.0
  %6181 = vmatprep.subr.mxu0 0.0
  %6182 = vmatpush1.msra.mxu0 0.0
  %6183 = vmatprep.subr.mxu0 0.0
  %6184 = vmatpush1.msra.mxu0 0.0
  %6185 = vmatprep.subr.mxu0 0.0
  %6186 = vmatpush1.msra.mxu0 0.0
  %6187 = vmatprep.subr.mxu0 0.0
  %6188 = vmatpush1.msra.mxu0 0.0
  %6189 = vmatprep.subr.mxu0 0.0
  %6190 = vmatpush1.msra.mxu0 0.0
  %6191 = vmatprep.subr.mxu0 0.0
  %6192 = vmatpush1.msra.mxu0 0.0
  %6193 = vmatprep.subr.mxu0 0.0
  %6194 = vmatpush1.msra.mxu0 0.0
  %6195 = vmatprep.subr.mxu0 0.0
  %6196 = vmatpush1.msra.mxu0 0.0
  %6197 = vmatprep.subr.mxu0 0.0
  %6198 = vmatpush1.msra.mxu0 0.0
  %6199 = vmatprep.subr.mxu0 0.0
  %6200 = vmatpush1.msra.mxu0 0.0
  %6201 = vmatprep.subr.mxu0 0.0
  %6202 = vmatpush1.msra.mxu0 0.0
  %6203 = vmatprep.subr.mxu0 0.0
  %6204 = vmatpush1.msra.mxu0 0.0
  %6205 = vmatprep.subr.mxu0 0.0
  %6206 = vmatpush1.msra.mxu0 0.0
  %6207 = vmatprep.mubr.f32.mxu0 0.0
  %6208 = vmatmul.mubr.f32.gmra.mrb[0].mxu0 %v6132
  %v6209 = vpop.f32.mrb[0].mxu0
  %v6210 = vadd.f32 %v6130, %v6209
  %v6211 = vpop.f32.mrb[0].mxu0
  %6212 = vmatprep.mubr.f32.mxu0 0.0
  %6213 = vmatmul.mubr.f32.gmra.mrb[0].mxu0 %v6135
  %v6214 = vpop.f32.mrb[0].mxu0
  %v6215 = vadd.f32 %v6130, %v6214
  %v6216 = vpop.f32.mrb[0].mxu0
  %6217 = vmatprep.mubr.f32.mxu0 0.0
  %6218 = vmatmul.mubr.f32.gmra.mrb[0].mxu0 %v6138
  %v6219 = vpop.f32.mrb[0].mxu0
  %v6220 = vadd.f32 %v6130, %v6219
  %v6221 = vpop.f32.mrb[0].mxu0
  %6222 = vmatprep.mubr.f32.mxu0 0.0
  %6223 = vmatmul.mubr.f32.gmra.mrb[0].mxu0 %v6141
  %v6224 = vpop.f32.mrb[0].mxu0
  %v6225 = vadd.f32 %v6130, %v6224
  %v6226 = vpop.f32.mrb[0].mxu0
  %6227 = vdwg.mxu0
  %v6228 = vmul.f32 %v6210, 0.5
  %v6229 = vmul.f32 %v6215, 0.5
  %v6230 = vmul.f32 %v6220, 0.5
  %v6231 = vmul.f32 %v6225, 0.5
  %v6232 = vmul.f32 %v6210, 0.70710677
  %v6233 = vmul.f32 %v6215, 0.70710677
  %v6234 = vmul.f32 %v6220, 0.70710677
  %v6235 = vmul.f32 %v6225, 0.70710677
  %v6236 = verf.f32.pop %v6232
  %v6237 = verf.f32.pop %v6233
  %v6238 = verf.f32.pop %v6234
  %v6239 = verf.f32.pop %v6235
  %v6240 = vadd.f32 %v6236, 1.0
  %v6241 = vadd.f32 %v6237, 1.0
  %v6242 = vadd.f32 %v6238, 1.0
  %v6243 = vadd.f32 %v6239, 1.0
  %v6244 = vmul.f32 %v6228, %v6240
  %v6245 = vmul.f32 %v6229, %v6241
  %v6246 = vmul.f32 %v6230, %v6242
  %v6247 = vmul.f32 %v6231, %v6243
  %s6248 = scalar_lea.vmem %s8, 128
  %v6249 = vld [vmem:[%s6248] sm:$0xff]
  %v6250 = vld [vmem:[%s6248 + $0x8] sm:$0xff]
  %v6251 = vld [vmem:[%s6248 + $0x10] sm:$0xff]
  %v6252 = vld [vmem:[%s6248 + $0x18] sm:$0xff]
  %v6253 = vld [vmem:[%s6248 + $0x20] sm:$0xff]
  %v6254 = vld [vmem:[%s6248 + $0x28] sm:$0xff]
  %v6255 = vld [vmem:[%s6248 + $0x30] sm:$0xff]
  %v6256 = vld [vmem:[%s6248 + $0x38] sm:$0xff]
  %v6257 = vld [vmem:[%s6248 + $0x40] sm:$0xff]
  %v6258 = vld [vmem:[%s6248 + $0x48] sm:$0xff]
  %v6259 = vld [vmem:[%s6248 + $0x50] sm:$0xff]
  %v6260 = vld [vmem:[%s6248 + $0x58] sm:$0xff]
  %v6261 = vld [vmem:[%s6248 + $0x60] sm:$0xff]
  %v6262 = vld [vmem:[%s6248 + $0x68] sm:$0xff]
  %v6263 = vld [vmem:[%s6248 + $0x70] sm:$0xff]
  %v6264 = vld [vmem:[%s6248 + $0x78] sm:$0xff]
  %v6266 = vlaneseq
  %v6267 = vshrl.u32 %v6266, 7
  %v6268 = vsub.s32 0, %v6267
  %v6269 = vrot.slane %v3338, %v6268
  %6271 = vmatprep.subr.mxu0 0.0
  %6272 = vmatpush1.msra.mxu0 %v6249
  %6273 = vmatprep.subr.mxu0 0.0
  %6274 = vmatpush1.msra.mxu0 %v6250
  %6275 = vmatprep.subr.mxu0 0.0
  %6276 = vmatpush1.msra.mxu0 %v6251
  %6277 = vmatprep.subr.mxu0 0.0
  %6278 = vmatpush1.msra.mxu0 %v6252
  %6279 = vmatprep.subr.mxu0 0.0
  %6280 = vmatpush1.msra.mxu0 %v6253
  %6281 = vmatprep.subr.mxu0 0.0
  %6282 = vmatpush1.msra.mxu0 %v6254
  %6283 = vmatprep.subr.mxu0 0.0
  %6284 = vmatpush1.msra.mxu0 %v6255
  %6285 = vmatprep.subr.mxu0 0.0
  %6286 = vmatpush1.msra.mxu0 %v6256
  %6287 = vmatprep.subr.mxu0 0.0
  %6288 = vmatpush1.msra.mxu0 %v6257
  %6289 = vmatprep.subr.mxu0 0.0
  %6290 = vmatpush1.msra.mxu0 %v6258
  %6291 = vmatprep.subr.mxu0 0.0
  %6292 = vmatpush1.msra.mxu0 %v6259
  %6293 = vmatprep.subr.mxu0 0.0
  %6294 = vmatpush1.msra.mxu0 %v6260
  %6295 = vmatprep.subr.mxu0 0.0
  %6296 = vmatpush1.msra.mxu0 %v6261
  %6297 = vmatprep.subr.mxu0 0.0
  %6298 = vmatpush1.msra.mxu0 %v6262
  %6299 = vmatprep.subr.mxu0 0.0
  %6300 = vmatpush1.msra.mxu0 %v6263
  %6301 = vmatprep.subr.mxu0 0.0
  %6302 = vmatpush1.msra.mxu0 %v6264
  %6303 = vmatprep.subr.mxu0 0.0
  %6304 = vmatpush1.msra.mxu0 0.0
  %6305 = vmatprep.subr.mxu0 0.0
  %6306 = vmatpush1.msra.mxu0 0.0
  %6307 = vmatprep.subr.mxu0 0.0
  %6308 = vmatpush1.msra.mxu0 0.0
  %6309 = vmatprep.subr.mxu0 0.0
  %6310 = vmatpush1.msra.mxu0 0.0
  %6311 = vmatprep.subr.mxu0 0.0
  %6312 = vmatpush1.msra.mxu0 0.0
  %6313 = vmatprep.subr.mxu0 0.0
  %6314 = vmatpush1.msra.mxu0 0.0
  %6315 = vmatprep.subr.mxu0 0.0
  %6316 = vmatpush1.msra.mxu0 0.0
  %6317 = vmatprep.subr.mxu0 0.0
  %6318 = vmatpush1.msra.mxu0 0.0
  %6319 = vmatprep.subr.mxu0 0.0
  %6320 = vmatpush1.msra.mxu0 0.0
  %6321 = vmatprep.subr.mxu0 0.0
  %6322 = vmatpush1.msra.mxu0 0.0
  %6323 = vmatprep.subr.mxu0 0.0
  %6324 = vmatpush1.msra.mxu0 0.0
  %6325 = vmatprep.subr.mxu0 0.0
  %6326 = vmatpush1.msra.mxu0 0.0
  %6327 = vmatprep.subr.mxu0 0.0
  %6328 = vmatpush1.msra.mxu0 0.0
  %6329 = vmatprep.subr.mxu0 0.0
  %6330 = vmatpush1.msra.mxu0 0.0
  %6331 = vmatprep.subr.mxu0 0.0
  %6332 = vmatpush1.msra.mxu0 0.0
  %6333 = vmatprep.subr.mxu0 0.0
  %6334 = vmatpush1.msra.mxu0 0.0
  %6335 = vmatprep.mubr.f32.mxu0 0.0
  %6336 = vmatmul.mubr.f32.gmra.mrb[0].mxu0 %v6244
  %v6337 = vpop.f32.mrb[0].mxu0
  %v6338 = vadd.f32 %v6269, %v6337
  %v6339 = vpop.f32.mrb[0].mxu0
  %6340 = vmatprep.mubr.f32.mxu0 0.0
  %6341 = vmatmul.mubr.f32.gmra.mrb[0].mxu0 %v6245
  %v6342 = vpop.f32.mrb[0].mxu0
  %v6343 = vadd.f32 %v6269, %v6342
  %v6344 = vpop.f32.mrb[0].mxu0
  %6345 = vmatprep.mubr.f32.mxu0 0.0
  %6346 = vmatmul.mubr.f32.gmra.mrb[0].mxu0 %v6246
  %v6347 = vpop.f32.mrb[0].mxu0
  %v6348 = vadd.f32 %v6269, %v6347
  %v6349 = vpop.f32.mrb[0].mxu0
  %6350 = vmatprep.mubr.f32.mxu0 0.0
  %6351 = vmatmul.mubr.f32.gmra.mrb[0].mxu0 %v6247
  %v6352 = vpop.f32.mrb[0].mxu0
  %v6353 = vadd.f32 %v6269, %v6352
  %v6354 = vpop.f32.mrb[0].mxu0
  %6355 = vdwg.mxu0
  %v6356 = vadd.f32 %v6045, %v6338
  %v6357 = vadd.f32 %v6046, %v6343
  %v6358 = vadd.f32 %v6047, %v6348
  %v6359 = vadd.f32 %v6048, %v6353
  %v6360 = vld [vmem:[%s9] sm:$0x1]
  %s6361 = scalar_lea.vmem %s9, 1
  %v6362 = vld [vmem:[%s6361] sm:$0x1]
  %v6363 = vsel %vm308, %v6356, 0.0
  %6364 = vadd.xlane.f32.xlu0 %v6363
  %v6365 = vpop.xlane.xlu0 %6364
  %v6366 = vsel %vm308, %v6357, 0.0
  %6367 = vadd.xlane.f32.xlu0 %v6366
  %v6368 = vpop.xlane.xlu0 %6367
  %v6369 = vsel %vm308, %v6358, 0.0
  %6370 = vadd.xlane.f32.xlu0 %v6369
  %v6371 = vpop.xlane.xlu0 %6370
  %v6372 = vsel %vm308, %v6359, 0.0
  %6373 = vadd.xlane.f32.xlu0 %v6372
  %v6374 = vpop.xlane.xlu0 %6373
  %v6375 = vmul.f32 %v6365, %v321
  %v6376 = vmul.f32 %v6368, %v321
  %v6377 = vmul.f32 %v6371, %v321
  %v6378 = vmul.f32 %v6374, %v321
  %v6379 = vsub.f32 %v6356, %v6375
  %v6380 = vsub.f32 %v6357, %v6376
  %v6381 = vsub.f32 %v6358, %v6377
  %v6382 = vsub.f32 %v6359, %v6378
  %v6383 = vmul.f32 %v6379, %v6379
  %v6384 = vmul.f32 %v6380, %v6380
  %v6385 = vmul.f32 %v6381, %v6381
  %v6386 = vmul.f32 %v6382, %v6382
  %v6387 = vsel %vm308, %v6383, 0.0
  %6388 = vadd.xlane.f32.xlu0 %v6387
  %v6389 = vpop.xlane.xlu0 %6388
  %v6390 = vsel %vm308, %v6384, 0.0
  %6391 = vadd.xlane.f32.xlu0 %v6390
  %v6392 = vpop.xlane.xlu0 %6391
  %v6393 = vsel %vm308, %v6385, 0.0
  %6394 = vadd.xlane.f32.xlu0 %v6393
  %v6395 = vpop.xlane.xlu0 %6394
  %v6396 = vsel %vm308, %v6386, 0.0
  %6397 = vadd.xlane.f32.xlu0 %v6396
  %v6398 = vpop.xlane.xlu0 %6397
  %v6399 = vmul.f32 %v6389, %v321
  %v6400 = vmul.f32 %v6392, %v321
  %v6401 = vmul.f32 %v6395, %v321
  %v6402 = vmul.f32 %v6398, %v321
  %v6403 = vadd.f32 %v6399, 1e-06
  %v6404 = vadd.f32 %v6400, 1e-06
  %v6405 = vadd.f32 %v6401, 1e-06
  %v6406 = vadd.f32 %v6402, 1e-06
  %v6407 = vrsqrt.pop %v6403
  %v6408 = vrsqrt.pop %v6404
  %v6409 = vrsqrt.pop %v6405
  %v6410 = vrsqrt.pop %v6406
  %v6411 = vmul.f32 %v6379, %v6407
  %v6412 = vmul.f32 %v6380, %v6408
  %v6413 = vmul.f32 %v6381, %v6409
  %v6414 = vmul.f32 %v6382, %v6410
  %v6416 = vlaneseq
  %v6417 = vshrl.u32 %v6416, 7
  %v6418 = vsub.s32 0, %v6417
  %v6419 = vrot.slane %v6360, %v6418
  %v6421 = vmul.f32 %v6411, %v6419
  %v6422 = vmul.f32 %v6412, %v6419
  %v6423 = vmul.f32 %v6413, %v6419
  %v6424 = vmul.f32 %v6414, %v6419
  %v6426 = vlaneseq
  %v6427 = vshrl.u32 %v6426, 7
  %v6428 = vsub.s32 0, %v6427
  %v6429 = vrot.slane %v6362, %v6428
  %v6431 = vadd.f32 %v6421, %v6429
  %v6432 = vadd.f32 %v6422, %v6429
  %v6433 = vadd.f32 %v6423, %v6429
  %v6434 = vadd.f32 %v6424, %v6429
  %v6435 = vld [vmem:[%s10] sm:$0xff]
  %v6436 = vld [vmem:[%s10 + $0x8] sm:$0xff]
  %v6437 = vld [vmem:[%s10 + $0x10] sm:$0xff]
  %v6438 = vld [vmem:[%s10 + $0x18] sm:$0xff]
  %v6439 = vld [vmem:[%s10 + $0x20] sm:$0x1]
  %v6440 = vlaneseq
  %v6441 = vshrl.u32 %v6440, 7
  %v6442 = vsub.s32 0, %v6441
  %v6443 = vrot.slane %v6439, %v6442
  %v6445 = vsel %vm308, %v6431, 0
  %v6448 = vsel %vm308, %v6432, 0
  %v6451 = vsel %vm308, %v6433, 0
  %v6454 = vsel %vm308, %v6434, 0
  %6456 = vmatprep.subr.mxu0 0.0
  %6457 = vmatpush1.msra.mxu0 %v6435
  %6458 = vmatprep.subr.mxu0 0.0
  %6459 = vmatpush1.msra.mxu0 %v6436
  %6460 = vmatprep.subr.mxu0 0.0
  %6461 = vmatpush1.msra.mxu0 %v6437
  %6462 = vmatprep.subr.mxu0 0.0
  %6463 = vmatpush1.msra.mxu0 %v6438
  %6464 = vmatprep.subr.mxu0 0.0
  %6465 = vmatpush1.msra.mxu0 0.0
  %6466 = vmatprep.subr.mxu0 0.0
  %6467 = vmatpush1.msra.mxu0 0.0
  %6468 = vmatprep.subr.mxu0 0.0
  %6469 = vmatpush1.msra.mxu0 0.0
  %6470 = vmatprep.subr.mxu0 0.0
  %6471 = vmatpush1.msra.mxu0 0.0
  %6472 = vmatprep.subr.mxu0 0.0
  %6473 = vmatpush1.msra.mxu0 0.0
  %6474 = vmatprep.subr.mxu0 0.0
  %6475 = vmatpush1.msra.mxu0 0.0
  %6476 = vmatprep.subr.mxu0 0.0
  %6477 = vmatpush1.msra.mxu0 0.0
  %6478 = vmatprep.subr.mxu0 0.0
  %6479 = vmatpush1.msra.mxu0 0.0
  %6480 = vmatprep.subr.mxu0 0.0
  %6481 = vmatpush1.msra.mxu0 0.0
  %6482 = vmatprep.subr.mxu0 0.0
  %6483 = vmatpush1.msra.mxu0 0.0
  %6484 = vmatprep.subr.mxu0 0.0
  %6485 = vmatpush1.msra.mxu0 0.0
  %6486 = vmatprep.subr.mxu0 0.0
  %6487 = vmatpush1.msra.mxu0 0.0
  %6488 = vmatprep.subr.mxu0 0.0
  %6489 = vmatpush1.msra.mxu0 0.0
  %6490 = vmatprep.subr.mxu0 0.0
  %6491 = vmatpush1.msra.mxu0 0.0
  %6492 = vmatprep.subr.mxu0 0.0
  %6493 = vmatpush1.msra.mxu0 0.0
  %6494 = vmatprep.subr.mxu0 0.0
  %6495 = vmatpush1.msra.mxu0 0.0
  %6496 = vmatprep.subr.mxu0 0.0
  %6497 = vmatpush1.msra.mxu0 0.0
  %6498 = vmatprep.subr.mxu0 0.0
  %6499 = vmatpush1.msra.mxu0 0.0
  %6500 = vmatprep.subr.mxu0 0.0
  %6501 = vmatpush1.msra.mxu0 0.0
  %6502 = vmatprep.subr.mxu0 0.0
  %6503 = vmatpush1.msra.mxu0 0.0
  %6504 = vmatprep.subr.mxu0 0.0
  %6505 = vmatpush1.msra.mxu0 0.0
  %6506 = vmatprep.subr.mxu0 0.0
  %6507 = vmatpush1.msra.mxu0 0.0
  %6508 = vmatprep.subr.mxu0 0.0
  %6509 = vmatpush1.msra.mxu0 0.0
  %6510 = vmatprep.subr.mxu0 0.0
  %6511 = vmatpush1.msra.mxu0 0.0
  %6512 = vmatprep.subr.mxu0 0.0
  %6513 = vmatpush1.msra.mxu0 0.0
  %6514 = vmatprep.subr.mxu0 0.0
  %6515 = vmatpush1.msra.mxu0 0.0
  %6516 = vmatprep.subr.mxu0 0.0
  %6517 = vmatpush1.msra.mxu0 0.0
  %6518 = vmatprep.subr.mxu0 0.0
  %6519 = vmatpush1.msra.mxu0 0.0
  %6520 = vmatprep.mubr.f32.mxu0 0.0
  %6521 = vmatmul.mubr.f32.gmra.mrb[0].mxu0 %v6445
  %v6522 = vpop.f32.mrb[0].mxu0
  %v6523 = vadd.f32 %v6443, %v6522
  %v6524 = vpop.f32.mrb[0].mxu0
  %6525 = vmatprep.mubr.f32.mxu0 0.0
  %6526 = vmatmul.mubr.f32.gmra.mrb[0].mxu0 %v6448
  %v6527 = vpop.f32.mrb[0].mxu0
  %v6528 = vadd.f32 %v6443, %v6527
  %v6529 = vpop.f32.mrb[0].mxu0
  %6530 = vmatprep.mubr.f32.mxu0 0.0
  %6531 = vmatmul.mubr.f32.gmra.mrb[0].mxu0 %v6451
  %v6532 = vpop.f32.mrb[0].mxu0
  %v6533 = vadd.f32 %v6443, %v6532
  %v6534 = vpop.f32.mrb[0].mxu0
  %6535 = vmatprep.mubr.f32.mxu0 0.0
  %6536 = vmatmul.mubr.f32.gmra.mrb[0].mxu0 %v6454
  %v6537 = vpop.f32.mrb[0].mxu0
  %v6538 = vadd.f32 %v6443, %v6537
  %v6539 = vpop.f32.mrb[0].mxu0
  %6540 = vdwg.mxu0
  %6541 = vst [vmem:[%s12] sm:$0xff] %v6523
  %6542 = vst [vmem:[%s12 + $0x8] sm:$0xff] %v6528
  %6543 = vst [vmem:[%s12 + $0x10] sm:$0xff] %v6533
  %6544 = vst [vmem:[%s12 + $0x18] sm:$0xff] %v6538
  // Predicated region
  $region50: #{vpt_vit3d_forward.2} parent=0 // pred_check
    _
  $region51: #{vpt_vit3d_forward.2} parent=0 // pred_check_branch
    %6546 = sbr.rel (0) target = $region53
  $region52: #{vpt_vit3d_forward.2} parent=0 // pred_region
    _
  $region53: #{vpt_vit3d_forward.2} parent=0 // pred_fallthru
    _
  // Predicated region
  $region54: #{vpt_vit3d_forward.2} parent=0 // pred_check
    _
  $region55: #{vpt_vit3d_forward.2} parent=0 // pred_check_branch
    %6548 = sbr.rel (0) target = $region57
  $region56: #{vpt_vit3d_forward.2} parent=0 // pred_region
    _
  $region57: #{vpt_vit3d_forward.2} parent=0 // pred_fallthru
    _

</llo_original>
